<compile_context>
chip_gen: v5e
topology: v5e:2x2
jax: 0.10.0
libtpu: 0.0.40
codegen_flags: <defaults>
</compile_context>

<pallas_src>
import functools

import jax
import jax.numpy as jnp
from jax.experimental import pallas as pl
from jax.experimental.pallas import tpu as pltpu


# ------------------------- tiling constants -------------------------
BM = 512                         # destination-node (row) tile
BK = 512                         # source-node (reduction) tile
LANE = 128                       # feature-dim padding multiple (lane width)
Z_RESIDENT_BUDGET = 4 * 1024 * 1024    # bf16 Z kept fully VMEM-resident below this
VMEM_LIMIT = 32 * 1024 * 1024          # safe scoped-VMEM limit on v5e/v6e/v7x


def _round_up(x, m):
    return (x + m - 1) // m * m


# ------------------------- kernels -------------------------
def feature_transform_kernel(x_ref, norm_ref, w_ref, z_ref):
    """Z = (norm_out .* X) @ W for one block of source-node rows (bf16 MXU)."""
    x = x_ref[...].astype(jnp.float32) * norm_ref[...]          # [BM, Fin] * [BM, 1]
    z = jnp.dot(x.astype(jnp.bfloat16), w_ref[...],
                preferred_element_type=jnp.float32)
    z_ref[...] = z.astype(z_ref.dtype)                          # bf16 Z


def aggregate_kernel(a_ref, z_ref, norm_ref, b_ref, o_ref, *scratch,
                     relu, resident_z):
    """Y[i] = norm_in[i] .* sum_k A[i,k] @ Z[k] + b   (optionally relu).

    When the output is f32 the accumulator IS the resident output block
    (constant block index along k); a separate f32 scratch is used only when
    the output is stored as bf16 (layer-1 h1).
    """
    acc_ref = scratch[0] if scratch else o_ref
    k = pl.program_id(1)

    @pl.when(k == 0)
    def _():
        acc_ref[...] = jnp.zeros_like(acc_ref)

    if resident_z:
        start = pl.multiple_of(k * BK, BK)
        z = z_ref[pl.ds(start, BK), :]                          # slice resident Z
    else:
        z = z_ref[...]
    # bf16 x bf16 MXU dot, f32 accumulate (A is 0/1 so bf16 is exact for A).
    acc_ref[...] += jnp.dot(a_ref[...], z, preferred_element_type=jnp.float32)

    @pl.when(k == pl.num_programs(1) - 1)
    def _():
        y = acc_ref[...] * norm_ref[...] + b_ref[...]           # [BM,1], [1,F] bcast
        if relu:
            y = jnp.maximum(y, 0.0)
        o_ref[...] = y.astype(o_ref.dtype)


# ------------------------- pallas_call wrappers -------------------------
def _feature_transform(x, norm_out_col, w_bf16):
    n_pad, fin = x.shape
    fout = w_bf16.shape[1]
    x_bytes = jnp.dtype(x.dtype).itemsize
    return pl.pallas_call(
        feature_transform_kernel,
        out_shape=jax.ShapeDtypeStruct((n_pad, fout), jnp.bfloat16),
        grid_spec=pltpu.PrefetchScalarGridSpec(
            num_scalar_prefetch=0,
            grid=(n_pad // BM,),
            in_specs=[
                pl.BlockSpec((BM, fin), lambda i: (i, 0)),
                pl.BlockSpec((BM, 1), lambda i: (i, 0)),
                pl.BlockSpec((fin, fout), lambda i: (0, 0)),    # bf16 W resident
            ],
            out_specs=pl.BlockSpec((BM, fout), lambda i: (i, 0)),
        ),
        compiler_params=pltpu.CompilerParams(
            dimension_semantics=("parallel",),
            vmem_limit_bytes=VMEM_LIMIT),
        cost_estimate=pl.CostEstimate(
            flops=2 * n_pad * fin * fout,
            transcendentals=0,
            bytes_accessed=(x_bytes * n_pad * fin + 2 * fin * fout
                            + 4 * n_pad + 2 * n_pad * fout)),
    )(x, norm_out_col, w_bf16)


def _aggregate(a_bf16, z_bf16, norm_in_col, bias_row, *, relu, out_dtype):
    n_pad = a_bf16.shape[0]
    f = z_bf16.shape[1]

    resident_z = (n_pad * f * 2) <= Z_RESIDENT_BUDGET
    kernel = functools.partial(aggregate_kernel, relu=relu, resident_z=resident_z)

    if resident_z:
        # Whole Z resident in VMEM; fetched once, sliced inside the kernel.
        z_spec = pl.BlockSpec((n_pad, f), lambda i, k: (0, 0))
        z_bytes = 2 * n_pad * f
    else:
        z_spec = pl.BlockSpec((BK, f), lambda i, k: (k, 0))
        z_bytes = (n_pad // BM) * 2 * n_pad * f                  # re-read per row block

    scratch_shapes = []
    if out_dtype != jnp.float32:
        scratch_shapes.append(pltpu.VMEM((BM, f), jnp.float32))  # f32 acc for bf16 out

    out_bytes = jnp.dtype(out_dtype).itemsize
    return pl.pallas_call(
        kernel,
        out_shape=jax.ShapeDtypeStruct((n_pad, f), out_dtype),
        grid_spec=pltpu.PrefetchScalarGridSpec(
            num_scalar_prefetch=0,
            grid=(n_pad // BM, n_pad // BK),                     # reduction axis last
            in_specs=[
                pl.BlockSpec((BM, BK), lambda i, k: (i, k)),     # A tile (bf16)
                z_spec,                                          # Z (bf16)
                pl.BlockSpec((BM, 1), lambda i, k: (i, 0)),      # norm_in rows
                pl.BlockSpec((1, f), lambda i, k: (0, 0)),       # bias (resident)
            ],
            out_specs=pl.BlockSpec((BM, f), lambda i, k: (i, 0)),
            scratch_shapes=scratch_shapes,
        ),
        compiler_params=pltpu.CompilerParams(
            dimension_semantics=("parallel", "arbitrary"),
            vmem_limit_bytes=VMEM_LIMIT),
        cost_estimate=pl.CostEstimate(
            flops=2 * n_pad * n_pad * f,
            transcendentals=0,
            bytes_accessed=(2 * n_pad * n_pad + z_bytes
                            + 4 * n_pad + 4 * f + out_bytes * n_pad * f)),
    )(a_bf16, z_bf16, norm_in_col, bias_row)


# ------------------------- full forward -------------------------
@jax.jit
def gcn_forward(adj, features, w1, b1, w2, b2):
    """adj: [N, N] dense adjacency (A[dst, src]); features: [N, in_size]."""
    n = adj.shape[0]
    in_size, hidden = w1.shape
    out_size = w2.shape[1]

    # Row-block count kept even when >1 so v7x's 2 TensorCores shard evenly.
    n_blocks = max(1, -(-n // BM))
    if n_blocks > 1 and n_blocks % 2 == 1:
        n_blocks += 1
    n_pad = n_blocks * BM
    fin_p = _round_up(in_size, LANE)
    hid_p = _round_up(hidden, LANE)
    out_p = _round_up(out_size, LANE)

    # Degree norms from the UNPADDED adjacency (padded rows/cols are zero,
    # so degrees are unchanged); avoids extra N^2 HBM passes.
    deg_in = jnp.sum(adj, axis=1)                                # [N] dst degrees
    deg_out = jnp.sum(adj, axis=0)                               # [N] src degrees
    norm_in = jax.lax.rsqrt(jnp.maximum(deg_in, 1.0))
    norm_out = jax.lax.rsqrt(jnp.maximum(deg_out, 1.0))
    norm_in_p = jnp.zeros((n_pad, 1), jnp.float32).at[:n, 0].set(norm_in)
    norm_out_p = jnp.zeros((n_pad, 1), jnp.float32).at[:n, 0].set(norm_out)

    # Pad the adjacency directly as bf16 (0/1 values are exact in bf16).
    a_bf16 = jnp.zeros((n_pad, n_pad), jnp.bfloat16).at[:n, :n].set(
        adj.astype(jnp.bfloat16))

    # Lane/tile-aligned, zero-padded operands; W in bf16 for the MXU path.
    x_p = jnp.zeros((n_pad, fin_p), jnp.float32).at[:n, :in_size].set(features)
    w1_p = jnp.zeros((fin_p, hid_p), jnp.bfloat16).at[:in_size, :hidden].set(
        w1.astype(jnp.bfloat16))
    b1_p = jnp.zeros((1, hid_p), jnp.float32).at[0, :hidden].set(b1)
    w2_p = jnp.zeros((hid_p, out_p), jnp.bfloat16).at[:hidden, :out_size].set(
        w2.astype(jnp.bfloat16))
    b2_p = jnp.zeros((1, out_p), jnp.float32).at[0, :out_size].set(b2)

    # Layer 1: h1 = relu(norm_in .* (A @ ((norm_out .* X) @ W1)) + b1)   (bf16)
    z1 = _feature_transform(x_p, norm_out_p, w1_p)
    h1 = _aggregate(a_bf16, z1, norm_in_p, b1_p, relu=True, out_dtype=jnp.bfloat16)

    # Layer 2: out = norm_in .* (A @ ((norm_out .* h1) @ W2)) + b2       (f32)
    z2 = _feature_transform(h1, norm_out_p, w2_p)
    out = _aggregate(a_bf16, z2, norm_in_p, b2_p, relu=False, out_dtype=jnp.float32)

    return out[:n, :out_size]


# ------------------------- pure-JAX reference -------------------------
def gcn_reference(adj, features, w1, b1, w2, b2):
    deg_in = jnp.sum(adj, axis=1, keepdims=True)
    deg_out = jnp.sum(adj, axis=0, keepdims=True)
    ni = jax.lax.rsqrt(jnp.maximum(deg_in, 1.0))   # [N,1]
    no = jax.lax.rsqrt(jnp.maximum(deg_out, 1.0))  # [1,N]
    h1 = ni * (adj @ ((no.T * features) @ w1)) + b1[None, :]
    h1 = jnp.maximum(h1, 0.0)
    return ni * (adj @ ((no.T * h1) @ w2)) + b2[None, :]


def xavier_uniform(key, shape):
    fan_in, fan_out = shape
    limit = jnp.sqrt(6.0 / (fan_in + fan_out))
    return jax.random.uniform(key, shape, jnp.float32, -limit, limit)


if __name__ == "__main__":
    # Small deterministic problem: N nodes, in_size -> hidden -> out_size.
    N, IN_SIZE, HIDDEN, OUT_SIZE = 8, 16, 32, 8

    key = jax.random.PRNGKey(0)
    k_adj, k_feat, k_w1, k_w2 = jax.random.split(key, 4)

    # Random symmetric graph with self-loops, dense {0,1} adjacency.
    rand = jax.random.uniform(k_adj, (N, N))
    adj = (rand + rand.T > 1.0).astype(jnp.float32)
    adj = jnp.maximum(adj, jnp.eye(N, dtype=jnp.float32))   # add self loops

    features = jax.random.normal(k_feat, (N, IN_SIZE), jnp.float32)

    # DGL GraphConv init: xavier_uniform weights, zero biases.
    w1 = xavier_uniform(k_w1, (IN_SIZE, HIDDEN))
    b1 = jnp.zeros((HIDDEN,), jnp.float32)
    w2 = xavier_uniform(k_w2, (HIDDEN, OUT_SIZE))
    b2 = jnp.zeros((OUT_SIZE,), jnp.float32)

    out = gcn_forward(adj, features, w1, b1, w2, b2)
    out = jax.block_until_ready(out)

    ref = gcn_reference(adj, features, w1, b1, w2, b2)
    assert out.shape == (N, OUT_SIZE)
    # bf16 Z / h1 / W introduce ~0.5% rounding vs the f32 reference.
    assert jnp.allclose(out, ref, atol=2e-2, rtol=2e-2), "mismatch vs JAX reference"

    print("KERNEL_OK")
</pallas_src>

<mosaic_0001>
module attributes {stable_mosaic.version = 11 : i64} {
  func.func @feature_transform_kernel(%arg0: i32, %arg1: memref<512x128xf32, #tpu.memory_space<vmem>>, %arg2: memref<512x1xf32, #tpu.memory_space<vmem>>, %arg3: memref<128x128xbf16, #tpu.memory_space<vmem>>, %arg4: memref<512x128xbf16, #tpu.memory_space<vmem>>) attributes {dimension_semantics = [#tpu.dimension_semantics<parallel>], iteration_bounds = array<i64: 1>, scalar_prefetch = 0 : i64, scratch_operands = 0 : i64, tpu.core_type = #tpu.core_type<tc>, window_params = [{transform_indices = @transform_0, window_bounds = array<i64: 512, 128>}, {transform_indices = @transform_1, window_bounds = array<i64: 512, 1>}, {pipeline_mode = #tpu.pipeline_mode<synchronous>, transform_indices = @transform_2, window_bounds = array<i64: 128, 128>}, {transform_indices = @transform_3, window_bounds = array<i64: 512, 128>}]} {
    %c0 = arith.constant 0 : index
    %c0_0 = arith.constant 0 : index
    %0 = vector.load %arg1[%c0, %c0_0] : memref<512x128xf32, #tpu.memory_space<vmem>>, vector<512x128xf32>
    %c0_1 = arith.constant 0 : index
    %c0_2 = arith.constant 0 : index
    %1 = vector.load %arg2[%c0_1, %c0_2] : memref<512x1xf32, #tpu.memory_space<vmem>>, vector<512x1xf32>
    %2 = vector.broadcast %1 : vector<512x1xf32> to vector<512x128xf32>
    %3 = arith.mulf %0, %2 : vector<512x128xf32>
    %4 = arith.truncf %3 : vector<512x128xf32> to vector<512x128xbf16>
    %c0_3 = arith.constant 0 : index
    %c0_4 = arith.constant 0 : index
    %5 = vector.load %arg3[%c0_3, %c0_4] : memref<128x128xbf16, #tpu.memory_space<vmem>>, vector<128x128xbf16>
    %cst = arith.constant dense<0.000000e+00> : vector<512x128xf32>
    %6 = tpu.matmul %4, %5, %cst {dimension_numbers = #tpu.dot_dimension_numbers<[1], [0], [0], [1], [0, 0, 1, 1], [], []>} : vector<512x128xbf16>, vector<128x128xbf16>, vector<512x128xf32> -> vector<512x128xf32>
    %7 = arith.truncf %6 : vector<512x128xf32> to vector<512x128xbf16>
    %c0_5 = arith.constant 0 : index
    %c0_6 = arith.constant 0 : index
    %8 = vector.load %arg4[%c0_5, %c0_6] : memref<512x128xbf16, #tpu.memory_space<vmem>>, vector<512x128xbf16>
    tpu.vector_store %arg4[%c0_5, %c0_6], %7 {strides = array<i32>} : memref<512x128xbf16, #tpu.memory_space<vmem>>, vector<512x128xbf16>,
    return
  }
  func.func @transform_0(%arg0: i32) -> (i32, i32) {
    %c0_i32 = arith.constant 0 : i32
    %c0_i32_0 = arith.constant 0 : i32
    return %arg0, %c0_i32 : i32, i32
  }
  func.func @transform_1(%arg0: i32) -> (i32, i32) {
    %c0_i32 = arith.constant 0 : i32
    %c0_i32_0 = arith.constant 0 : i32
    return %arg0, %c0_i32 : i32, i32
  }
  func.func @transform_2(%arg0: i32) -> (i32, i32) {
    %c0_i32 = arith.constant 0 : i32
    %c0_i32_0 = arith.constant 0 : i32
    %c0_i32_1 = arith.constant 0 : i32
    return %c0_i32, %c0_i32_0 : i32, i32
  }
  func.func @transform_3(%arg0: i32) -> (i32, i32) {
    %c0_i32 = arith.constant 0 : i32
    %c0_i32_0 = arith.constant 0 : i32
    return %arg0, %c0_i32 : i32, i32
  }
}

module attributes {stable_mosaic.version = 11 : i64} {
  func.func @aggregate_kernel(%arg0: i32, %arg1: i32, %arg2: memref<512x512xbf16, #tpu.memory_space<vmem>>, %arg3: memref<512x128xbf16, #tpu.memory_space<vmem>>, %arg4: memref<512x1xf32, #tpu.memory_space<vmem>>, %arg5: memref<1x128xf32, #tpu.memory_space<vmem>>, %arg6: memref<512x128xbf16, #tpu.memory_space<vmem>>, %arg7: memref<512x128xf32, #tpu.memory_space<vmem>>) attributes {dimension_semantics = [#tpu.dimension_semantics<parallel>, #tpu.dimension_semantics<arbitrary>], iteration_bounds = array<i64: 1, 1>, scalar_prefetch = 0 : i64, scratch_operands = 1 : i64, tpu.core_type = #tpu.core_type<tc>, window_params = [{transform_indices = @transform_0, window_bounds = array<i64: 512, 512>}, {pipeline_mode = #tpu.pipeline_mode<synchronous>, transform_indices = @transform_1, window_bounds = array<i64: 512, 128>}, {transform_indices = @transform_2, window_bounds = array<i64: 512, 1>}, {pipeline_mode = #tpu.pipeline_mode<synchronous>, transform_indices = @transform_3, window_bounds = array<i64: 1, 128>}, {transform_indices = @transform_4, window_bounds = array<i64: 512, 128>}]} {
    %c0_i32 = arith.constant 0 : i32
    %0 = arith.cmpi eq, %arg1, %c0_i32 : i32
    %1 = arith.extui %0 : i1 to i32
    %c0_i32_0 = arith.constant 0 : i32
    %2 = arith.cmpi ne, %1, %c0_i32_0 : i32
    scf.if %2 {
      %cst_9 = arith.constant 0.000000e+00 : f32
      %15 = vector.broadcast %cst_9 : f32 to vector<512x128xf32>
      %c0_10 = arith.constant 0 : index
      %c0_11 = arith.constant 0 : index
      %16 = vector.load %arg7[%c0_10, %c0_11] : memref<512x128xf32, #tpu.memory_space<vmem>>, vector<512x128xf32>
      tpu.vector_store %arg7[%c0_10, %c0_11], %15 {strides = array<i32>} : memref<512x128xf32, #tpu.memory_space<vmem>>, vector<512x128xf32>,
    } else {
    }
    %c512_i32 = arith.constant 512 : i32
    %3 = arith.muli %arg1, %c512_i32 : i32
    %4 = tpu.assume_multiple %3, 512 : i32
    %5 = arith.index_cast %4 : i32 to index
    %c0 = arith.constant 0 : index
    %6 = vector.load %arg3[%5, %c0] : memref<512x128xbf16, #tpu.memory_space<vmem>>, vector<512x128xbf16>
    %c0_1 = arith.constant 0 : index
    %c0_2 = arith.constant 0 : index
    %7 = vector.load %arg7[%c0_1, %c0_2] : memref<512x128xf32, #tpu.memory_space<vmem>>, vector<512x128xf32>
    %c0_3 = arith.constant 0 : index
    %c0_4 = arith.constant 0 : index
    %8 = vector.load %arg2[%c0_3, %c0_4] : memref<512x512xbf16, #tpu.memory_space<vmem>>, vector<512x512xbf16>
    %cst = arith.constant dense<0.000000e+00> : vector<512x128xf32>
    %9 = tpu.matmul %8, %6, %cst {dimension_numbers = #tpu.dot_dimension_numbers<[1], [0], [0], [1], [0, 0, 1, 1], [], []>} : vector<512x512xbf16>, vector<512x128xbf16>, vector<512x128xf32> -> vector<512x128xf32>
    %10 = arith.addf %7, %9 : vector<512x128xf32>
    %c0_5 = arith.constant 0 : index
    %c0_6 = arith.constant 0 : index
    %11 = vector.load %arg7[%c0_5, %c0_6] : memref<512x128xf32, #tpu.memory_space<vmem>>, vector<512x128xf32>
    tpu.vector_store %arg7[%c0_5, %c0_6], %10 {strides = array<i32>} : memref<512x128xf32, #tpu.memory_space<vmem>>, vector<512x128xf32>,
    %c0_i32_7 = arith.constant 0 : i32
    %12 = arith.cmpi eq, %arg1, %c0_i32_7 : i32
    %13 = arith.extui %12 : i1 to i32
    %c0_i32_8 = arith.constant 0 : i32
    %14 = arith.cmpi ne, %13, %c0_i32_8 : i32
    scf.if %14 {
      %c0_9 = arith.constant 0 : index
      %c0_10 = arith.constant 0 : index
      %15 = vector.load %arg7[%c0_9, %c0_10] : memref<512x128xf32, #tpu.memory_space<vmem>>, vector<512x128xf32>
      %c0_11 = arith.constant 0 : index
      %c0_12 = arith.constant 0 : index
      %16 = vector.load %arg4[%c0_11, %c0_12] : memref<512x1xf32, #tpu.memory_space<vmem>>, vector<512x1xf32>
      %17 = vector.broadcast %16 : vector<512x1xf32> to vector<512x128xf32>
      %18 = arith.mulf %15, %17 : vector<512x128xf32>
      %c0_13 = arith.constant 0 : index
      %c0_14 = arith.constant 0 : index
      %19 = vector.load %arg5[%c0_13, %c0_14] : memref<1x128xf32, #tpu.memory_space<vmem>>, vector<1x128xf32>
      %20 = vector.broadcast %19 : vector<1x128xf32> to vector<512x128xf32>
      %21 = arith.addf %18, %20 : vector<512x128xf32>
      %cst_15 = arith.constant 0.000000e+00 : f32
      %22 = vector.broadcast %cst_15 : f32 to vector<512x128xf32>
      %23 = arith.maximumf %21, %22 : vector<512x128xf32>
      %24 = arith.truncf %23 : vector<512x128xf32> to vector<512x128xbf16>
      %c0_16 = arith.constant 0 : index
      %c0_17 = arith.constant 0 : index
      %25 = vector.load %arg6[%c0_16, %c0_17] : memref<512x128xbf16, #tpu.memory_space<vmem>>, vector<512x128xbf16>
      tpu.vector_store %arg6[%c0_16, %c0_17], %24 {strides = array<i32>} : memref<512x128xbf16, #tpu.memory_space<vmem>>, vector<512x128xbf16>,
    } else {
    }
    return
  }
  func.func @transform_0(%arg0: i32, %arg1: i32) -> (i32, i32) {
    %c0_i32 = arith.constant 0 : i32
    return %arg0, %arg1 : i32, i32
  }
  func.func @transform_1(%arg0: i32, %arg1: i32) -> (i32, i32) {
    %c0_i32 = arith.constant 0 : i32
    %c0_i32_0 = arith.constant 0 : i32
    %c0_i32_1 = arith.constant 0 : i32
    return %c0_i32, %c0_i32_0 : i32, i32
  }
  func.func @transform_2(%arg0: i32, %arg1: i32) -> (i32, i32) {
    %c0_i32 = arith.constant 0 : i32
    %c0_i32_0 = arith.constant 0 : i32
    return %arg0, %c0_i32 : i32, i32
  }
  func.func @transform_3(%arg0: i32, %arg1: i32) -> (i32, i32) {
    %c0_i32 = arith.constant 0 : i32
    %c0_i32_0 = arith.constant 0 : i32
    %c0_i32_1 = arith.constant 0 : i32
    return %c0_i32, %c0_i32_0 : i32, i32
  }
  func.func @transform_4(%arg0: i32, %arg1: i32) -> (i32, i32) {
    %c0_i32 = arith.constant 0 : i32
    %c0_i32_0 = arith.constant 0 : i32
    return %arg0, %c0_i32 : i32, i32
  }
}

module attributes {stable_mosaic.version = 11 : i64} {
  func.func @feature_transform_kernel(%arg0: i32, %arg1: memref<512x128xbf16, #tpu.memory_space<vmem>>, %arg2: memref<512x1xf32, #tpu.memory_space<vmem>>, %arg3: memref<128x128xbf16, #tpu.memory_space<vmem>>, %arg4: memref<512x128xbf16, #tpu.memory_space<vmem>>) attributes {dimension_semantics = [#tpu.dimension_semantics<parallel>], iteration_bounds = array<i64: 1>, scalar_prefetch = 0 : i64, scratch_operands = 0 : i64, tpu.core_type = #tpu.core_type<tc>, window_params = [{transform_indices = @transform_0, window_bounds = array<i64: 512, 128>}, {transform_indices = @transform_1, window_bounds = array<i64: 512, 1>}, {pipeline_mode = #tpu.pipeline_mode<synchronous>, transform_indices = @transform_2, window_bounds = array<i64: 128, 128>}, {transform_indices = @transform_3, window_bounds = array<i64: 512, 128>}]} {
    %c0 = arith.constant 0 : index
    %c0_0 = arith.constant 0 : index
    %0 = vector.load %arg1[%c0, %c0_0] : memref<512x128xbf16, #tpu.memory_space<vmem>>, vector<512x128xbf16>
    %1 = arith.extf %0 : vector<512x128xbf16> to vector<512x128xf32>
    %c0_1 = arith.constant 0 : index
    %c0_2 = arith.constant 0 : index
    %2 = vector.load %arg2[%c0_1, %c0_2] : memref<512x1xf32, #tpu.memory_space<vmem>>, vector<512x1xf32>
    %3 = vector.broadcast %2 : vector<512x1xf32> to vector<512x128xf32>
    %4 = arith.mulf %1, %3 : vector<512x128xf32>
    %5 = arith.truncf %4 : vector<512x128xf32> to vector<512x128xbf16>
    %c0_3 = arith.constant 0 : index
    %c0_4 = arith.constant 0 : index
    %6 = vector.load %arg3[%c0_3, %c0_4] : memref<128x128xbf16, #tpu.memory_space<vmem>>, vector<128x128xbf16>
    %cst = arith.constant dense<0.000000e+00> : vector<512x128xf32>
    %7 = tpu.matmul %5, %6, %cst {dimension_numbers = #tpu.dot_dimension_numbers<[1], [0], [0], [1], [0, 0, 1, 1], [], []>} : vector<512x128xbf16>, vector<128x128xbf16>, vector<512x128xf32> -> vector<512x128xf32>
    %8 = arith.truncf %7 : vector<512x128xf32> to vector<512x128xbf16>
    %c0_5 = arith.constant 0 : index
    %c0_6 = arith.constant 0 : index
    %9 = vector.load %arg4[%c0_5, %c0_6] : memref<512x128xbf16, #tpu.memory_space<vmem>>, vector<512x128xbf16>
    tpu.vector_store %arg4[%c0_5, %c0_6], %8 {strides = array<i32>} : memref<512x128xbf16, #tpu.memory_space<vmem>>, vector<512x128xbf16>,
    return
  }
  func.func @transform_0(%arg0: i32) -> (i32, i32) {
    %c0_i32 = arith.constant 0 : i32
    %c0_i32_0 = arith.constant 0 : i32
    return %arg0, %c0_i32 : i32, i32
  }
  func.func @transform_1(%arg0: i32) -> (i32, i32) {
    %c0_i32 = arith.constant 0 : i32
    %c0_i32_0 = arith.constant 0 : i32
    return %arg0, %c0_i32 : i32, i32
  }
  func.func @transform_2(%arg0: i32) -> (i32, i32) {
    %c0_i32 = arith.constant 0 : i32
    %c0_i32_0 = arith.constant 0 : i32
    %c0_i32_1 = arith.constant 0 : i32
    return %c0_i32, %c0_i32_0 : i32, i32
  }
  func.func @transform_3(%arg0: i32) -> (i32, i32) {
    %c0_i32 = arith.constant 0 : i32
    %c0_i32_0 = arith.constant 0 : i32
    return %arg0, %c0_i32 : i32, i32
  }
}

module attributes {stable_mosaic.version = 11 : i64} {
  func.func @aggregate_kernel(%arg0: i32, %arg1: i32, %arg2: memref<512x512xbf16, #tpu.memory_space<vmem>>, %arg3: memref<512x128xbf16, #tpu.memory_space<vmem>>, %arg4: memref<512x1xf32, #tpu.memory_space<vmem>>, %arg5: memref<1x128xf32, #tpu.memory_space<vmem>>, %arg6: memref<512x128xf32, #tpu.memory_space<vmem>>) attributes {dimension_semantics = [#tpu.dimension_semantics<parallel>, #tpu.dimension_semantics<arbitrary>], iteration_bounds = array<i64: 1, 1>, scalar_prefetch = 0 : i64, scratch_operands = 0 : i64, tpu.core_type = #tpu.core_type<tc>, window_params = [{transform_indices = @transform_0, window_bounds = array<i64: 512, 512>}, {pipeline_mode = #tpu.pipeline_mode<synchronous>, transform_indices = @transform_1, window_bounds = array<i64: 512, 128>}, {transform_indices = @transform_2, window_bounds = array<i64: 512, 1>}, {pipeline_mode = #tpu.pipeline_mode<synchronous>, transform_indices = @transform_3, window_bounds = array<i64: 1, 128>}, {transform_indices = @transform_4, window_bounds = array<i64: 512, 128>}]} {
    %c0_i32 = arith.constant 0 : i32
    %0 = arith.cmpi eq, %arg1, %c0_i32 : i32
    %1 = arith.extui %0 : i1 to i32
    %c0_i32_0 = arith.constant 0 : i32
    %2 = arith.cmpi ne, %1, %c0_i32_0 : i32
    scf.if %2 {
      %cst_9 = arith.constant 0.000000e+00 : f32
      %15 = vector.broadcast %cst_9 : f32 to vector<512x128xf32>
      %c0_10 = arith.constant 0 : index
      %c0_11 = arith.constant 0 : index
      %16 = vector.load %arg6[%c0_10, %c0_11] : memref<512x128xf32, #tpu.memory_space<vmem>>, vector<512x128xf32>
      tpu.vector_store %arg6[%c0_10, %c0_11], %15 {strides = array<i32>} : memref<512x128xf32, #tpu.memory_space<vmem>>, vector<512x128xf32>,
    } else {
    }
    %c512_i32 = arith.constant 512 : i32
    %3 = arith.muli %arg1, %c512_i32 : i32
    %4 = tpu.assume_multiple %3, 512 : i32
    %5 = arith.index_cast %4 : i32 to index
    %c0 = arith.constant 0 : index
    %6 = vector.load %arg3[%5, %c0] : memref<512x128xbf16, #tpu.memory_space<vmem>>, vector<512x128xbf16>
    %c0_1 = arith.constant 0 : index
    %c0_2 = arith.constant 0 : index
    %7 = vector.load %arg6[%c0_1, %c0_2] : memref<512x128xf32, #tpu.memory_space<vmem>>, vector<512x128xf32>
    %c0_3 = arith.constant 0 : index
    %c0_4 = arith.constant 0 : index
    %8 = vector.load %arg2[%c0_3, %c0_4] : memref<512x512xbf16, #tpu.memory_space<vmem>>, vector<512x512xbf16>
    %cst = arith.constant dense<0.000000e+00> : vector<512x128xf32>
    %9 = tpu.matmul %8, %6, %cst {dimension_numbers = #tpu.dot_dimension_numbers<[1], [0], [0], [1], [0, 0, 1, 1], [], []>} : vector<512x512xbf16>, vector<512x128xbf16>, vector<512x128xf32> -> vector<512x128xf32>
    %10 = arith.addf %7, %9 : vector<512x128xf32>
    %c0_5 = arith.constant 0 : index
    %c0_6 = arith.constant 0 : index
    %11 = vector.load %arg6[%c0_5, %c0_6] : memref<512x128xf32, #tpu.memory_space<vmem>>, vector<512x128xf32>
    tpu.vector_store %arg6[%c0_5, %c0_6], %10 {strides = array<i32>} : memref<512x128xf32, #tpu.memory_space<vmem>>, vector<512x128xf32>,
    %c0_i32_7 = arith.constant 0 : i32
    %12 = arith.cmpi eq, %arg1, %c0_i32_7 : i32
    %13 = arith.extui %12 : i1 to i32
    %c0_i32_8 = arith.constant 0 : i32
    %14 = arith.cmpi ne, %13, %c0_i32_8 : i32
    scf.if %14 {
      %c0_9 = arith.constant 0 : index
      %c0_10 = arith.constant 0 : index
      %15 = vector.load %arg6[%c0_9, %c0_10] : memref<512x128xf32, #tpu.memory_space<vmem>>, vector<512x128xf32>
      %c0_11 = arith.constant 0 : index
      %c0_12 = arith.constant 0 : index
      %16 = vector.load %arg4[%c0_11, %c0_12] : memref<512x1xf32, #tpu.memory_space<vmem>>, vector<512x1xf32>
      %17 = vector.broadcast %16 : vector<512x1xf32> to vector<512x128xf32>
      %18 = arith.mulf %15, %17 : vector<512x128xf32>
      %c0_13 = arith.constant 0 : index
      %c0_14 = arith.constant 0 : index
      %19 = vector.load %arg5[%c0_13, %c0_14] : memref<1x128xf32, #tpu.memory_space<vmem>>, vector<1x128xf32>
      %20 = vector.broadcast %19 : vector<1x128xf32> to vector<512x128xf32>
      %21 = arith.addf %18, %20 : vector<512x128xf32>
      %c0_15 = arith.constant 0 : index
      %c0_16 = arith.constant 0 : index
      %22 = vector.load %arg6[%c0_15, %c0_16] : memref<512x128xf32, #tpu.memory_space<vmem>>, vector<512x128xf32>
      tpu.vector_store %arg6[%c0_15, %c0_16], %21 {strides = array<i32>} : memref<512x128xf32, #tpu.memory_space<vmem>>, vector<512x128xf32>,
    } else {
    }
    return
  }
  func.func @transform_0(%arg0: i32, %arg1: i32) -> (i32, i32) {
    %c0_i32 = arith.constant 0 : i32
    return %arg0, %arg1 : i32, i32
  }
  func.func @transform_1(%arg0: i32, %arg1: i32) -> (i32, i32) {
    %c0_i32 = arith.constant 0 : i32
    %c0_i32_0 = arith.constant 0 : i32
    %c0_i32_1 = arith.constant 0 : i32
    return %c0_i32, %c0_i32_0 : i32, i32
  }
  func.func @transform_2(%arg0: i32, %arg1: i32) -> (i32, i32) {
    %c0_i32 = arith.constant 0 : i32
    %c0_i32_0 = arith.constant 0 : i32
    return %arg0, %c0_i32 : i32, i32
  }
  func.func @transform_3(%arg0: i32, %arg1: i32) -> (i32, i32) {
    %c0_i32 = arith.constant 0 : i32
    %c0_i32_0 = arith.constant 0 : i32
    %c0_i32_1 = arith.constant 0 : i32
    return %c0_i32, %c0_i32_0 : i32, i32
  }
  func.func @transform_4(%arg0: i32, %arg1: i32) -> (i32, i32) {
    %c0_i32 = arith.constant 0 : i32
    %c0_i32_0 = arith.constant 0 : i32
    return %arg0, %c0_i32 : i32, i32
  }
}

</mosaic_0001>

<llo_original>
// kernel: gcn_forward.4
$region0: #{gcn_forward.4}
  #allocation0 [shape = 'u32[]', space=smem, size = 0x4, offset = 0x4, fixed_abs, tag = 'smem constant byte address 0x4 - core index']
  #allocation1 [shape = 'u32[72,128]{1,0:T(1,128)}', space=vmem, size = 0x9000, scoped, tag = 'internal scratch']
  %s0 = inlined_call_operand.vmem [shape: f32[512,128], index: 0, kind: input, shape index: {}]
  %s1 = inlined_call_operand.vmem [shape: f32[512,1], index: 1, kind: input, shape index: {}]
  %s2 = inlined_call_operand.vmem [shape: bf16[128,128], index: 2, kind: input, shape index: {}]
  %s3 = inlined_call_operand.vmem [shape: bf16[512,128], index: 3, kind: output, shape index: {}]
  %s4 = sld [smem:[#allocation0]]
  $region22: #{gcn_forward.4} parent=0
    _
  %s6 = ssub.s32 1, %s4
  %s7 = scalar_select 0, %s6, %s4
  // Predicated region
  $region2: #{gcn_forward.4} parent=0 // pred_check
    _
  $region3: #{gcn_forward.4} parent=0 // pred_check_branch
    %9 = sbr.rel (0) target = $region5
  $region4: #{gcn_forward.4} parent=0 // pred_region
    _
  $region5: #{gcn_forward.4} parent=0 // pred_fallthru
    _
  // Predicated region
  $region6: #{gcn_forward.4} parent=0 // pred_check
    _
  $region7: #{gcn_forward.4} parent=0 // pred_check_branch
    %11 = sbr.rel (0) target = $region9
  $region8: #{gcn_forward.4} parent=0 // pred_region
    _
  $region9: #{gcn_forward.4} parent=0 // pred_fallthru
    _
  // Predicated region
  $region10: #{gcn_forward.4} parent=0 // pred_check
    _
  $region11: #{gcn_forward.4} parent=0 // pred_check_branch
    %13 = sbr.rel (0) target = $region13
  $region12: #{gcn_forward.4} parent=0 // pred_region
    _
  $region13: #{gcn_forward.4} parent=0 // pred_fallthru
    _
  %v14 = vld [vmem:[%s0] sm:$0xff]
  %v15 = vld [vmem:[%s0 + $0x8] sm:$0xff]
  %v16 = vld [vmem:[%s0 + $0x10] sm:$0xff]
  %v17 = vld [vmem:[%s0 + $0x18] sm:$0xff]
  %v18 = vld [vmem:[%s0 + $0x20] sm:$0xff]
  %v19 = vld [vmem:[%s0 + $0x28] sm:$0xff]
  %v20 = vld [vmem:[%s0 + $0x30] sm:$0xff]
  %v21 = vld [vmem:[%s0 + $0x38] sm:$0xff]
  %v22 = vld [vmem:[%s0 + $0x40] sm:$0xff]
  %v23 = vld [vmem:[%s0 + $0x48] sm:$0xff]
  %v24 = vld [vmem:[%s0 + $0x50] sm:$0xff]
  %v25 = vld [vmem:[%s0 + $0x58] sm:$0xff]
  %v26 = vld [vmem:[%s0 + $0x60] sm:$0xff]
  %v27 = vld [vmem:[%s0 + $0x68] sm:$0xff]
  %v28 = vld [vmem:[%s0 + $0x70] sm:$0xff]
  %v29 = vld [vmem:[%s0 + $0x78] sm:$0xff]
  %v30 = vld [vmem:[%s0 + $0x80] sm:$0xff]
  %v31 = vld [vmem:[%s0 + $0x88] sm:$0xff]
  %v32 = vld [vmem:[%s0 + $0x90] sm:$0xff]
  %v33 = vld [vmem:[%s0 + $0x98] sm:$0xff]
  %v34 = vld [vmem:[%s0 + $0xa0] sm:$0xff]
  %v35 = vld [vmem:[%s0 + $0xa8] sm:$0xff]
  %v36 = vld [vmem:[%s0 + $0xb0] sm:$0xff]
  %v37 = vld [vmem:[%s0 + $0xb8] sm:$0xff]
  %v38 = vld [vmem:[%s0 + $0xc0] sm:$0xff]
  %v39 = vld [vmem:[%s0 + $0xc8] sm:$0xff]
  %v40 = vld [vmem:[%s0 + $0xd0] sm:$0xff]
  %v41 = vld [vmem:[%s0 + $0xd8] sm:$0xff]
  %v42 = vld [vmem:[%s0 + $0xe0] sm:$0xff]
  %v43 = vld [vmem:[%s0 + $0xe8] sm:$0xff]
  %v44 = vld [vmem:[%s0 + $0xf0] sm:$0xff]
  %v45 = vld [vmem:[%s0 + $0xf8] sm:$0xff]
  %v46 = vld [vmem:[%s0 + $0x100] sm:$0xff]
  %v47 = vld [vmem:[%s0 + $0x108] sm:$0xff]
  %v48 = vld [vmem:[%s0 + $0x110] sm:$0xff]
  %v49 = vld [vmem:[%s0 + $0x118] sm:$0xff]
  %v50 = vld [vmem:[%s0 + $0x120] sm:$0xff]
  %v51 = vld [vmem:[%s0 + $0x128] sm:$0xff]
  %v52 = vld [vmem:[%s0 + $0x130] sm:$0xff]
  %v53 = vld [vmem:[%s0 + $0x138] sm:$0xff]
  %v54 = vld [vmem:[%s0 + $0x140] sm:$0xff]
  %v55 = vld [vmem:[%s0 + $0x148] sm:$0xff]
  %v56 = vld [vmem:[%s0 + $0x150] sm:$0xff]
  %v57 = vld [vmem:[%s0 + $0x158] sm:$0xff]
  %v58 = vld [vmem:[%s0 + $0x160] sm:$0xff]
  %v59 = vld [vmem:[%s0 + $0x168] sm:$0xff]
  %v60 = vld [vmem:[%s0 + $0x170] sm:$0xff]
  %v61 = vld [vmem:[%s0 + $0x178] sm:$0xff]
  %v62 = vld [vmem:[%s0 + $0x180] sm:$0xff]
  %v63 = vld [vmem:[%s0 + $0x188] sm:$0xff]
  %v64 = vld [vmem:[%s0 + $0x190] sm:$0xff]
  %v65 = vld [vmem:[%s0 + $0x198] sm:$0xff]
  %v66 = vld [vmem:[%s0 + $0x1a0] sm:$0xff]
  %v67 = vld [vmem:[%s0 + $0x1a8] sm:$0xff]
  %v68 = vld [vmem:[%s0 + $0x1b0] sm:$0xff]
  %v69 = vld [vmem:[%s0 + $0x1b8] sm:$0xff]
  %v70 = vld [vmem:[%s0 + $0x1c0] sm:$0xff]
  %v71 = vld [vmem:[%s0 + $0x1c8] sm:$0xff]
  %v72 = vld [vmem:[%s0 + $0x1d0] sm:$0xff]
  %v73 = vld [vmem:[%s0 + $0x1d8] sm:$0xff]
  %v74 = vld [vmem:[%s0 + $0x1e0] sm:$0xff]
  %v75 = vld [vmem:[%s0 + $0x1e8] sm:$0xff]
  %v76 = vld [vmem:[%s0 + $0x1f0] sm:$0xff]
  %v77 = vld [vmem:[%s0 + $0x1f8] sm:$0xff]
  %v78 = vld [vmem:[%s1] sm:$0xff]
  %v79 = vld [vmem:[%s1 + $0x8] sm:$0xff]
  %v80 = vld [vmem:[%s1 + $0x10] sm:$0xff]
  %v81 = vld [vmem:[%s1 + $0x18] sm:$0xff]
  %v82 = vld [vmem:[%s1 + $0x20] sm:$0xff]
  %v83 = vld [vmem:[%s1 + $0x28] sm:$0xff]
  %v84 = vld [vmem:[%s1 + $0x30] sm:$0xff]
  %v85 = vld [vmem:[%s1 + $0x38] sm:$0xff]
  %v86 = vld [vmem:[%s1 + $0x40] sm:$0xff]
  %v87 = vld [vmem:[%s1 + $0x48] sm:$0xff]
  %v88 = vld [vmem:[%s1 + $0x50] sm:$0xff]
  %v89 = vld [vmem:[%s1 + $0x58] sm:$0xff]
  %v90 = vld [vmem:[%s1 + $0x60] sm:$0xff]
  %v91 = vld [vmem:[%s1 + $0x68] sm:$0xff]
  %v92 = vld [vmem:[%s1 + $0x70] sm:$0xff]
  %v93 = vld [vmem:[%s1 + $0x78] sm:$0xff]
  %v94 = vld [vmem:[%s1 + $0x80] sm:$0xff]
  %v95 = vld [vmem:[%s1 + $0x88] sm:$0xff]
  %v96 = vld [vmem:[%s1 + $0x90] sm:$0xff]
  %v97 = vld [vmem:[%s1 + $0x98] sm:$0xff]
  %v98 = vld [vmem:[%s1 + $0xa0] sm:$0xff]
  %v99 = vld [vmem:[%s1 + $0xa8] sm:$0xff]
  %v100 = vld [vmem:[%s1 + $0xb0] sm:$0xff]
  %v101 = vld [vmem:[%s1 + $0xb8] sm:$0xff]
  %v102 = vld [vmem:[%s1 + $0xc0] sm:$0xff]
  %v103 = vld [vmem:[%s1 + $0xc8] sm:$0xff]
  %v104 = vld [vmem:[%s1 + $0xd0] sm:$0xff]
  %v105 = vld [vmem:[%s1 + $0xd8] sm:$0xff]
  %v106 = vld [vmem:[%s1 + $0xe0] sm:$0xff]
  %v107 = vld [vmem:[%s1 + $0xe8] sm:$0xff]
  %v108 = vld [vmem:[%s1 + $0xf0] sm:$0xff]
  %v109 = vld [vmem:[%s1 + $0xf8] sm:$0xff]
  %v110 = vld [vmem:[%s1 + $0x100] sm:$0xff]
  %v111 = vld [vmem:[%s1 + $0x108] sm:$0xff]
  %v112 = vld [vmem:[%s1 + $0x110] sm:$0xff]
  %v113 = vld [vmem:[%s1 + $0x118] sm:$0xff]
  %v114 = vld [vmem:[%s1 + $0x120] sm:$0xff]
  %v115 = vld [vmem:[%s1 + $0x128] sm:$0xff]
  %v116 = vld [vmem:[%s1 + $0x130] sm:$0xff]
  %v117 = vld [vmem:[%s1 + $0x138] sm:$0xff]
  %v118 = vld [vmem:[%s1 + $0x140] sm:$0xff]
  %v119 = vld [vmem:[%s1 + $0x148] sm:$0xff]
  %v120 = vld [vmem:[%s1 + $0x150] sm:$0xff]
  %v121 = vld [vmem:[%s1 + $0x158] sm:$0xff]
  %v122 = vld [vmem:[%s1 + $0x160] sm:$0xff]
  %v123 = vld [vmem:[%s1 + $0x168] sm:$0xff]
  %v124 = vld [vmem:[%s1 + $0x170] sm:$0xff]
  %v125 = vld [vmem:[%s1 + $0x178] sm:$0xff]
  %v126 = vld [vmem:[%s1 + $0x180] sm:$0xff]
  %v127 = vld [vmem:[%s1 + $0x188] sm:$0xff]
  %v128 = vld [vmem:[%s1 + $0x190] sm:$0xff]
  %v129 = vld [vmem:[%s1 + $0x198] sm:$0xff]
  %v130 = vld [vmem:[%s1 + $0x1a0] sm:$0xff]
  %v131 = vld [vmem:[%s1 + $0x1a8] sm:$0xff]
  %v132 = vld [vmem:[%s1 + $0x1b0] sm:$0xff]
  %v133 = vld [vmem:[%s1 + $0x1b8] sm:$0xff]
  %v134 = vld [vmem:[%s1 + $0x1c0] sm:$0xff]
  %v135 = vld [vmem:[%s1 + $0x1c8] sm:$0xff]
  %v136 = vld [vmem:[%s1 + $0x1d0] sm:$0xff]
  %v137 = vld [vmem:[%s1 + $0x1d8] sm:$0xff]
  %v138 = vld [vmem:[%s1 + $0x1e0] sm:$0xff]
  %v139 = vld [vmem:[%s1 + $0x1e8] sm:$0xff]
  %v140 = vld [vmem:[%s1 + $0x1f0] sm:$0xff]
  %v141 = vld [vmem:[%s1 + $0x1f8] sm:$0xff]
  %143 = vset.pattern.permute.xlu0 0
  %144 = vperm.xlu0 %143, %v78
  %v145 = vpop.permute.xlu0 %144
  %148 = vset.pattern.permute.xlu0 0
  %149 = vperm.xlu0 %148, %v79
  %v150 = vpop.permute.xlu0 %149
  %153 = vset.pattern.permute.xlu0 0
  %154 = vperm.xlu0 %153, %v80
  %v155 = vpop.permute.xlu0 %154
  %158 = vset.pattern.permute.xlu0 0
  %159 = vperm.xlu0 %158, %v81
  %v160 = vpop.permute.xlu0 %159
  %163 = vset.pattern.permute.xlu0 0
  %164 = vperm.xlu0 %163, %v82
  %v165 = vpop.permute.xlu0 %164
  %168 = vset.pattern.permute.xlu0 0
  %169 = vperm.xlu0 %168, %v83
  %v170 = vpop.permute.xlu0 %169
  %173 = vset.pattern.permute.xlu0 0
  %174 = vperm.xlu0 %173, %v84
  %v175 = vpop.permute.xlu0 %174
  %178 = vset.pattern.permute.xlu0 0
  %179 = vperm.xlu0 %178, %v85
  %v180 = vpop.permute.xlu0 %179
  %183 = vset.pattern.permute.xlu0 0
  %184 = vperm.xlu0 %183, %v86
  %v185 = vpop.permute.xlu0 %184
  %188 = vset.pattern.permute.xlu0 0
  %189 = vperm.xlu0 %188, %v87
  %v190 = vpop.permute.xlu0 %189
  %193 = vset.pattern.permute.xlu0 0
  %194 = vperm.xlu0 %193, %v88
  %v195 = vpop.permute.xlu0 %194
  %198 = vset.pattern.permute.xlu0 0
  %199 = vperm.xlu0 %198, %v89
  %v200 = vpop.permute.xlu0 %199
  %203 = vset.pattern.permute.xlu0 0
  %204 = vperm.xlu0 %203, %v90
  %v205 = vpop.permute.xlu0 %204
  %208 = vset.pattern.permute.xlu0 0
  %209 = vperm.xlu0 %208, %v91
  %v210 = vpop.permute.xlu0 %209
  %213 = vset.pattern.permute.xlu0 0
  %214 = vperm.xlu0 %213, %v92
  %v215 = vpop.permute.xlu0 %214
  %218 = vset.pattern.permute.xlu0 0
  %219 = vperm.xlu0 %218, %v93
  %v220 = vpop.permute.xlu0 %219
  %223 = vset.pattern.permute.xlu0 0
  %224 = vperm.xlu0 %223, %v94
  %v225 = vpop.permute.xlu0 %224
  %228 = vset.pattern.permute.xlu0 0
  %229 = vperm.xlu0 %228, %v95
  %v230 = vpop.permute.xlu0 %229
  %233 = vset.pattern.permute.xlu0 0
  %234 = vperm.xlu0 %233, %v96
  %v235 = vpop.permute.xlu0 %234
  %238 = vset.pattern.permute.xlu0 0
  %239 = vperm.xlu0 %238, %v97
  %v240 = vpop.permute.xlu0 %239
  %243 = vset.pattern.permute.xlu0 0
  %244 = vperm.xlu0 %243, %v98
  %v245 = vpop.permute.xlu0 %244
  %248 = vset.pattern.permute.xlu0 0
  %249 = vperm.xlu0 %248, %v99
  %v250 = vpop.permute.xlu0 %249
  %253 = vset.pattern.permute.xlu0 0
  %254 = vperm.xlu0 %253, %v100
  %v255 = vpop.permute.xlu0 %254
  %258 = vset.pattern.permute.xlu0 0
  %259 = vperm.xlu0 %258, %v101
  %v260 = vpop.permute.xlu0 %259
  %263 = vset.pattern.permute.xlu0 0
  %264 = vperm.xlu0 %263, %v102
  %v265 = vpop.permute.xlu0 %264
  %268 = vset.pattern.permute.xlu0 0
  %269 = vperm.xlu0 %268, %v103
  %v270 = vpop.permute.xlu0 %269
  %273 = vset.pattern.permute.xlu0 0
  %274 = vperm.xlu0 %273, %v104
  %v275 = vpop.permute.xlu0 %274
  %278 = vset.pattern.permute.xlu0 0
  %279 = vperm.xlu0 %278, %v105
  %v280 = vpop.permute.xlu0 %279
  %283 = vset.pattern.permute.xlu0 0
  %284 = vperm.xlu0 %283, %v106
  %v285 = vpop.permute.xlu0 %284
  %288 = vset.pattern.permute.xlu0 0
  %289 = vperm.xlu0 %288, %v107
  %v290 = vpop.permute.xlu0 %289
  %293 = vset.pattern.permute.xlu0 0
  %294 = vperm.xlu0 %293, %v108
  %v295 = vpop.permute.xlu0 %294
  %298 = vset.pattern.permute.xlu0 0
  %299 = vperm.xlu0 %298, %v109
  %v300 = vpop.permute.xlu0 %299
  %303 = vset.pattern.permute.xlu0 0
  %304 = vperm.xlu0 %303, %v110
  %v305 = vpop.permute.xlu0 %304
  %308 = vset.pattern.permute.xlu0 0
  %309 = vperm.xlu0 %308, %v111
  %v310 = vpop.permute.xlu0 %309
  %313 = vset.pattern.permute.xlu0 0
  %314 = vperm.xlu0 %313, %v112
  %v315 = vpop.permute.xlu0 %314
  %318 = vset.pattern.permute.xlu0 0
  %319 = vperm.xlu0 %318, %v113
  %v320 = vpop.permute.xlu0 %319
  %323 = vset.pattern.permute.xlu0 0
  %324 = vperm.xlu0 %323, %v114
  %v325 = vpop.permute.xlu0 %324
  %328 = vset.pattern.permute.xlu0 0
  %329 = vperm.xlu0 %328, %v115
  %v330 = vpop.permute.xlu0 %329
  %333 = vset.pattern.permute.xlu0 0
  %334 = vperm.xlu0 %333, %v116
  %v335 = vpop.permute.xlu0 %334
  %338 = vset.pattern.permute.xlu0 0
  %339 = vperm.xlu0 %338, %v117
  %v340 = vpop.permute.xlu0 %339
  %343 = vset.pattern.permute.xlu0 0
  %344 = vperm.xlu0 %343, %v118
  %v345 = vpop.permute.xlu0 %344
  %348 = vset.pattern.permute.xlu0 0
  %349 = vperm.xlu0 %348, %v119
  %v350 = vpop.permute.xlu0 %349
  %353 = vset.pattern.permute.xlu0 0
  %354 = vperm.xlu0 %353, %v120
  %v355 = vpop.permute.xlu0 %354
  %358 = vset.pattern.permute.xlu0 0
  %359 = vperm.xlu0 %358, %v121
  %v360 = vpop.permute.xlu0 %359
  %363 = vset.pattern.permute.xlu0 0
  %364 = vperm.xlu0 %363, %v122
  %v365 = vpop.permute.xlu0 %364
  %368 = vset.pattern.permute.xlu0 0
  %369 = vperm.xlu0 %368, %v123
  %v370 = vpop.permute.xlu0 %369
  %373 = vset.pattern.permute.xlu0 0
  %374 = vperm.xlu0 %373, %v124
  %v375 = vpop.permute.xlu0 %374
  %378 = vset.pattern.permute.xlu0 0
  %379 = vperm.xlu0 %378, %v125
  %v380 = vpop.permute.xlu0 %379
  %383 = vset.pattern.permute.xlu0 0
  %384 = vperm.xlu0 %383, %v126
  %v385 = vpop.permute.xlu0 %384
  %388 = vset.pattern.permute.xlu0 0
  %389 = vperm.xlu0 %388, %v127
  %v390 = vpop.permute.xlu0 %389
  %393 = vset.pattern.permute.xlu0 0
  %394 = vperm.xlu0 %393, %v128
  %v395 = vpop.permute.xlu0 %394
  %398 = vset.pattern.permute.xlu0 0
  %399 = vperm.xlu0 %398, %v129
  %v400 = vpop.permute.xlu0 %399
  %403 = vset.pattern.permute.xlu0 0
  %404 = vperm.xlu0 %403, %v130
  %v405 = vpop.permute.xlu0 %404
  %408 = vset.pattern.permute.xlu0 0
  %409 = vperm.xlu0 %408, %v131
  %v410 = vpop.permute.xlu0 %409
  %413 = vset.pattern.permute.xlu0 0
  %414 = vperm.xlu0 %413, %v132
  %v415 = vpop.permute.xlu0 %414
  %418 = vset.pattern.permute.xlu0 0
  %419 = vperm.xlu0 %418, %v133
  %v420 = vpop.permute.xlu0 %419
  %423 = vset.pattern.permute.xlu0 0
  %424 = vperm.xlu0 %423, %v134
  %v425 = vpop.permute.xlu0 %424
  %428 = vset.pattern.permute.xlu0 0
  %429 = vperm.xlu0 %428, %v135
  %v430 = vpop.permute.xlu0 %429
  %433 = vset.pattern.permute.xlu0 0
  %434 = vperm.xlu0 %433, %v136
  %v435 = vpop.permute.xlu0 %434
  %438 = vset.pattern.permute.xlu0 0
  %439 = vperm.xlu0 %438, %v137
  %v440 = vpop.permute.xlu0 %439
  %443 = vset.pattern.permute.xlu0 0
  %444 = vperm.xlu0 %443, %v138
  %v445 = vpop.permute.xlu0 %444
  %448 = vset.pattern.permute.xlu0 0
  %449 = vperm.xlu0 %448, %v139
  %v450 = vpop.permute.xlu0 %449
  %453 = vset.pattern.permute.xlu0 0
  %454 = vperm.xlu0 %453, %v140
  %v455 = vpop.permute.xlu0 %454
  %458 = vset.pattern.permute.xlu0 0
  %459 = vperm.xlu0 %458, %v141
  %v460 = vpop.permute.xlu0 %459
  %v462 = vmul.f32 %v14, %v145
  %v463 = vmul.f32 %v15, %v150
  %v464 = vmul.f32 %v16, %v155
  %v465 = vmul.f32 %v17, %v160
  %v466 = vmul.f32 %v18, %v165
  %v467 = vmul.f32 %v19, %v170
  %v468 = vmul.f32 %v20, %v175
  %v469 = vmul.f32 %v21, %v180
  %v470 = vmul.f32 %v22, %v185
  %v471 = vmul.f32 %v23, %v190
  %v472 = vmul.f32 %v24, %v195
  %v473 = vmul.f32 %v25, %v200
  %v474 = vmul.f32 %v26, %v205
  %v475 = vmul.f32 %v27, %v210
  %v476 = vmul.f32 %v28, %v215
  %v477 = vmul.f32 %v29, %v220
  %v478 = vmul.f32 %v30, %v225
  %v479 = vmul.f32 %v31, %v230
  %v480 = vmul.f32 %v32, %v235
  %v481 = vmul.f32 %v33, %v240
  %v482 = vmul.f32 %v34, %v245
  %v483 = vmul.f32 %v35, %v250
  %v484 = vmul.f32 %v36, %v255
  %v485 = vmul.f32 %v37, %v260
  %v486 = vmul.f32 %v38, %v265
  %v487 = vmul.f32 %v39, %v270
  %v488 = vmul.f32 %v40, %v275
  %v489 = vmul.f32 %v41, %v280
  %v490 = vmul.f32 %v42, %v285
  %v491 = vmul.f32 %v43, %v290
  %v492 = vmul.f32 %v44, %v295
  %v493 = vmul.f32 %v45, %v300
  %v494 = vmul.f32 %v46, %v305
  %v495 = vmul.f32 %v47, %v310
  %v496 = vmul.f32 %v48, %v315
  %v497 = vmul.f32 %v49, %v320
  %v498 = vmul.f32 %v50, %v325
  %v499 = vmul.f32 %v51, %v330
  %v500 = vmul.f32 %v52, %v335
  %v501 = vmul.f32 %v53, %v340
  %v502 = vmul.f32 %v54, %v345
  %v503 = vmul.f32 %v55, %v350
  %v504 = vmul.f32 %v56, %v355
  %v505 = vmul.f32 %v57, %v360
  %v506 = vmul.f32 %v58, %v365
  %v507 = vmul.f32 %v59, %v370
  %v508 = vmul.f32 %v60, %v375
  %v509 = vmul.f32 %v61, %v380
  %v510 = vmul.f32 %v62, %v385
  %v511 = vmul.f32 %v63, %v390
  %v512 = vmul.f32 %v64, %v395
  %v513 = vmul.f32 %v65, %v400
  %v514 = vmul.f32 %v66, %v405
  %v515 = vmul.f32 %v67, %v410
  %v516 = vmul.f32 %v68, %v415
  %v517 = vmul.f32 %v69, %v420
  %v518 = vmul.f32 %v70, %v425
  %v519 = vmul.f32 %v71, %v430
  %v520 = vmul.f32 %v72, %v435
  %v521 = vmul.f32 %v73, %v440
  %v522 = vmul.f32 %v74, %v445
  %v523 = vmul.f32 %v75, %v450
  %v524 = vmul.f32 %v76, %v455
  %v525 = vmul.f32 %v77, %v460
  %v526 = vpack.c.bf16 %v463, %v462
  %v527 = vpack.c.bf16 %v465, %v464
  %v528 = vpack.c.bf16 %v467, %v466
  %v529 = vpack.c.bf16 %v469, %v468
  %v530 = vpack.c.bf16 %v471, %v470
  %v531 = vpack.c.bf16 %v473, %v472
  %v532 = vpack.c.bf16 %v475, %v474
  %v533 = vpack.c.bf16 %v477, %v476
  %v534 = vpack.c.bf16 %v479, %v478
  %v535 = vpack.c.bf16 %v481, %v480
  %v536 = vpack.c.bf16 %v483, %v482
  %v537 = vpack.c.bf16 %v485, %v484
  %v538 = vpack.c.bf16 %v487, %v486
  %v539 = vpack.c.bf16 %v489, %v488
  %v540 = vpack.c.bf16 %v491, %v490
  %v541 = vpack.c.bf16 %v493, %v492
  %v542 = vpack.c.bf16 %v495, %v494
  %v543 = vpack.c.bf16 %v497, %v496
  %v544 = vpack.c.bf16 %v499, %v498
  %v545 = vpack.c.bf16 %v501, %v500
  %v546 = vpack.c.bf16 %v503, %v502
  %v547 = vpack.c.bf16 %v505, %v504
  %v548 = vpack.c.bf16 %v507, %v506
  %v549 = vpack.c.bf16 %v509, %v508
  %v550 = vpack.c.bf16 %v511, %v510
  %v551 = vpack.c.bf16 %v513, %v512
  %v552 = vpack.c.bf16 %v515, %v514
  %v553 = vpack.c.bf16 %v517, %v516
  %v554 = vpack.c.bf16 %v519, %v518
  %v555 = vpack.c.bf16 %v521, %v520
  %v556 = vpack.c.bf16 %v523, %v522
  %v557 = vpack.c.bf16 %v525, %v524
  %v558 = vld [vmem:[%s2] sm:$0xf]
  %v559 = vld [vmem:[%s2 + $0x4] sm:$0xf]
  %v560 = vld [vmem:[%s2 + $0x8] sm:$0xf]
  %v561 = vld [vmem:[%s2 + $0xc] sm:$0xf]
  %v562 = vld [vmem:[%s2 + $0x10] sm:$0xf]
  %v563 = vld [vmem:[%s2 + $0x14] sm:$0xf]
  %v564 = vld [vmem:[%s2 + $0x18] sm:$0xf]
  %v565 = vld [vmem:[%s2 + $0x1c] sm:$0xf]
  %v566 = vld [vmem:[%s2 + $0x20] sm:$0xf]
  %v567 = vld [vmem:[%s2 + $0x24] sm:$0xf]
  %v568 = vld [vmem:[%s2 + $0x28] sm:$0xf]
  %v569 = vld [vmem:[%s2 + $0x2c] sm:$0xf]
  %v570 = vld [vmem:[%s2 + $0x30] sm:$0xf]
  %v571 = vld [vmem:[%s2 + $0x34] sm:$0xf]
  %v572 = vld [vmem:[%s2 + $0x38] sm:$0xf]
  %v573 = vld [vmem:[%s2 + $0x3c] sm:$0xf]
  %v590 = vunpack.c.l.b16 %v558
  %v591 = vunpack.c.l.b16 %v559
  %v592 = vunpack.c.l.b16 %v560
  %v593 = vunpack.c.l.b16 %v561
  %v594 = vunpack.c.l.b16 %v562
  %v595 = vunpack.c.l.b16 %v563
  %v596 = vunpack.c.l.b16 %v564
  %v597 = vunpack.c.l.b16 %v565
  %v598 = vunpack.c.l.b16 %v566
  %v599 = vunpack.c.l.b16 %v567
  %v600 = vunpack.c.l.b16 %v568
  %v601 = vunpack.c.l.b16 %v569
  %v602 = vunpack.c.l.b16 %v570
  %v603 = vunpack.c.l.b16 %v571
  %v604 = vunpack.c.l.b16 %v572
  %v605 = vunpack.c.l.b16 %v573
  %v606 = vpack.c.b16 %v591, %v590
  %v607 = vpack.c.b16 %v593, %v592
  %v608 = vpack.c.b16 %v595, %v594
  %v609 = vpack.c.b16 %v597, %v596
  %v610 = vpack.c.b16 %v599, %v598
  %v611 = vpack.c.b16 %v601, %v600
  %v612 = vpack.c.b16 %v603, %v602
  %v613 = vpack.c.b16 %v605, %v604
  %622 = vmatpush.bf16.msra.mxu0 %v613
  %623 = vmatpush.bf16.msra.mxu0 %v612
  %624 = vmatpush.bf16.msra.mxu0 %v611
  %625 = vmatpush.bf16.msra.mxu0 %v610
  %626 = vmatpush.bf16.msra.mxu0 %v609
  %627 = vmatpush.bf16.msra.mxu0 %v608
  %628 = vmatpush.bf16.msra.mxu0 %v607
  %629 = vmatpush.bf16.msra.mxu0 %v606
  %630 = vmatmul.bf16.gmra.mxu0 %v526
  %v631 = vpop.f32.mrf.mxu0
  %v632 = vadd.f32 0.0, %v631
  %v633 = vpop.f32.mrf.mxu0
  %v634 = vadd.f32 0.0, %v633
  %635 = vmatmul.bf16.gmra.mxu0 %v527
  %v636 = vpop.f32.mrf.mxu0
  %v637 = vadd.f32 0.0, %v636
  %v638 = vpop.f32.mrf.mxu0
  %v639 = vadd.f32 0.0, %v638
  %640 = vmatmul.bf16.gmra.mxu0 %v528
  %v641 = vpop.f32.mrf.mxu0
  %v642 = vadd.f32 0.0, %v641
  %v643 = vpop.f32.mrf.mxu0
  %v644 = vadd.f32 0.0, %v643
  %645 = vmatmul.bf16.gmra.mxu0 %v529
  %v646 = vpop.f32.mrf.mxu0
  %v647 = vadd.f32 0.0, %v646
  %v648 = vpop.f32.mrf.mxu0
  %v649 = vadd.f32 0.0, %v648
  %650 = vmatmul.bf16.gmra.mxu0 %v530
  %v651 = vpop.f32.mrf.mxu0
  %v652 = vadd.f32 0.0, %v651
  %v653 = vpop.f32.mrf.mxu0
  %v654 = vadd.f32 0.0, %v653
  %655 = vmatmul.bf16.gmra.mxu0 %v531
  %v656 = vpop.f32.mrf.mxu0
  %v657 = vadd.f32 0.0, %v656
  %v658 = vpop.f32.mrf.mxu0
  %v659 = vadd.f32 0.0, %v658
  %660 = vmatmul.bf16.gmra.mxu0 %v532
  %v661 = vpop.f32.mrf.mxu0
  %v662 = vadd.f32 0.0, %v661
  %v663 = vpop.f32.mrf.mxu0
  %v664 = vadd.f32 0.0, %v663
  %665 = vmatmul.bf16.gmra.mxu0 %v533
  %v666 = vpop.f32.mrf.mxu0
  %v667 = vadd.f32 0.0, %v666
  %v668 = vpop.f32.mrf.mxu0
  %v669 = vadd.f32 0.0, %v668
  %670 = vmatmul.bf16.gmra.mxu0 %v534
  %v671 = vpop.f32.mrf.mxu0
  %v672 = vadd.f32 0.0, %v671
  %v673 = vpop.f32.mrf.mxu0
  %v674 = vadd.f32 0.0, %v673
  %675 = vmatmul.bf16.gmra.mxu0 %v535
  %v676 = vpop.f32.mrf.mxu0
  %v677 = vadd.f32 0.0, %v676
  %v678 = vpop.f32.mrf.mxu0
  %v679 = vadd.f32 0.0, %v678
  %680 = vmatmul.bf16.gmra.mxu0 %v536
  %v681 = vpop.f32.mrf.mxu0
  %v682 = vadd.f32 0.0, %v681
  %v683 = vpop.f32.mrf.mxu0
  %v684 = vadd.f32 0.0, %v683
  %685 = vmatmul.bf16.gmra.mxu0 %v537
  %v686 = vpop.f32.mrf.mxu0
  %v687 = vadd.f32 0.0, %v686
  %v688 = vpop.f32.mrf.mxu0
  %v689 = vadd.f32 0.0, %v688
  %690 = vmatmul.bf16.gmra.mxu0 %v538
  %v691 = vpop.f32.mrf.mxu0
  %v692 = vadd.f32 0.0, %v691
  %v693 = vpop.f32.mrf.mxu0
  %v694 = vadd.f32 0.0, %v693
  %695 = vmatmul.bf16.gmra.mxu0 %v539
  %v696 = vpop.f32.mrf.mxu0
  %v697 = vadd.f32 0.0, %v696
  %v698 = vpop.f32.mrf.mxu0
  %v699 = vadd.f32 0.0, %v698
  %700 = vmatmul.bf16.gmra.mxu0 %v540
  %v701 = vpop.f32.mrf.mxu0
  %v702 = vadd.f32 0.0, %v701
  %v703 = vpop.f32.mrf.mxu0
  %v704 = vadd.f32 0.0, %v703
  %705 = vmatmul.bf16.gmra.mxu0 %v541
  %v706 = vpop.f32.mrf.mxu0
  %v707 = vadd.f32 0.0, %v706
  %v708 = vpop.f32.mrf.mxu0
  %v709 = vadd.f32 0.0, %v708
  %710 = vmatmul.bf16.gmra.mxu0 %v542
  %v711 = vpop.f32.mrf.mxu0
  %v712 = vadd.f32 0.0, %v711
  %v713 = vpop.f32.mrf.mxu0
  %v714 = vadd.f32 0.0, %v713
  %715 = vmatmul.bf16.gmra.mxu0 %v543
  %v716 = vpop.f32.mrf.mxu0
  %v717 = vadd.f32 0.0, %v716
  %v718 = vpop.f32.mrf.mxu0
  %v719 = vadd.f32 0.0, %v718
  %720 = vmatmul.bf16.gmra.mxu0 %v544
  %v721 = vpop.f32.mrf.mxu0
  %v722 = vadd.f32 0.0, %v721
  %v723 = vpop.f32.mrf.mxu0
  %v724 = vadd.f32 0.0, %v723
  %725 = vmatmul.bf16.gmra.mxu0 %v545
  %v726 = vpop.f32.mrf.mxu0
  %v727 = vadd.f32 0.0, %v726
  %v728 = vpop.f32.mrf.mxu0
  %v729 = vadd.f32 0.0, %v728
  %730 = vmatmul.bf16.gmra.mxu0 %v546
  %v731 = vpop.f32.mrf.mxu0
  %v732 = vadd.f32 0.0, %v731
  %v733 = vpop.f32.mrf.mxu0
  %v734 = vadd.f32 0.0, %v733
  %735 = vmatmul.bf16.gmra.mxu0 %v547
  %v736 = vpop.f32.mrf.mxu0
  %v737 = vadd.f32 0.0, %v736
  %v738 = vpop.f32.mrf.mxu0
  %v739 = vadd.f32 0.0, %v738
  %740 = vmatmul.bf16.gmra.mxu0 %v548
  %v741 = vpop.f32.mrf.mxu0
  %v742 = vadd.f32 0.0, %v741
  %v743 = vpop.f32.mrf.mxu0
  %v744 = vadd.f32 0.0, %v743
  %745 = vmatmul.bf16.gmra.mxu0 %v549
  %v746 = vpop.f32.mrf.mxu0
  %v747 = vadd.f32 0.0, %v746
  %v748 = vpop.f32.mrf.mxu0
  %v749 = vadd.f32 0.0, %v748
  %750 = vmatmul.bf16.gmra.mxu0 %v550
  %v751 = vpop.f32.mrf.mxu0
  %v752 = vadd.f32 0.0, %v751
  %v753 = vpop.f32.mrf.mxu0
  %v754 = vadd.f32 0.0, %v753
  %755 = vmatmul.bf16.gmra.mxu0 %v551
  %v756 = vpop.f32.mrf.mxu0
  %v757 = vadd.f32 0.0, %v756
  %v758 = vpop.f32.mrf.mxu0
  %v759 = vadd.f32 0.0, %v758
  %760 = vmatmul.bf16.gmra.mxu0 %v552
  %v761 = vpop.f32.mrf.mxu0
  %v762 = vadd.f32 0.0, %v761
  %v763 = vpop.f32.mrf.mxu0
  %v764 = vadd.f32 0.0, %v763
  %765 = vmatmul.bf16.gmra.mxu0 %v553
  %v766 = vpop.f32.mrf.mxu0
  %v767 = vadd.f32 0.0, %v766
  %v768 = vpop.f32.mrf.mxu0
  %v769 = vadd.f32 0.0, %v768
  %770 = vmatmul.bf16.gmra.mxu0 %v554
  %v771 = vpop.f32.mrf.mxu0
  %v772 = vadd.f32 0.0, %v771
  %v773 = vpop.f32.mrf.mxu0
  %v774 = vadd.f32 0.0, %v773
  %775 = vmatmul.bf16.gmra.mxu0 %v555
  %v776 = vpop.f32.mrf.mxu0
  %v777 = vadd.f32 0.0, %v776
  %v778 = vpop.f32.mrf.mxu0
  %v779 = vadd.f32 0.0, %v778
  %780 = vmatmul.bf16.gmra.mxu0 %v556
  %v781 = vpop.f32.mrf.mxu0
  %v782 = vadd.f32 0.0, %v781
  %v783 = vpop.f32.mrf.mxu0
  %v784 = vadd.f32 0.0, %v783
  %785 = vmatmul.bf16.gmra.mxu0 %v557
  %v786 = vpop.f32.mrf.mxu0
  %v787 = vadd.f32 0.0, %v786
  %v788 = vpop.f32.mrf.mxu0
  %v789 = vadd.f32 0.0, %v788
  %790 = vdwg.mxu0
  %v791 = vpack.c.bf16 %v632, %v632
  %v792 = vpack.c.bf16 %v634, %v634
  %v793 = vpack.c.bf16 %v637, %v637
  %v794 = vpack.c.bf16 %v639, %v639
  %v795 = vpack.c.bf16 %v642, %v642
  %v796 = vpack.c.bf16 %v644, %v644
  %v797 = vpack.c.bf16 %v647, %v647
  %v798 = vpack.c.bf16 %v649, %v649
  %v799 = vpack.c.bf16 %v652, %v652
  %v800 = vpack.c.bf16 %v654, %v654
  %v801 = vpack.c.bf16 %v657, %v657
  %v802 = vpack.c.bf16 %v659, %v659
  %v803 = vpack.c.bf16 %v662, %v662
  %v804 = vpack.c.bf16 %v664, %v664
  %v805 = vpack.c.bf16 %v667, %v667
  %v806 = vpack.c.bf16 %v669, %v669
  %v807 = vpack.c.bf16 %v672, %v672
  %v808 = vpack.c.bf16 %v674, %v674
  %v809 = vpack.c.bf16 %v677, %v677
  %v810 = vpack.c.bf16 %v679, %v679
  %v811 = vpack.c.bf16 %v682, %v682
  %v812 = vpack.c.bf16 %v684, %v684
  %v813 = vpack.c.bf16 %v687, %v687
  %v814 = vpack.c.bf16 %v689, %v689
  %v815 = vpack.c.bf16 %v692, %v692
  %v816 = vpack.c.bf16 %v694, %v694
  %v817 = vpack.c.bf16 %v697, %v697
  %v818 = vpack.c.bf16 %v699, %v699
  %v819 = vpack.c.bf16 %v702, %v702
  %v820 = vpack.c.bf16 %v704, %v704
  %v821 = vpack.c.bf16 %v707, %v707
  %v822 = vpack.c.bf16 %v709, %v709
  %v823 = vpack.c.bf16 %v712, %v712
  %v824 = vpack.c.bf16 %v714, %v714
  %v825 = vpack.c.bf16 %v717, %v717
  %v826 = vpack.c.bf16 %v719, %v719
  %v827 = vpack.c.bf16 %v722, %v722
  %v828 = vpack.c.bf16 %v724, %v724
  %v829 = vpack.c.bf16 %v727, %v727
  %v830 = vpack.c.bf16 %v729, %v729
  %v831 = vpack.c.bf16 %v732, %v732
  %v832 = vpack.c.bf16 %v734, %v734
  %v833 = vpack.c.bf16 %v737, %v737
  %v834 = vpack.c.bf16 %v739, %v739
  %v835 = vpack.c.bf16 %v742, %v742
  %v836 = vpack.c.bf16 %v744, %v744
  %v837 = vpack.c.bf16 %v747, %v747
  %v838 = vpack.c.bf16 %v749, %v749
  %v839 = vpack.c.bf16 %v752, %v752
  %v840 = vpack.c.bf16 %v754, %v754
  %v841 = vpack.c.bf16 %v757, %v757
  %v842 = vpack.c.bf16 %v759, %v759
  %v843 = vpack.c.bf16 %v762, %v762
  %v844 = vpack.c.bf16 %v764, %v764
  %v845 = vpack.c.bf16 %v767, %v767
  %v846 = vpack.c.bf16 %v769, %v769
  %v847 = vpack.c.bf16 %v772, %v772
  %v848 = vpack.c.bf16 %v774, %v774
  %v849 = vpack.c.bf16 %v777, %v777
  %v850 = vpack.c.bf16 %v779, %v779
  %v851 = vpack.c.bf16 %v782, %v782
  %v852 = vpack.c.bf16 %v784, %v784
  %v853 = vpack.c.bf16 %v787, %v787
  %v854 = vpack.c.bf16 %v789, %v789
  %855 = vst [vmem:[%s3] sm:$0xf] %v791
  %856 = vst [vmem:[%s3 + $0x4] sm:$0xf] %v792
  %857 = vst [vmem:[%s3 + $0x8] sm:$0xf] %v793
  %858 = vst [vmem:[%s3 + $0xc] sm:$0xf] %v794
  %859 = vst [vmem:[%s3 + $0x10] sm:$0xf] %v795
  %860 = vst [vmem:[%s3 + $0x14] sm:$0xf] %v796
  %861 = vst [vmem:[%s3 + $0x18] sm:$0xf] %v797
  %862 = vst [vmem:[%s3 + $0x1c] sm:$0xf] %v798
  %863 = vst [vmem:[%s3 + $0x20] sm:$0xf] %v799
  %864 = vst [vmem:[%s3 + $0x24] sm:$0xf] %v800
  %865 = vst [vmem:[%s3 + $0x28] sm:$0xf] %v801
  %866 = vst [vmem:[%s3 + $0x2c] sm:$0xf] %v802
  %867 = vst [vmem:[%s3 + $0x30] sm:$0xf] %v803
  %868 = vst [vmem:[%s3 + $0x34] sm:$0xf] %v804
  %869 = vst [vmem:[%s3 + $0x38] sm:$0xf] %v805
  %870 = vst [vmem:[%s3 + $0x3c] sm:$0xf] %v806
  %871 = vst [vmem:[%s3 + $0x40] sm:$0xf] %v807
  %872 = vst [vmem:[%s3 + $0x44] sm:$0xf] %v808
  %873 = vst [vmem:[%s3 + $0x48] sm:$0xf] %v809
  %874 = vst [vmem:[%s3 + $0x4c] sm:$0xf] %v810
  %875 = vst [vmem:[%s3 + $0x50] sm:$0xf] %v811
  %876 = vst [vmem:[%s3 + $0x54] sm:$0xf] %v812
  %877 = vst [vmem:[%s3 + $0x58] sm:$0xf] %v813
  %878 = vst [vmem:[%s3 + $0x5c] sm:$0xf] %v814
  %879 = vst [vmem:[%s3 + $0x60] sm:$0xf] %v815
  %880 = vst [vmem:[%s3 + $0x64] sm:$0xf] %v816
  %881 = vst [vmem:[%s3 + $0x68] sm:$0xf] %v817
  %882 = vst [vmem:[%s3 + $0x6c] sm:$0xf] %v818
  %883 = vst [vmem:[%s3 + $0x70] sm:$0xf] %v819
  %884 = vst [vmem:[%s3 + $0x74] sm:$0xf] %v820
  %885 = vst [vmem:[%s3 + $0x78] sm:$0xf] %v821
  %886 = vst [vmem:[%s3 + $0x7c] sm:$0xf] %v822
  %887 = vst [vmem:[%s3 + $0x80] sm:$0xf] %v823
  %888 = vst [vmem:[%s3 + $0x84] sm:$0xf] %v824
  %889 = vst [vmem:[%s3 + $0x88] sm:$0xf] %v825
  %890 = vst [vmem:[%s3 + $0x8c] sm:$0xf] %v826
  %891 = vst [vmem:[%s3 + $0x90] sm:$0xf] %v827
  %892 = vst [vmem:[%s3 + $0x94] sm:$0xf] %v828
  %893 = vst [vmem:[%s3 + $0x98] sm:$0xf] %v829
  %894 = vst [vmem:[%s3 + $0x9c] sm:$0xf] %v830
  %895 = vst [vmem:[%s3 + $0xa0] sm:$0xf] %v831
  %896 = vst [vmem:[%s3 + $0xa4] sm:$0xf] %v832
  %897 = vst [vmem:[%s3 + $0xa8] sm:$0xf] %v833
  %898 = vst [vmem:[%s3 + $0xac] sm:$0xf] %v834
  %899 = vst [vmem:[%s3 + $0xb0] sm:$0xf] %v835
  %900 = vst [vmem:[%s3 + $0xb4] sm:$0xf] %v836
  %901 = vst [vmem:[%s3 + $0xb8] sm:$0xf] %v837
  %902 = vst [vmem:[%s3 + $0xbc] sm:$0xf] %v838
  %903 = vst [vmem:[%s3 + $0xc0] sm:$0xf] %v839
  %904 = vst [vmem:[%s3 + $0xc4] sm:$0xf] %v840
  %905 = vst [vmem:[%s3 + $0xc8] sm:$0xf] %v841
  %906 = vst [vmem:[%s3 + $0xcc] sm:$0xf] %v842
  %907 = vst [vmem:[%s3 + $0xd0] sm:$0xf] %v843
  %908 = vst [vmem:[%s3 + $0xd4] sm:$0xf] %v844
  %909 = vst [vmem:[%s3 + $0xd8] sm:$0xf] %v845
  %910 = vst [vmem:[%s3 + $0xdc] sm:$0xf] %v846
  %911 = vst [vmem:[%s3 + $0xe0] sm:$0xf] %v847
  %912 = vst [vmem:[%s3 + $0xe4] sm:$0xf] %v848
  %913 = vst [vmem:[%s3 + $0xe8] sm:$0xf] %v849
  %914 = vst [vmem:[%s3 + $0xec] sm:$0xf] %v850
  %915 = vst [vmem:[%s3 + $0xf0] sm:$0xf] %v851
  %916 = vst [vmem:[%s3 + $0xf4] sm:$0xf] %v852
  %917 = vst [vmem:[%s3 + $0xf8] sm:$0xf] %v853
  %918 = vst [vmem:[%s3 + $0xfc] sm:$0xf] %v854
  // Predicated region
  $region14: #{gcn_forward.4} parent=0 // pred_check
    _
  $region15: #{gcn_forward.4} parent=0 // pred_check_branch
    %920 = sbr.rel (0) target = $region17
  $region16: #{gcn_forward.4} parent=0 // pred_region
    _
  $region17: #{gcn_forward.4} parent=0 // pred_fallthru
    _
  // Predicated region
  $region18: #{gcn_forward.4} parent=0 // pred_check
    _
  $region19: #{gcn_forward.4} parent=0 // pred_check_branch
    %922 = sbr.rel (0) target = $region21
  $region20: #{gcn_forward.4} parent=0 // pred_region
    _
  $region21: #{gcn_forward.4} parent=0 // pred_fallthru
    _

// kernel: gcn_forward.6
$region0: #{gcn_forward.6}
  #allocation0 [shape = 'u32[]', space=smem, size = 0x4, offset = 0x4, fixed_abs, tag = 'smem constant byte address 0x4 - core index']
  #allocation1 [shape = 'u32[72,128]{1,0:T(1,128)}', space=vmem, size = 0x9000, scoped, tag = 'internal scratch']
  %s0 = inlined_call_operand.vmem [shape: bf16[512,128], index: 0, kind: input, shape index: {}]
  %s1 = inlined_call_operand.vmem [shape: f32[512,1], index: 1, kind: input, shape index: {}]
  %s2 = inlined_call_operand.vmem [shape: bf16[128,128], index: 2, kind: input, shape index: {}]
  %s3 = inlined_call_operand.vmem [shape: bf16[512,128], index: 3, kind: output, shape index: {}]
  %s4 = sld [smem:[#allocation0]]
  $region22: #{gcn_forward.6} parent=0
    _
  %s6 = ssub.s32 1, %s4
  %s7 = scalar_select 0, %s6, %s4
  // Predicated region
  $region2: #{gcn_forward.6} parent=0 // pred_check
    _
  $region3: #{gcn_forward.6} parent=0 // pred_check_branch
    %9 = sbr.rel (0) target = $region5
  $region4: #{gcn_forward.6} parent=0 // pred_region
    _
  $region5: #{gcn_forward.6} parent=0 // pred_fallthru
    _
  // Predicated region
  $region6: #{gcn_forward.6} parent=0 // pred_check
    _
  $region7: #{gcn_forward.6} parent=0 // pred_check_branch
    %11 = sbr.rel (0) target = $region9
  $region8: #{gcn_forward.6} parent=0 // pred_region
    _
  $region9: #{gcn_forward.6} parent=0 // pred_fallthru
    _
  // Predicated region
  $region10: #{gcn_forward.6} parent=0 // pred_check
    _
  $region11: #{gcn_forward.6} parent=0 // pred_check_branch
    %13 = sbr.rel (0) target = $region13
  $region12: #{gcn_forward.6} parent=0 // pred_region
    _
  $region13: #{gcn_forward.6} parent=0 // pred_fallthru
    _
  %v14 = vld [vmem:[%s0] sm:$0xf]
  %v15 = vld [vmem:[%s0 + $0x4] sm:$0xf]
  %v16 = vld [vmem:[%s0 + $0x8] sm:$0xf]
  %v17 = vld [vmem:[%s0 + $0xc] sm:$0xf]
  %v18 = vld [vmem:[%s0 + $0x10] sm:$0xf]
  %v19 = vld [vmem:[%s0 + $0x14] sm:$0xf]
  %v20 = vld [vmem:[%s0 + $0x18] sm:$0xf]
  %v21 = vld [vmem:[%s0 + $0x1c] sm:$0xf]
  %v22 = vld [vmem:[%s0 + $0x20] sm:$0xf]
  %v23 = vld [vmem:[%s0 + $0x24] sm:$0xf]
  %v24 = vld [vmem:[%s0 + $0x28] sm:$0xf]
  %v25 = vld [vmem:[%s0 + $0x2c] sm:$0xf]
  %v26 = vld [vmem:[%s0 + $0x30] sm:$0xf]
  %v27 = vld [vmem:[%s0 + $0x34] sm:$0xf]
  %v28 = vld [vmem:[%s0 + $0x38] sm:$0xf]
  %v29 = vld [vmem:[%s0 + $0x3c] sm:$0xf]
  %v30 = vld [vmem:[%s0 + $0x40] sm:$0xf]
  %v31 = vld [vmem:[%s0 + $0x44] sm:$0xf]
  %v32 = vld [vmem:[%s0 + $0x48] sm:$0xf]
  %v33 = vld [vmem:[%s0 + $0x4c] sm:$0xf]
  %v34 = vld [vmem:[%s0 + $0x50] sm:$0xf]
  %v35 = vld [vmem:[%s0 + $0x54] sm:$0xf]
  %v36 = vld [vmem:[%s0 + $0x58] sm:$0xf]
  %v37 = vld [vmem:[%s0 + $0x5c] sm:$0xf]
  %v38 = vld [vmem:[%s0 + $0x60] sm:$0xf]
  %v39 = vld [vmem:[%s0 + $0x64] sm:$0xf]
  %v40 = vld [vmem:[%s0 + $0x68] sm:$0xf]
  %v41 = vld [vmem:[%s0 + $0x6c] sm:$0xf]
  %v42 = vld [vmem:[%s0 + $0x70] sm:$0xf]
  %v43 = vld [vmem:[%s0 + $0x74] sm:$0xf]
  %v44 = vld [vmem:[%s0 + $0x78] sm:$0xf]
  %v45 = vld [vmem:[%s0 + $0x7c] sm:$0xf]
  %v46 = vld [vmem:[%s0 + $0x80] sm:$0xf]
  %v47 = vld [vmem:[%s0 + $0x84] sm:$0xf]
  %v48 = vld [vmem:[%s0 + $0x88] sm:$0xf]
  %v49 = vld [vmem:[%s0 + $0x8c] sm:$0xf]
  %v50 = vld [vmem:[%s0 + $0x90] sm:$0xf]
  %v51 = vld [vmem:[%s0 + $0x94] sm:$0xf]
  %v52 = vld [vmem:[%s0 + $0x98] sm:$0xf]
  %v53 = vld [vmem:[%s0 + $0x9c] sm:$0xf]
  %v54 = vld [vmem:[%s0 + $0xa0] sm:$0xf]
  %v55 = vld [vmem:[%s0 + $0xa4] sm:$0xf]
  %v56 = vld [vmem:[%s0 + $0xa8] sm:$0xf]
  %v57 = vld [vmem:[%s0 + $0xac] sm:$0xf]
  %v58 = vld [vmem:[%s0 + $0xb0] sm:$0xf]
  %v59 = vld [vmem:[%s0 + $0xb4] sm:$0xf]
  %v60 = vld [vmem:[%s0 + $0xb8] sm:$0xf]
  %v61 = vld [vmem:[%s0 + $0xbc] sm:$0xf]
  %v62 = vld [vmem:[%s0 + $0xc0] sm:$0xf]
  %v63 = vld [vmem:[%s0 + $0xc4] sm:$0xf]
  %v64 = vld [vmem:[%s0 + $0xc8] sm:$0xf]
  %v65 = vld [vmem:[%s0 + $0xcc] sm:$0xf]
  %v66 = vld [vmem:[%s0 + $0xd0] sm:$0xf]
  %v67 = vld [vmem:[%s0 + $0xd4] sm:$0xf]
  %v68 = vld [vmem:[%s0 + $0xd8] sm:$0xf]
  %v69 = vld [vmem:[%s0 + $0xdc] sm:$0xf]
  %v70 = vld [vmem:[%s0 + $0xe0] sm:$0xf]
  %v71 = vld [vmem:[%s0 + $0xe4] sm:$0xf]
  %v72 = vld [vmem:[%s0 + $0xe8] sm:$0xf]
  %v73 = vld [vmem:[%s0 + $0xec] sm:$0xf]
  %v74 = vld [vmem:[%s0 + $0xf0] sm:$0xf]
  %v75 = vld [vmem:[%s0 + $0xf4] sm:$0xf]
  %v76 = vld [vmem:[%s0 + $0xf8] sm:$0xf]
  %v77 = vld [vmem:[%s0 + $0xfc] sm:$0xf]
  %v78 = vunpack.c.l.bf16 %v14
  %v79 = vunpack.c.l.bf16 %v15
  %v80 = vunpack.c.l.bf16 %v16
  %v81 = vunpack.c.l.bf16 %v17
  %v82 = vunpack.c.l.bf16 %v18
  %v83 = vunpack.c.l.bf16 %v19
  %v84 = vunpack.c.l.bf16 %v20
  %v85 = vunpack.c.l.bf16 %v21
  %v86 = vunpack.c.l.bf16 %v22
  %v87 = vunpack.c.l.bf16 %v23
  %v88 = vunpack.c.l.bf16 %v24
  %v89 = vunpack.c.l.bf16 %v25
  %v90 = vunpack.c.l.bf16 %v26
  %v91 = vunpack.c.l.bf16 %v27
  %v92 = vunpack.c.l.bf16 %v28
  %v93 = vunpack.c.l.bf16 %v29
  %v94 = vunpack.c.l.bf16 %v30
  %v95 = vunpack.c.l.bf16 %v31
  %v96 = vunpack.c.l.bf16 %v32
  %v97 = vunpack.c.l.bf16 %v33
  %v98 = vunpack.c.l.bf16 %v34
  %v99 = vunpack.c.l.bf16 %v35
  %v100 = vunpack.c.l.bf16 %v36
  %v101 = vunpack.c.l.bf16 %v37
  %v102 = vunpack.c.l.bf16 %v38
  %v103 = vunpack.c.l.bf16 %v39
  %v104 = vunpack.c.l.bf16 %v40
  %v105 = vunpack.c.l.bf16 %v41
  %v106 = vunpack.c.l.bf16 %v42
  %v107 = vunpack.c.l.bf16 %v43
  %v108 = vunpack.c.l.bf16 %v44
  %v109 = vunpack.c.l.bf16 %v45
  %v110 = vunpack.c.l.bf16 %v46
  %v111 = vunpack.c.l.bf16 %v47
  %v112 = vunpack.c.l.bf16 %v48
  %v113 = vunpack.c.l.bf16 %v49
  %v114 = vunpack.c.l.bf16 %v50
  %v115 = vunpack.c.l.bf16 %v51
  %v116 = vunpack.c.l.bf16 %v52
  %v117 = vunpack.c.l.bf16 %v53
  %v118 = vunpack.c.l.bf16 %v54
  %v119 = vunpack.c.l.bf16 %v55
  %v120 = vunpack.c.l.bf16 %v56
  %v121 = vunpack.c.l.bf16 %v57
  %v122 = vunpack.c.l.bf16 %v58
  %v123 = vunpack.c.l.bf16 %v59
  %v124 = vunpack.c.l.bf16 %v60
  %v125 = vunpack.c.l.bf16 %v61
  %v126 = vunpack.c.l.bf16 %v62
  %v127 = vunpack.c.l.bf16 %v63
  %v128 = vunpack.c.l.bf16 %v64
  %v129 = vunpack.c.l.bf16 %v65
  %v130 = vunpack.c.l.bf16 %v66
  %v131 = vunpack.c.l.bf16 %v67
  %v132 = vunpack.c.l.bf16 %v68
  %v133 = vunpack.c.l.bf16 %v69
  %v134 = vunpack.c.l.bf16 %v70
  %v135 = vunpack.c.l.bf16 %v71
  %v136 = vunpack.c.l.bf16 %v72
  %v137 = vunpack.c.l.bf16 %v73
  %v138 = vunpack.c.l.bf16 %v74
  %v139 = vunpack.c.l.bf16 %v75
  %v140 = vunpack.c.l.bf16 %v76
  %v141 = vunpack.c.l.bf16 %v77
  %v142 = vld [vmem:[%s1] sm:$0xff]
  %v143 = vld [vmem:[%s1 + $0x8] sm:$0xff]
  %v144 = vld [vmem:[%s1 + $0x10] sm:$0xff]
  %v145 = vld [vmem:[%s1 + $0x18] sm:$0xff]
  %v146 = vld [vmem:[%s1 + $0x20] sm:$0xff]
  %v147 = vld [vmem:[%s1 + $0x28] sm:$0xff]
  %v148 = vld [vmem:[%s1 + $0x30] sm:$0xff]
  %v149 = vld [vmem:[%s1 + $0x38] sm:$0xff]
  %v150 = vld [vmem:[%s1 + $0x40] sm:$0xff]
  %v151 = vld [vmem:[%s1 + $0x48] sm:$0xff]
  %v152 = vld [vmem:[%s1 + $0x50] sm:$0xff]
  %v153 = vld [vmem:[%s1 + $0x58] sm:$0xff]
  %v154 = vld [vmem:[%s1 + $0x60] sm:$0xff]
  %v155 = vld [vmem:[%s1 + $0x68] sm:$0xff]
  %v156 = vld [vmem:[%s1 + $0x70] sm:$0xff]
  %v157 = vld [vmem:[%s1 + $0x78] sm:$0xff]
  %v158 = vld [vmem:[%s1 + $0x80] sm:$0xff]
  %v159 = vld [vmem:[%s1 + $0x88] sm:$0xff]
  %v160 = vld [vmem:[%s1 + $0x90] sm:$0xff]
  %v161 = vld [vmem:[%s1 + $0x98] sm:$0xff]
  %v162 = vld [vmem:[%s1 + $0xa0] sm:$0xff]
  %v163 = vld [vmem:[%s1 + $0xa8] sm:$0xff]
  %v164 = vld [vmem:[%s1 + $0xb0] sm:$0xff]
  %v165 = vld [vmem:[%s1 + $0xb8] sm:$0xff]
  %v166 = vld [vmem:[%s1 + $0xc0] sm:$0xff]
  %v167 = vld [vmem:[%s1 + $0xc8] sm:$0xff]
  %v168 = vld [vmem:[%s1 + $0xd0] sm:$0xff]
  %v169 = vld [vmem:[%s1 + $0xd8] sm:$0xff]
  %v170 = vld [vmem:[%s1 + $0xe0] sm:$0xff]
  %v171 = vld [vmem:[%s1 + $0xe8] sm:$0xff]
  %v172 = vld [vmem:[%s1 + $0xf0] sm:$0xff]
  %v173 = vld [vmem:[%s1 + $0xf8] sm:$0xff]
  %v174 = vld [vmem:[%s1 + $0x100] sm:$0xff]
  %v175 = vld [vmem:[%s1 + $0x108] sm:$0xff]
  %v176 = vld [vmem:[%s1 + $0x110] sm:$0xff]
  %v177 = vld [vmem:[%s1 + $0x118] sm:$0xff]
  %v178 = vld [vmem:[%s1 + $0x120] sm:$0xff]
  %v179 = vld [vmem:[%s1 + $0x128] sm:$0xff]
  %v180 = vld [vmem:[%s1 + $0x130] sm:$0xff]
  %v181 = vld [vmem:[%s1 + $0x138] sm:$0xff]
  %v182 = vld [vmem:[%s1 + $0x140] sm:$0xff]
  %v183 = vld [vmem:[%s1 + $0x148] sm:$0xff]
  %v184 = vld [vmem:[%s1 + $0x150] sm:$0xff]
  %v185 = vld [vmem:[%s1 + $0x158] sm:$0xff]
  %v186 = vld [vmem:[%s1 + $0x160] sm:$0xff]
  %v187 = vld [vmem:[%s1 + $0x168] sm:$0xff]
  %v188 = vld [vmem:[%s1 + $0x170] sm:$0xff]
  %v189 = vld [vmem:[%s1 + $0x178] sm:$0xff]
  %v190 = vld [vmem:[%s1 + $0x180] sm:$0xff]
  %v191 = vld [vmem:[%s1 + $0x188] sm:$0xff]
  %v192 = vld [vmem:[%s1 + $0x190] sm:$0xff]
  %v193 = vld [vmem:[%s1 + $0x198] sm:$0xff]
  %v194 = vld [vmem:[%s1 + $0x1a0] sm:$0xff]
  %v195 = vld [vmem:[%s1 + $0x1a8] sm:$0xff]
  %v196 = vld [vmem:[%s1 + $0x1b0] sm:$0xff]
  %v197 = vld [vmem:[%s1 + $0x1b8] sm:$0xff]
  %v198 = vld [vmem:[%s1 + $0x1c0] sm:$0xff]
  %v199 = vld [vmem:[%s1 + $0x1c8] sm:$0xff]
  %v200 = vld [vmem:[%s1 + $0x1d0] sm:$0xff]
  %v201 = vld [vmem:[%s1 + $0x1d8] sm:$0xff]
  %v202 = vld [vmem:[%s1 + $0x1e0] sm:$0xff]
  %v203 = vld [vmem:[%s1 + $0x1e8] sm:$0xff]
  %v204 = vld [vmem:[%s1 + $0x1f0] sm:$0xff]
  %v205 = vld [vmem:[%s1 + $0x1f8] sm:$0xff]
  %207 = vset.pattern.permute.xlu0 0
  %208 = vperm.xlu0 %207, %v142
  %v209 = vpop.permute.xlu0 %208
  %212 = vset.pattern.permute.xlu0 0
  %213 = vperm.xlu0 %212, %v143
  %v214 = vpop.permute.xlu0 %213
  %217 = vset.pattern.permute.xlu0 0
  %218 = vperm.xlu0 %217, %v144
  %v219 = vpop.permute.xlu0 %218
  %222 = vset.pattern.permute.xlu0 0
  %223 = vperm.xlu0 %222, %v145
  %v224 = vpop.permute.xlu0 %223
  %227 = vset.pattern.permute.xlu0 0
  %228 = vperm.xlu0 %227, %v146
  %v229 = vpop.permute.xlu0 %228
  %232 = vset.pattern.permute.xlu0 0
  %233 = vperm.xlu0 %232, %v147
  %v234 = vpop.permute.xlu0 %233
  %237 = vset.pattern.permute.xlu0 0
  %238 = vperm.xlu0 %237, %v148
  %v239 = vpop.permute.xlu0 %238
  %242 = vset.pattern.permute.xlu0 0
  %243 = vperm.xlu0 %242, %v149
  %v244 = vpop.permute.xlu0 %243
  %247 = vset.pattern.permute.xlu0 0
  %248 = vperm.xlu0 %247, %v150
  %v249 = vpop.permute.xlu0 %248
  %252 = vset.pattern.permute.xlu0 0
  %253 = vperm.xlu0 %252, %v151
  %v254 = vpop.permute.xlu0 %253
  %257 = vset.pattern.permute.xlu0 0
  %258 = vperm.xlu0 %257, %v152
  %v259 = vpop.permute.xlu0 %258
  %262 = vset.pattern.permute.xlu0 0
  %263 = vperm.xlu0 %262, %v153
  %v264 = vpop.permute.xlu0 %263
  %267 = vset.pattern.permute.xlu0 0
  %268 = vperm.xlu0 %267, %v154
  %v269 = vpop.permute.xlu0 %268
  %272 = vset.pattern.permute.xlu0 0
  %273 = vperm.xlu0 %272, %v155
  %v274 = vpop.permute.xlu0 %273
  %277 = vset.pattern.permute.xlu0 0
  %278 = vperm.xlu0 %277, %v156
  %v279 = vpop.permute.xlu0 %278
  %282 = vset.pattern.permute.xlu0 0
  %283 = vperm.xlu0 %282, %v157
  %v284 = vpop.permute.xlu0 %283
  %287 = vset.pattern.permute.xlu0 0
  %288 = vperm.xlu0 %287, %v158
  %v289 = vpop.permute.xlu0 %288
  %292 = vset.pattern.permute.xlu0 0
  %293 = vperm.xlu0 %292, %v159
  %v294 = vpop.permute.xlu0 %293
  %297 = vset.pattern.permute.xlu0 0
  %298 = vperm.xlu0 %297, %v160
  %v299 = vpop.permute.xlu0 %298
  %302 = vset.pattern.permute.xlu0 0
  %303 = vperm.xlu0 %302, %v161
  %v304 = vpop.permute.xlu0 %303
  %307 = vset.pattern.permute.xlu0 0
  %308 = vperm.xlu0 %307, %v162
  %v309 = vpop.permute.xlu0 %308
  %312 = vset.pattern.permute.xlu0 0
  %313 = vperm.xlu0 %312, %v163
  %v314 = vpop.permute.xlu0 %313
  %317 = vset.pattern.permute.xlu0 0
  %318 = vperm.xlu0 %317, %v164
  %v319 = vpop.permute.xlu0 %318
  %322 = vset.pattern.permute.xlu0 0
  %323 = vperm.xlu0 %322, %v165
  %v324 = vpop.permute.xlu0 %323
  %327 = vset.pattern.permute.xlu0 0
  %328 = vperm.xlu0 %327, %v166
  %v329 = vpop.permute.xlu0 %328
  %332 = vset.pattern.permute.xlu0 0
  %333 = vperm.xlu0 %332, %v167
  %v334 = vpop.permute.xlu0 %333
  %337 = vset.pattern.permute.xlu0 0
  %338 = vperm.xlu0 %337, %v168
  %v339 = vpop.permute.xlu0 %338
  %342 = vset.pattern.permute.xlu0 0
  %343 = vperm.xlu0 %342, %v169
  %v344 = vpop.permute.xlu0 %343
  %347 = vset.pattern.permute.xlu0 0
  %348 = vperm.xlu0 %347, %v170
  %v349 = vpop.permute.xlu0 %348
  %352 = vset.pattern.permute.xlu0 0
  %353 = vperm.xlu0 %352, %v171
  %v354 = vpop.permute.xlu0 %353
  %357 = vset.pattern.permute.xlu0 0
  %358 = vperm.xlu0 %357, %v172
  %v359 = vpop.permute.xlu0 %358
  %362 = vset.pattern.permute.xlu0 0
  %363 = vperm.xlu0 %362, %v173
  %v364 = vpop.permute.xlu0 %363
  %367 = vset.pattern.permute.xlu0 0
  %368 = vperm.xlu0 %367, %v174
  %v369 = vpop.permute.xlu0 %368
  %372 = vset.pattern.permute.xlu0 0
  %373 = vperm.xlu0 %372, %v175
  %v374 = vpop.permute.xlu0 %373
  %377 = vset.pattern.permute.xlu0 0
  %378 = vperm.xlu0 %377, %v176
  %v379 = vpop.permute.xlu0 %378
  %382 = vset.pattern.permute.xlu0 0
  %383 = vperm.xlu0 %382, %v177
  %v384 = vpop.permute.xlu0 %383
  %387 = vset.pattern.permute.xlu0 0
  %388 = vperm.xlu0 %387, %v178
  %v389 = vpop.permute.xlu0 %388
  %392 = vset.pattern.permute.xlu0 0
  %393 = vperm.xlu0 %392, %v179
  %v394 = vpop.permute.xlu0 %393
  %397 = vset.pattern.permute.xlu0 0
  %398 = vperm.xlu0 %397, %v180
  %v399 = vpop.permute.xlu0 %398
  %402 = vset.pattern.permute.xlu0 0
  %403 = vperm.xlu0 %402, %v181
  %v404 = vpop.permute.xlu0 %403
  %407 = vset.pattern.permute.xlu0 0
  %408 = vperm.xlu0 %407, %v182
  %v409 = vpop.permute.xlu0 %408
  %412 = vset.pattern.permute.xlu0 0
  %413 = vperm.xlu0 %412, %v183
  %v414 = vpop.permute.xlu0 %413
  %417 = vset.pattern.permute.xlu0 0
  %418 = vperm.xlu0 %417, %v184
  %v419 = vpop.permute.xlu0 %418
  %422 = vset.pattern.permute.xlu0 0
  %423 = vperm.xlu0 %422, %v185
  %v424 = vpop.permute.xlu0 %423
  %427 = vset.pattern.permute.xlu0 0
  %428 = vperm.xlu0 %427, %v186
  %v429 = vpop.permute.xlu0 %428
  %432 = vset.pattern.permute.xlu0 0
  %433 = vperm.xlu0 %432, %v187
  %v434 = vpop.permute.xlu0 %433
  %437 = vset.pattern.permute.xlu0 0
  %438 = vperm.xlu0 %437, %v188
  %v439 = vpop.permute.xlu0 %438
  %442 = vset.pattern.permute.xlu0 0
  %443 = vperm.xlu0 %442, %v189
  %v444 = vpop.permute.xlu0 %443
  %447 = vset.pattern.permute.xlu0 0
  %448 = vperm.xlu0 %447, %v190
  %v449 = vpop.permute.xlu0 %448
  %452 = vset.pattern.permute.xlu0 0
  %453 = vperm.xlu0 %452, %v191
  %v454 = vpop.permute.xlu0 %453
  %457 = vset.pattern.permute.xlu0 0
  %458 = vperm.xlu0 %457, %v192
  %v459 = vpop.permute.xlu0 %458
  %462 = vset.pattern.permute.xlu0 0
  %463 = vperm.xlu0 %462, %v193
  %v464 = vpop.permute.xlu0 %463
  %467 = vset.pattern.permute.xlu0 0
  %468 = vperm.xlu0 %467, %v194
  %v469 = vpop.permute.xlu0 %468
  %472 = vset.pattern.permute.xlu0 0
  %473 = vperm.xlu0 %472, %v195
  %v474 = vpop.permute.xlu0 %473
  %477 = vset.pattern.permute.xlu0 0
  %478 = vperm.xlu0 %477, %v196
  %v479 = vpop.permute.xlu0 %478
  %482 = vset.pattern.permute.xlu0 0
  %483 = vperm.xlu0 %482, %v197
  %v484 = vpop.permute.xlu0 %483
  %487 = vset.pattern.permute.xlu0 0
  %488 = vperm.xlu0 %487, %v198
  %v489 = vpop.permute.xlu0 %488
  %492 = vset.pattern.permute.xlu0 0
  %493 = vperm.xlu0 %492, %v199
  %v494 = vpop.permute.xlu0 %493
  %497 = vset.pattern.permute.xlu0 0
  %498 = vperm.xlu0 %497, %v200
  %v499 = vpop.permute.xlu0 %498
  %502 = vset.pattern.permute.xlu0 0
  %503 = vperm.xlu0 %502, %v201
  %v504 = vpop.permute.xlu0 %503
  %507 = vset.pattern.permute.xlu0 0
  %508 = vperm.xlu0 %507, %v202
  %v509 = vpop.permute.xlu0 %508
  %512 = vset.pattern.permute.xlu0 0
  %513 = vperm.xlu0 %512, %v203
  %v514 = vpop.permute.xlu0 %513
  %517 = vset.pattern.permute.xlu0 0
  %518 = vperm.xlu0 %517, %v204
  %v519 = vpop.permute.xlu0 %518
  %522 = vset.pattern.permute.xlu0 0
  %523 = vperm.xlu0 %522, %v205
  %v524 = vpop.permute.xlu0 %523
  %v526 = vmul.f32 %v78, %v209
  %v527 = vmul.f32 %v79, %v214
  %v528 = vmul.f32 %v80, %v219
  %v529 = vmul.f32 %v81, %v224
  %v530 = vmul.f32 %v82, %v229
  %v531 = vmul.f32 %v83, %v234
  %v532 = vmul.f32 %v84, %v239
  %v533 = vmul.f32 %v85, %v244
  %v534 = vmul.f32 %v86, %v249
  %v535 = vmul.f32 %v87, %v254
  %v536 = vmul.f32 %v88, %v259
  %v537 = vmul.f32 %v89, %v264
  %v538 = vmul.f32 %v90, %v269
  %v539 = vmul.f32 %v91, %v274
  %v540 = vmul.f32 %v92, %v279
  %v541 = vmul.f32 %v93, %v284
  %v542 = vmul.f32 %v94, %v289
  %v543 = vmul.f32 %v95, %v294
  %v544 = vmul.f32 %v96, %v299
  %v545 = vmul.f32 %v97, %v304
  %v546 = vmul.f32 %v98, %v309
  %v547 = vmul.f32 %v99, %v314
  %v548 = vmul.f32 %v100, %v319
  %v549 = vmul.f32 %v101, %v324
  %v550 = vmul.f32 %v102, %v329
  %v551 = vmul.f32 %v103, %v334
  %v552 = vmul.f32 %v104, %v339
  %v553 = vmul.f32 %v105, %v344
  %v554 = vmul.f32 %v106, %v349
  %v555 = vmul.f32 %v107, %v354
  %v556 = vmul.f32 %v108, %v359
  %v557 = vmul.f32 %v109, %v364
  %v558 = vmul.f32 %v110, %v369
  %v559 = vmul.f32 %v111, %v374
  %v560 = vmul.f32 %v112, %v379
  %v561 = vmul.f32 %v113, %v384
  %v562 = vmul.f32 %v114, %v389
  %v563 = vmul.f32 %v115, %v394
  %v564 = vmul.f32 %v116, %v399
  %v565 = vmul.f32 %v117, %v404
  %v566 = vmul.f32 %v118, %v409
  %v567 = vmul.f32 %v119, %v414
  %v568 = vmul.f32 %v120, %v419
  %v569 = vmul.f32 %v121, %v424
  %v570 = vmul.f32 %v122, %v429
  %v571 = vmul.f32 %v123, %v434
  %v572 = vmul.f32 %v124, %v439
  %v573 = vmul.f32 %v125, %v444
  %v574 = vmul.f32 %v126, %v449
  %v575 = vmul.f32 %v127, %v454
  %v576 = vmul.f32 %v128, %v459
  %v577 = vmul.f32 %v129, %v464
  %v578 = vmul.f32 %v130, %v469
  %v579 = vmul.f32 %v131, %v474
  %v580 = vmul.f32 %v132, %v479
  %v581 = vmul.f32 %v133, %v484
  %v582 = vmul.f32 %v134, %v489
  %v583 = vmul.f32 %v135, %v494
  %v584 = vmul.f32 %v136, %v499
  %v585 = vmul.f32 %v137, %v504
  %v586 = vmul.f32 %v138, %v509
  %v587 = vmul.f32 %v139, %v514
  %v588 = vmul.f32 %v140, %v519
  %v589 = vmul.f32 %v141, %v524
  %v590 = vpack.c.bf16 %v527, %v526
  %v591 = vpack.c.bf16 %v529, %v528
  %v592 = vpack.c.bf16 %v531, %v530
  %v593 = vpack.c.bf16 %v533, %v532
  %v594 = vpack.c.bf16 %v535, %v534
  %v595 = vpack.c.bf16 %v537, %v536
  %v596 = vpack.c.bf16 %v539, %v538
  %v597 = vpack.c.bf16 %v541, %v540
  %v598 = vpack.c.bf16 %v543, %v542
  %v599 = vpack.c.bf16 %v545, %v544
  %v600 = vpack.c.bf16 %v547, %v546
  %v601 = vpack.c.bf16 %v549, %v548
  %v602 = vpack.c.bf16 %v551, %v550
  %v603 = vpack.c.bf16 %v553, %v552
  %v604 = vpack.c.bf16 %v555, %v554
  %v605 = vpack.c.bf16 %v557, %v556
  %v606 = vpack.c.bf16 %v559, %v558
  %v607 = vpack.c.bf16 %v561, %v560
  %v608 = vpack.c.bf16 %v563, %v562
  %v609 = vpack.c.bf16 %v565, %v564
  %v610 = vpack.c.bf16 %v567, %v566
  %v611 = vpack.c.bf16 %v569, %v568
  %v612 = vpack.c.bf16 %v571, %v570
  %v613 = vpack.c.bf16 %v573, %v572
  %v614 = vpack.c.bf16 %v575, %v574
  %v615 = vpack.c.bf16 %v577, %v576
  %v616 = vpack.c.bf16 %v579, %v578
  %v617 = vpack.c.bf16 %v581, %v580
  %v618 = vpack.c.bf16 %v583, %v582
  %v619 = vpack.c.bf16 %v585, %v584
  %v620 = vpack.c.bf16 %v587, %v586
  %v621 = vpack.c.bf16 %v589, %v588
  %v622 = vld [vmem:[%s2] sm:$0xf]
  %v623 = vld [vmem:[%s2 + $0x4] sm:$0xf]
  %v624 = vld [vmem:[%s2 + $0x8] sm:$0xf]
  %v625 = vld [vmem:[%s2 + $0xc] sm:$0xf]
  %v626 = vld [vmem:[%s2 + $0x10] sm:$0xf]
  %v627 = vld [vmem:[%s2 + $0x14] sm:$0xf]
  %v628 = vld [vmem:[%s2 + $0x18] sm:$0xf]
  %v629 = vld [vmem:[%s2 + $0x1c] sm:$0xf]
  %v630 = vld [vmem:[%s2 + $0x20] sm:$0xf]
  %v631 = vld [vmem:[%s2 + $0x24] sm:$0xf]
  %v632 = vld [vmem:[%s2 + $0x28] sm:$0xf]
  %v633 = vld [vmem:[%s2 + $0x2c] sm:$0xf]
  %v634 = vld [vmem:[%s2 + $0x30] sm:$0xf]
  %v635 = vld [vmem:[%s2 + $0x34] sm:$0xf]
  %v636 = vld [vmem:[%s2 + $0x38] sm:$0xf]
  %v637 = vld [vmem:[%s2 + $0x3c] sm:$0xf]
  %v654 = vunpack.c.l.b16 %v622
  %v655 = vunpack.c.l.b16 %v623
  %v656 = vunpack.c.l.b16 %v624
  %v657 = vunpack.c.l.b16 %v625
  %v658 = vunpack.c.l.b16 %v626
  %v659 = vunpack.c.l.b16 %v627
  %v660 = vunpack.c.l.b16 %v628
  %v661 = vunpack.c.l.b16 %v629
  %v662 = vunpack.c.l.b16 %v630
  %v663 = vunpack.c.l.b16 %v631
  %v664 = vunpack.c.l.b16 %v632
  %v665 = vunpack.c.l.b16 %v633
  %v666 = vunpack.c.l.b16 %v634
  %v667 = vunpack.c.l.b16 %v635
  %v668 = vunpack.c.l.b16 %v636
  %v669 = vunpack.c.l.b16 %v637
  %v670 = vpack.c.b16 %v655, %v654
  %v671 = vpack.c.b16 %v657, %v656
  %v672 = vpack.c.b16 %v659, %v658
  %v673 = vpack.c.b16 %v661, %v660
  %v674 = vpack.c.b16 %v663, %v662
  %v675 = vpack.c.b16 %v665, %v664
  %v676 = vpack.c.b16 %v667, %v666
  %v677 = vpack.c.b16 %v669, %v668
  %686 = vmatpush.bf16.msra.mxu0 %v677
  %687 = vmatpush.bf16.msra.mxu0 %v676
  %688 = vmatpush.bf16.msra.mxu0 %v675
  %689 = vmatpush.bf16.msra.mxu0 %v674
  %690 = vmatpush.bf16.msra.mxu0 %v673
  %691 = vmatpush.bf16.msra.mxu0 %v672
  %692 = vmatpush.bf16.msra.mxu0 %v671
  %693 = vmatpush.bf16.msra.mxu0 %v670
  %694 = vmatmul.bf16.gmra.mxu0 %v590
  %v695 = vpop.f32.mrf.mxu0
  %v696 = vadd.f32 0.0, %v695
  %v697 = vpop.f32.mrf.mxu0
  %v698 = vadd.f32 0.0, %v697
  %699 = vmatmul.bf16.gmra.mxu0 %v591
  %v700 = vpop.f32.mrf.mxu0
  %v701 = vadd.f32 0.0, %v700
  %v702 = vpop.f32.mrf.mxu0
  %v703 = vadd.f32 0.0, %v702
  %704 = vmatmul.bf16.gmra.mxu0 %v592
  %v705 = vpop.f32.mrf.mxu0
  %v706 = vadd.f32 0.0, %v705
  %v707 = vpop.f32.mrf.mxu0
  %v708 = vadd.f32 0.0, %v707
  %709 = vmatmul.bf16.gmra.mxu0 %v593
  %v710 = vpop.f32.mrf.mxu0
  %v711 = vadd.f32 0.0, %v710
  %v712 = vpop.f32.mrf.mxu0
  %v713 = vadd.f32 0.0, %v712
  %714 = vmatmul.bf16.gmra.mxu0 %v594
  %v715 = vpop.f32.mrf.mxu0
  %v716 = vadd.f32 0.0, %v715
  %v717 = vpop.f32.mrf.mxu0
  %v718 = vadd.f32 0.0, %v717
  %719 = vmatmul.bf16.gmra.mxu0 %v595
  %v720 = vpop.f32.mrf.mxu0
  %v721 = vadd.f32 0.0, %v720
  %v722 = vpop.f32.mrf.mxu0
  %v723 = vadd.f32 0.0, %v722
  %724 = vmatmul.bf16.gmra.mxu0 %v596
  %v725 = vpop.f32.mrf.mxu0
  %v726 = vadd.f32 0.0, %v725
  %v727 = vpop.f32.mrf.mxu0
  %v728 = vadd.f32 0.0, %v727
  %729 = vmatmul.bf16.gmra.mxu0 %v597
  %v730 = vpop.f32.mrf.mxu0
  %v731 = vadd.f32 0.0, %v730
  %v732 = vpop.f32.mrf.mxu0
  %v733 = vadd.f32 0.0, %v732
  %734 = vmatmul.bf16.gmra.mxu0 %v598
  %v735 = vpop.f32.mrf.mxu0
  %v736 = vadd.f32 0.0, %v735
  %v737 = vpop.f32.mrf.mxu0
  %v738 = vadd.f32 0.0, %v737
  %739 = vmatmul.bf16.gmra.mxu0 %v599
  %v740 = vpop.f32.mrf.mxu0
  %v741 = vadd.f32 0.0, %v740
  %v742 = vpop.f32.mrf.mxu0
  %v743 = vadd.f32 0.0, %v742
  %744 = vmatmul.bf16.gmra.mxu0 %v600
  %v745 = vpop.f32.mrf.mxu0
  %v746 = vadd.f32 0.0, %v745
  %v747 = vpop.f32.mrf.mxu0
  %v748 = vadd.f32 0.0, %v747
  %749 = vmatmul.bf16.gmra.mxu0 %v601
  %v750 = vpop.f32.mrf.mxu0
  %v751 = vadd.f32 0.0, %v750
  %v752 = vpop.f32.mrf.mxu0
  %v753 = vadd.f32 0.0, %v752
  %754 = vmatmul.bf16.gmra.mxu0 %v602
  %v755 = vpop.f32.mrf.mxu0
  %v756 = vadd.f32 0.0, %v755
  %v757 = vpop.f32.mrf.mxu0
  %v758 = vadd.f32 0.0, %v757
  %759 = vmatmul.bf16.gmra.mxu0 %v603
  %v760 = vpop.f32.mrf.mxu0
  %v761 = vadd.f32 0.0, %v760
  %v762 = vpop.f32.mrf.mxu0
  %v763 = vadd.f32 0.0, %v762
  %764 = vmatmul.bf16.gmra.mxu0 %v604
  %v765 = vpop.f32.mrf.mxu0
  %v766 = vadd.f32 0.0, %v765
  %v767 = vpop.f32.mrf.mxu0
  %v768 = vadd.f32 0.0, %v767
  %769 = vmatmul.bf16.gmra.mxu0 %v605
  %v770 = vpop.f32.mrf.mxu0
  %v771 = vadd.f32 0.0, %v770
  %v772 = vpop.f32.mrf.mxu0
  %v773 = vadd.f32 0.0, %v772
  %774 = vmatmul.bf16.gmra.mxu0 %v606
  %v775 = vpop.f32.mrf.mxu0
  %v776 = vadd.f32 0.0, %v775
  %v777 = vpop.f32.mrf.mxu0
  %v778 = vadd.f32 0.0, %v777
  %779 = vmatmul.bf16.gmra.mxu0 %v607
  %v780 = vpop.f32.mrf.mxu0
  %v781 = vadd.f32 0.0, %v780
  %v782 = vpop.f32.mrf.mxu0
  %v783 = vadd.f32 0.0, %v782
  %784 = vmatmul.bf16.gmra.mxu0 %v608
  %v785 = vpop.f32.mrf.mxu0
  %v786 = vadd.f32 0.0, %v785
  %v787 = vpop.f32.mrf.mxu0
  %v788 = vadd.f32 0.0, %v787
  %789 = vmatmul.bf16.gmra.mxu0 %v609
  %v790 = vpop.f32.mrf.mxu0
  %v791 = vadd.f32 0.0, %v790
  %v792 = vpop.f32.mrf.mxu0
  %v793 = vadd.f32 0.0, %v792
  %794 = vmatmul.bf16.gmra.mxu0 %v610
  %v795 = vpop.f32.mrf.mxu0
  %v796 = vadd.f32 0.0, %v795
  %v797 = vpop.f32.mrf.mxu0
  %v798 = vadd.f32 0.0, %v797
  %799 = vmatmul.bf16.gmra.mxu0 %v611
  %v800 = vpop.f32.mrf.mxu0
  %v801 = vadd.f32 0.0, %v800
  %v802 = vpop.f32.mrf.mxu0
  %v803 = vadd.f32 0.0, %v802
  %804 = vmatmul.bf16.gmra.mxu0 %v612
  %v805 = vpop.f32.mrf.mxu0
  %v806 = vadd.f32 0.0, %v805
  %v807 = vpop.f32.mrf.mxu0
  %v808 = vadd.f32 0.0, %v807
  %809 = vmatmul.bf16.gmra.mxu0 %v613
  %v810 = vpop.f32.mrf.mxu0
  %v811 = vadd.f32 0.0, %v810
  %v812 = vpop.f32.mrf.mxu0
  %v813 = vadd.f32 0.0, %v812
  %814 = vmatmul.bf16.gmra.mxu0 %v614
  %v815 = vpop.f32.mrf.mxu0
  %v816 = vadd.f32 0.0, %v815
  %v817 = vpop.f32.mrf.mxu0
  %v818 = vadd.f32 0.0, %v817
  %819 = vmatmul.bf16.gmra.mxu0 %v615
  %v820 = vpop.f32.mrf.mxu0
  %v821 = vadd.f32 0.0, %v820
  %v822 = vpop.f32.mrf.mxu0
  %v823 = vadd.f32 0.0, %v822
  %824 = vmatmul.bf16.gmra.mxu0 %v616
  %v825 = vpop.f32.mrf.mxu0
  %v826 = vadd.f32 0.0, %v825
  %v827 = vpop.f32.mrf.mxu0
  %v828 = vadd.f32 0.0, %v827
  %829 = vmatmul.bf16.gmra.mxu0 %v617
  %v830 = vpop.f32.mrf.mxu0
  %v831 = vadd.f32 0.0, %v830
  %v832 = vpop.f32.mrf.mxu0
  %v833 = vadd.f32 0.0, %v832
  %834 = vmatmul.bf16.gmra.mxu0 %v618
  %v835 = vpop.f32.mrf.mxu0
  %v836 = vadd.f32 0.0, %v835
  %v837 = vpop.f32.mrf.mxu0
  %v838 = vadd.f32 0.0, %v837
  %839 = vmatmul.bf16.gmra.mxu0 %v619
  %v840 = vpop.f32.mrf.mxu0
  %v841 = vadd.f32 0.0, %v840
  %v842 = vpop.f32.mrf.mxu0
  %v843 = vadd.f32 0.0, %v842
  %844 = vmatmul.bf16.gmra.mxu0 %v620
  %v845 = vpop.f32.mrf.mxu0
  %v846 = vadd.f32 0.0, %v845
  %v847 = vpop.f32.mrf.mxu0
  %v848 = vadd.f32 0.0, %v847
  %849 = vmatmul.bf16.gmra.mxu0 %v621
  %v850 = vpop.f32.mrf.mxu0
  %v851 = vadd.f32 0.0, %v850
  %v852 = vpop.f32.mrf.mxu0
  %v853 = vadd.f32 0.0, %v852
  %854 = vdwg.mxu0
  %v855 = vpack.c.bf16 %v696, %v696
  %v856 = vpack.c.bf16 %v698, %v698
  %v857 = vpack.c.bf16 %v701, %v701
  %v858 = vpack.c.bf16 %v703, %v703
  %v859 = vpack.c.bf16 %v706, %v706
  %v860 = vpack.c.bf16 %v708, %v708
  %v861 = vpack.c.bf16 %v711, %v711
  %v862 = vpack.c.bf16 %v713, %v713
  %v863 = vpack.c.bf16 %v716, %v716
  %v864 = vpack.c.bf16 %v718, %v718
  %v865 = vpack.c.bf16 %v721, %v721
  %v866 = vpack.c.bf16 %v723, %v723
  %v867 = vpack.c.bf16 %v726, %v726
  %v868 = vpack.c.bf16 %v728, %v728
  %v869 = vpack.c.bf16 %v731, %v731
  %v870 = vpack.c.bf16 %v733, %v733
  %v871 = vpack.c.bf16 %v736, %v736
  %v872 = vpack.c.bf16 %v738, %v738
  %v873 = vpack.c.bf16 %v741, %v741
  %v874 = vpack.c.bf16 %v743, %v743
  %v875 = vpack.c.bf16 %v746, %v746
  %v876 = vpack.c.bf16 %v748, %v748
  %v877 = vpack.c.bf16 %v751, %v751
  %v878 = vpack.c.bf16 %v753, %v753
  %v879 = vpack.c.bf16 %v756, %v756
  %v880 = vpack.c.bf16 %v758, %v758
  %v881 = vpack.c.bf16 %v761, %v761
  %v882 = vpack.c.bf16 %v763, %v763
  %v883 = vpack.c.bf16 %v766, %v766
  %v884 = vpack.c.bf16 %v768, %v768
  %v885 = vpack.c.bf16 %v771, %v771
  %v886 = vpack.c.bf16 %v773, %v773
  %v887 = vpack.c.bf16 %v776, %v776
  %v888 = vpack.c.bf16 %v778, %v778
  %v889 = vpack.c.bf16 %v781, %v781
  %v890 = vpack.c.bf16 %v783, %v783
  %v891 = vpack.c.bf16 %v786, %v786
  %v892 = vpack.c.bf16 %v788, %v788
  %v893 = vpack.c.bf16 %v791, %v791
  %v894 = vpack.c.bf16 %v793, %v793
  %v895 = vpack.c.bf16 %v796, %v796
  %v896 = vpack.c.bf16 %v798, %v798
  %v897 = vpack.c.bf16 %v801, %v801
  %v898 = vpack.c.bf16 %v803, %v803
  %v899 = vpack.c.bf16 %v806, %v806
  %v900 = vpack.c.bf16 %v808, %v808
  %v901 = vpack.c.bf16 %v811, %v811
  %v902 = vpack.c.bf16 %v813, %v813
  %v903 = vpack.c.bf16 %v816, %v816
  %v904 = vpack.c.bf16 %v818, %v818
  %v905 = vpack.c.bf16 %v821, %v821
  %v906 = vpack.c.bf16 %v823, %v823
  %v907 = vpack.c.bf16 %v826, %v826
  %v908 = vpack.c.bf16 %v828, %v828
  %v909 = vpack.c.bf16 %v831, %v831
  %v910 = vpack.c.bf16 %v833, %v833
  %v911 = vpack.c.bf16 %v836, %v836
  %v912 = vpack.c.bf16 %v838, %v838
  %v913 = vpack.c.bf16 %v841, %v841
  %v914 = vpack.c.bf16 %v843, %v843
  %v915 = vpack.c.bf16 %v846, %v846
  %v916 = vpack.c.bf16 %v848, %v848
  %v917 = vpack.c.bf16 %v851, %v851
  %v918 = vpack.c.bf16 %v853, %v853
  %919 = vst [vmem:[%s3] sm:$0xf] %v855
  %920 = vst [vmem:[%s3 + $0x4] sm:$0xf] %v856
  %921 = vst [vmem:[%s3 + $0x8] sm:$0xf] %v857
  %922 = vst [vmem:[%s3 + $0xc] sm:$0xf] %v858
  %923 = vst [vmem:[%s3 + $0x10] sm:$0xf] %v859
  %924 = vst [vmem:[%s3 + $0x14] sm:$0xf] %v860
  %925 = vst [vmem:[%s3 + $0x18] sm:$0xf] %v861
  %926 = vst [vmem:[%s3 + $0x1c] sm:$0xf] %v862
  %927 = vst [vmem:[%s3 + $0x20] sm:$0xf] %v863
  %928 = vst [vmem:[%s3 + $0x24] sm:$0xf] %v864
  %929 = vst [vmem:[%s3 + $0x28] sm:$0xf] %v865
  %930 = vst [vmem:[%s3 + $0x2c] sm:$0xf] %v866
  %931 = vst [vmem:[%s3 + $0x30] sm:$0xf] %v867
  %932 = vst [vmem:[%s3 + $0x34] sm:$0xf] %v868
  %933 = vst [vmem:[%s3 + $0x38] sm:$0xf] %v869
  %934 = vst [vmem:[%s3 + $0x3c] sm:$0xf] %v870
  %935 = vst [vmem:[%s3 + $0x40] sm:$0xf] %v871
  %936 = vst [vmem:[%s3 + $0x44] sm:$0xf] %v872
  %937 = vst [vmem:[%s3 + $0x48] sm:$0xf] %v873
  %938 = vst [vmem:[%s3 + $0x4c] sm:$0xf] %v874
  %939 = vst [vmem:[%s3 + $0x50] sm:$0xf] %v875
  %940 = vst [vmem:[%s3 + $0x54] sm:$0xf] %v876
  %941 = vst [vmem:[%s3 + $0x58] sm:$0xf] %v877
  %942 = vst [vmem:[%s3 + $0x5c] sm:$0xf] %v878
  %943 = vst [vmem:[%s3 + $0x60] sm:$0xf] %v879
  %944 = vst [vmem:[%s3 + $0x64] sm:$0xf] %v880
  %945 = vst [vmem:[%s3 + $0x68] sm:$0xf] %v881
  %946 = vst [vmem:[%s3 + $0x6c] sm:$0xf] %v882
  %947 = vst [vmem:[%s3 + $0x70] sm:$0xf] %v883
  %948 = vst [vmem:[%s3 + $0x74] sm:$0xf] %v884
  %949 = vst [vmem:[%s3 + $0x78] sm:$0xf] %v885
  %950 = vst [vmem:[%s3 + $0x7c] sm:$0xf] %v886
  %951 = vst [vmem:[%s3 + $0x80] sm:$0xf] %v887
  %952 = vst [vmem:[%s3 + $0x84] sm:$0xf] %v888
  %953 = vst [vmem:[%s3 + $0x88] sm:$0xf] %v889
  %954 = vst [vmem:[%s3 + $0x8c] sm:$0xf] %v890
  %955 = vst [vmem:[%s3 + $0x90] sm:$0xf] %v891
  %956 = vst [vmem:[%s3 + $0x94] sm:$0xf] %v892
  %957 = vst [vmem:[%s3 + $0x98] sm:$0xf] %v893
  %958 = vst [vmem:[%s3 + $0x9c] sm:$0xf] %v894
  %959 = vst [vmem:[%s3 + $0xa0] sm:$0xf] %v895
  %960 = vst [vmem:[%s3 + $0xa4] sm:$0xf] %v896
  %961 = vst [vmem:[%s3 + $0xa8] sm:$0xf] %v897
  %962 = vst [vmem:[%s3 + $0xac] sm:$0xf] %v898
  %963 = vst [vmem:[%s3 + $0xb0] sm:$0xf] %v899
  %964 = vst [vmem:[%s3 + $0xb4] sm:$0xf] %v900
  %965 = vst [vmem:[%s3 + $0xb8] sm:$0xf] %v901
  %966 = vst [vmem:[%s3 + $0xbc] sm:$0xf] %v902
  %967 = vst [vmem:[%s3 + $0xc0] sm:$0xf] %v903
  %968 = vst [vmem:[%s3 + $0xc4] sm:$0xf] %v904
  %969 = vst [vmem:[%s3 + $0xc8] sm:$0xf] %v905
  %970 = vst [vmem:[%s3 + $0xcc] sm:$0xf] %v906
  %971 = vst [vmem:[%s3 + $0xd0] sm:$0xf] %v907
  %972 = vst [vmem:[%s3 + $0xd4] sm:$0xf] %v908
  %973 = vst [vmem:[%s3 + $0xd8] sm:$0xf] %v909
  %974 = vst [vmem:[%s3 + $0xdc] sm:$0xf] %v910
  %975 = vst [vmem:[%s3 + $0xe0] sm:$0xf] %v911
  %976 = vst [vmem:[%s3 + $0xe4] sm:$0xf] %v912
  %977 = vst [vmem:[%s3 + $0xe8] sm:$0xf] %v913
  %978 = vst [vmem:[%s3 + $0xec] sm:$0xf] %v914
  %979 = vst [vmem:[%s3 + $0xf0] sm:$0xf] %v915
  %980 = vst [vmem:[%s3 + $0xf4] sm:$0xf] %v916
  %981 = vst [vmem:[%s3 + $0xf8] sm:$0xf] %v917
  %982 = vst [vmem:[%s3 + $0xfc] sm:$0xf] %v918
  // Predicated region
  $region14: #{gcn_forward.6} parent=0 // pred_check
    _
  $region15: #{gcn_forward.6} parent=0 // pred_check_branch
    %984 = sbr.rel (0) target = $region17
  $region16: #{gcn_forward.6} parent=0 // pred_region
    _
  $region17: #{gcn_forward.6} parent=0 // pred_fallthru
    _
  // Predicated region
  $region18: #{gcn_forward.6} parent=0 // pred_check
    _
  $region19: #{gcn_forward.6} parent=0 // pred_check_branch
    %986 = sbr.rel (0) target = $region21
  $region20: #{gcn_forward.6} parent=0 // pred_region
    _
  $region21: #{gcn_forward.6} parent=0 // pred_fallthru
    _

// kernel: gcn_forward.5
$region0: #{gcn_forward.5}
  #allocation0 [shape = 'u32[]', space=smem, size = 0x4, offset = 0x4, fixed_abs, tag = 'smem constant byte address 0x4 - core index']
  #allocation1 [shape = 'u32[72,128]{1,0:T(1,128)}', space=vmem, size = 0x9000, scoped, tag = 'internal scratch']
  #allocation2 [shape = 'f32[512,128]{1,0:T(8,128)}', space=vmem, size = 0x40000, scoped, tag = 'scratch operand']
  %s0 = inlined_call_operand.vmem [shape: bf16[512,512], index: 0, kind: input, shape index: {}]
  %s1 = inlined_call_operand.vmem [shape: bf16[512,128], index: 1, kind: input, shape index: {}]
  %s2 = inlined_call_operand.vmem [shape: f32[512,1], index: 2, kind: input, shape index: {}]
  %s3 = inlined_call_operand.vmem [shape: f32[1,128], index: 3, kind: input, shape index: {}]
  %s4 = inlined_call_operand.vmem [shape: bf16[512,128], index: 4, kind: output, shape index: {}]
  %s5 = sld [smem:[#allocation0]]
  $region34: #{gcn_forward.5} parent=0
    _
  %s7 = ssub.s32 1, %s5
  %s8 = scalar_select 0, %s7, %s5
  // Predicated region
  $region2: #{gcn_forward.5} parent=0 // pred_check
    _
  $region3: #{gcn_forward.5} parent=0 // pred_check_branch
    %10 = sbr.rel (0) target = $region5
  $region4: #{gcn_forward.5} parent=0 // pred_region
    _
  $region5: #{gcn_forward.5} parent=0 // pred_fallthru
    _
  // Predicated region
  $region6: #{gcn_forward.5} parent=0 // pred_check
    _
  $region7: #{gcn_forward.5} parent=0 // pred_check_branch
    %12 = sbr.rel (0) target = $region9
  $region8: #{gcn_forward.5} parent=0 // pred_region
    _
  $region9: #{gcn_forward.5} parent=0 // pred_fallthru
    _
  // Predicated region
  $region10: #{gcn_forward.5} parent=0 // pred_check
    _
  $region11: #{gcn_forward.5} parent=0 // pred_check_branch
    %14 = sbr.rel (0) target = $region13
  $region12: #{gcn_forward.5} parent=0 // pred_region
    _
  $region13: #{gcn_forward.5} parent=0 // pred_fallthru
    _
  // Predicated region
  $region14: #{gcn_forward.5} parent=0 // pred_check
    _
  $region15: #{gcn_forward.5} parent=0 // pred_check_branch
    %16 = sbr.rel (0) target = $region17
  $region16: #{gcn_forward.5} parent=0 // pred_region
    _
  $region17: #{gcn_forward.5} parent=0 // pred_fallthru
    _
  %p17 = scmp.eq.s32.totalorder 0, 0
  // Predicated region
  $region18: #{gcn_forward.5} parent=0 // pred_check
    %p18 = pneg %p17
  $region19: #{gcn_forward.5} parent=0 // pred_check_branch
    %20 = sbr.rel (%p18) target = $region21
  $region20: #{gcn_forward.5} parent=0 // pred_region
    %21 = vst [vmem:[#allocation2] sm:$0xff] 0.0
    %22 = vst [vmem:[#allocation2 + $0x8] sm:$0xff] 0.0
    %23 = vst [vmem:[#allocation2 + $0x10] sm:$0xff] 0.0
    %24 = vst [vmem:[#allocation2 + $0x18] sm:$0xff] 0.0
    %25 = vst [vmem:[#allocation2 + $0x20] sm:$0xff] 0.0
    %26 = vst [vmem:[#allocation2 + $0x28] sm:$0xff] 0.0
    %27 = vst [vmem:[#allocation2 + $0x30] sm:$0xff] 0.0
    %28 = vst [vmem:[#allocation2 + $0x38] sm:$0xff] 0.0
    %29 = vst [vmem:[#allocation2 + $0x40] sm:$0xff] 0.0
    %30 = vst [vmem:[#allocation2 + $0x48] sm:$0xff] 0.0
    %31 = vst [vmem:[#allocation2 + $0x50] sm:$0xff] 0.0
    %32 = vst [vmem:[#allocation2 + $0x58] sm:$0xff] 0.0
    %33 = vst [vmem:[#allocation2 + $0x60] sm:$0xff] 0.0
    %34 = vst [vmem:[#allocation2 + $0x68] sm:$0xff] 0.0
    %35 = vst [vmem:[#allocation2 + $0x70] sm:$0xff] 0.0
    %36 = vst [vmem:[#allocation2 + $0x78] sm:$0xff] 0.0
    %37 = vst [vmem:[#allocation2 + $0x80] sm:$0xff] 0.0
    %38 = vst [vmem:[#allocation2 + $0x88] sm:$0xff] 0.0
    %39 = vst [vmem:[#allocation2 + $0x90] sm:$0xff] 0.0
    %40 = vst [vmem:[#allocation2 + $0x98] sm:$0xff] 0.0
    %41 = vst [vmem:[#allocation2 + $0xa0] sm:$0xff] 0.0
    %42 = vst [vmem:[#allocation2 + $0xa8] sm:$0xff] 0.0
    %43 = vst [vmem:[#allocation2 + $0xb0] sm:$0xff] 0.0
    %44 = vst [vmem:[#allocation2 + $0xb8] sm:$0xff] 0.0
    %45 = vst [vmem:[#allocation2 + $0xc0] sm:$0xff] 0.0
    %46 = vst [vmem:[#allocation2 + $0xc8] sm:$0xff] 0.0
    %47 = vst [vmem:[#allocation2 + $0xd0] sm:$0xff] 0.0
    %48 = vst [vmem:[#allocation2 + $0xd8] sm:$0xff] 0.0
    %49 = vst [vmem:[#allocation2 + $0xe0] sm:$0xff] 0.0
    %50 = vst [vmem:[#allocation2 + $0xe8] sm:$0xff] 0.0
    %51 = vst [vmem:[#allocation2 + $0xf0] sm:$0xff] 0.0
    %52 = vst [vmem:[#allocation2 + $0xf8] sm:$0xff] 0.0
    %53 = vst [vmem:[#allocation2 + $0x100] sm:$0xff] 0.0
    %54 = vst [vmem:[#allocation2 + $0x108] sm:$0xff] 0.0
    %55 = vst [vmem:[#allocation2 + $0x110] sm:$0xff] 0.0
    %56 = vst [vmem:[#allocation2 + $0x118] sm:$0xff] 0.0
    %57 = vst [vmem:[#allocation2 + $0x120] sm:$0xff] 0.0
    %58 = vst [vmem:[#allocation2 + $0x128] sm:$0xff] 0.0
    %59 = vst [vmem:[#allocation2 + $0x130] sm:$0xff] 0.0
    %60 = vst [vmem:[#allocation2 + $0x138] sm:$0xff] 0.0
    %61 = vst [vmem:[#allocation2 + $0x140] sm:$0xff] 0.0
    %62 = vst [vmem:[#allocation2 + $0x148] sm:$0xff] 0.0
    %63 = vst [vmem:[#allocation2 + $0x150] sm:$0xff] 0.0
    %64 = vst [vmem:[#allocation2 + $0x158] sm:$0xff] 0.0
    %65 = vst [vmem:[#allocation2 + $0x160] sm:$0xff] 0.0
    %66 = vst [vmem:[#allocation2 + $0x168] sm:$0xff] 0.0
    %67 = vst [vmem:[#allocation2 + $0x170] sm:$0xff] 0.0
    %68 = vst [vmem:[#allocation2 + $0x178] sm:$0xff] 0.0
    %69 = vst [vmem:[#allocation2 + $0x180] sm:$0xff] 0.0
    %70 = vst [vmem:[#allocation2 + $0x188] sm:$0xff] 0.0
    %71 = vst [vmem:[#allocation2 + $0x190] sm:$0xff] 0.0
    %72 = vst [vmem:[#allocation2 + $0x198] sm:$0xff] 0.0
    %73 = vst [vmem:[#allocation2 + $0x1a0] sm:$0xff] 0.0
    %74 = vst [vmem:[#allocation2 + $0x1a8] sm:$0xff] 0.0
    %75 = vst [vmem:[#allocation2 + $0x1b0] sm:$0xff] 0.0
    %76 = vst [vmem:[#allocation2 + $0x1b8] sm:$0xff] 0.0
    %77 = vst [vmem:[#allocation2 + $0x1c0] sm:$0xff] 0.0
    %78 = vst [vmem:[#allocation2 + $0x1c8] sm:$0xff] 0.0
    %79 = vst [vmem:[#allocation2 + $0x1d0] sm:$0xff] 0.0
    %80 = vst [vmem:[#allocation2 + $0x1d8] sm:$0xff] 0.0
    %81 = vst [vmem:[#allocation2 + $0x1e0] sm:$0xff] 0.0
    %82 = vst [vmem:[#allocation2 + $0x1e8] sm:$0xff] 0.0
    %83 = vst [vmem:[#allocation2 + $0x1f0] sm:$0xff] 0.0
    %84 = vst [vmem:[#allocation2 + $0x1f8] sm:$0xff] 0.0
  $region21: #{gcn_forward.5} parent=0 // pred_fallthru
    _
  %s85 = smul.u32 0, 512
  %s86 = sshra.s32 %s85, 3
  %s87 = sand.u32 %s85, 7
  %s88 = smul.addr %s86, 4
  %s89 = scalar_lea.vmem %s1, %s88
  %v90 = vld [vmem:[%s89] sm:$0xf]
  %v91 = vld [vmem:[%s89 + $0x4] sm:$0xf]
  %v92 = vld [vmem:[%s89 + $0x8] sm:$0xf]
  %v93 = vld [vmem:[%s89 + $0xc] sm:$0xf]
  %v94 = vld [vmem:[%s89 + $0x10] sm:$0xf]
  %v95 = vld [vmem:[%s89 + $0x14] sm:$0xf]
  %v96 = vld [vmem:[%s89 + $0x18] sm:$0xf]
  %v97 = vld [vmem:[%s89 + $0x1c] sm:$0xf]
  %v98 = vld [vmem:[%s89 + $0x20] sm:$0xf]
  %v99 = vld [vmem:[%s89 + $0x24] sm:$0xf]
  %v100 = vld [vmem:[%s89 + $0x28] sm:$0xf]
  %v101 = vld [vmem:[%s89 + $0x2c] sm:$0xf]
  %v102 = vld [vmem:[%s89 + $0x30] sm:$0xf]
  %v103 = vld [vmem:[%s89 + $0x34] sm:$0xf]
  %v104 = vld [vmem:[%s89 + $0x38] sm:$0xf]
  %v105 = vld [vmem:[%s89 + $0x3c] sm:$0xf]
  %v106 = vld [vmem:[%s89 + $0x40] sm:$0xf]
  %v107 = vld [vmem:[%s89 + $0x44] sm:$0xf]
  %v108 = vld [vmem:[%s89 + $0x48] sm:$0xf]
  %v109 = vld [vmem:[%s89 + $0x4c] sm:$0xf]
  %v110 = vld [vmem:[%s89 + $0x50] sm:$0xf]
  %v111 = vld [vmem:[%s89 + $0x54] sm:$0xf]
  %v112 = vld [vmem:[%s89 + $0x58] sm:$0xf]
  %v113 = vld [vmem:[%s89 + $0x5c] sm:$0xf]
  %v114 = vld [vmem:[%s89 + $0x60] sm:$0xf]
  %v115 = vld [vmem:[%s89 + $0x64] sm:$0xf]
  %v116 = vld [vmem:[%s89 + $0x68] sm:$0xf]
  %v117 = vld [vmem:[%s89 + $0x6c] sm:$0xf]
  %v118 = vld [vmem:[%s89 + $0x70] sm:$0xf]
  %v119 = vld [vmem:[%s89 + $0x74] sm:$0xf]
  %v120 = vld [vmem:[%s89 + $0x78] sm:$0xf]
  %v121 = vld [vmem:[%s89 + $0x7c] sm:$0xf]
  %v122 = vld [vmem:[%s89 + $0x80] sm:$0xf]
  %v123 = vld [vmem:[%s89 + $0x84] sm:$0xf]
  %v124 = vld [vmem:[%s89 + $0x88] sm:$0xf]
  %v125 = vld [vmem:[%s89 + $0x8c] sm:$0xf]
  %v126 = vld [vmem:[%s89 + $0x90] sm:$0xf]
  %v127 = vld [vmem:[%s89 + $0x94] sm:$0xf]
  %v128 = vld [vmem:[%s89 + $0x98] sm:$0xf]
  %v129 = vld [vmem:[%s89 + $0x9c] sm:$0xf]
  %v130 = vld [vmem:[%s89 + $0xa0] sm:$0xf]
  %v131 = vld [vmem:[%s89 + $0xa4] sm:$0xf]
  %v132 = vld [vmem:[%s89 + $0xa8] sm:$0xf]
  %v133 = vld [vmem:[%s89 + $0xac] sm:$0xf]
  %v134 = vld [vmem:[%s89 + $0xb0] sm:$0xf]
  %v135 = vld [vmem:[%s89 + $0xb4] sm:$0xf]
  %v136 = vld [vmem:[%s89 + $0xb8] sm:$0xf]
  %v137 = vld [vmem:[%s89 + $0xbc] sm:$0xf]
  %v138 = vld [vmem:[%s89 + $0xc0] sm:$0xf]
  %v139 = vld [vmem:[%s89 + $0xc4] sm:$0xf]
  %v140 = vld [vmem:[%s89 + $0xc8] sm:$0xf]
  %v141 = vld [vmem:[%s89 + $0xcc] sm:$0xf]
  %v142 = vld [vmem:[%s89 + $0xd0] sm:$0xf]
  %v143 = vld [vmem:[%s89 + $0xd4] sm:$0xf]
  %v144 = vld [vmem:[%s89 + $0xd8] sm:$0xf]
  %v145 = vld [vmem:[%s89 + $0xdc] sm:$0xf]
  %v146 = vld [vmem:[%s89 + $0xe0] sm:$0xf]
  %v147 = vld [vmem:[%s89 + $0xe4] sm:$0xf]
  %v148 = vld [vmem:[%s89 + $0xe8] sm:$0xf]
  %v149 = vld [vmem:[%s89 + $0xec] sm:$0xf]
  %v150 = vld [vmem:[%s89 + $0xf0] sm:$0xf]
  %v151 = vld [vmem:[%s89 + $0xf4] sm:$0xf]
  %v152 = vld [vmem:[%s89 + $0xf8] sm:$0xf]
  %v153 = vld [vmem:[%s89 + $0xfc] sm:$0xf]
  %v154 = vld [vmem:[#allocation2] sm:$0xff]
  %v155 = vld [vmem:[#allocation2 + $0x8] sm:$0xff]
  %v156 = vld [vmem:[#allocation2 + $0x10] sm:$0xff]
  %v157 = vld [vmem:[#allocation2 + $0x18] sm:$0xff]
  %v158 = vld [vmem:[#allocation2 + $0x20] sm:$0xff]
  %v159 = vld [vmem:[#allocation2 + $0x28] sm:$0xff]
  %v160 = vld [vmem:[#allocation2 + $0x30] sm:$0xff]
  %v161 = vld [vmem:[#allocation2 + $0x38] sm:$0xff]
  %v162 = vld [vmem:[#allocation2 + $0x40] sm:$0xff]
  %v163 = vld [vmem:[#allocation2 + $0x48] sm:$0xff]
  %v164 = vld [vmem:[#allocation2 + $0x50] sm:$0xff]
  %v165 = vld [vmem:[#allocation2 + $0x58] sm:$0xff]
  %v166 = vld [vmem:[#allocation2 + $0x60] sm:$0xff]
  %v167 = vld [vmem:[#allocation2 + $0x68] sm:$0xff]
  %v168 = vld [vmem:[#allocation2 + $0x70] sm:$0xff]
  %v169 = vld [vmem:[#allocation2 + $0x78] sm:$0xff]
  %v170 = vld [vmem:[#allocation2 + $0x80] sm:$0xff]
  %v171 = vld [vmem:[#allocation2 + $0x88] sm:$0xff]
  %v172 = vld [vmem:[#allocation2 + $0x90] sm:$0xff]
  %v173 = vld [vmem:[#allocation2 + $0x98] sm:$0xff]
  %v174 = vld [vmem:[#allocation2 + $0xa0] sm:$0xff]
  %v175 = vld [vmem:[#allocation2 + $0xa8] sm:$0xff]
  %v176 = vld [vmem:[#allocation2 + $0xb0] sm:$0xff]
  %v177 = vld [vmem:[#allocation2 + $0xb8] sm:$0xff]
  %v178 = vld [vmem:[#allocation2 + $0xc0] sm:$0xff]
  %v179 = vld [vmem:[#allocation2 + $0xc8] sm:$0xff]
  %v180 = vld [vmem:[#allocation2 + $0xd0] sm:$0xff]
  %v181 = vld [vmem:[#allocation2 + $0xd8] sm:$0xff]
  %v182 = vld [vmem:[#allocation2 + $0xe0] sm:$0xff]
  %v183 = vld [vmem:[#allocation2 + $0xe8] sm:$0xff]
  %v184 = vld [vmem:[#allocation2 + $0xf0] sm:$0xff]
  %v185 = vld [vmem:[#allocation2 + $0xf8] sm:$0xff]
  %v186 = vld [vmem:[#allocation2 + $0x100] sm:$0xff]
  %v187 = vld [vmem:[#allocation2 + $0x108] sm:$0xff]
  %v188 = vld [vmem:[#allocation2 + $0x110] sm:$0xff]
  %v189 = vld [vmem:[#allocation2 + $0x118] sm:$0xff]
  %v190 = vld [vmem:[#allocation2 + $0x120] sm:$0xff]
  %v191 = vld [vmem:[#allocation2 + $0x128] sm:$0xff]
  %v192 = vld [vmem:[#allocation2 + $0x130] sm:$0xff]
  %v193 = vld [vmem:[#allocation2 + $0x138] sm:$0xff]
  %v194 = vld [vmem:[#allocation2 + $0x140] sm:$0xff]
  %v195 = vld [vmem:[#allocation2 + $0x148] sm:$0xff]
  %v196 = vld [vmem:[#allocation2 + $0x150] sm:$0xff]
  %v197 = vld [vmem:[#allocation2 + $0x158] sm:$0xff]
  %v198 = vld [vmem:[#allocation2 + $0x160] sm:$0xff]
  %v199 = vld [vmem:[#allocation2 + $0x168] sm:$0xff]
  %v200 = vld [vmem:[#allocation2 + $0x170] sm:$0xff]
  %v201 = vld [vmem:[#allocation2 + $0x178] sm:$0xff]
  %v202 = vld [vmem:[#allocation2 + $0x180] sm:$0xff]
  %v203 = vld [vmem:[#allocation2 + $0x188] sm:$0xff]
  %v204 = vld [vmem:[#allocation2 + $0x190] sm:$0xff]
  %v205 = vld [vmem:[#allocation2 + $0x198] sm:$0xff]
  %v206 = vld [vmem:[#allocation2 + $0x1a0] sm:$0xff]
  %v207 = vld [vmem:[#allocation2 + $0x1a8] sm:$0xff]
  %v208 = vld [vmem:[#allocation2 + $0x1b0] sm:$0xff]
  %v209 = vld [vmem:[#allocation2 + $0x1b8] sm:$0xff]
  %v210 = vld [vmem:[#allocation2 + $0x1c0] sm:$0xff]
  %v211 = vld [vmem:[#allocation2 + $0x1c8] sm:$0xff]
  %v212 = vld [vmem:[#allocation2 + $0x1d0] sm:$0xff]
  %v213 = vld [vmem:[#allocation2 + $0x1d8] sm:$0xff]
  %v214 = vld [vmem:[#allocation2 + $0x1e0] sm:$0xff]
  %v215 = vld [vmem:[#allocation2 + $0x1e8] sm:$0xff]
  %v216 = vld [vmem:[#allocation2 + $0x1f0] sm:$0xff]
  %v217 = vld [vmem:[#allocation2 + $0x1f8] sm:$0xff]
  %v218 = vld [vmem:[%s0] sm:$0xff]
  %v219 = vld [vmem:[%s0 + $0x8] sm:$0xff]
  %v220 = vld [vmem:[%s0 + $0x10] sm:$0xff]
  %v221 = vld [vmem:[%s0 + $0x18] sm:$0xff]
  %v222 = vld [vmem:[%s0 + $0x20] sm:$0xff]
  %v223 = vld [vmem:[%s0 + $0x28] sm:$0xff]
  %v224 = vld [vmem:[%s0 + $0x30] sm:$0xff]
  %v225 = vld [vmem:[%s0 + $0x38] sm:$0xff]
  %v226 = vld [vmem:[%s0 + $0x40] sm:$0xff]
  %v227 = vld [vmem:[%s0 + $0x48] sm:$0xff]
  %v228 = vld [vmem:[%s0 + $0x50] sm:$0xff]
  %v229 = vld [vmem:[%s0 + $0x58] sm:$0xff]
  %v230 = vld [vmem:[%s0 + $0x60] sm:$0xff]
  %v231 = vld [vmem:[%s0 + $0x68] sm:$0xff]
  %v232 = vld [vmem:[%s0 + $0x70] sm:$0xff]
  %v233 = vld [vmem:[%s0 + $0x78] sm:$0xff]
  %v234 = vld [vmem:[%s0 + $0x80] sm:$0xff]
  %v235 = vld [vmem:[%s0 + $0x88] sm:$0xff]
  %v236 = vld [vmem:[%s0 + $0x90] sm:$0xff]
  %v237 = vld [vmem:[%s0 + $0x98] sm:$0xff]
  %v238 = vld [vmem:[%s0 + $0xa0] sm:$0xff]
  %v239 = vld [vmem:[%s0 + $0xa8] sm:$0xff]
  %v240 = vld [vmem:[%s0 + $0xb0] sm:$0xff]
  %v241 = vld [vmem:[%s0 + $0xb8] sm:$0xff]
  %v242 = vld [vmem:[%s0 + $0xc0] sm:$0xff]
  %v243 = vld [vmem:[%s0 + $0xc8] sm:$0xff]
  %v244 = vld [vmem:[%s0 + $0xd0] sm:$0xff]
  %v245 = vld [vmem:[%s0 + $0xd8] sm:$0xff]
  %v246 = vld [vmem:[%s0 + $0xe0] sm:$0xff]
  %v247 = vld [vmem:[%s0 + $0xe8] sm:$0xff]
  %v248 = vld [vmem:[%s0 + $0xf0] sm:$0xff]
  %v249 = vld [vmem:[%s0 + $0xf8] sm:$0xff]
  %v250 = vld [vmem:[%s0 + $0x100] sm:$0xff]
  %v251 = vld [vmem:[%s0 + $0x108] sm:$0xff]
  %v252 = vld [vmem:[%s0 + $0x110] sm:$0xff]
  %v253 = vld [vmem:[%s0 + $0x118] sm:$0xff]
  %v254 = vld [vmem:[%s0 + $0x120] sm:$0xff]
  %v255 = vld [vmem:[%s0 + $0x128] sm:$0xff]
  %v256 = vld [vmem:[%s0 + $0x130] sm:$0xff]
  %v257 = vld [vmem:[%s0 + $0x138] sm:$0xff]
  %v258 = vld [vmem:[%s0 + $0x140] sm:$0xff]
  %v259 = vld [vmem:[%s0 + $0x148] sm:$0xff]
  %v260 = vld [vmem:[%s0 + $0x150] sm:$0xff]
  %v261 = vld [vmem:[%s0 + $0x158] sm:$0xff]
  %v262 = vld [vmem:[%s0 + $0x160] sm:$0xff]
  %v263 = vld [vmem:[%s0 + $0x168] sm:$0xff]
  %v264 = vld [vmem:[%s0 + $0x170] sm:$0xff]
  %v265 = vld [vmem:[%s0 + $0x178] sm:$0xff]
  %v266 = vld [vmem:[%s0 + $0x180] sm:$0xff]
  %v267 = vld [vmem:[%s0 + $0x188] sm:$0xff]
  %v268 = vld [vmem:[%s0 + $0x190] sm:$0xff]
  %v269 = vld [vmem:[%s0 + $0x198] sm:$0xff]
  %v270 = vld [vmem:[%s0 + $0x1a0] sm:$0xff]
  %v271 = vld [vmem:[%s0 + $0x1a8] sm:$0xff]
  %v272 = vld [vmem:[%s0 + $0x1b0] sm:$0xff]
  %v273 = vld [vmem:[%s0 + $0x1b8] sm:$0xff]
  %v274 = vld [vmem:[%s0 + $0x1c0] sm:$0xff]
  %v275 = vld [vmem:[%s0 + $0x1c8] sm:$0xff]
  %v276 = vld [vmem:[%s0 + $0x1d0] sm:$0xff]
  %v277 = vld [vmem:[%s0 + $0x1d8] sm:$0xff]
  %v278 = vld [vmem:[%s0 + $0x1e0] sm:$0xff]
  %v279 = vld [vmem:[%s0 + $0x1e8] sm:$0xff]
  %v280 = vld [vmem:[%s0 + $0x1f0] sm:$0xff]
  %v281 = vld [vmem:[%s0 + $0x1f8] sm:$0xff]
  %v282 = vld [vmem:[%s0 + $0x200] sm:$0xff]
  %v283 = vld [vmem:[%s0 + $0x208] sm:$0xff]
  %v284 = vld [vmem:[%s0 + $0x210] sm:$0xff]
  %v285 = vld [vmem:[%s0 + $0x218] sm:$0xff]
  %v286 = vld [vmem:[%s0 + $0x220] sm:$0xff]
  %v287 = vld [vmem:[%s0 + $0x228] sm:$0xff]
  %v288 = vld [vmem:[%s0 + $0x230] sm:$0xff]
  %v289 = vld [vmem:[%s0 + $0x238] sm:$0xff]
  %v290 = vld [vmem:[%s0 + $0x240] sm:$0xff]
  %v291 = vld [vmem:[%s0 + $0x248] sm:$0xff]
  %v292 = vld [vmem:[%s0 + $0x250] sm:$0xff]
  %v293 = vld [vmem:[%s0 + $0x258] sm:$0xff]
  %v294 = vld [vmem:[%s0 + $0x260] sm:$0xff]
  %v295 = vld [vmem:[%s0 + $0x268] sm:$0xff]
  %v296 = vld [vmem:[%s0 + $0x270] sm:$0xff]
  %v297 = vld [vmem:[%s0 + $0x278] sm:$0xff]
  %v298 = vld [vmem:[%s0 + $0x280] sm:$0xff]
  %v299 = vld [vmem:[%s0 + $0x288] sm:$0xff]
  %v300 = vld [vmem:[%s0 + $0x290] sm:$0xff]
  %v301 = vld [vmem:[%s0 + $0x298] sm:$0xff]
  %v302 = vld [vmem:[%s0 + $0x2a0] sm:$0xff]
  %v303 = vld [vmem:[%s0 + $0x2a8] sm:$0xff]
  %v304 = vld [vmem:[%s0 + $0x2b0] sm:$0xff]
  %v305 = vld [vmem:[%s0 + $0x2b8] sm:$0xff]
  %v306 = vld [vmem:[%s0 + $0x2c0] sm:$0xff]
  %v307 = vld [vmem:[%s0 + $0x2c8] sm:$0xff]
  %v308 = vld [vmem:[%s0 + $0x2d0] sm:$0xff]
  %v309 = vld [vmem:[%s0 + $0x2d8] sm:$0xff]
  %v310 = vld [vmem:[%s0 + $0x2e0] sm:$0xff]
  %v311 = vld [vmem:[%s0 + $0x2e8] sm:$0xff]
  %v312 = vld [vmem:[%s0 + $0x2f0] sm:$0xff]
  %v313 = vld [vmem:[%s0 + $0x2f8] sm:$0xff]
  %v314 = vld [vmem:[%s0 + $0x300] sm:$0xff]
  %v315 = vld [vmem:[%s0 + $0x308] sm:$0xff]
  %v316 = vld [vmem:[%s0 + $0x310] sm:$0xff]
  %v317 = vld [vmem:[%s0 + $0x318] sm:$0xff]
  %v318 = vld [vmem:[%s0 + $0x320] sm:$0xff]
  %v319 = vld [vmem:[%s0 + $0x328] sm:$0xff]
  %v320 = vld [vmem:[%s0 + $0x330] sm:$0xff]
  %v321 = vld [vmem:[%s0 + $0x338] sm:$0xff]
  %v322 = vld [vmem:[%s0 + $0x340] sm:$0xff]
  %v323 = vld [vmem:[%s0 + $0x348] sm:$0xff]
  %v324 = vld [vmem:[%s0 + $0x350] sm:$0xff]
  %v325 = vld [vmem:[%s0 + $0x358] sm:$0xff]
  %v326 = vld [vmem:[%s0 + $0x360] sm:$0xff]
  %v327 = vld [vmem:[%s0 + $0x368] sm:$0xff]
  %v328 = vld [vmem:[%s0 + $0x370] sm:$0xff]
  %v329 = vld [vmem:[%s0 + $0x378] sm:$0xff]
  %v330 = vld [vmem:[%s0 + $0x380] sm:$0xff]
  %v331 = vld [vmem:[%s0 + $0x388] sm:$0xff]
  %v332 = vld [vmem:[%s0 + $0x390] sm:$0xff]
  %v333 = vld [vmem:[%s0 + $0x398] sm:$0xff]
  %v334 = vld [vmem:[%s0 + $0x3a0] sm:$0xff]
  %v335 = vld [vmem:[%s0 + $0x3a8] sm:$0xff]
  %v336 = vld [vmem:[%s0 + $0x3b0] sm:$0xff]
  %v337 = vld [vmem:[%s0 + $0x3b8] sm:$0xff]
  %v338 = vld [vmem:[%s0 + $0x3c0] sm:$0xff]
  %v339 = vld [vmem:[%s0 + $0x3c8] sm:$0xff]
  %v340 = vld [vmem:[%s0 + $0x3d0] sm:$0xff]
  %v341 = vld [vmem:[%s0 + $0x3d8] sm:$0xff]
  %v342 = vld [vmem:[%s0 + $0x3e0] sm:$0xff]
  %v343 = vld [vmem:[%s0 + $0x3e8] sm:$0xff]
  %v344 = vld [vmem:[%s0 + $0x3f0] sm:$0xff]
  %v345 = vld [vmem:[%s0 + $0x3f8] sm:$0xff]
  %v474 = vunpack.c.l.b16 %v218
  %v475 = vunpack.c.h.b16 %v218
  %v476 = vunpack.c.l.b16 %v219
  %v477 = vunpack.c.h.b16 %v219
  %v478 = vunpack.c.l.b16 %v220
  %v479 = vunpack.c.h.b16 %v220
  %v480 = vunpack.c.l.b16 %v221
  %v481 = vunpack.c.h.b16 %v221
  %v482 = vunpack.c.l.b16 %v222
  %v483 = vunpack.c.h.b16 %v222
  %v484 = vunpack.c.l.b16 %v223
  %v485 = vunpack.c.h.b16 %v223
  %v486 = vunpack.c.l.b16 %v224
  %v487 = vunpack.c.h.b16 %v224
  %v488 = vunpack.c.l.b16 %v225
  %v489 = vunpack.c.h.b16 %v225
  %v490 = vunpack.c.l.b16 %v226
  %v491 = vunpack.c.h.b16 %v226
  %v492 = vunpack.c.l.b16 %v227
  %v493 = vunpack.c.h.b16 %v227
  %v494 = vunpack.c.l.b16 %v228
  %v495 = vunpack.c.h.b16 %v228
  %v496 = vunpack.c.l.b16 %v229
  %v497 = vunpack.c.h.b16 %v229
  %v498 = vunpack.c.l.b16 %v230
  %v499 = vunpack.c.h.b16 %v230
  %v500 = vunpack.c.l.b16 %v231
  %v501 = vunpack.c.h.b16 %v231
  %v502 = vunpack.c.l.b16 %v232
  %v503 = vunpack.c.h.b16 %v232
  %v504 = vunpack.c.l.b16 %v233
  %v505 = vunpack.c.h.b16 %v233
  %v506 = vunpack.c.l.b16 %v234
  %v507 = vunpack.c.h.b16 %v234
  %v508 = vunpack.c.l.b16 %v235
  %v509 = vunpack.c.h.b16 %v235
  %v510 = vunpack.c.l.b16 %v236
  %v511 = vunpack.c.h.b16 %v236
  %v512 = vunpack.c.l.b16 %v237
  %v513 = vunpack.c.h.b16 %v237
  %v514 = vunpack.c.l.b16 %v238
  %v515 = vunpack.c.h.b16 %v238
  %v516 = vunpack.c.l.b16 %v239
  %v517 = vunpack.c.h.b16 %v239
  %v518 = vunpack.c.l.b16 %v240
  %v519 = vunpack.c.h.b16 %v240
  %v520 = vunpack.c.l.b16 %v241
  %v521 = vunpack.c.h.b16 %v241
  %v522 = vunpack.c.l.b16 %v242
  %v523 = vunpack.c.h.b16 %v242
  %v524 = vunpack.c.l.b16 %v243
  %v525 = vunpack.c.h.b16 %v243
  %v526 = vunpack.c.l.b16 %v244
  %v527 = vunpack.c.h.b16 %v244
  %v528 = vunpack.c.l.b16 %v245
  %v529 = vunpack.c.h.b16 %v245
  %v530 = vunpack.c.l.b16 %v246
  %v531 = vunpack.c.h.b16 %v246
  %v532 = vunpack.c.l.b16 %v247
  %v533 = vunpack.c.h.b16 %v247
  %v534 = vunpack.c.l.b16 %v248
  %v535 = vunpack.c.h.b16 %v248
  %v536 = vunpack.c.l.b16 %v249
  %v537 = vunpack.c.h.b16 %v249
  %v538 = vunpack.c.l.b16 %v250
  %v539 = vunpack.c.h.b16 %v250
  %v540 = vunpack.c.l.b16 %v251
  %v541 = vunpack.c.h.b16 %v251
  %v542 = vunpack.c.l.b16 %v252
  %v543 = vunpack.c.h.b16 %v252
  %v544 = vunpack.c.l.b16 %v253
  %v545 = vunpack.c.h.b16 %v253
  %v546 = vunpack.c.l.b16 %v254
  %v547 = vunpack.c.h.b16 %v254
  %v548 = vunpack.c.l.b16 %v255
  %v549 = vunpack.c.h.b16 %v255
  %v550 = vunpack.c.l.b16 %v256
  %v551 = vunpack.c.h.b16 %v256
  %v552 = vunpack.c.l.b16 %v257
  %v553 = vunpack.c.h.b16 %v257
  %v554 = vunpack.c.l.b16 %v258
  %v555 = vunpack.c.h.b16 %v258
  %v556 = vunpack.c.l.b16 %v259
  %v557 = vunpack.c.h.b16 %v259
  %v558 = vunpack.c.l.b16 %v260
  %v559 = vunpack.c.h.b16 %v260
  %v560 = vunpack.c.l.b16 %v261
  %v561 = vunpack.c.h.b16 %v261
  %v562 = vunpack.c.l.b16 %v262
  %v563 = vunpack.c.h.b16 %v262
  %v564 = vunpack.c.l.b16 %v263
  %v565 = vunpack.c.h.b16 %v263
  %v566 = vunpack.c.l.b16 %v264
  %v567 = vunpack.c.h.b16 %v264
  %v568 = vunpack.c.l.b16 %v265
  %v569 = vunpack.c.h.b16 %v265
  %v570 = vunpack.c.l.b16 %v266
  %v571 = vunpack.c.h.b16 %v266
  %v572 = vunpack.c.l.b16 %v267
  %v573 = vunpack.c.h.b16 %v267
  %v574 = vunpack.c.l.b16 %v268
  %v575 = vunpack.c.h.b16 %v268
  %v576 = vunpack.c.l.b16 %v269
  %v577 = vunpack.c.h.b16 %v269
  %v578 = vunpack.c.l.b16 %v270
  %v579 = vunpack.c.h.b16 %v270
  %v580 = vunpack.c.l.b16 %v271
  %v581 = vunpack.c.h.b16 %v271
  %v582 = vunpack.c.l.b16 %v272
  %v583 = vunpack.c.h.b16 %v272
  %v584 = vunpack.c.l.b16 %v273
  %v585 = vunpack.c.h.b16 %v273
  %v586 = vunpack.c.l.b16 %v274
  %v587 = vunpack.c.h.b16 %v274
  %v588 = vunpack.c.l.b16 %v275
  %v589 = vunpack.c.h.b16 %v275
  %v590 = vunpack.c.l.b16 %v276
  %v591 = vunpack.c.h.b16 %v276
  %v592 = vunpack.c.l.b16 %v277
  %v593 = vunpack.c.h.b16 %v277
  %v594 = vunpack.c.l.b16 %v278
  %v595 = vunpack.c.h.b16 %v278
  %v596 = vunpack.c.l.b16 %v279
  %v597 = vunpack.c.h.b16 %v279
  %v598 = vunpack.c.l.b16 %v280
  %v599 = vunpack.c.h.b16 %v280
  %v600 = vunpack.c.l.b16 %v281
  %v601 = vunpack.c.h.b16 %v281
  %v602 = vunpack.c.l.b16 %v282
  %v603 = vunpack.c.h.b16 %v282
  %v604 = vunpack.c.l.b16 %v283
  %v605 = vunpack.c.h.b16 %v283
  %v606 = vunpack.c.l.b16 %v284
  %v607 = vunpack.c.h.b16 %v284
  %v608 = vunpack.c.l.b16 %v285
  %v609 = vunpack.c.h.b16 %v285
  %v610 = vunpack.c.l.b16 %v286
  %v611 = vunpack.c.h.b16 %v286
  %v612 = vunpack.c.l.b16 %v287
  %v613 = vunpack.c.h.b16 %v287
  %v614 = vunpack.c.l.b16 %v288
  %v615 = vunpack.c.h.b16 %v288
  %v616 = vunpack.c.l.b16 %v289
  %v617 = vunpack.c.h.b16 %v289
  %v618 = vunpack.c.l.b16 %v290
  %v619 = vunpack.c.h.b16 %v290
  %v620 = vunpack.c.l.b16 %v291
  %v621 = vunpack.c.h.b16 %v291
  %v622 = vunpack.c.l.b16 %v292
  %v623 = vunpack.c.h.b16 %v292
  %v624 = vunpack.c.l.b16 %v293
  %v625 = vunpack.c.h.b16 %v293
  %v626 = vunpack.c.l.b16 %v294
  %v627 = vunpack.c.h.b16 %v294
  %v628 = vunpack.c.l.b16 %v295
  %v629 = vunpack.c.h.b16 %v295
  %v630 = vunpack.c.l.b16 %v296
  %v631 = vunpack.c.h.b16 %v296
  %v632 = vunpack.c.l.b16 %v297
  %v633 = vunpack.c.h.b16 %v297
  %v634 = vunpack.c.l.b16 %v298
  %v635 = vunpack.c.h.b16 %v298
  %v636 = vunpack.c.l.b16 %v299
  %v637 = vunpack.c.h.b16 %v299
  %v638 = vunpack.c.l.b16 %v300
  %v639 = vunpack.c.h.b16 %v300
  %v640 = vunpack.c.l.b16 %v301
  %v641 = vunpack.c.h.b16 %v301
  %v642 = vunpack.c.l.b16 %v302
  %v643 = vunpack.c.h.b16 %v302
  %v644 = vunpack.c.l.b16 %v303
  %v645 = vunpack.c.h.b16 %v303
  %v646 = vunpack.c.l.b16 %v304
  %v647 = vunpack.c.h.b16 %v304
  %v648 = vunpack.c.l.b16 %v305
  %v649 = vunpack.c.h.b16 %v305
  %v650 = vunpack.c.l.b16 %v306
  %v651 = vunpack.c.h.b16 %v306
  %v652 = vunpack.c.l.b16 %v307
  %v653 = vunpack.c.h.b16 %v307
  %v654 = vunpack.c.l.b16 %v308
  %v655 = vunpack.c.h.b16 %v308
  %v656 = vunpack.c.l.b16 %v309
  %v657 = vunpack.c.h.b16 %v309
  %v658 = vunpack.c.l.b16 %v310
  %v659 = vunpack.c.h.b16 %v310
  %v660 = vunpack.c.l.b16 %v311
  %v661 = vunpack.c.h.b16 %v311
  %v662 = vunpack.c.l.b16 %v312
  %v663 = vunpack.c.h.b16 %v312
  %v664 = vunpack.c.l.b16 %v313
  %v665 = vunpack.c.h.b16 %v313
  %v666 = vunpack.c.l.b16 %v314
  %v667 = vunpack.c.h.b16 %v314
  %v668 = vunpack.c.l.b16 %v315
  %v669 = vunpack.c.h.b16 %v315
  %v670 = vunpack.c.l.b16 %v316
  %v671 = vunpack.c.h.b16 %v316
  %v672 = vunpack.c.l.b16 %v317
  %v673 = vunpack.c.h.b16 %v317
  %v674 = vunpack.c.l.b16 %v318
  %v675 = vunpack.c.h.b16 %v318
  %v676 = vunpack.c.l.b16 %v319
  %v677 = vunpack.c.h.b16 %v319
  %v678 = vunpack.c.l.b16 %v320
  %v679 = vunpack.c.h.b16 %v320
  %v680 = vunpack.c.l.b16 %v321
  %v681 = vunpack.c.h.b16 %v321
  %v682 = vunpack.c.l.b16 %v322
  %v683 = vunpack.c.h.b16 %v322
  %v684 = vunpack.c.l.b16 %v323
  %v685 = vunpack.c.h.b16 %v323
  %v686 = vunpack.c.l.b16 %v324
  %v687 = vunpack.c.h.b16 %v324
  %v688 = vunpack.c.l.b16 %v325
  %v689 = vunpack.c.h.b16 %v325
  %v690 = vunpack.c.l.b16 %v326
  %v691 = vunpack.c.h.b16 %v326
  %v692 = vunpack.c.l.b16 %v327
  %v693 = vunpack.c.h.b16 %v327
  %v694 = vunpack.c.l.b16 %v328
  %v695 = vunpack.c.h.b16 %v328
  %v696 = vunpack.c.l.b16 %v329
  %v697 = vunpack.c.h.b16 %v329
  %v698 = vunpack.c.l.b16 %v330
  %v699 = vunpack.c.h.b16 %v330
  %v700 = vunpack.c.l.b16 %v331
  %v701 = vunpack.c.h.b16 %v331
  %v702 = vunpack.c.l.b16 %v332
  %v703 = vunpack.c.h.b16 %v332
  %v704 = vunpack.c.l.b16 %v333
  %v705 = vunpack.c.h.b16 %v333
  %v706 = vunpack.c.l.b16 %v334
  %v707 = vunpack.c.h.b16 %v334
  %v708 = vunpack.c.l.b16 %v335
  %v709 = vunpack.c.h.b16 %v335
  %v710 = vunpack.c.l.b16 %v336
  %v711 = vunpack.c.h.b16 %v336
  %v712 = vunpack.c.l.b16 %v337
  %v713 = vunpack.c.h.b16 %v337
  %v714 = vunpack.c.l.b16 %v338
  %v715 = vunpack.c.h.b16 %v338
  %v716 = vunpack.c.l.b16 %v339
  %v717 = vunpack.c.h.b16 %v339
  %v718 = vunpack.c.l.b16 %v340
  %v719 = vunpack.c.h.b16 %v340
  %v720 = vunpack.c.l.b16 %v341
  %v721 = vunpack.c.h.b16 %v341
  %v722 = vunpack.c.l.b16 %v342
  %v723 = vunpack.c.h.b16 %v342
  %v724 = vunpack.c.l.b16 %v343
  %v725 = vunpack.c.h.b16 %v343
  %v726 = vunpack.c.l.b16 %v344
  %v727 = vunpack.c.h.b16 %v344
  %v728 = vunpack.c.l.b16 %v345
  %v729 = vunpack.c.h.b16 %v345
  %v730 = vpack.c.b16 %v478, %v474
  %v731 = vpack.c.b16 %v479, %v475
  %v732 = vpack.c.b16 %v480, %v476
  %v733 = vpack.c.b16 %v481, %v477
  %v734 = vpack.c.b16 %v486, %v482
  %v735 = vpack.c.b16 %v487, %v483
  %v736 = vpack.c.b16 %v488, %v484
  %v737 = vpack.c.b16 %v489, %v485
  %v738 = vpack.c.b16 %v494, %v490
  %v739 = vpack.c.b16 %v495, %v491
  %v740 = vpack.c.b16 %v496, %v492
  %v741 = vpack.c.b16 %v497, %v493
  %v742 = vpack.c.b16 %v502, %v498
  %v743 = vpack.c.b16 %v503, %v499
  %v744 = vpack.c.b16 %v504, %v500
  %v745 = vpack.c.b16 %v505, %v501
  %v746 = vpack.c.b16 %v510, %v506
  %v747 = vpack.c.b16 %v511, %v507
  %v748 = vpack.c.b16 %v512, %v508
  %v749 = vpack.c.b16 %v513, %v509
  %v750 = vpack.c.b16 %v518, %v514
  %v751 = vpack.c.b16 %v519, %v515
  %v752 = vpack.c.b16 %v520, %v516
  %v753 = vpack.c.b16 %v521, %v517
  %v754 = vpack.c.b16 %v526, %v522
  %v755 = vpack.c.b16 %v527, %v523
  %v756 = vpack.c.b16 %v528, %v524
  %v757 = vpack.c.b16 %v529, %v525
  %v758 = vpack.c.b16 %v534, %v530
  %v759 = vpack.c.b16 %v535, %v531
  %v760 = vpack.c.b16 %v536, %v532
  %v761 = vpack.c.b16 %v537, %v533
  %v762 = vpack.c.b16 %v542, %v538
  %v763 = vpack.c.b16 %v543, %v539
  %v764 = vpack.c.b16 %v544, %v540
  %v765 = vpack.c.b16 %v545, %v541
  %v766 = vpack.c.b16 %v550, %v546
  %v767 = vpack.c.b16 %v551, %v547
  %v768 = vpack.c.b16 %v552, %v548
  %v769 = vpack.c.b16 %v553, %v549
  %v770 = vpack.c.b16 %v558, %v554
  %v771 = vpack.c.b16 %v559, %v555
  %v772 = vpack.c.b16 %v560, %v556
  %v773 = vpack.c.b16 %v561, %v557
  %v774 = vpack.c.b16 %v566, %v562
  %v775 = vpack.c.b16 %v567, %v563
  %v776 = vpack.c.b16 %v568, %v564
  %v777 = vpack.c.b16 %v569, %v565
  %v778 = vpack.c.b16 %v574, %v570
  %v779 = vpack.c.b16 %v575, %v571
  %v780 = vpack.c.b16 %v576, %v572
  %v781 = vpack.c.b16 %v577, %v573
  %v782 = vpack.c.b16 %v582, %v578
  %v783 = vpack.c.b16 %v583, %v579
  %v784 = vpack.c.b16 %v584, %v580
  %v785 = vpack.c.b16 %v585, %v581
  %v786 = vpack.c.b16 %v590, %v586
  %v787 = vpack.c.b16 %v591, %v587
  %v788 = vpack.c.b16 %v592, %v588
  %v789 = vpack.c.b16 %v593, %v589
  %v790 = vpack.c.b16 %v598, %v594
  %v791 = vpack.c.b16 %v599, %v595
  %v792 = vpack.c.b16 %v600, %v596
  %v793 = vpack.c.b16 %v601, %v597
  %v794 = vpack.c.b16 %v606, %v602
  %v795 = vpack.c.b16 %v607, %v603
  %v796 = vpack.c.b16 %v608, %v604
  %v797 = vpack.c.b16 %v609, %v605
  %v798 = vpack.c.b16 %v614, %v610
  %v799 = vpack.c.b16 %v615, %v611
  %v800 = vpack.c.b16 %v616, %v612
  %v801 = vpack.c.b16 %v617, %v613
  %v802 = vpack.c.b16 %v622, %v618
  %v803 = vpack.c.b16 %v623, %v619
  %v804 = vpack.c.b16 %v624, %v620
  %v805 = vpack.c.b16 %v625, %v621
  %v806 = vpack.c.b16 %v630, %v626
  %v807 = vpack.c.b16 %v631, %v627
  %v808 = vpack.c.b16 %v632, %v628
  %v809 = vpack.c.b16 %v633, %v629
  %v810 = vpack.c.b16 %v638, %v634
  %v811 = vpack.c.b16 %v639, %v635
  %v812 = vpack.c.b16 %v640, %v636
  %v813 = vpack.c.b16 %v641, %v637
  %v814 = vpack.c.b16 %v646, %v642
  %v815 = vpack.c.b16 %v647, %v643
  %v816 = vpack.c.b16 %v648, %v644
  %v817 = vpack.c.b16 %v649, %v645
  %v818 = vpack.c.b16 %v654, %v650
  %v819 = vpack.c.b16 %v655, %v651
  %v820 = vpack.c.b16 %v656, %v652
  %v821 = vpack.c.b16 %v657, %v653
  %v822 = vpack.c.b16 %v662, %v658
  %v823 = vpack.c.b16 %v663, %v659
  %v824 = vpack.c.b16 %v664, %v660
  %v825 = vpack.c.b16 %v665, %v661
  %v826 = vpack.c.b16 %v670, %v666
  %v827 = vpack.c.b16 %v671, %v667
  %v828 = vpack.c.b16 %v672, %v668
  %v829 = vpack.c.b16 %v673, %v669
  %v830 = vpack.c.b16 %v678, %v674
  %v831 = vpack.c.b16 %v679, %v675
  %v832 = vpack.c.b16 %v680, %v676
  %v833 = vpack.c.b16 %v681, %v677
  %v834 = vpack.c.b16 %v686, %v682
  %v835 = vpack.c.b16 %v687, %v683
  %v836 = vpack.c.b16 %v688, %v684
  %v837 = vpack.c.b16 %v689, %v685
  %v838 = vpack.c.b16 %v694, %v690
  %v839 = vpack.c.b16 %v695, %v691
  %v840 = vpack.c.b16 %v696, %v692
  %v841 = vpack.c.b16 %v697, %v693
  %v842 = vpack.c.b16 %v702, %v698
  %v843 = vpack.c.b16 %v703, %v699
  %v844 = vpack.c.b16 %v704, %v700
  %v845 = vpack.c.b16 %v705, %v701
  %v846 = vpack.c.b16 %v710, %v706
  %v847 = vpack.c.b16 %v711, %v707
  %v848 = vpack.c.b16 %v712, %v708
  %v849 = vpack.c.b16 %v713, %v709
  %v850 = vpack.c.b16 %v718, %v714
  %v851 = vpack.c.b16 %v719, %v715
  %v852 = vpack.c.b16 %v720, %v716
  %v853 = vpack.c.b16 %v721, %v717
  %v854 = vpack.c.b16 %v726, %v722
  %v855 = vpack.c.b16 %v727, %v723
  %v856 = vpack.c.b16 %v728, %v724
  %v857 = vpack.c.b16 %v729, %v725
  %v1050 = vunpack.c.l.b16 %v90
  %v1051 = vunpack.c.l.b16 %v91
  %v1052 = vunpack.c.l.b16 %v92
  %v1053 = vunpack.c.l.b16 %v93
  %v1054 = vunpack.c.l.b16 %v94
  %v1055 = vunpack.c.l.b16 %v95
  %v1056 = vunpack.c.l.b16 %v96
  %v1057 = vunpack.c.l.b16 %v97
  %v1058 = vunpack.c.l.b16 %v98
  %v1059 = vunpack.c.l.b16 %v99
  %v1060 = vunpack.c.l.b16 %v100
  %v1061 = vunpack.c.l.b16 %v101
  %v1062 = vunpack.c.l.b16 %v102
  %v1063 = vunpack.c.l.b16 %v103
  %v1064 = vunpack.c.l.b16 %v104
  %v1065 = vunpack.c.l.b16 %v105
  %v1066 = vunpack.c.l.b16 %v106
  %v1067 = vunpack.c.l.b16 %v107
  %v1068 = vunpack.c.l.b16 %v108
  %v1069 = vunpack.c.l.b16 %v109
  %v1070 = vunpack.c.l.b16 %v110
  %v1071 = vunpack.c.l.b16 %v111
  %v1072 = vunpack.c.l.b16 %v112
  %v1073 = vunpack.c.l.b16 %v113
  %v1074 = vunpack.c.l.b16 %v114
  %v1075 = vunpack.c.l.b16 %v115
  %v1076 = vunpack.c.l.b16 %v116
  %v1077 = vunpack.c.l.b16 %v117
  %v1078 = vunpack.c.l.b16 %v118
  %v1079 = vunpack.c.l.b16 %v119
  %v1080 = vunpack.c.l.b16 %v120
  %v1081 = vunpack.c.l.b16 %v121
  %v1082 = vunpack.c.l.b16 %v122
  %v1083 = vunpack.c.l.b16 %v123
  %v1084 = vunpack.c.l.b16 %v124
  %v1085 = vunpack.c.l.b16 %v125
  %v1086 = vunpack.c.l.b16 %v126
  %v1087 = vunpack.c.l.b16 %v127
  %v1088 = vunpack.c.l.b16 %v128
  %v1089 = vunpack.c.l.b16 %v129
  %v1090 = vunpack.c.l.b16 %v130
  %v1091 = vunpack.c.l.b16 %v131
  %v1092 = vunpack.c.l.b16 %v132
  %v1093 = vunpack.c.l.b16 %v133
  %v1094 = vunpack.c.l.b16 %v134
  %v1095 = vunpack.c.l.b16 %v135
  %v1096 = vunpack.c.l.b16 %v136
  %v1097 = vunpack.c.l.b16 %v137
  %v1098 = vunpack.c.l.b16 %v138
  %v1099 = vunpack.c.l.b16 %v139
  %v1100 = vunpack.c.l.b16 %v140
  %v1101 = vunpack.c.l.b16 %v141
  %v1102 = vunpack.c.l.b16 %v142
  %v1103 = vunpack.c.l.b16 %v143
  %v1104 = vunpack.c.l.b16 %v144
  %v1105 = vunpack.c.l.b16 %v145
  %v1106 = vunpack.c.l.b16 %v146
  %v1107 = vunpack.c.l.b16 %v147
  %v1108 = vunpack.c.l.b16 %v148
  %v1109 = vunpack.c.l.b16 %v149
  %v1110 = vunpack.c.l.b16 %v150
  %v1111 = vunpack.c.l.b16 %v151
  %v1112 = vunpack.c.l.b16 %v152
  %v1113 = vunpack.c.l.b16 %v153
  %v1114 = vpack.c.b16 %v1051, %v1050
  %v1115 = vpack.c.b16 %v1053, %v1052
  %v1116 = vpack.c.b16 %v1055, %v1054
  %v1117 = vpack.c.b16 %v1057, %v1056
  %v1118 = vpack.c.b16 %v1059, %v1058
  %v1119 = vpack.c.b16 %v1061, %v1060
  %v1120 = vpack.c.b16 %v1063, %v1062
  %v1121 = vpack.c.b16 %v1065, %v1064
  %v1122 = vpack.c.b16 %v1067, %v1066
  %v1123 = vpack.c.b16 %v1069, %v1068
  %v1124 = vpack.c.b16 %v1071, %v1070
  %v1125 = vpack.c.b16 %v1073, %v1072
  %v1126 = vpack.c.b16 %v1075, %v1074
  %v1127 = vpack.c.b16 %v1077, %v1076
  %v1128 = vpack.c.b16 %v1079, %v1078
  %v1129 = vpack.c.b16 %v1081, %v1080
  %v1130 = vpack.c.b16 %v1083, %v1082
  %v1131 = vpack.c.b16 %v1085, %v1084
  %v1132 = vpack.c.b16 %v1087, %v1086
  %v1133 = vpack.c.b16 %v1089, %v1088
  %v1134 = vpack.c.b16 %v1091, %v1090
  %v1135 = vpack.c.b16 %v1093, %v1092
  %v1136 = vpack.c.b16 %v1095, %v1094
  %v1137 = vpack.c.b16 %v1097, %v1096
  %v1138 = vpack.c.b16 %v1099, %v1098
  %v1139 = vpack.c.b16 %v1101, %v1100
  %v1140 = vpack.c.b16 %v1103, %v1102
  %v1141 = vpack.c.b16 %v1105, %v1104
  %v1142 = vpack.c.b16 %v1107, %v1106
  %v1143 = vpack.c.b16 %v1109, %v1108
  %v1144 = vpack.c.b16 %v1111, %v1110
  %v1145 = vpack.c.b16 %v1113, %v1112
  %1178 = vmatpush.bf16.msra.mxu0 %v1121
  %1179 = vmatpush.bf16.msra.mxu0 %v1120
  %1180 = vmatpush.bf16.msra.mxu0 %v1119
  %1181 = vmatpush.bf16.msra.mxu0 %v1118
  %1182 = vmatpush.bf16.msra.mxu0 %v1117
  %1183 = vmatpush.bf16.msra.mxu0 %v1116
  %1184 = vmatpush.bf16.msra.mxu0 %v1115
  %1185 = vmatpush.bf16.msra.mxu0 %v1114
  %1186 = vmatmul.bf16.gmra.mxu0 %v730
  %v1187 = vpop.f32.mrf.mxu0
  %v1188 = vadd.f32 0.0, %v1187
  %v1189 = vpop.f32.mrf.mxu0
  %v1190 = vadd.f32 0.0, %v1189
  %1191 = vmatmul.bf16.gmra.mxu0 %v734
  %v1192 = vpop.f32.mrf.mxu0
  %v1193 = vadd.f32 0.0, %v1192
  %v1194 = vpop.f32.mrf.mxu0
  %v1195 = vadd.f32 0.0, %v1194
  %1196 = vmatmul.bf16.gmra.mxu0 %v738
  %v1197 = vpop.f32.mrf.mxu0
  %v1198 = vadd.f32 0.0, %v1197
  %v1199 = vpop.f32.mrf.mxu0
  %v1200 = vadd.f32 0.0, %v1199
  %1201 = vmatmul.bf16.gmra.mxu0 %v742
  %v1202 = vpop.f32.mrf.mxu0
  %v1203 = vadd.f32 0.0, %v1202
  %v1204 = vpop.f32.mrf.mxu0
  %v1205 = vadd.f32 0.0, %v1204
  %1206 = vmatmul.bf16.gmra.mxu0 %v746
  %v1207 = vpop.f32.mrf.mxu0
  %v1208 = vadd.f32 0.0, %v1207
  %v1209 = vpop.f32.mrf.mxu0
  %v1210 = vadd.f32 0.0, %v1209
  %1211 = vmatmul.bf16.gmra.mxu0 %v750
  %v1212 = vpop.f32.mrf.mxu0
  %v1213 = vadd.f32 0.0, %v1212
  %v1214 = vpop.f32.mrf.mxu0
  %v1215 = vadd.f32 0.0, %v1214
  %1216 = vmatmul.bf16.gmra.mxu0 %v754
  %v1217 = vpop.f32.mrf.mxu0
  %v1218 = vadd.f32 0.0, %v1217
  %v1219 = vpop.f32.mrf.mxu0
  %v1220 = vadd.f32 0.0, %v1219
  %1221 = vmatmul.bf16.gmra.mxu0 %v758
  %v1222 = vpop.f32.mrf.mxu0
  %v1223 = vadd.f32 0.0, %v1222
  %v1224 = vpop.f32.mrf.mxu0
  %v1225 = vadd.f32 0.0, %v1224
  %1226 = vmatmul.bf16.gmra.mxu0 %v762
  %v1227 = vpop.f32.mrf.mxu0
  %v1228 = vadd.f32 0.0, %v1227
  %v1229 = vpop.f32.mrf.mxu0
  %v1230 = vadd.f32 0.0, %v1229
  %1231 = vmatmul.bf16.gmra.mxu0 %v766
  %v1232 = vpop.f32.mrf.mxu0
  %v1233 = vadd.f32 0.0, %v1232
  %v1234 = vpop.f32.mrf.mxu0
  %v1235 = vadd.f32 0.0, %v1234
  %1236 = vmatmul.bf16.gmra.mxu0 %v770
  %v1237 = vpop.f32.mrf.mxu0
  %v1238 = vadd.f32 0.0, %v1237
  %v1239 = vpop.f32.mrf.mxu0
  %v1240 = vadd.f32 0.0, %v1239
  %1241 = vmatmul.bf16.gmra.mxu0 %v774
  %v1242 = vpop.f32.mrf.mxu0
  %v1243 = vadd.f32 0.0, %v1242
  %v1244 = vpop.f32.mrf.mxu0
  %v1245 = vadd.f32 0.0, %v1244
  %1246 = vmatmul.bf16.gmra.mxu0 %v778
  %v1247 = vpop.f32.mrf.mxu0
  %v1248 = vadd.f32 0.0, %v1247
  %v1249 = vpop.f32.mrf.mxu0
  %v1250 = vadd.f32 0.0, %v1249
  %1251 = vmatmul.bf16.gmra.mxu0 %v782
  %v1252 = vpop.f32.mrf.mxu0
  %v1253 = vadd.f32 0.0, %v1252
  %v1254 = vpop.f32.mrf.mxu0
  %v1255 = vadd.f32 0.0, %v1254
  %1256 = vmatmul.bf16.gmra.mxu0 %v786
  %v1257 = vpop.f32.mrf.mxu0
  %v1258 = vadd.f32 0.0, %v1257
  %v1259 = vpop.f32.mrf.mxu0
  %v1260 = vadd.f32 0.0, %v1259
  %1261 = vmatmul.bf16.gmra.mxu0 %v790
  %v1262 = vpop.f32.mrf.mxu0
  %v1263 = vadd.f32 0.0, %v1262
  %v1264 = vpop.f32.mrf.mxu0
  %v1265 = vadd.f32 0.0, %v1264
  %1266 = vmatmul.bf16.gmra.mxu0 %v794
  %v1267 = vpop.f32.mrf.mxu0
  %v1268 = vadd.f32 0.0, %v1267
  %v1269 = vpop.f32.mrf.mxu0
  %v1270 = vadd.f32 0.0, %v1269
  %1271 = vmatmul.bf16.gmra.mxu0 %v798
  %v1272 = vpop.f32.mrf.mxu0
  %v1273 = vadd.f32 0.0, %v1272
  %v1274 = vpop.f32.mrf.mxu0
  %v1275 = vadd.f32 0.0, %v1274
  %1276 = vmatmul.bf16.gmra.mxu0 %v802
  %v1277 = vpop.f32.mrf.mxu0
  %v1278 = vadd.f32 0.0, %v1277
  %v1279 = vpop.f32.mrf.mxu0
  %v1280 = vadd.f32 0.0, %v1279
  %1281 = vmatmul.bf16.gmra.mxu0 %v806
  %v1282 = vpop.f32.mrf.mxu0
  %v1283 = vadd.f32 0.0, %v1282
  %v1284 = vpop.f32.mrf.mxu0
  %v1285 = vadd.f32 0.0, %v1284
  %1286 = vmatmul.bf16.gmra.mxu0 %v810
  %v1287 = vpop.f32.mrf.mxu0
  %v1288 = vadd.f32 0.0, %v1287
  %v1289 = vpop.f32.mrf.mxu0
  %v1290 = vadd.f32 0.0, %v1289
  %1291 = vmatmul.bf16.gmra.mxu0 %v814
  %v1292 = vpop.f32.mrf.mxu0
  %v1293 = vadd.f32 0.0, %v1292
  %v1294 = vpop.f32.mrf.mxu0
  %v1295 = vadd.f32 0.0, %v1294
  %1296 = vmatmul.bf16.gmra.mxu0 %v818
  %v1297 = vpop.f32.mrf.mxu0
  %v1298 = vadd.f32 0.0, %v1297
  %v1299 = vpop.f32.mrf.mxu0
  %v1300 = vadd.f32 0.0, %v1299
  %1301 = vmatmul.bf16.gmra.mxu0 %v822
  %v1302 = vpop.f32.mrf.mxu0
  %v1303 = vadd.f32 0.0, %v1302
  %v1304 = vpop.f32.mrf.mxu0
  %v1305 = vadd.f32 0.0, %v1304
  %1306 = vmatmul.bf16.gmra.mxu0 %v826
  %v1307 = vpop.f32.mrf.mxu0
  %v1308 = vadd.f32 0.0, %v1307
  %v1309 = vpop.f32.mrf.mxu0
  %v1310 = vadd.f32 0.0, %v1309
  %1311 = vmatmul.bf16.gmra.mxu0 %v830
  %v1312 = vpop.f32.mrf.mxu0
  %v1313 = vadd.f32 0.0, %v1312
  %v1314 = vpop.f32.mrf.mxu0
  %v1315 = vadd.f32 0.0, %v1314
  %1316 = vmatmul.bf16.gmra.mxu0 %v834
  %v1317 = vpop.f32.mrf.mxu0
  %v1318 = vadd.f32 0.0, %v1317
  %v1319 = vpop.f32.mrf.mxu0
  %v1320 = vadd.f32 0.0, %v1319
  %1321 = vmatmul.bf16.gmra.mxu0 %v838
  %v1322 = vpop.f32.mrf.mxu0
  %v1323 = vadd.f32 0.0, %v1322
  %v1324 = vpop.f32.mrf.mxu0
  %v1325 = vadd.f32 0.0, %v1324
  %1326 = vmatmul.bf16.gmra.mxu0 %v842
  %v1327 = vpop.f32.mrf.mxu0
  %v1328 = vadd.f32 0.0, %v1327
  %v1329 = vpop.f32.mrf.mxu0
  %v1330 = vadd.f32 0.0, %v1329
  %1331 = vmatmul.bf16.gmra.mxu0 %v846
  %v1332 = vpop.f32.mrf.mxu0
  %v1333 = vadd.f32 0.0, %v1332
  %v1334 = vpop.f32.mrf.mxu0
  %v1335 = vadd.f32 0.0, %v1334
  %1336 = vmatmul.bf16.gmra.mxu0 %v850
  %v1337 = vpop.f32.mrf.mxu0
  %v1338 = vadd.f32 0.0, %v1337
  %v1339 = vpop.f32.mrf.mxu0
  %v1340 = vadd.f32 0.0, %v1339
  %1341 = vmatmul.bf16.gmra.mxu0 %v854
  %v1342 = vpop.f32.mrf.mxu0
  %v1343 = vadd.f32 0.0, %v1342
  %v1344 = vpop.f32.mrf.mxu0
  %v1345 = vadd.f32 0.0, %v1344
  %1346 = vdwg.mxu0
  %1347 = vmatpush.bf16.msra.mxu0 %v1129
  %1348 = vmatpush.bf16.msra.mxu0 %v1128
  %1349 = vmatpush.bf16.msra.mxu0 %v1127
  %1350 = vmatpush.bf16.msra.mxu0 %v1126
  %1351 = vmatpush.bf16.msra.mxu0 %v1125
  %1352 = vmatpush.bf16.msra.mxu0 %v1124
  %1353 = vmatpush.bf16.msra.mxu0 %v1123
  %1354 = vmatpush.bf16.msra.mxu0 %v1122
  %1355 = vmatmul.bf16.gmra.mxu0 %v731
  %v1356 = vpop.f32.mrf.mxu0
  %v1357 = vadd.f32 %v1188, %v1356
  %v1358 = vpop.f32.mrf.mxu0
  %v1359 = vadd.f32 %v1190, %v1358
  %1360 = vmatmul.bf16.gmra.mxu0 %v735
  %v1361 = vpop.f32.mrf.mxu0
  %v1362 = vadd.f32 %v1193, %v1361
  %v1363 = vpop.f32.mrf.mxu0
  %v1364 = vadd.f32 %v1195, %v1363
  %1365 = vmatmul.bf16.gmra.mxu0 %v739
  %v1366 = vpop.f32.mrf.mxu0
  %v1367 = vadd.f32 %v1198, %v1366
  %v1368 = vpop.f32.mrf.mxu0
  %v1369 = vadd.f32 %v1200, %v1368
  %1370 = vmatmul.bf16.gmra.mxu0 %v743
  %v1371 = vpop.f32.mrf.mxu0
  %v1372 = vadd.f32 %v1203, %v1371
  %v1373 = vpop.f32.mrf.mxu0
  %v1374 = vadd.f32 %v1205, %v1373
  %1375 = vmatmul.bf16.gmra.mxu0 %v747
  %v1376 = vpop.f32.mrf.mxu0
  %v1377 = vadd.f32 %v1208, %v1376
  %v1378 = vpop.f32.mrf.mxu0
  %v1379 = vadd.f32 %v1210, %v1378
  %1380 = vmatmul.bf16.gmra.mxu0 %v751
  %v1381 = vpop.f32.mrf.mxu0
  %v1382 = vadd.f32 %v1213, %v1381
  %v1383 = vpop.f32.mrf.mxu0
  %v1384 = vadd.f32 %v1215, %v1383
  %1385 = vmatmul.bf16.gmra.mxu0 %v755
  %v1386 = vpop.f32.mrf.mxu0
  %v1387 = vadd.f32 %v1218, %v1386
  %v1388 = vpop.f32.mrf.mxu0
  %v1389 = vadd.f32 %v1220, %v1388
  %1390 = vmatmul.bf16.gmra.mxu0 %v759
  %v1391 = vpop.f32.mrf.mxu0
  %v1392 = vadd.f32 %v1223, %v1391
  %v1393 = vpop.f32.mrf.mxu0
  %v1394 = vadd.f32 %v1225, %v1393
  %1395 = vmatmul.bf16.gmra.mxu0 %v763
  %v1396 = vpop.f32.mrf.mxu0
  %v1397 = vadd.f32 %v1228, %v1396
  %v1398 = vpop.f32.mrf.mxu0
  %v1399 = vadd.f32 %v1230, %v1398
  %1400 = vmatmul.bf16.gmra.mxu0 %v767
  %v1401 = vpop.f32.mrf.mxu0
  %v1402 = vadd.f32 %v1233, %v1401
  %v1403 = vpop.f32.mrf.mxu0
  %v1404 = vadd.f32 %v1235, %v1403
  %1405 = vmatmul.bf16.gmra.mxu0 %v771
  %v1406 = vpop.f32.mrf.mxu0
  %v1407 = vadd.f32 %v1238, %v1406
  %v1408 = vpop.f32.mrf.mxu0
  %v1409 = vadd.f32 %v1240, %v1408
  %1410 = vmatmul.bf16.gmra.mxu0 %v775
  %v1411 = vpop.f32.mrf.mxu0
  %v1412 = vadd.f32 %v1243, %v1411
  %v1413 = vpop.f32.mrf.mxu0
  %v1414 = vadd.f32 %v1245, %v1413
  %1415 = vmatmul.bf16.gmra.mxu0 %v779
  %v1416 = vpop.f32.mrf.mxu0
  %v1417 = vadd.f32 %v1248, %v1416
  %v1418 = vpop.f32.mrf.mxu0
  %v1419 = vadd.f32 %v1250, %v1418
  %1420 = vmatmul.bf16.gmra.mxu0 %v783
  %v1421 = vpop.f32.mrf.mxu0
  %v1422 = vadd.f32 %v1253, %v1421
  %v1423 = vpop.f32.mrf.mxu0
  %v1424 = vadd.f32 %v1255, %v1423
  %1425 = vmatmul.bf16.gmra.mxu0 %v787
  %v1426 = vpop.f32.mrf.mxu0
  %v1427 = vadd.f32 %v1258, %v1426
  %v1428 = vpop.f32.mrf.mxu0
  %v1429 = vadd.f32 %v1260, %v1428
  %1430 = vmatmul.bf16.gmra.mxu0 %v791
  %v1431 = vpop.f32.mrf.mxu0
  %v1432 = vadd.f32 %v1263, %v1431
  %v1433 = vpop.f32.mrf.mxu0
  %v1434 = vadd.f32 %v1265, %v1433
  %1435 = vmatmul.bf16.gmra.mxu0 %v795
  %v1436 = vpop.f32.mrf.mxu0
  %v1437 = vadd.f32 %v1268, %v1436
  %v1438 = vpop.f32.mrf.mxu0
  %v1439 = vadd.f32 %v1270, %v1438
  %1440 = vmatmul.bf16.gmra.mxu0 %v799
  %v1441 = vpop.f32.mrf.mxu0
  %v1442 = vadd.f32 %v1273, %v1441
  %v1443 = vpop.f32.mrf.mxu0
  %v1444 = vadd.f32 %v1275, %v1443
  %1445 = vmatmul.bf16.gmra.mxu0 %v803
  %v1446 = vpop.f32.mrf.mxu0
  %v1447 = vadd.f32 %v1278, %v1446
  %v1448 = vpop.f32.mrf.mxu0
  %v1449 = vadd.f32 %v1280, %v1448
  %1450 = vmatmul.bf16.gmra.mxu0 %v807
  %v1451 = vpop.f32.mrf.mxu0
  %v1452 = vadd.f32 %v1283, %v1451
  %v1453 = vpop.f32.mrf.mxu0
  %v1454 = vadd.f32 %v1285, %v1453
  %1455 = vmatmul.bf16.gmra.mxu0 %v811
  %v1456 = vpop.f32.mrf.mxu0
  %v1457 = vadd.f32 %v1288, %v1456
  %v1458 = vpop.f32.mrf.mxu0
  %v1459 = vadd.f32 %v1290, %v1458
  %1460 = vmatmul.bf16.gmra.mxu0 %v815
  %v1461 = vpop.f32.mrf.mxu0
  %v1462 = vadd.f32 %v1293, %v1461
  %v1463 = vpop.f32.mrf.mxu0
  %v1464 = vadd.f32 %v1295, %v1463
  %1465 = vmatmul.bf16.gmra.mxu0 %v819
  %v1466 = vpop.f32.mrf.mxu0
  %v1467 = vadd.f32 %v1298, %v1466
  %v1468 = vpop.f32.mrf.mxu0
  %v1469 = vadd.f32 %v1300, %v1468
  %1470 = vmatmul.bf16.gmra.mxu0 %v823
  %v1471 = vpop.f32.mrf.mxu0
  %v1472 = vadd.f32 %v1303, %v1471
  %v1473 = vpop.f32.mrf.mxu0
  %v1474 = vadd.f32 %v1305, %v1473
  %1475 = vmatmul.bf16.gmra.mxu0 %v827
  %v1476 = vpop.f32.mrf.mxu0
  %v1477 = vadd.f32 %v1308, %v1476
  %v1478 = vpop.f32.mrf.mxu0
  %v1479 = vadd.f32 %v1310, %v1478
  %1480 = vmatmul.bf16.gmra.mxu0 %v831
  %v1481 = vpop.f32.mrf.mxu0
  %v1482 = vadd.f32 %v1313, %v1481
  %v1483 = vpop.f32.mrf.mxu0
  %v1484 = vadd.f32 %v1315, %v1483
  %1485 = vmatmul.bf16.gmra.mxu0 %v835
  %v1486 = vpop.f32.mrf.mxu0
  %v1487 = vadd.f32 %v1318, %v1486
  %v1488 = vpop.f32.mrf.mxu0
  %v1489 = vadd.f32 %v1320, %v1488
  %1490 = vmatmul.bf16.gmra.mxu0 %v839
  %v1491 = vpop.f32.mrf.mxu0
  %v1492 = vadd.f32 %v1323, %v1491
  %v1493 = vpop.f32.mrf.mxu0
  %v1494 = vadd.f32 %v1325, %v1493
  %1495 = vmatmul.bf16.gmra.mxu0 %v843
  %v1496 = vpop.f32.mrf.mxu0
  %v1497 = vadd.f32 %v1328, %v1496
  %v1498 = vpop.f32.mrf.mxu0
  %v1499 = vadd.f32 %v1330, %v1498
  %1500 = vmatmul.bf16.gmra.mxu0 %v847
  %v1501 = vpop.f32.mrf.mxu0
  %v1502 = vadd.f32 %v1333, %v1501
  %v1503 = vpop.f32.mrf.mxu0
  %v1504 = vadd.f32 %v1335, %v1503
  %1505 = vmatmul.bf16.gmra.mxu0 %v851
  %v1506 = vpop.f32.mrf.mxu0
  %v1507 = vadd.f32 %v1338, %v1506
  %v1508 = vpop.f32.mrf.mxu0
  %v1509 = vadd.f32 %v1340, %v1508
  %1510 = vmatmul.bf16.gmra.mxu0 %v855
  %v1511 = vpop.f32.mrf.mxu0
  %v1512 = vadd.f32 %v1343, %v1511
  %v1513 = vpop.f32.mrf.mxu0
  %v1514 = vadd.f32 %v1345, %v1513
  %1515 = vdwg.mxu0
  %1516 = vmatpush.bf16.msra.mxu0 %v1137
  %1517 = vmatpush.bf16.msra.mxu0 %v1136
  %1518 = vmatpush.bf16.msra.mxu0 %v1135
  %1519 = vmatpush.bf16.msra.mxu0 %v1134
  %1520 = vmatpush.bf16.msra.mxu0 %v1133
  %1521 = vmatpush.bf16.msra.mxu0 %v1132
  %1522 = vmatpush.bf16.msra.mxu0 %v1131
  %1523 = vmatpush.bf16.msra.mxu0 %v1130
  %1524 = vmatmul.bf16.gmra.mxu0 %v732
  %v1525 = vpop.f32.mrf.mxu0
  %v1526 = vadd.f32 %v1357, %v1525
  %v1527 = vpop.f32.mrf.mxu0
  %v1528 = vadd.f32 %v1359, %v1527
  %1529 = vmatmul.bf16.gmra.mxu0 %v736
  %v1530 = vpop.f32.mrf.mxu0
  %v1531 = vadd.f32 %v1362, %v1530
  %v1532 = vpop.f32.mrf.mxu0
  %v1533 = vadd.f32 %v1364, %v1532
  %1534 = vmatmul.bf16.gmra.mxu0 %v740
  %v1535 = vpop.f32.mrf.mxu0
  %v1536 = vadd.f32 %v1367, %v1535
  %v1537 = vpop.f32.mrf.mxu0
  %v1538 = vadd.f32 %v1369, %v1537
  %1539 = vmatmul.bf16.gmra.mxu0 %v744
  %v1540 = vpop.f32.mrf.mxu0
  %v1541 = vadd.f32 %v1372, %v1540
  %v1542 = vpop.f32.mrf.mxu0
  %v1543 = vadd.f32 %v1374, %v1542
  %1544 = vmatmul.bf16.gmra.mxu0 %v748
  %v1545 = vpop.f32.mrf.mxu0
  %v1546 = vadd.f32 %v1377, %v1545
  %v1547 = vpop.f32.mrf.mxu0
  %v1548 = vadd.f32 %v1379, %v1547
  %1549 = vmatmul.bf16.gmra.mxu0 %v752
  %v1550 = vpop.f32.mrf.mxu0
  %v1551 = vadd.f32 %v1382, %v1550
  %v1552 = vpop.f32.mrf.mxu0
  %v1553 = vadd.f32 %v1384, %v1552
  %1554 = vmatmul.bf16.gmra.mxu0 %v756
  %v1555 = vpop.f32.mrf.mxu0
  %v1556 = vadd.f32 %v1387, %v1555
  %v1557 = vpop.f32.mrf.mxu0
  %v1558 = vadd.f32 %v1389, %v1557
  %1559 = vmatmul.bf16.gmra.mxu0 %v760
  %v1560 = vpop.f32.mrf.mxu0
  %v1561 = vadd.f32 %v1392, %v1560
  %v1562 = vpop.f32.mrf.mxu0
  %v1563 = vadd.f32 %v1394, %v1562
  %1564 = vmatmul.bf16.gmra.mxu0 %v764
  %v1565 = vpop.f32.mrf.mxu0
  %v1566 = vadd.f32 %v1397, %v1565
  %v1567 = vpop.f32.mrf.mxu0
  %v1568 = vadd.f32 %v1399, %v1567
  %1569 = vmatmul.bf16.gmra.mxu0 %v768
  %v1570 = vpop.f32.mrf.mxu0
  %v1571 = vadd.f32 %v1402, %v1570
  %v1572 = vpop.f32.mrf.mxu0
  %v1573 = vadd.f32 %v1404, %v1572
  %1574 = vmatmul.bf16.gmra.mxu0 %v772
  %v1575 = vpop.f32.mrf.mxu0
  %v1576 = vadd.f32 %v1407, %v1575
  %v1577 = vpop.f32.mrf.mxu0
  %v1578 = vadd.f32 %v1409, %v1577
  %1579 = vmatmul.bf16.gmra.mxu0 %v776
  %v1580 = vpop.f32.mrf.mxu0
  %v1581 = vadd.f32 %v1412, %v1580
  %v1582 = vpop.f32.mrf.mxu0
  %v1583 = vadd.f32 %v1414, %v1582
  %1584 = vmatmul.bf16.gmra.mxu0 %v780
  %v1585 = vpop.f32.mrf.mxu0
  %v1586 = vadd.f32 %v1417, %v1585
  %v1587 = vpop.f32.mrf.mxu0
  %v1588 = vadd.f32 %v1419, %v1587
  %1589 = vmatmul.bf16.gmra.mxu0 %v784
  %v1590 = vpop.f32.mrf.mxu0
  %v1591 = vadd.f32 %v1422, %v1590
  %v1592 = vpop.f32.mrf.mxu0
  %v1593 = vadd.f32 %v1424, %v1592
  %1594 = vmatmul.bf16.gmra.mxu0 %v788
  %v1595 = vpop.f32.mrf.mxu0
  %v1596 = vadd.f32 %v1427, %v1595
  %v1597 = vpop.f32.mrf.mxu0
  %v1598 = vadd.f32 %v1429, %v1597
  %1599 = vmatmul.bf16.gmra.mxu0 %v792
  %v1600 = vpop.f32.mrf.mxu0
  %v1601 = vadd.f32 %v1432, %v1600
  %v1602 = vpop.f32.mrf.mxu0
  %v1603 = vadd.f32 %v1434, %v1602
  %1604 = vmatmul.bf16.gmra.mxu0 %v796
  %v1605 = vpop.f32.mrf.mxu0
  %v1606 = vadd.f32 %v1437, %v1605
  %v1607 = vpop.f32.mrf.mxu0
  %v1608 = vadd.f32 %v1439, %v1607
  %1609 = vmatmul.bf16.gmra.mxu0 %v800
  %v1610 = vpop.f32.mrf.mxu0
  %v1611 = vadd.f32 %v1442, %v1610
  %v1612 = vpop.f32.mrf.mxu0
  %v1613 = vadd.f32 %v1444, %v1612
  %1614 = vmatmul.bf16.gmra.mxu0 %v804
  %v1615 = vpop.f32.mrf.mxu0
  %v1616 = vadd.f32 %v1447, %v1615
  %v1617 = vpop.f32.mrf.mxu0
  %v1618 = vadd.f32 %v1449, %v1617
  %1619 = vmatmul.bf16.gmra.mxu0 %v808
  %v1620 = vpop.f32.mrf.mxu0
  %v1621 = vadd.f32 %v1452, %v1620
  %v1622 = vpop.f32.mrf.mxu0
  %v1623 = vadd.f32 %v1454, %v1622
  %1624 = vmatmul.bf16.gmra.mxu0 %v812
  %v1625 = vpop.f32.mrf.mxu0
  %v1626 = vadd.f32 %v1457, %v1625
  %v1627 = vpop.f32.mrf.mxu0
  %v1628 = vadd.f32 %v1459, %v1627
  %1629 = vmatmul.bf16.gmra.mxu0 %v816
  %v1630 = vpop.f32.mrf.mxu0
  %v1631 = vadd.f32 %v1462, %v1630
  %v1632 = vpop.f32.mrf.mxu0
  %v1633 = vadd.f32 %v1464, %v1632
  %1634 = vmatmul.bf16.gmra.mxu0 %v820
  %v1635 = vpop.f32.mrf.mxu0
  %v1636 = vadd.f32 %v1467, %v1635
  %v1637 = vpop.f32.mrf.mxu0
  %v1638 = vadd.f32 %v1469, %v1637
  %1639 = vmatmul.bf16.gmra.mxu0 %v824
  %v1640 = vpop.f32.mrf.mxu0
  %v1641 = vadd.f32 %v1472, %v1640
  %v1642 = vpop.f32.mrf.mxu0
  %v1643 = vadd.f32 %v1474, %v1642
  %1644 = vmatmul.bf16.gmra.mxu0 %v828
  %v1645 = vpop.f32.mrf.mxu0
  %v1646 = vadd.f32 %v1477, %v1645
  %v1647 = vpop.f32.mrf.mxu0
  %v1648 = vadd.f32 %v1479, %v1647
  %1649 = vmatmul.bf16.gmra.mxu0 %v832
  %v1650 = vpop.f32.mrf.mxu0
  %v1651 = vadd.f32 %v1482, %v1650
  %v1652 = vpop.f32.mrf.mxu0
  %v1653 = vadd.f32 %v1484, %v1652
  %1654 = vmatmul.bf16.gmra.mxu0 %v836
  %v1655 = vpop.f32.mrf.mxu0
  %v1656 = vadd.f32 %v1487, %v1655
  %v1657 = vpop.f32.mrf.mxu0
  %v1658 = vadd.f32 %v1489, %v1657
  %1659 = vmatmul.bf16.gmra.mxu0 %v840
  %v1660 = vpop.f32.mrf.mxu0
  %v1661 = vadd.f32 %v1492, %v1660
  %v1662 = vpop.f32.mrf.mxu0
  %v1663 = vadd.f32 %v1494, %v1662
  %1664 = vmatmul.bf16.gmra.mxu0 %v844
  %v1665 = vpop.f32.mrf.mxu0
  %v1666 = vadd.f32 %v1497, %v1665
  %v1667 = vpop.f32.mrf.mxu0
  %v1668 = vadd.f32 %v1499, %v1667
  %1669 = vmatmul.bf16.gmra.mxu0 %v848
  %v1670 = vpop.f32.mrf.mxu0
  %v1671 = vadd.f32 %v1502, %v1670
  %v1672 = vpop.f32.mrf.mxu0
  %v1673 = vadd.f32 %v1504, %v1672
  %1674 = vmatmul.bf16.gmra.mxu0 %v852
  %v1675 = vpop.f32.mrf.mxu0
  %v1676 = vadd.f32 %v1507, %v1675
  %v1677 = vpop.f32.mrf.mxu0
  %v1678 = vadd.f32 %v1509, %v1677
  %1679 = vmatmul.bf16.gmra.mxu0 %v856
  %v1680 = vpop.f32.mrf.mxu0
  %v1681 = vadd.f32 %v1512, %v1680
  %v1682 = vpop.f32.mrf.mxu0
  %v1683 = vadd.f32 %v1514, %v1682
  %1684 = vdwg.mxu0
  %1685 = vmatpush.bf16.msra.mxu0 %v1145
  %1686 = vmatpush.bf16.msra.mxu0 %v1144
  %1687 = vmatpush.bf16.msra.mxu0 %v1143
  %1688 = vmatpush.bf16.msra.mxu0 %v1142
  %1689 = vmatpush.bf16.msra.mxu0 %v1141
  %1690 = vmatpush.bf16.msra.mxu0 %v1140
  %1691 = vmatpush.bf16.msra.mxu0 %v1139
  %1692 = vmatpush.bf16.msra.mxu0 %v1138
  %1693 = vmatmul.bf16.gmra.mxu0 %v733
  %v1694 = vpop.f32.mrf.mxu0
  %v1695 = vadd.f32 %v1526, %v1694
  %v1696 = vpop.f32.mrf.mxu0
  %v1697 = vadd.f32 %v1528, %v1696
  %1698 = vmatmul.bf16.gmra.mxu0 %v737
  %v1699 = vpop.f32.mrf.mxu0
  %v1700 = vadd.f32 %v1531, %v1699
  %v1701 = vpop.f32.mrf.mxu0
  %v1702 = vadd.f32 %v1533, %v1701
  %1703 = vmatmul.bf16.gmra.mxu0 %v741
  %v1704 = vpop.f32.mrf.mxu0
  %v1705 = vadd.f32 %v1536, %v1704
  %v1706 = vpop.f32.mrf.mxu0
  %v1707 = vadd.f32 %v1538, %v1706
  %1708 = vmatmul.bf16.gmra.mxu0 %v745
  %v1709 = vpop.f32.mrf.mxu0
  %v1710 = vadd.f32 %v1541, %v1709
  %v1711 = vpop.f32.mrf.mxu0
  %v1712 = vadd.f32 %v1543, %v1711
  %1713 = vmatmul.bf16.gmra.mxu0 %v749
  %v1714 = vpop.f32.mrf.mxu0
  %v1715 = vadd.f32 %v1546, %v1714
  %v1716 = vpop.f32.mrf.mxu0
  %v1717 = vadd.f32 %v1548, %v1716
  %1718 = vmatmul.bf16.gmra.mxu0 %v753
  %v1719 = vpop.f32.mrf.mxu0
  %v1720 = vadd.f32 %v1551, %v1719
  %v1721 = vpop.f32.mrf.mxu0
  %v1722 = vadd.f32 %v1553, %v1721
  %1723 = vmatmul.bf16.gmra.mxu0 %v757
  %v1724 = vpop.f32.mrf.mxu0
  %v1725 = vadd.f32 %v1556, %v1724
  %v1726 = vpop.f32.mrf.mxu0
  %v1727 = vadd.f32 %v1558, %v1726
  %1728 = vmatmul.bf16.gmra.mxu0 %v761
  %v1729 = vpop.f32.mrf.mxu0
  %v1730 = vadd.f32 %v1561, %v1729
  %v1731 = vpop.f32.mrf.mxu0
  %v1732 = vadd.f32 %v1563, %v1731
  %1733 = vmatmul.bf16.gmra.mxu0 %v765
  %v1734 = vpop.f32.mrf.mxu0
  %v1735 = vadd.f32 %v1566, %v1734
  %v1736 = vpop.f32.mrf.mxu0
  %v1737 = vadd.f32 %v1568, %v1736
  %1738 = vmatmul.bf16.gmra.mxu0 %v769
  %v1739 = vpop.f32.mrf.mxu0
  %v1740 = vadd.f32 %v1571, %v1739
  %v1741 = vpop.f32.mrf.mxu0
  %v1742 = vadd.f32 %v1573, %v1741
  %1743 = vmatmul.bf16.gmra.mxu0 %v773
  %v1744 = vpop.f32.mrf.mxu0
  %v1745 = vadd.f32 %v1576, %v1744
  %v1746 = vpop.f32.mrf.mxu0
  %v1747 = vadd.f32 %v1578, %v1746
  %1748 = vmatmul.bf16.gmra.mxu0 %v777
  %v1749 = vpop.f32.mrf.mxu0
  %v1750 = vadd.f32 %v1581, %v1749
  %v1751 = vpop.f32.mrf.mxu0
  %v1752 = vadd.f32 %v1583, %v1751
  %1753 = vmatmul.bf16.gmra.mxu0 %v781
  %v1754 = vpop.f32.mrf.mxu0
  %v1755 = vadd.f32 %v1586, %v1754
  %v1756 = vpop.f32.mrf.mxu0
  %v1757 = vadd.f32 %v1588, %v1756
  %1758 = vmatmul.bf16.gmra.mxu0 %v785
  %v1759 = vpop.f32.mrf.mxu0
  %v1760 = vadd.f32 %v1591, %v1759
  %v1761 = vpop.f32.mrf.mxu0
  %v1762 = vadd.f32 %v1593, %v1761
  %1763 = vmatmul.bf16.gmra.mxu0 %v789
  %v1764 = vpop.f32.mrf.mxu0
  %v1765 = vadd.f32 %v1596, %v1764
  %v1766 = vpop.f32.mrf.mxu0
  %v1767 = vadd.f32 %v1598, %v1766
  %1768 = vmatmul.bf16.gmra.mxu0 %v793
  %v1769 = vpop.f32.mrf.mxu0
  %v1770 = vadd.f32 %v1601, %v1769
  %v1771 = vpop.f32.mrf.mxu0
  %v1772 = vadd.f32 %v1603, %v1771
  %1773 = vmatmul.bf16.gmra.mxu0 %v797
  %v1774 = vpop.f32.mrf.mxu0
  %v1775 = vadd.f32 %v1606, %v1774
  %v1776 = vpop.f32.mrf.mxu0
  %v1777 = vadd.f32 %v1608, %v1776
  %1778 = vmatmul.bf16.gmra.mxu0 %v801
  %v1779 = vpop.f32.mrf.mxu0
  %v1780 = vadd.f32 %v1611, %v1779
  %v1781 = vpop.f32.mrf.mxu0
  %v1782 = vadd.f32 %v1613, %v1781
  %1783 = vmatmul.bf16.gmra.mxu0 %v805
  %v1784 = vpop.f32.mrf.mxu0
  %v1785 = vadd.f32 %v1616, %v1784
  %v1786 = vpop.f32.mrf.mxu0
  %v1787 = vadd.f32 %v1618, %v1786
  %1788 = vmatmul.bf16.gmra.mxu0 %v809
  %v1789 = vpop.f32.mrf.mxu0
  %v1790 = vadd.f32 %v1621, %v1789
  %v1791 = vpop.f32.mrf.mxu0
  %v1792 = vadd.f32 %v1623, %v1791
  %1793 = vmatmul.bf16.gmra.mxu0 %v813
  %v1794 = vpop.f32.mrf.mxu0
  %v1795 = vadd.f32 %v1626, %v1794
  %v1796 = vpop.f32.mrf.mxu0
  %v1797 = vadd.f32 %v1628, %v1796
  %1798 = vmatmul.bf16.gmra.mxu0 %v817
  %v1799 = vpop.f32.mrf.mxu0
  %v1800 = vadd.f32 %v1631, %v1799
  %v1801 = vpop.f32.mrf.mxu0
  %v1802 = vadd.f32 %v1633, %v1801
  %1803 = vmatmul.bf16.gmra.mxu0 %v821
  %v1804 = vpop.f32.mrf.mxu0
  %v1805 = vadd.f32 %v1636, %v1804
  %v1806 = vpop.f32.mrf.mxu0
  %v1807 = vadd.f32 %v1638, %v1806
  %1808 = vmatmul.bf16.gmra.mxu0 %v825
  %v1809 = vpop.f32.mrf.mxu0
  %v1810 = vadd.f32 %v1641, %v1809
  %v1811 = vpop.f32.mrf.mxu0
  %v1812 = vadd.f32 %v1643, %v1811
  %1813 = vmatmul.bf16.gmra.mxu0 %v829
  %v1814 = vpop.f32.mrf.mxu0
  %v1815 = vadd.f32 %v1646, %v1814
  %v1816 = vpop.f32.mrf.mxu0
  %v1817 = vadd.f32 %v1648, %v1816
  %1818 = vmatmul.bf16.gmra.mxu0 %v833
  %v1819 = vpop.f32.mrf.mxu0
  %v1820 = vadd.f32 %v1651, %v1819
  %v1821 = vpop.f32.mrf.mxu0
  %v1822 = vadd.f32 %v1653, %v1821
  %1823 = vmatmul.bf16.gmra.mxu0 %v837
  %v1824 = vpop.f32.mrf.mxu0
  %v1825 = vadd.f32 %v1656, %v1824
  %v1826 = vpop.f32.mrf.mxu0
  %v1827 = vadd.f32 %v1658, %v1826
  %1828 = vmatmul.bf16.gmra.mxu0 %v841
  %v1829 = vpop.f32.mrf.mxu0
  %v1830 = vadd.f32 %v1661, %v1829
  %v1831 = vpop.f32.mrf.mxu0
  %v1832 = vadd.f32 %v1663, %v1831
  %1833 = vmatmul.bf16.gmra.mxu0 %v845
  %v1834 = vpop.f32.mrf.mxu0
  %v1835 = vadd.f32 %v1666, %v1834
  %v1836 = vpop.f32.mrf.mxu0
  %v1837 = vadd.f32 %v1668, %v1836
  %1838 = vmatmul.bf16.gmra.mxu0 %v849
  %v1839 = vpop.f32.mrf.mxu0
  %v1840 = vadd.f32 %v1671, %v1839
  %v1841 = vpop.f32.mrf.mxu0
  %v1842 = vadd.f32 %v1673, %v1841
  %1843 = vmatmul.bf16.gmra.mxu0 %v853
  %v1844 = vpop.f32.mrf.mxu0
  %v1845 = vadd.f32 %v1676, %v1844
  %v1846 = vpop.f32.mrf.mxu0
  %v1847 = vadd.f32 %v1678, %v1846
  %1848 = vmatmul.bf16.gmra.mxu0 %v857
  %v1849 = vpop.f32.mrf.mxu0
  %v1850 = vadd.f32 %v1681, %v1849
  %v1851 = vpop.f32.mrf.mxu0
  %v1852 = vadd.f32 %v1683, %v1851
  %1853 = vdwg.mxu0
  %v1854 = vadd.f32 %v154, %v1695
  %v1855 = vadd.f32 %v155, %v1697
  %v1856 = vadd.f32 %v156, %v1700
  %v1857 = vadd.f32 %v157, %v1702
  %v1858 = vadd.f32 %v158, %v1705
  %v1859 = vadd.f32 %v159, %v1707
  %v1860 = vadd.f32 %v160, %v1710
  %v1861 = vadd.f32 %v161, %v1712
  %v1862 = vadd.f32 %v162, %v1715
  %v1863 = vadd.f32 %v163, %v1717
  %v1864 = vadd.f32 %v164, %v1720
  %v1865 = vadd.f32 %v165, %v1722
  %v1866 = vadd.f32 %v166, %v1725
  %v1867 = vadd.f32 %v167, %v1727
  %v1868 = vadd.f32 %v168, %v1730
  %v1869 = vadd.f32 %v169, %v1732
  %v1870 = vadd.f32 %v170, %v1735
  %v1871 = vadd.f32 %v171, %v1737
  %v1872 = vadd.f32 %v172, %v1740
  %v1873 = vadd.f32 %v173, %v1742
  %v1874 = vadd.f32 %v174, %v1745
  %v1875 = vadd.f32 %v175, %v1747
  %v1876 = vadd.f32 %v176, %v1750
  %v1877 = vadd.f32 %v177, %v1752
  %v1878 = vadd.f32 %v178, %v1755
  %v1879 = vadd.f32 %v179, %v1757
  %v1880 = vadd.f32 %v180, %v1760
  %v1881 = vadd.f32 %v181, %v1762
  %v1882 = vadd.f32 %v182, %v1765
  %v1883 = vadd.f32 %v183, %v1767
  %v1884 = vadd.f32 %v184, %v1770
  %v1885 = vadd.f32 %v185, %v1772
  %v1886 = vadd.f32 %v186, %v1775
  %v1887 = vadd.f32 %v187, %v1777
  %v1888 = vadd.f32 %v188, %v1780
  %v1889 = vadd.f32 %v189, %v1782
  %v1890 = vadd.f32 %v190, %v1785
  %v1891 = vadd.f32 %v191, %v1787
  %v1892 = vadd.f32 %v192, %v1790
  %v1893 = vadd.f32 %v193, %v1792
  %v1894 = vadd.f32 %v194, %v1795
  %v1895 = vadd.f32 %v195, %v1797
  %v1896 = vadd.f32 %v196, %v1800
  %v1897 = vadd.f32 %v197, %v1802
  %v1898 = vadd.f32 %v198, %v1805
  %v1899 = vadd.f32 %v199, %v1807
  %v1900 = vadd.f32 %v200, %v1810
  %v1901 = vadd.f32 %v201, %v1812
  %v1902 = vadd.f32 %v202, %v1815
  %v1903 = vadd.f32 %v203, %v1817
  %v1904 = vadd.f32 %v204, %v1820
  %v1905 = vadd.f32 %v205, %v1822
  %v1906 = vadd.f32 %v206, %v1825
  %v1907 = vadd.f32 %v207, %v1827
  %v1908 = vadd.f32 %v208, %v1830
  %v1909 = vadd.f32 %v209, %v1832
  %v1910 = vadd.f32 %v210, %v1835
  %v1911 = vadd.f32 %v211, %v1837
  %v1912 = vadd.f32 %v212, %v1840
  %v1913 = vadd.f32 %v213, %v1842
  %v1914 = vadd.f32 %v214, %v1845
  %v1915 = vadd.f32 %v215, %v1847
  %v1916 = vadd.f32 %v216, %v1850
  %v1917 = vadd.f32 %v217, %v1852
  %1918 = vst [vmem:[#allocation2] sm:$0xff] %v1854
  %1919 = vst [vmem:[#allocation2 + $0x8] sm:$0xff] %v1855
  %1920 = vst [vmem:[#allocation2 + $0x10] sm:$0xff] %v1856
  %1921 = vst [vmem:[#allocation2 + $0x18] sm:$0xff] %v1857
  %1922 = vst [vmem:[#allocation2 + $0x20] sm:$0xff] %v1858
  %1923 = vst [vmem:[#allocation2 + $0x28] sm:$0xff] %v1859
  %1924 = vst [vmem:[#allocation2 + $0x30] sm:$0xff] %v1860
  %1925 = vst [vmem:[#allocation2 + $0x38] sm:$0xff] %v1861
  %1926 = vst [vmem:[#allocation2 + $0x40] sm:$0xff] %v1862
  %1927 = vst [vmem:[#allocation2 + $0x48] sm:$0xff] %v1863
  %1928 = vst [vmem:[#allocation2 + $0x50] sm:$0xff] %v1864
  %1929 = vst [vmem:[#allocation2 + $0x58] sm:$0xff] %v1865
  %1930 = vst [vmem:[#allocation2 + $0x60] sm:$0xff] %v1866
  %1931 = vst [vmem:[#allocation2 + $0x68] sm:$0xff] %v1867
  %1932 = vst [vmem:[#allocation2 + $0x70] sm:$0xff] %v1868
  %1933 = vst [vmem:[#allocation2 + $0x78] sm:$0xff] %v1869
  %1934 = vst [vmem:[#allocation2 + $0x80] sm:$0xff] %v1870
  %1935 = vst [vmem:[#allocation2 + $0x88] sm:$0xff] %v1871
  %1936 = vst [vmem:[#allocation2 + $0x90] sm:$0xff] %v1872
  %1937 = vst [vmem:[#allocation2 + $0x98] sm:$0xff] %v1873
  %1938 = vst [vmem:[#allocation2 + $0xa0] sm:$0xff] %v1874
  %1939 = vst [vmem:[#allocation2 + $0xa8] sm:$0xff] %v1875
  %1940 = vst [vmem:[#allocation2 + $0xb0] sm:$0xff] %v1876
  %1941 = vst [vmem:[#allocation2 + $0xb8] sm:$0xff] %v1877
  %1942 = vst [vmem:[#allocation2 + $0xc0] sm:$0xff] %v1878
  %1943 = vst [vmem:[#allocation2 + $0xc8] sm:$0xff] %v1879
  %1944 = vst [vmem:[#allocation2 + $0xd0] sm:$0xff] %v1880
  %1945 = vst [vmem:[#allocation2 + $0xd8] sm:$0xff] %v1881
  %1946 = vst [vmem:[#allocation2 + $0xe0] sm:$0xff] %v1882
  %1947 = vst [vmem:[#allocation2 + $0xe8] sm:$0xff] %v1883
  %1948 = vst [vmem:[#allocation2 + $0xf0] sm:$0xff] %v1884
  %1949 = vst [vmem:[#allocation2 + $0xf8] sm:$0xff] %v1885
  %1950 = vst [vmem:[#allocation2 + $0x100] sm:$0xff] %v1886
  %1951 = vst [vmem:[#allocation2 + $0x108] sm:$0xff] %v1887
  %1952 = vst [vmem:[#allocation2 + $0x110] sm:$0xff] %v1888
  %1953 = vst [vmem:[#allocation2 + $0x118] sm:$0xff] %v1889
  %1954 = vst [vmem:[#allocation2 + $0x120] sm:$0xff] %v1890
  %1955 = vst [vmem:[#allocation2 + $0x128] sm:$0xff] %v1891
  %1956 = vst [vmem:[#allocation2 + $0x130] sm:$0xff] %v1892
  %1957 = vst [vmem:[#allocation2 + $0x138] sm:$0xff] %v1893
  %1958 = vst [vmem:[#allocation2 + $0x140] sm:$0xff] %v1894
  %1959 = vst [vmem:[#allocation2 + $0x148] sm:$0xff] %v1895
  %1960 = vst [vmem:[#allocation2 + $0x150] sm:$0xff] %v1896
  %1961 = vst [vmem:[#allocation2 + $0x158] sm:$0xff] %v1897
  %1962 = vst [vmem:[#allocation2 + $0x160] sm:$0xff] %v1898
  %1963 = vst [vmem:[#allocation2 + $0x168] sm:$0xff] %v1899
  %1964 = vst [vmem:[#allocation2 + $0x170] sm:$0xff] %v1900
  %1965 = vst [vmem:[#allocation2 + $0x178] sm:$0xff] %v1901
  %1966 = vst [vmem:[#allocation2 + $0x180] sm:$0xff] %v1902
  %1967 = vst [vmem:[#allocation2 + $0x188] sm:$0xff] %v1903
  %1968 = vst [vmem:[#allocation2 + $0x190] sm:$0xff] %v1904
  %1969 = vst [vmem:[#allocation2 + $0x198] sm:$0xff] %v1905
  %1970 = vst [vmem:[#allocation2 + $0x1a0] sm:$0xff] %v1906
  %1971 = vst [vmem:[#allocation2 + $0x1a8] sm:$0xff] %v1907
  %1972 = vst [vmem:[#allocation2 + $0x1b0] sm:$0xff] %v1908
  %1973 = vst [vmem:[#allocation2 + $0x1b8] sm:$0xff] %v1909
  %1974 = vst [vmem:[#allocation2 + $0x1c0] sm:$0xff] %v1910
  %1975 = vst [vmem:[#allocation2 + $0x1c8] sm:$0xff] %v1911
  %1976 = vst [vmem:[#allocation2 + $0x1d0] sm:$0xff] %v1912
  %1977 = vst [vmem:[#allocation2 + $0x1d8] sm:$0xff] %v1913
  %1978 = vst [vmem:[#allocation2 + $0x1e0] sm:$0xff] %v1914
  %1979 = vst [vmem:[#allocation2 + $0x1e8] sm:$0xff] %v1915
  %1980 = vst [vmem:[#allocation2 + $0x1f0] sm:$0xff] %v1916
  %1981 = vst [vmem:[#allocation2 + $0x1f8] sm:$0xff] %v1917
  // Predicated region
  $region22: #{gcn_forward.5} parent=0 // pred_check
    %p1982 = pneg %p17
  $region23: #{gcn_forward.5} parent=0 // pred_check_branch
    %1984 = sbr.rel (%p1982) target = $region25
  $region24: #{gcn_forward.5} parent=0 // pred_region
    %v1985 = vld [vmem:[#allocation2] sm:$0xff]
    %v1986 = vld [vmem:[#allocation2 + $0x8] sm:$0xff]
    %v1987 = vld [vmem:[#allocation2 + $0x10] sm:$0xff]
    %v1988 = vld [vmem:[#allocation2 + $0x18] sm:$0xff]
    %v1989 = vld [vmem:[#allocation2 + $0x20] sm:$0xff]
    %v1990 = vld [vmem:[#allocation2 + $0x28] sm:$0xff]
    %v1991 = vld [vmem:[#allocation2 + $0x30] sm:$0xff]
    %v1992 = vld [vmem:[#allocation2 + $0x38] sm:$0xff]
    %v1993 = vld [vmem:[#allocation2 + $0x40] sm:$0xff]
    %v1994 = vld [vmem:[#allocation2 + $0x48] sm:$0xff]
    %v1995 = vld [vmem:[#allocation2 + $0x50] sm:$0xff]
    %v1996 = vld [vmem:[#allocation2 + $0x58] sm:$0xff]
    %v1997 = vld [vmem:[#allocation2 + $0x60] sm:$0xff]
    %v1998 = vld [vmem:[#allocation2 + $0x68] sm:$0xff]
    %v1999 = vld [vmem:[#allocation2 + $0x70] sm:$0xff]
    %v2000 = vld [vmem:[#allocation2 + $0x78] sm:$0xff]
    %v2001 = vld [vmem:[#allocation2 + $0x80] sm:$0xff]
    %v2002 = vld [vmem:[#allocation2 + $0x88] sm:$0xff]
    %v2003 = vld [vmem:[#allocation2 + $0x90] sm:$0xff]
    %v2004 = vld [vmem:[#allocation2 + $0x98] sm:$0xff]
    %v2005 = vld [vmem:[#allocation2 + $0xa0] sm:$0xff]
    %v2006 = vld [vmem:[#allocation2 + $0xa8] sm:$0xff]
    %v2007 = vld [vmem:[#allocation2 + $0xb0] sm:$0xff]
    %v2008 = vld [vmem:[#allocation2 + $0xb8] sm:$0xff]
    %v2009 = vld [vmem:[#allocation2 + $0xc0] sm:$0xff]
    %v2010 = vld [vmem:[#allocation2 + $0xc8] sm:$0xff]
    %v2011 = vld [vmem:[#allocation2 + $0xd0] sm:$0xff]
    %v2012 = vld [vmem:[#allocation2 + $0xd8] sm:$0xff]
    %v2013 = vld [vmem:[#allocation2 + $0xe0] sm:$0xff]
    %v2014 = vld [vmem:[#allocation2 + $0xe8] sm:$0xff]
    %v2015 = vld [vmem:[#allocation2 + $0xf0] sm:$0xff]
    %v2016 = vld [vmem:[#allocation2 + $0xf8] sm:$0xff]
    %v2017 = vld [vmem:[#allocation2 + $0x100] sm:$0xff]
    %v2018 = vld [vmem:[#allocation2 + $0x108] sm:$0xff]
    %v2019 = vld [vmem:[#allocation2 + $0x110] sm:$0xff]
    %v2020 = vld [vmem:[#allocation2 + $0x118] sm:$0xff]
    %v2021 = vld [vmem:[#allocation2 + $0x120] sm:$0xff]
    %v2022 = vld [vmem:[#allocation2 + $0x128] sm:$0xff]
    %v2023 = vld [vmem:[#allocation2 + $0x130] sm:$0xff]
    %v2024 = vld [vmem:[#allocation2 + $0x138] sm:$0xff]
    %v2025 = vld [vmem:[#allocation2 + $0x140] sm:$0xff]
    %v2026 = vld [vmem:[#allocation2 + $0x148] sm:$0xff]
    %v2027 = vld [vmem:[#allocation2 + $0x150] sm:$0xff]
    %v2028 = vld [vmem:[#allocation2 + $0x158] sm:$0xff]
    %v2029 = vld [vmem:[#allocation2 + $0x160] sm:$0xff]
    %v2030 = vld [vmem:[#allocation2 + $0x168] sm:$0xff]
    %v2031 = vld [vmem:[#allocation2 + $0x170] sm:$0xff]
    %v2032 = vld [vmem:[#allocation2 + $0x178] sm:$0xff]
    %v2033 = vld [vmem:[#allocation2 + $0x180] sm:$0xff]
    %v2034 = vld [vmem:[#allocation2 + $0x188] sm:$0xff]
    %v2035 = vld [vmem:[#allocation2 + $0x190] sm:$0xff]
    %v2036 = vld [vmem:[#allocation2 + $0x198] sm:$0xff]
    %v2037 = vld [vmem:[#allocation2 + $0x1a0] sm:$0xff]
    %v2038 = vld [vmem:[#allocation2 + $0x1a8] sm:$0xff]
    %v2039 = vld [vmem:[#allocation2 + $0x1b0] sm:$0xff]
    %v2040 = vld [vmem:[#allocation2 + $0x1b8] sm:$0xff]
    %v2041 = vld [vmem:[#allocation2 + $0x1c0] sm:$0xff]
    %v2042 = vld [vmem:[#allocation2 + $0x1c8] sm:$0xff]
    %v2043 = vld [vmem:[#allocation2 + $0x1d0] sm:$0xff]
    %v2044 = vld [vmem:[#allocation2 + $0x1d8] sm:$0xff]
    %v2045 = vld [vmem:[#allocation2 + $0x1e0] sm:$0xff]
    %v2046 = vld [vmem:[#allocation2 + $0x1e8] sm:$0xff]
    %v2047 = vld [vmem:[#allocation2 + $0x1f0] sm:$0xff]
    %v2048 = vld [vmem:[#allocation2 + $0x1f8] sm:$0xff]
    %v2049 = vld [vmem:[%s2] sm:$0xff]
    %v2050 = vld [vmem:[%s2 + $0x8] sm:$0xff]
    %v2051 = vld [vmem:[%s2 + $0x10] sm:$0xff]
    %v2052 = vld [vmem:[%s2 + $0x18] sm:$0xff]
    %v2053 = vld [vmem:[%s2 + $0x20] sm:$0xff]
    %v2054 = vld [vmem:[%s2 + $0x28] sm:$0xff]
    %v2055 = vld [vmem:[%s2 + $0x30] sm:$0xff]
    %v2056 = vld [vmem:[%s2 + $0x38] sm:$0xff]
    %v2057 = vld [vmem:[%s2 + $0x40] sm:$0xff]
    %v2058 = vld [vmem:[%s2 + $0x48] sm:$0xff]
    %v2059 = vld [vmem:[%s2 + $0x50] sm:$0xff]
    %v2060 = vld [vmem:[%s2 + $0x58] sm:$0xff]
    %v2061 = vld [vmem:[%s2 + $0x60] sm:$0xff]
    %v2062 = vld [vmem:[%s2 + $0x68] sm:$0xff]
    %v2063 = vld [vmem:[%s2 + $0x70] sm:$0xff]
    %v2064 = vld [vmem:[%s2 + $0x78] sm:$0xff]
    %v2065 = vld [vmem:[%s2 + $0x80] sm:$0xff]
    %v2066 = vld [vmem:[%s2 + $0x88] sm:$0xff]
    %v2067 = vld [vmem:[%s2 + $0x90] sm:$0xff]
    %v2068 = vld [vmem:[%s2 + $0x98] sm:$0xff]
    %v2069 = vld [vmem:[%s2 + $0xa0] sm:$0xff]
    %v2070 = vld [vmem:[%s2 + $0xa8] sm:$0xff]
    %v2071 = vld [vmem:[%s2 + $0xb0] sm:$0xff]
    %v2072 = vld [vmem:[%s2 + $0xb8] sm:$0xff]
    %v2073 = vld [vmem:[%s2 + $0xc0] sm:$0xff]
    %v2074 = vld [vmem:[%s2 + $0xc8] sm:$0xff]
    %v2075 = vld [vmem:[%s2 + $0xd0] sm:$0xff]
    %v2076 = vld [vmem:[%s2 + $0xd8] sm:$0xff]
    %v2077 = vld [vmem:[%s2 + $0xe0] sm:$0xff]
    %v2078 = vld [vmem:[%s2 + $0xe8] sm:$0xff]
    %v2079 = vld [vmem:[%s2 + $0xf0] sm:$0xff]
    %v2080 = vld [vmem:[%s2 + $0xf8] sm:$0xff]
    %v2081 = vld [vmem:[%s2 + $0x100] sm:$0xff]
    %v2082 = vld [vmem:[%s2 + $0x108] sm:$0xff]
    %v2083 = vld [vmem:[%s2 + $0x110] sm:$0xff]
    %v2084 = vld [vmem:[%s2 + $0x118] sm:$0xff]
    %v2085 = vld [vmem:[%s2 + $0x120] sm:$0xff]
    %v2086 = vld [vmem:[%s2 + $0x128] sm:$0xff]
    %v2087 = vld [vmem:[%s2 + $0x130] sm:$0xff]
    %v2088 = vld [vmem:[%s2 + $0x138] sm:$0xff]
    %v2089 = vld [vmem:[%s2 + $0x140] sm:$0xff]
    %v2090 = vld [vmem:[%s2 + $0x148] sm:$0xff]
    %v2091 = vld [vmem:[%s2 + $0x150] sm:$0xff]
    %v2092 = vld [vmem:[%s2 + $0x158] sm:$0xff]
    %v2093 = vld [vmem:[%s2 + $0x160] sm:$0xff]
    %v2094 = vld [vmem:[%s2 + $0x168] sm:$0xff]
    %v2095 = vld [vmem:[%s2 + $0x170] sm:$0xff]
    %v2096 = vld [vmem:[%s2 + $0x178] sm:$0xff]
    %v2097 = vld [vmem:[%s2 + $0x180] sm:$0xff]
    %v2098 = vld [vmem:[%s2 + $0x188] sm:$0xff]
    %v2099 = vld [vmem:[%s2 + $0x190] sm:$0xff]
    %v2100 = vld [vmem:[%s2 + $0x198] sm:$0xff]
    %v2101 = vld [vmem:[%s2 + $0x1a0] sm:$0xff]
    %v2102 = vld [vmem:[%s2 + $0x1a8] sm:$0xff]
    %v2103 = vld [vmem:[%s2 + $0x1b0] sm:$0xff]
    %v2104 = vld [vmem:[%s2 + $0x1b8] sm:$0xff]
    %v2105 = vld [vmem:[%s2 + $0x1c0] sm:$0xff]
    %v2106 = vld [vmem:[%s2 + $0x1c8] sm:$0xff]
    %v2107 = vld [vmem:[%s2 + $0x1d0] sm:$0xff]
    %v2108 = vld [vmem:[%s2 + $0x1d8] sm:$0xff]
    %v2109 = vld [vmem:[%s2 + $0x1e0] sm:$0xff]
    %v2110 = vld [vmem:[%s2 + $0x1e8] sm:$0xff]
    %v2111 = vld [vmem:[%s2 + $0x1f0] sm:$0xff]
    %v2112 = vld [vmem:[%s2 + $0x1f8] sm:$0xff]
    %2114 = vset.pattern.permute.xlu0 0
    %2115 = vperm.xlu0 %2114, %v2049
    %v2116 = vpop.permute.xlu0 %2115
    %2119 = vset.pattern.permute.xlu0 0
    %2120 = vperm.xlu0 %2119, %v2050
    %v2121 = vpop.permute.xlu0 %2120
    %2124 = vset.pattern.permute.xlu0 0
    %2125 = vperm.xlu0 %2124, %v2051
    %v2126 = vpop.permute.xlu0 %2125
    %2129 = vset.pattern.permute.xlu0 0
    %2130 = vperm.xlu0 %2129, %v2052
    %v2131 = vpop.permute.xlu0 %2130
    %2134 = vset.pattern.permute.xlu0 0
    %2135 = vperm.xlu0 %2134, %v2053
    %v2136 = vpop.permute.xlu0 %2135
    %2139 = vset.pattern.permute.xlu0 0
    %2140 = vperm.xlu0 %2139, %v2054
    %v2141 = vpop.permute.xlu0 %2140
    %2144 = vset.pattern.permute.xlu0 0
    %2145 = vperm.xlu0 %2144, %v2055
    %v2146 = vpop.permute.xlu0 %2145
    %2149 = vset.pattern.permute.xlu0 0
    %2150 = vperm.xlu0 %2149, %v2056
    %v2151 = vpop.permute.xlu0 %2150
    %2154 = vset.pattern.permute.xlu0 0
    %2155 = vperm.xlu0 %2154, %v2057
    %v2156 = vpop.permute.xlu0 %2155
    %2159 = vset.pattern.permute.xlu0 0
    %2160 = vperm.xlu0 %2159, %v2058
    %v2161 = vpop.permute.xlu0 %2160
    %2164 = vset.pattern.permute.xlu0 0
    %2165 = vperm.xlu0 %2164, %v2059
    %v2166 = vpop.permute.xlu0 %2165
    %2169 = vset.pattern.permute.xlu0 0
    %2170 = vperm.xlu0 %2169, %v2060
    %v2171 = vpop.permute.xlu0 %2170
    %2174 = vset.pattern.permute.xlu0 0
    %2175 = vperm.xlu0 %2174, %v2061
    %v2176 = vpop.permute.xlu0 %2175
    %2179 = vset.pattern.permute.xlu0 0
    %2180 = vperm.xlu0 %2179, %v2062
    %v2181 = vpop.permute.xlu0 %2180
    %2184 = vset.pattern.permute.xlu0 0
    %2185 = vperm.xlu0 %2184, %v2063
    %v2186 = vpop.permute.xlu0 %2185
    %2189 = vset.pattern.permute.xlu0 0
    %2190 = vperm.xlu0 %2189, %v2064
    %v2191 = vpop.permute.xlu0 %2190
    %2194 = vset.pattern.permute.xlu0 0
    %2195 = vperm.xlu0 %2194, %v2065
    %v2196 = vpop.permute.xlu0 %2195
    %2199 = vset.pattern.permute.xlu0 0
    %2200 = vperm.xlu0 %2199, %v2066
    %v2201 = vpop.permute.xlu0 %2200
    %2204 = vset.pattern.permute.xlu0 0
    %2205 = vperm.xlu0 %2204, %v2067
    %v2206 = vpop.permute.xlu0 %2205
    %2209 = vset.pattern.permute.xlu0 0
    %2210 = vperm.xlu0 %2209, %v2068
    %v2211 = vpop.permute.xlu0 %2210
    %2214 = vset.pattern.permute.xlu0 0
    %2215 = vperm.xlu0 %2214, %v2069
    %v2216 = vpop.permute.xlu0 %2215
    %2219 = vset.pattern.permute.xlu0 0
    %2220 = vperm.xlu0 %2219, %v2070
    %v2221 = vpop.permute.xlu0 %2220
    %2224 = vset.pattern.permute.xlu0 0
    %2225 = vperm.xlu0 %2224, %v2071
    %v2226 = vpop.permute.xlu0 %2225
    %2229 = vset.pattern.permute.xlu0 0
    %2230 = vperm.xlu0 %2229, %v2072
    %v2231 = vpop.permute.xlu0 %2230
    %2234 = vset.pattern.permute.xlu0 0
    %2235 = vperm.xlu0 %2234, %v2073
    %v2236 = vpop.permute.xlu0 %2235
    %2239 = vset.pattern.permute.xlu0 0
    %2240 = vperm.xlu0 %2239, %v2074
    %v2241 = vpop.permute.xlu0 %2240
    %2244 = vset.pattern.permute.xlu0 0
    %2245 = vperm.xlu0 %2244, %v2075
    %v2246 = vpop.permute.xlu0 %2245
    %2249 = vset.pattern.permute.xlu0 0
    %2250 = vperm.xlu0 %2249, %v2076
    %v2251 = vpop.permute.xlu0 %2250
    %2254 = vset.pattern.permute.xlu0 0
    %2255 = vperm.xlu0 %2254, %v2077
    %v2256 = vpop.permute.xlu0 %2255
    %2259 = vset.pattern.permute.xlu0 0
    %2260 = vperm.xlu0 %2259, %v2078
    %v2261 = vpop.permute.xlu0 %2260
    %2264 = vset.pattern.permute.xlu0 0
    %2265 = vperm.xlu0 %2264, %v2079
    %v2266 = vpop.permute.xlu0 %2265
    %2269 = vset.pattern.permute.xlu0 0
    %2270 = vperm.xlu0 %2269, %v2080
    %v2271 = vpop.permute.xlu0 %2270
    %2274 = vset.pattern.permute.xlu0 0
    %2275 = vperm.xlu0 %2274, %v2081
    %v2276 = vpop.permute.xlu0 %2275
    %2279 = vset.pattern.permute.xlu0 0
    %2280 = vperm.xlu0 %2279, %v2082
    %v2281 = vpop.permute.xlu0 %2280
    %2284 = vset.pattern.permute.xlu0 0
    %2285 = vperm.xlu0 %2284, %v2083
    %v2286 = vpop.permute.xlu0 %2285
    %2289 = vset.pattern.permute.xlu0 0
    %2290 = vperm.xlu0 %2289, %v2084
    %v2291 = vpop.permute.xlu0 %2290
    %2294 = vset.pattern.permute.xlu0 0
    %2295 = vperm.xlu0 %2294, %v2085
    %v2296 = vpop.permute.xlu0 %2295
    %2299 = vset.pattern.permute.xlu0 0
    %2300 = vperm.xlu0 %2299, %v2086
    %v2301 = vpop.permute.xlu0 %2300
    %2304 = vset.pattern.permute.xlu0 0
    %2305 = vperm.xlu0 %2304, %v2087
    %v2306 = vpop.permute.xlu0 %2305
    %2309 = vset.pattern.permute.xlu0 0
    %2310 = vperm.xlu0 %2309, %v2088
    %v2311 = vpop.permute.xlu0 %2310
    %2314 = vset.pattern.permute.xlu0 0
    %2315 = vperm.xlu0 %2314, %v2089
    %v2316 = vpop.permute.xlu0 %2315
    %2319 = vset.pattern.permute.xlu0 0
    %2320 = vperm.xlu0 %2319, %v2090
    %v2321 = vpop.permute.xlu0 %2320
    %2324 = vset.pattern.permute.xlu0 0
    %2325 = vperm.xlu0 %2324, %v2091
    %v2326 = vpop.permute.xlu0 %2325
    %2329 = vset.pattern.permute.xlu0 0
    %2330 = vperm.xlu0 %2329, %v2092
    %v2331 = vpop.permute.xlu0 %2330
    %2334 = vset.pattern.permute.xlu0 0
    %2335 = vperm.xlu0 %2334, %v2093
    %v2336 = vpop.permute.xlu0 %2335
    %2339 = vset.pattern.permute.xlu0 0
    %2340 = vperm.xlu0 %2339, %v2094
    %v2341 = vpop.permute.xlu0 %2340
    %2344 = vset.pattern.permute.xlu0 0
    %2345 = vperm.xlu0 %2344, %v2095
    %v2346 = vpop.permute.xlu0 %2345
    %2349 = vset.pattern.permute.xlu0 0
    %2350 = vperm.xlu0 %2349, %v2096
    %v2351 = vpop.permute.xlu0 %2350
    %2354 = vset.pattern.permute.xlu0 0
    %2355 = vperm.xlu0 %2354, %v2097
    %v2356 = vpop.permute.xlu0 %2355
    %2359 = vset.pattern.permute.xlu0 0
    %2360 = vperm.xlu0 %2359, %v2098
    %v2361 = vpop.permute.xlu0 %2360
    %2364 = vset.pattern.permute.xlu0 0
    %2365 = vperm.xlu0 %2364, %v2099
    %v2366 = vpop.permute.xlu0 %2365
    %2369 = vset.pattern.permute.xlu0 0
    %2370 = vperm.xlu0 %2369, %v2100
    %v2371 = vpop.permute.xlu0 %2370
    %2374 = vset.pattern.permute.xlu0 0
    %2375 = vperm.xlu0 %2374, %v2101
    %v2376 = vpop.permute.xlu0 %2375
    %2379 = vset.pattern.permute.xlu0 0
    %2380 = vperm.xlu0 %2379, %v2102
    %v2381 = vpop.permute.xlu0 %2380
    %2384 = vset.pattern.permute.xlu0 0
    %2385 = vperm.xlu0 %2384, %v2103
    %v2386 = vpop.permute.xlu0 %2385
    %2389 = vset.pattern.permute.xlu0 0
    %2390 = vperm.xlu0 %2389, %v2104
    %v2391 = vpop.permute.xlu0 %2390
    %2394 = vset.pattern.permute.xlu0 0
    %2395 = vperm.xlu0 %2394, %v2105
    %v2396 = vpop.permute.xlu0 %2395
    %2399 = vset.pattern.permute.xlu0 0
    %2400 = vperm.xlu0 %2399, %v2106
    %v2401 = vpop.permute.xlu0 %2400
    %2404 = vset.pattern.permute.xlu0 0
    %2405 = vperm.xlu0 %2404, %v2107
    %v2406 = vpop.permute.xlu0 %2405
    %2409 = vset.pattern.permute.xlu0 0
    %2410 = vperm.xlu0 %2409, %v2108
    %v2411 = vpop.permute.xlu0 %2410
    %2414 = vset.pattern.permute.xlu0 0
    %2415 = vperm.xlu0 %2414, %v2109
    %v2416 = vpop.permute.xlu0 %2415
    %2419 = vset.pattern.permute.xlu0 0
    %2420 = vperm.xlu0 %2419, %v2110
    %v2421 = vpop.permute.xlu0 %2420
    %2424 = vset.pattern.permute.xlu0 0
    %2425 = vperm.xlu0 %2424, %v2111
    %v2426 = vpop.permute.xlu0 %2425
    %2429 = vset.pattern.permute.xlu0 0
    %2430 = vperm.xlu0 %2429, %v2112
    %v2431 = vpop.permute.xlu0 %2430
    %v2433 = vmul.f32 %v1985, %v2116
    %v2434 = vmul.f32 %v1986, %v2121
    %v2435 = vmul.f32 %v1987, %v2126
    %v2436 = vmul.f32 %v1988, %v2131
    %v2437 = vmul.f32 %v1989, %v2136
    %v2438 = vmul.f32 %v1990, %v2141
    %v2439 = vmul.f32 %v1991, %v2146
    %v2440 = vmul.f32 %v1992, %v2151
    %v2441 = vmul.f32 %v1993, %v2156
    %v2442 = vmul.f32 %v1994, %v2161
    %v2443 = vmul.f32 %v1995, %v2166
    %v2444 = vmul.f32 %v1996, %v2171
    %v2445 = vmul.f32 %v1997, %v2176
    %v2446 = vmul.f32 %v1998, %v2181
    %v2447 = vmul.f32 %v1999, %v2186
    %v2448 = vmul.f32 %v2000, %v2191
    %v2449 = vmul.f32 %v2001, %v2196
    %v2450 = vmul.f32 %v2002, %v2201
    %v2451 = vmul.f32 %v2003, %v2206
    %v2452 = vmul.f32 %v2004, %v2211
    %v2453 = vmul.f32 %v2005, %v2216
    %v2454 = vmul.f32 %v2006, %v2221
    %v2455 = vmul.f32 %v2007, %v2226
    %v2456 = vmul.f32 %v2008, %v2231
    %v2457 = vmul.f32 %v2009, %v2236
    %v2458 = vmul.f32 %v2010, %v2241
    %v2459 = vmul.f32 %v2011, %v2246
    %v2460 = vmul.f32 %v2012, %v2251
    %v2461 = vmul.f32 %v2013, %v2256
    %v2462 = vmul.f32 %v2014, %v2261
    %v2463 = vmul.f32 %v2015, %v2266
    %v2464 = vmul.f32 %v2016, %v2271
    %v2465 = vmul.f32 %v2017, %v2276
    %v2466 = vmul.f32 %v2018, %v2281
    %v2467 = vmul.f32 %v2019, %v2286
    %v2468 = vmul.f32 %v2020, %v2291
    %v2469 = vmul.f32 %v2021, %v2296
    %v2470 = vmul.f32 %v2022, %v2301
    %v2471 = vmul.f32 %v2023, %v2306
    %v2472 = vmul.f32 %v2024, %v2311
    %v2473 = vmul.f32 %v2025, %v2316
    %v2474 = vmul.f32 %v2026, %v2321
    %v2475 = vmul.f32 %v2027, %v2326
    %v2476 = vmul.f32 %v2028, %v2331
    %v2477 = vmul.f32 %v2029, %v2336
    %v2478 = vmul.f32 %v2030, %v2341
    %v2479 = vmul.f32 %v2031, %v2346
    %v2480 = vmul.f32 %v2032, %v2351
    %v2481 = vmul.f32 %v2033, %v2356
    %v2482 = vmul.f32 %v2034, %v2361
    %v2483 = vmul.f32 %v2035, %v2366
    %v2484 = vmul.f32 %v2036, %v2371
    %v2485 = vmul.f32 %v2037, %v2376
    %v2486 = vmul.f32 %v2038, %v2381
    %v2487 = vmul.f32 %v2039, %v2386
    %v2488 = vmul.f32 %v2040, %v2391
    %v2489 = vmul.f32 %v2041, %v2396
    %v2490 = vmul.f32 %v2042, %v2401
    %v2491 = vmul.f32 %v2043, %v2406
    %v2492 = vmul.f32 %v2044, %v2411
    %v2493 = vmul.f32 %v2045, %v2416
    %v2494 = vmul.f32 %v2046, %v2421
    %v2495 = vmul.f32 %v2047, %v2426
    %v2496 = vmul.f32 %v2048, %v2431
    %v2497 = vld [vmem:[%s3] sm:$0x1]
    %v2499 = vperm.slane %v2497, 0
    %v2501 = vadd.f32 %v2433, %v2499
    %v2502 = vadd.f32 %v2434, %v2499
    %v2503 = vadd.f32 %v2435, %v2499
    %v2504 = vadd.f32 %v2436, %v2499
    %v2505 = vadd.f32 %v2437, %v2499
    %v2506 = vadd.f32 %v2438, %v2499
    %v2507 = vadd.f32 %v2439, %v2499
    %v2508 = vadd.f32 %v2440, %v2499
    %v2509 = vadd.f32 %v2441, %v2499
    %v2510 = vadd.f32 %v2442, %v2499
    %v2511 = vadd.f32 %v2443, %v2499
    %v2512 = vadd.f32 %v2444, %v2499
    %v2513 = vadd.f32 %v2445, %v2499
    %v2514 = vadd.f32 %v2446, %v2499
    %v2515 = vadd.f32 %v2447, %v2499
    %v2516 = vadd.f32 %v2448, %v2499
    %v2517 = vadd.f32 %v2449, %v2499
    %v2518 = vadd.f32 %v2450, %v2499
    %v2519 = vadd.f32 %v2451, %v2499
    %v2520 = vadd.f32 %v2452, %v2499
    %v2521 = vadd.f32 %v2453, %v2499
    %v2522 = vadd.f32 %v2454, %v2499
    %v2523 = vadd.f32 %v2455, %v2499
    %v2524 = vadd.f32 %v2456, %v2499
    %v2525 = vadd.f32 %v2457, %v2499
    %v2526 = vadd.f32 %v2458, %v2499
    %v2527 = vadd.f32 %v2459, %v2499
    %v2528 = vadd.f32 %v2460, %v2499
    %v2529 = vadd.f32 %v2461, %v2499
    %v2530 = vadd.f32 %v2462, %v2499
    %v2531 = vadd.f32 %v2463, %v2499
    %v2532 = vadd.f32 %v2464, %v2499
    %v2533 = vadd.f32 %v2465, %v2499
    %v2534 = vadd.f32 %v2466, %v2499
    %v2535 = vadd.f32 %v2467, %v2499
    %v2536 = vadd.f32 %v2468, %v2499
    %v2537 = vadd.f32 %v2469, %v2499
    %v2538 = vadd.f32 %v2470, %v2499
    %v2539 = vadd.f32 %v2471, %v2499
    %v2540 = vadd.f32 %v2472, %v2499
    %v2541 = vadd.f32 %v2473, %v2499
    %v2542 = vadd.f32 %v2474, %v2499
    %v2543 = vadd.f32 %v2475, %v2499
    %v2544 = vadd.f32 %v2476, %v2499
    %v2545 = vadd.f32 %v2477, %v2499
    %v2546 = vadd.f32 %v2478, %v2499
    %v2547 = vadd.f32 %v2479, %v2499
    %v2548 = vadd.f32 %v2480, %v2499
    %v2549 = vadd.f32 %v2481, %v2499
    %v2550 = vadd.f32 %v2482, %v2499
    %v2551 = vadd.f32 %v2483, %v2499
    %v2552 = vadd.f32 %v2484, %v2499
    %v2553 = vadd.f32 %v2485, %v2499
    %v2554 = vadd.f32 %v2486, %v2499
    %v2555 = vadd.f32 %v2487, %v2499
    %v2556 = vadd.f32 %v2488, %v2499
    %v2557 = vadd.f32 %v2489, %v2499
    %v2558 = vadd.f32 %v2490, %v2499
    %v2559 = vadd.f32 %v2491, %v2499
    %v2560 = vadd.f32 %v2492, %v2499
    %v2561 = vadd.f32 %v2493, %v2499
    %v2562 = vadd.f32 %v2494, %v2499
    %v2563 = vadd.f32 %v2495, %v2499
    %v2564 = vadd.f32 %v2496, %v2499
    %v2565 = vmax.f32 %v2501, 0.0
    %v2566 = vmax.f32 %v2502, 0.0
    %v2567 = vmax.f32 %v2503, 0.0
    %v2568 = vmax.f32 %v2504, 0.0
    %v2569 = vmax.f32 %v2505, 0.0
    %v2570 = vmax.f32 %v2506, 0.0
    %v2571 = vmax.f32 %v2507, 0.0
    %v2572 = vmax.f32 %v2508, 0.0
    %v2573 = vmax.f32 %v2509, 0.0
    %v2574 = vmax.f32 %v2510, 0.0
    %v2575 = vmax.f32 %v2511, 0.0
    %v2576 = vmax.f32 %v2512, 0.0
    %v2577 = vmax.f32 %v2513, 0.0
    %v2578 = vmax.f32 %v2514, 0.0
    %v2579 = vmax.f32 %v2515, 0.0
    %v2580 = vmax.f32 %v2516, 0.0
    %v2581 = vmax.f32 %v2517, 0.0
    %v2582 = vmax.f32 %v2518, 0.0
    %v2583 = vmax.f32 %v2519, 0.0
    %v2584 = vmax.f32 %v2520, 0.0
    %v2585 = vmax.f32 %v2521, 0.0
    %v2586 = vmax.f32 %v2522, 0.0
    %v2587 = vmax.f32 %v2523, 0.0
    %v2588 = vmax.f32 %v2524, 0.0
    %v2589 = vmax.f32 %v2525, 0.0
    %v2590 = vmax.f32 %v2526, 0.0
    %v2591 = vmax.f32 %v2527, 0.0
    %v2592 = vmax.f32 %v2528, 0.0
    %v2593 = vmax.f32 %v2529, 0.0
    %v2594 = vmax.f32 %v2530, 0.0
    %v2595 = vmax.f32 %v2531, 0.0
    %v2596 = vmax.f32 %v2532, 0.0
    %v2597 = vmax.f32 %v2533, 0.0
    %v2598 = vmax.f32 %v2534, 0.0
    %v2599 = vmax.f32 %v2535, 0.0
    %v2600 = vmax.f32 %v2536, 0.0
    %v2601 = vmax.f32 %v2537, 0.0
    %v2602 = vmax.f32 %v2538, 0.0
    %v2603 = vmax.f32 %v2539, 0.0
    %v2604 = vmax.f32 %v2540, 0.0
    %v2605 = vmax.f32 %v2541, 0.0
    %v2606 = vmax.f32 %v2542, 0.0
    %v2607 = vmax.f32 %v2543, 0.0
    %v2608 = vmax.f32 %v2544, 0.0
    %v2609 = vmax.f32 %v2545, 0.0
    %v2610 = vmax.f32 %v2546, 0.0
    %v2611 = vmax.f32 %v2547, 0.0
    %v2612 = vmax.f32 %v2548, 0.0
    %v2613 = vmax.f32 %v2549, 0.0
    %v2614 = vmax.f32 %v2550, 0.0
    %v2615 = vmax.f32 %v2551, 0.0
    %v2616 = vmax.f32 %v2552, 0.0
    %v2617 = vmax.f32 %v2553, 0.0
    %v2618 = vmax.f32 %v2554, 0.0
    %v2619 = vmax.f32 %v2555, 0.0
    %v2620 = vmax.f32 %v2556, 0.0
    %v2621 = vmax.f32 %v2557, 0.0
    %v2622 = vmax.f32 %v2558, 0.0
    %v2623 = vmax.f32 %v2559, 0.0
    %v2624 = vmax.f32 %v2560, 0.0
    %v2625 = vmax.f32 %v2561, 0.0
    %v2626 = vmax.f32 %v2562, 0.0
    %v2627 = vmax.f32 %v2563, 0.0
    %v2628 = vmax.f32 %v2564, 0.0
    %v2629 = vpack.c.bf16 %v2565, %v2565
    %v2630 = vpack.c.bf16 %v2566, %v2566
    %v2631 = vpack.c.bf16 %v2567, %v2567
    %v2632 = vpack.c.bf16 %v2568, %v2568
    %v2633 = vpack.c.bf16 %v2569, %v2569
    %v2634 = vpack.c.bf16 %v2570, %v2570
    %v2635 = vpack.c.bf16 %v2571, %v2571
    %v2636 = vpack.c.bf16 %v2572, %v2572
    %v2637 = vpack.c.bf16 %v2573, %v2573
    %v2638 = vpack.c.bf16 %v2574, %v2574
    %v2639 = vpack.c.bf16 %v2575, %v2575
    %v2640 = vpack.c.bf16 %v2576, %v2576
    %v2641 = vpack.c.bf16 %v2577, %v2577
    %v2642 = vpack.c.bf16 %v2578, %v2578
    %v2643 = vpack.c.bf16 %v2579, %v2579
    %v2644 = vpack.c.bf16 %v2580, %v2580
    %v2645 = vpack.c.bf16 %v2581, %v2581
    %v2646 = vpack.c.bf16 %v2582, %v2582
    %v2647 = vpack.c.bf16 %v2583, %v2583
    %v2648 = vpack.c.bf16 %v2584, %v2584
    %v2649 = vpack.c.bf16 %v2585, %v2585
    %v2650 = vpack.c.bf16 %v2586, %v2586
    %v2651 = vpack.c.bf16 %v2587, %v2587
    %v2652 = vpack.c.bf16 %v2588, %v2588
    %v2653 = vpack.c.bf16 %v2589, %v2589
    %v2654 = vpack.c.bf16 %v2590, %v2590
    %v2655 = vpack.c.bf16 %v2591, %v2591
    %v2656 = vpack.c.bf16 %v2592, %v2592
    %v2657 = vpack.c.bf16 %v2593, %v2593
    %v2658 = vpack.c.bf16 %v2594, %v2594
    %v2659 = vpack.c.bf16 %v2595, %v2595
    %v2660 = vpack.c.bf16 %v2596, %v2596
    %v2661 = vpack.c.bf16 %v2597, %v2597
    %v2662 = vpack.c.bf16 %v2598, %v2598
    %v2663 = vpack.c.bf16 %v2599, %v2599
    %v2664 = vpack.c.bf16 %v2600, %v2600
    %v2665 = vpack.c.bf16 %v2601, %v2601
    %v2666 = vpack.c.bf16 %v2602, %v2602
    %v2667 = vpack.c.bf16 %v2603, %v2603
    %v2668 = vpack.c.bf16 %v2604, %v2604
    %v2669 = vpack.c.bf16 %v2605, %v2605
    %v2670 = vpack.c.bf16 %v2606, %v2606
    %v2671 = vpack.c.bf16 %v2607, %v2607
    %v2672 = vpack.c.bf16 %v2608, %v2608
    %v2673 = vpack.c.bf16 %v2609, %v2609
    %v2674 = vpack.c.bf16 %v2610, %v2610
    %v2675 = vpack.c.bf16 %v2611, %v2611
    %v2676 = vpack.c.bf16 %v2612, %v2612
    %v2677 = vpack.c.bf16 %v2613, %v2613
    %v2678 = vpack.c.bf16 %v2614, %v2614
    %v2679 = vpack.c.bf16 %v2615, %v2615
    %v2680 = vpack.c.bf16 %v2616, %v2616
    %v2681 = vpack.c.bf16 %v2617, %v2617
    %v2682 = vpack.c.bf16 %v2618, %v2618
    %v2683 = vpack.c.bf16 %v2619, %v2619
    %v2684 = vpack.c.bf16 %v2620, %v2620
    %v2685 = vpack.c.bf16 %v2621, %v2621
    %v2686 = vpack.c.bf16 %v2622, %v2622
    %v2687 = vpack.c.bf16 %v2623, %v2623
    %v2688 = vpack.c.bf16 %v2624, %v2624
    %v2689 = vpack.c.bf16 %v2625, %v2625
    %v2690 = vpack.c.bf16 %v2626, %v2626
    %v2691 = vpack.c.bf16 %v2627, %v2627
    %v2692 = vpack.c.bf16 %v2628, %v2628
    %2693 = vst [vmem:[%s4] sm:$0xf] %v2629
    %2694 = vst [vmem:[%s4 + $0x4] sm:$0xf] %v2630
    %2695 = vst [vmem:[%s4 + $0x8] sm:$0xf] %v2631
    %2696 = vst [vmem:[%s4 + $0xc] sm:$0xf] %v2632
    %2697 = vst [vmem:[%s4 + $0x10] sm:$0xf] %v2633
    %2698 = vst [vmem:[%s4 + $0x14] sm:$0xf] %v2634
    %2699 = vst [vmem:[%s4 + $0x18] sm:$0xf] %v2635
    %2700 = vst [vmem:[%s4 + $0x1c] sm:$0xf] %v2636
    %2701 = vst [vmem:[%s4 + $0x20] sm:$0xf] %v2637
    %2702 = vst [vmem:[%s4 + $0x24] sm:$0xf] %v2638
    %2703 = vst [vmem:[%s4 + $0x28] sm:$0xf] %v2639
    %2704 = vst [vmem:[%s4 + $0x2c] sm:$0xf] %v2640
    %2705 = vst [vmem:[%s4 + $0x30] sm:$0xf] %v2641
    %2706 = vst [vmem:[%s4 + $0x34] sm:$0xf] %v2642
    %2707 = vst [vmem:[%s4 + $0x38] sm:$0xf] %v2643
    %2708 = vst [vmem:[%s4 + $0x3c] sm:$0xf] %v2644
    %2709 = vst [vmem:[%s4 + $0x40] sm:$0xf] %v2645
    %2710 = vst [vmem:[%s4 + $0x44] sm:$0xf] %v2646
    %2711 = vst [vmem:[%s4 + $0x48] sm:$0xf] %v2647
    %2712 = vst [vmem:[%s4 + $0x4c] sm:$0xf] %v2648
    %2713 = vst [vmem:[%s4 + $0x50] sm:$0xf] %v2649
    %2714 = vst [vmem:[%s4 + $0x54] sm:$0xf] %v2650
    %2715 = vst [vmem:[%s4 + $0x58] sm:$0xf] %v2651
    %2716 = vst [vmem:[%s4 + $0x5c] sm:$0xf] %v2652
    %2717 = vst [vmem:[%s4 + $0x60] sm:$0xf] %v2653
    %2718 = vst [vmem:[%s4 + $0x64] sm:$0xf] %v2654
    %2719 = vst [vmem:[%s4 + $0x68] sm:$0xf] %v2655
    %2720 = vst [vmem:[%s4 + $0x6c] sm:$0xf] %v2656
    %2721 = vst [vmem:[%s4 + $0x70] sm:$0xf] %v2657
    %2722 = vst [vmem:[%s4 + $0x74] sm:$0xf] %v2658
    %2723 = vst [vmem:[%s4 + $0x78] sm:$0xf] %v2659
    %2724 = vst [vmem:[%s4 + $0x7c] sm:$0xf] %v2660
    %2725 = vst [vmem:[%s4 + $0x80] sm:$0xf] %v2661
    %2726 = vst [vmem:[%s4 + $0x84] sm:$0xf] %v2662
    %2727 = vst [vmem:[%s4 + $0x88] sm:$0xf] %v2663
    %2728 = vst [vmem:[%s4 + $0x8c] sm:$0xf] %v2664
    %2729 = vst [vmem:[%s4 + $0x90] sm:$0xf] %v2665
    %2730 = vst [vmem:[%s4 + $0x94] sm:$0xf] %v2666
    %2731 = vst [vmem:[%s4 + $0x98] sm:$0xf] %v2667
    %2732 = vst [vmem:[%s4 + $0x9c] sm:$0xf] %v2668
    %2733 = vst [vmem:[%s4 + $0xa0] sm:$0xf] %v2669
    %2734 = vst [vmem:[%s4 + $0xa4] sm:$0xf] %v2670
    %2735 = vst [vmem:[%s4 + $0xa8] sm:$0xf] %v2671
    %2736 = vst [vmem:[%s4 + $0xac] sm:$0xf] %v2672
    %2737 = vst [vmem:[%s4 + $0xb0] sm:$0xf] %v2673
    %2738 = vst [vmem:[%s4 + $0xb4] sm:$0xf] %v2674
    %2739 = vst [vmem:[%s4 + $0xb8] sm:$0xf] %v2675
    %2740 = vst [vmem:[%s4 + $0xbc] sm:$0xf] %v2676
    %2741 = vst [vmem:[%s4 + $0xc0] sm:$0xf] %v2677
    %2742 = vst [vmem:[%s4 + $0xc4] sm:$0xf] %v2678
    %2743 = vst [vmem:[%s4 + $0xc8] sm:$0xf] %v2679
    %2744 = vst [vmem:[%s4 + $0xcc] sm:$0xf] %v2680
    %2745 = vst [vmem:[%s4 + $0xd0] sm:$0xf] %v2681
    %2746 = vst [vmem:[%s4 + $0xd4] sm:$0xf] %v2682
    %2747 = vst [vmem:[%s4 + $0xd8] sm:$0xf] %v2683
    %2748 = vst [vmem:[%s4 + $0xdc] sm:$0xf] %v2684
    %2749 = vst [vmem:[%s4 + $0xe0] sm:$0xf] %v2685
    %2750 = vst [vmem:[%s4 + $0xe4] sm:$0xf] %v2686
    %2751 = vst [vmem:[%s4 + $0xe8] sm:$0xf] %v2687
    %2752 = vst [vmem:[%s4 + $0xec] sm:$0xf] %v2688
    %2753 = vst [vmem:[%s4 + $0xf0] sm:$0xf] %v2689
    %2754 = vst [vmem:[%s4 + $0xf4] sm:$0xf] %v2690
    %2755 = vst [vmem:[%s4 + $0xf8] sm:$0xf] %v2691
    %2756 = vst [vmem:[%s4 + $0xfc] sm:$0xf] %v2692
  $region25: #{gcn_forward.5} parent=0 // pred_fallthru
    _
  // Predicated region
  $region26: #{gcn_forward.5} parent=0 // pred_check
    _
  $region27: #{gcn_forward.5} parent=0 // pred_check_branch
    %2758 = sbr.rel (0) target = $region29
  $region28: #{gcn_forward.5} parent=0 // pred_region
    _
  $region29: #{gcn_forward.5} parent=0 // pred_fallthru
    _
  // Predicated region
  $region30: #{gcn_forward.5} parent=0 // pred_check
    _
  $region31: #{gcn_forward.5} parent=0 // pred_check_branch
    %2760 = sbr.rel (0) target = $region33
  $region32: #{gcn_forward.5} parent=0 // pred_region
    _
  $region33: #{gcn_forward.5} parent=0 // pred_fallthru
    _

// kernel: gcn_forward.7
$region0: #{gcn_forward.7}
  #allocation0 [shape = 'u32[]', space=smem, size = 0x4, offset = 0x4, fixed_abs, tag = 'smem constant byte address 0x4 - core index']
  #allocation1 [shape = 'u32[72,128]{1,0:T(1,128)}', space=vmem, size = 0x9000, scoped, tag = 'internal scratch']
  %s0 = inlined_call_operand.vmem [shape: bf16[512,512], index: 0, kind: input, shape index: {}]
  %s1 = inlined_call_operand.vmem [shape: bf16[512,128], index: 1, kind: input, shape index: {}]
  %s2 = inlined_call_operand.vmem [shape: f32[512,1], index: 2, kind: input, shape index: {}]
  %s3 = inlined_call_operand.vmem [shape: f32[1,128], index: 3, kind: input, shape index: {}]
  %s4 = inlined_call_operand.vmem [shape: f32[512,128], index: 4, kind: output, shape index: {}]
  %s5 = sld [smem:[#allocation0]]
  $region34: #{gcn_forward.7} parent=0
    _
  %s7 = ssub.s32 1, %s5
  %s8 = scalar_select 0, %s7, %s5
  // Predicated region
  $region2: #{gcn_forward.7} parent=0 // pred_check
    _
  $region3: #{gcn_forward.7} parent=0 // pred_check_branch
    %10 = sbr.rel (0) target = $region5
  $region4: #{gcn_forward.7} parent=0 // pred_region
    _
  $region5: #{gcn_forward.7} parent=0 // pred_fallthru
    _
  // Predicated region
  $region6: #{gcn_forward.7} parent=0 // pred_check
    _
  $region7: #{gcn_forward.7} parent=0 // pred_check_branch
    %12 = sbr.rel (0) target = $region9
  $region8: #{gcn_forward.7} parent=0 // pred_region
    _
  $region9: #{gcn_forward.7} parent=0 // pred_fallthru
    _
  // Predicated region
  $region10: #{gcn_forward.7} parent=0 // pred_check
    _
  $region11: #{gcn_forward.7} parent=0 // pred_check_branch
    %14 = sbr.rel (0) target = $region13
  $region12: #{gcn_forward.7} parent=0 // pred_region
    _
  $region13: #{gcn_forward.7} parent=0 // pred_fallthru
    _
  // Predicated region
  $region14: #{gcn_forward.7} parent=0 // pred_check
    _
  $region15: #{gcn_forward.7} parent=0 // pred_check_branch
    %16 = sbr.rel (0) target = $region17
  $region16: #{gcn_forward.7} parent=0 // pred_region
    _
  $region17: #{gcn_forward.7} parent=0 // pred_fallthru
    _
  %p17 = scmp.eq.s32.totalorder 0, 0
  // Predicated region
  $region18: #{gcn_forward.7} parent=0 // pred_check
    %p18 = pneg %p17
  $region19: #{gcn_forward.7} parent=0 // pred_check_branch
    %20 = sbr.rel (%p18) target = $region21
  $region20: #{gcn_forward.7} parent=0 // pred_region
    %21 = vst [vmem:[%s4] sm:$0xff] 0.0
    %22 = vst [vmem:[%s4 + $0x8] sm:$0xff] 0.0
    %23 = vst [vmem:[%s4 + $0x10] sm:$0xff] 0.0
    %24 = vst [vmem:[%s4 + $0x18] sm:$0xff] 0.0
    %25 = vst [vmem:[%s4 + $0x20] sm:$0xff] 0.0
    %26 = vst [vmem:[%s4 + $0x28] sm:$0xff] 0.0
    %27 = vst [vmem:[%s4 + $0x30] sm:$0xff] 0.0
    %28 = vst [vmem:[%s4 + $0x38] sm:$0xff] 0.0
    %29 = vst [vmem:[%s4 + $0x40] sm:$0xff] 0.0
    %30 = vst [vmem:[%s4 + $0x48] sm:$0xff] 0.0
    %31 = vst [vmem:[%s4 + $0x50] sm:$0xff] 0.0
    %32 = vst [vmem:[%s4 + $0x58] sm:$0xff] 0.0
    %33 = vst [vmem:[%s4 + $0x60] sm:$0xff] 0.0
    %34 = vst [vmem:[%s4 + $0x68] sm:$0xff] 0.0
    %35 = vst [vmem:[%s4 + $0x70] sm:$0xff] 0.0
    %36 = vst [vmem:[%s4 + $0x78] sm:$0xff] 0.0
    %37 = vst [vmem:[%s4 + $0x80] sm:$0xff] 0.0
    %38 = vst [vmem:[%s4 + $0x88] sm:$0xff] 0.0
    %39 = vst [vmem:[%s4 + $0x90] sm:$0xff] 0.0
    %40 = vst [vmem:[%s4 + $0x98] sm:$0xff] 0.0
    %41 = vst [vmem:[%s4 + $0xa0] sm:$0xff] 0.0
    %42 = vst [vmem:[%s4 + $0xa8] sm:$0xff] 0.0
    %43 = vst [vmem:[%s4 + $0xb0] sm:$0xff] 0.0
    %44 = vst [vmem:[%s4 + $0xb8] sm:$0xff] 0.0
    %45 = vst [vmem:[%s4 + $0xc0] sm:$0xff] 0.0
    %46 = vst [vmem:[%s4 + $0xc8] sm:$0xff] 0.0
    %47 = vst [vmem:[%s4 + $0xd0] sm:$0xff] 0.0
    %48 = vst [vmem:[%s4 + $0xd8] sm:$0xff] 0.0
    %49 = vst [vmem:[%s4 + $0xe0] sm:$0xff] 0.0
    %50 = vst [vmem:[%s4 + $0xe8] sm:$0xff] 0.0
    %51 = vst [vmem:[%s4 + $0xf0] sm:$0xff] 0.0
    %52 = vst [vmem:[%s4 + $0xf8] sm:$0xff] 0.0
    %53 = vst [vmem:[%s4 + $0x100] sm:$0xff] 0.0
    %54 = vst [vmem:[%s4 + $0x108] sm:$0xff] 0.0
    %55 = vst [vmem:[%s4 + $0x110] sm:$0xff] 0.0
    %56 = vst [vmem:[%s4 + $0x118] sm:$0xff] 0.0
    %57 = vst [vmem:[%s4 + $0x120] sm:$0xff] 0.0
    %58 = vst [vmem:[%s4 + $0x128] sm:$0xff] 0.0
    %59 = vst [vmem:[%s4 + $0x130] sm:$0xff] 0.0
    %60 = vst [vmem:[%s4 + $0x138] sm:$0xff] 0.0
    %61 = vst [vmem:[%s4 + $0x140] sm:$0xff] 0.0
    %62 = vst [vmem:[%s4 + $0x148] sm:$0xff] 0.0
    %63 = vst [vmem:[%s4 + $0x150] sm:$0xff] 0.0
    %64 = vst [vmem:[%s4 + $0x158] sm:$0xff] 0.0
    %65 = vst [vmem:[%s4 + $0x160] sm:$0xff] 0.0
    %66 = vst [vmem:[%s4 + $0x168] sm:$0xff] 0.0
    %67 = vst [vmem:[%s4 + $0x170] sm:$0xff] 0.0
    %68 = vst [vmem:[%s4 + $0x178] sm:$0xff] 0.0
    %69 = vst [vmem:[%s4 + $0x180] sm:$0xff] 0.0
    %70 = vst [vmem:[%s4 + $0x188] sm:$0xff] 0.0
    %71 = vst [vmem:[%s4 + $0x190] sm:$0xff] 0.0
    %72 = vst [vmem:[%s4 + $0x198] sm:$0xff] 0.0
    %73 = vst [vmem:[%s4 + $0x1a0] sm:$0xff] 0.0
    %74 = vst [vmem:[%s4 + $0x1a8] sm:$0xff] 0.0
    %75 = vst [vmem:[%s4 + $0x1b0] sm:$0xff] 0.0
    %76 = vst [vmem:[%s4 + $0x1b8] sm:$0xff] 0.0
    %77 = vst [vmem:[%s4 + $0x1c0] sm:$0xff] 0.0
    %78 = vst [vmem:[%s4 + $0x1c8] sm:$0xff] 0.0
    %79 = vst [vmem:[%s4 + $0x1d0] sm:$0xff] 0.0
    %80 = vst [vmem:[%s4 + $0x1d8] sm:$0xff] 0.0
    %81 = vst [vmem:[%s4 + $0x1e0] sm:$0xff] 0.0
    %82 = vst [vmem:[%s4 + $0x1e8] sm:$0xff] 0.0
    %83 = vst [vmem:[%s4 + $0x1f0] sm:$0xff] 0.0
    %84 = vst [vmem:[%s4 + $0x1f8] sm:$0xff] 0.0
  $region21: #{gcn_forward.7} parent=0 // pred_fallthru
    _
  %s85 = smul.u32 0, 512
  %s86 = sshra.s32 %s85, 3
  %s87 = sand.u32 %s85, 7
  %s88 = smul.addr %s86, 4
  %s89 = scalar_lea.vmem %s1, %s88
  %v90 = vld [vmem:[%s89] sm:$0xf]
  %v91 = vld [vmem:[%s89 + $0x4] sm:$0xf]
  %v92 = vld [vmem:[%s89 + $0x8] sm:$0xf]
  %v93 = vld [vmem:[%s89 + $0xc] sm:$0xf]
  %v94 = vld [vmem:[%s89 + $0x10] sm:$0xf]
  %v95 = vld [vmem:[%s89 + $0x14] sm:$0xf]
  %v96 = vld [vmem:[%s89 + $0x18] sm:$0xf]
  %v97 = vld [vmem:[%s89 + $0x1c] sm:$0xf]
  %v98 = vld [vmem:[%s89 + $0x20] sm:$0xf]
  %v99 = vld [vmem:[%s89 + $0x24] sm:$0xf]
  %v100 = vld [vmem:[%s89 + $0x28] sm:$0xf]
  %v101 = vld [vmem:[%s89 + $0x2c] sm:$0xf]
  %v102 = vld [vmem:[%s89 + $0x30] sm:$0xf]
  %v103 = vld [vmem:[%s89 + $0x34] sm:$0xf]
  %v104 = vld [vmem:[%s89 + $0x38] sm:$0xf]
  %v105 = vld [vmem:[%s89 + $0x3c] sm:$0xf]
  %v106 = vld [vmem:[%s89 + $0x40] sm:$0xf]
  %v107 = vld [vmem:[%s89 + $0x44] sm:$0xf]
  %v108 = vld [vmem:[%s89 + $0x48] sm:$0xf]
  %v109 = vld [vmem:[%s89 + $0x4c] sm:$0xf]
  %v110 = vld [vmem:[%s89 + $0x50] sm:$0xf]
  %v111 = vld [vmem:[%s89 + $0x54] sm:$0xf]
  %v112 = vld [vmem:[%s89 + $0x58] sm:$0xf]
  %v113 = vld [vmem:[%s89 + $0x5c] sm:$0xf]
  %v114 = vld [vmem:[%s89 + $0x60] sm:$0xf]
  %v115 = vld [vmem:[%s89 + $0x64] sm:$0xf]
  %v116 = vld [vmem:[%s89 + $0x68] sm:$0xf]
  %v117 = vld [vmem:[%s89 + $0x6c] sm:$0xf]
  %v118 = vld [vmem:[%s89 + $0x70] sm:$0xf]
  %v119 = vld [vmem:[%s89 + $0x74] sm:$0xf]
  %v120 = vld [vmem:[%s89 + $0x78] sm:$0xf]
  %v121 = vld [vmem:[%s89 + $0x7c] sm:$0xf]
  %v122 = vld [vmem:[%s89 + $0x80] sm:$0xf]
  %v123 = vld [vmem:[%s89 + $0x84] sm:$0xf]
  %v124 = vld [vmem:[%s89 + $0x88] sm:$0xf]
  %v125 = vld [vmem:[%s89 + $0x8c] sm:$0xf]
  %v126 = vld [vmem:[%s89 + $0x90] sm:$0xf]
  %v127 = vld [vmem:[%s89 + $0x94] sm:$0xf]
  %v128 = vld [vmem:[%s89 + $0x98] sm:$0xf]
  %v129 = vld [vmem:[%s89 + $0x9c] sm:$0xf]
  %v130 = vld [vmem:[%s89 + $0xa0] sm:$0xf]
  %v131 = vld [vmem:[%s89 + $0xa4] sm:$0xf]
  %v132 = vld [vmem:[%s89 + $0xa8] sm:$0xf]
  %v133 = vld [vmem:[%s89 + $0xac] sm:$0xf]
  %v134 = vld [vmem:[%s89 + $0xb0] sm:$0xf]
  %v135 = vld [vmem:[%s89 + $0xb4] sm:$0xf]
  %v136 = vld [vmem:[%s89 + $0xb8] sm:$0xf]
  %v137 = vld [vmem:[%s89 + $0xbc] sm:$0xf]
  %v138 = vld [vmem:[%s89 + $0xc0] sm:$0xf]
  %v139 = vld [vmem:[%s89 + $0xc4] sm:$0xf]
  %v140 = vld [vmem:[%s89 + $0xc8] sm:$0xf]
  %v141 = vld [vmem:[%s89 + $0xcc] sm:$0xf]
  %v142 = vld [vmem:[%s89 + $0xd0] sm:$0xf]
  %v143 = vld [vmem:[%s89 + $0xd4] sm:$0xf]
  %v144 = vld [vmem:[%s89 + $0xd8] sm:$0xf]
  %v145 = vld [vmem:[%s89 + $0xdc] sm:$0xf]
  %v146 = vld [vmem:[%s89 + $0xe0] sm:$0xf]
  %v147 = vld [vmem:[%s89 + $0xe4] sm:$0xf]
  %v148 = vld [vmem:[%s89 + $0xe8] sm:$0xf]
  %v149 = vld [vmem:[%s89 + $0xec] sm:$0xf]
  %v150 = vld [vmem:[%s89 + $0xf0] sm:$0xf]
  %v151 = vld [vmem:[%s89 + $0xf4] sm:$0xf]
  %v152 = vld [vmem:[%s89 + $0xf8] sm:$0xf]
  %v153 = vld [vmem:[%s89 + $0xfc] sm:$0xf]
  %v154 = vld [vmem:[%s4] sm:$0xff]
  %v155 = vld [vmem:[%s4 + $0x8] sm:$0xff]
  %v156 = vld [vmem:[%s4 + $0x10] sm:$0xff]
  %v157 = vld [vmem:[%s4 + $0x18] sm:$0xff]
  %v158 = vld [vmem:[%s4 + $0x20] sm:$0xff]
  %v159 = vld [vmem:[%s4 + $0x28] sm:$0xff]
  %v160 = vld [vmem:[%s4 + $0x30] sm:$0xff]
  %v161 = vld [vmem:[%s4 + $0x38] sm:$0xff]
  %v162 = vld [vmem:[%s4 + $0x40] sm:$0xff]
  %v163 = vld [vmem:[%s4 + $0x48] sm:$0xff]
  %v164 = vld [vmem:[%s4 + $0x50] sm:$0xff]
  %v165 = vld [vmem:[%s4 + $0x58] sm:$0xff]
  %v166 = vld [vmem:[%s4 + $0x60] sm:$0xff]
  %v167 = vld [vmem:[%s4 + $0x68] sm:$0xff]
  %v168 = vld [vmem:[%s4 + $0x70] sm:$0xff]
  %v169 = vld [vmem:[%s4 + $0x78] sm:$0xff]
  %v170 = vld [vmem:[%s4 + $0x80] sm:$0xff]
  %v171 = vld [vmem:[%s4 + $0x88] sm:$0xff]
  %v172 = vld [vmem:[%s4 + $0x90] sm:$0xff]
  %v173 = vld [vmem:[%s4 + $0x98] sm:$0xff]
  %v174 = vld [vmem:[%s4 + $0xa0] sm:$0xff]
  %v175 = vld [vmem:[%s4 + $0xa8] sm:$0xff]
  %v176 = vld [vmem:[%s4 + $0xb0] sm:$0xff]
  %v177 = vld [vmem:[%s4 + $0xb8] sm:$0xff]
  %v178 = vld [vmem:[%s4 + $0xc0] sm:$0xff]
  %v179 = vld [vmem:[%s4 + $0xc8] sm:$0xff]
  %v180 = vld [vmem:[%s4 + $0xd0] sm:$0xff]
  %v181 = vld [vmem:[%s4 + $0xd8] sm:$0xff]
  %v182 = vld [vmem:[%s4 + $0xe0] sm:$0xff]
  %v183 = vld [vmem:[%s4 + $0xe8] sm:$0xff]
  %v184 = vld [vmem:[%s4 + $0xf0] sm:$0xff]
  %v185 = vld [vmem:[%s4 + $0xf8] sm:$0xff]
  %v186 = vld [vmem:[%s4 + $0x100] sm:$0xff]
  %v187 = vld [vmem:[%s4 + $0x108] sm:$0xff]
  %v188 = vld [vmem:[%s4 + $0x110] sm:$0xff]
  %v189 = vld [vmem:[%s4 + $0x118] sm:$0xff]
  %v190 = vld [vmem:[%s4 + $0x120] sm:$0xff]
  %v191 = vld [vmem:[%s4 + $0x128] sm:$0xff]
  %v192 = vld [vmem:[%s4 + $0x130] sm:$0xff]
  %v193 = vld [vmem:[%s4 + $0x138] sm:$0xff]
  %v194 = vld [vmem:[%s4 + $0x140] sm:$0xff]
  %v195 = vld [vmem:[%s4 + $0x148] sm:$0xff]
  %v196 = vld [vmem:[%s4 + $0x150] sm:$0xff]
  %v197 = vld [vmem:[%s4 + $0x158] sm:$0xff]
  %v198 = vld [vmem:[%s4 + $0x160] sm:$0xff]
  %v199 = vld [vmem:[%s4 + $0x168] sm:$0xff]
  %v200 = vld [vmem:[%s4 + $0x170] sm:$0xff]
  %v201 = vld [vmem:[%s4 + $0x178] sm:$0xff]
  %v202 = vld [vmem:[%s4 + $0x180] sm:$0xff]
  %v203 = vld [vmem:[%s4 + $0x188] sm:$0xff]
  %v204 = vld [vmem:[%s4 + $0x190] sm:$0xff]
  %v205 = vld [vmem:[%s4 + $0x198] sm:$0xff]
  %v206 = vld [vmem:[%s4 + $0x1a0] sm:$0xff]
  %v207 = vld [vmem:[%s4 + $0x1a8] sm:$0xff]
  %v208 = vld [vmem:[%s4 + $0x1b0] sm:$0xff]
  %v209 = vld [vmem:[%s4 + $0x1b8] sm:$0xff]
  %v210 = vld [vmem:[%s4 + $0x1c0] sm:$0xff]
  %v211 = vld [vmem:[%s4 + $0x1c8] sm:$0xff]
  %v212 = vld [vmem:[%s4 + $0x1d0] sm:$0xff]
  %v213 = vld [vmem:[%s4 + $0x1d8] sm:$0xff]
  %v214 = vld [vmem:[%s4 + $0x1e0] sm:$0xff]
  %v215 = vld [vmem:[%s4 + $0x1e8] sm:$0xff]
  %v216 = vld [vmem:[%s4 + $0x1f0] sm:$0xff]
  %v217 = vld [vmem:[%s4 + $0x1f8] sm:$0xff]
  %v218 = vld [vmem:[%s0] sm:$0xff]
  %v219 = vld [vmem:[%s0 + $0x8] sm:$0xff]
  %v220 = vld [vmem:[%s0 + $0x10] sm:$0xff]
  %v221 = vld [vmem:[%s0 + $0x18] sm:$0xff]
  %v222 = vld [vmem:[%s0 + $0x20] sm:$0xff]
  %v223 = vld [vmem:[%s0 + $0x28] sm:$0xff]
  %v224 = vld [vmem:[%s0 + $0x30] sm:$0xff]
  %v225 = vld [vmem:[%s0 + $0x38] sm:$0xff]
  %v226 = vld [vmem:[%s0 + $0x40] sm:$0xff]
  %v227 = vld [vmem:[%s0 + $0x48] sm:$0xff]
  %v228 = vld [vmem:[%s0 + $0x50] sm:$0xff]
  %v229 = vld [vmem:[%s0 + $0x58] sm:$0xff]
  %v230 = vld [vmem:[%s0 + $0x60] sm:$0xff]
  %v231 = vld [vmem:[%s0 + $0x68] sm:$0xff]
  %v232 = vld [vmem:[%s0 + $0x70] sm:$0xff]
  %v233 = vld [vmem:[%s0 + $0x78] sm:$0xff]
  %v234 = vld [vmem:[%s0 + $0x80] sm:$0xff]
  %v235 = vld [vmem:[%s0 + $0x88] sm:$0xff]
  %v236 = vld [vmem:[%s0 + $0x90] sm:$0xff]
  %v237 = vld [vmem:[%s0 + $0x98] sm:$0xff]
  %v238 = vld [vmem:[%s0 + $0xa0] sm:$0xff]
  %v239 = vld [vmem:[%s0 + $0xa8] sm:$0xff]
  %v240 = vld [vmem:[%s0 + $0xb0] sm:$0xff]
  %v241 = vld [vmem:[%s0 + $0xb8] sm:$0xff]
  %v242 = vld [vmem:[%s0 + $0xc0] sm:$0xff]
  %v243 = vld [vmem:[%s0 + $0xc8] sm:$0xff]
  %v244 = vld [vmem:[%s0 + $0xd0] sm:$0xff]
  %v245 = vld [vmem:[%s0 + $0xd8] sm:$0xff]
  %v246 = vld [vmem:[%s0 + $0xe0] sm:$0xff]
  %v247 = vld [vmem:[%s0 + $0xe8] sm:$0xff]
  %v248 = vld [vmem:[%s0 + $0xf0] sm:$0xff]
  %v249 = vld [vmem:[%s0 + $0xf8] sm:$0xff]
  %v250 = vld [vmem:[%s0 + $0x100] sm:$0xff]
  %v251 = vld [vmem:[%s0 + $0x108] sm:$0xff]
  %v252 = vld [vmem:[%s0 + $0x110] sm:$0xff]
  %v253 = vld [vmem:[%s0 + $0x118] sm:$0xff]
  %v254 = vld [vmem:[%s0 + $0x120] sm:$0xff]
  %v255 = vld [vmem:[%s0 + $0x128] sm:$0xff]
  %v256 = vld [vmem:[%s0 + $0x130] sm:$0xff]
  %v257 = vld [vmem:[%s0 + $0x138] sm:$0xff]
  %v258 = vld [vmem:[%s0 + $0x140] sm:$0xff]
  %v259 = vld [vmem:[%s0 + $0x148] sm:$0xff]
  %v260 = vld [vmem:[%s0 + $0x150] sm:$0xff]
  %v261 = vld [vmem:[%s0 + $0x158] sm:$0xff]
  %v262 = vld [vmem:[%s0 + $0x160] sm:$0xff]
  %v263 = vld [vmem:[%s0 + $0x168] sm:$0xff]
  %v264 = vld [vmem:[%s0 + $0x170] sm:$0xff]
  %v265 = vld [vmem:[%s0 + $0x178] sm:$0xff]
  %v266 = vld [vmem:[%s0 + $0x180] sm:$0xff]
  %v267 = vld [vmem:[%s0 + $0x188] sm:$0xff]
  %v268 = vld [vmem:[%s0 + $0x190] sm:$0xff]
  %v269 = vld [vmem:[%s0 + $0x198] sm:$0xff]
  %v270 = vld [vmem:[%s0 + $0x1a0] sm:$0xff]
  %v271 = vld [vmem:[%s0 + $0x1a8] sm:$0xff]
  %v272 = vld [vmem:[%s0 + $0x1b0] sm:$0xff]
  %v273 = vld [vmem:[%s0 + $0x1b8] sm:$0xff]
  %v274 = vld [vmem:[%s0 + $0x1c0] sm:$0xff]
  %v275 = vld [vmem:[%s0 + $0x1c8] sm:$0xff]
  %v276 = vld [vmem:[%s0 + $0x1d0] sm:$0xff]
  %v277 = vld [vmem:[%s0 + $0x1d8] sm:$0xff]
  %v278 = vld [vmem:[%s0 + $0x1e0] sm:$0xff]
  %v279 = vld [vmem:[%s0 + $0x1e8] sm:$0xff]
  %v280 = vld [vmem:[%s0 + $0x1f0] sm:$0xff]
  %v281 = vld [vmem:[%s0 + $0x1f8] sm:$0xff]
  %v282 = vld [vmem:[%s0 + $0x200] sm:$0xff]
  %v283 = vld [vmem:[%s0 + $0x208] sm:$0xff]
  %v284 = vld [vmem:[%s0 + $0x210] sm:$0xff]
  %v285 = vld [vmem:[%s0 + $0x218] sm:$0xff]
  %v286 = vld [vmem:[%s0 + $0x220] sm:$0xff]
  %v287 = vld [vmem:[%s0 + $0x228] sm:$0xff]
  %v288 = vld [vmem:[%s0 + $0x230] sm:$0xff]
  %v289 = vld [vmem:[%s0 + $0x238] sm:$0xff]
  %v290 = vld [vmem:[%s0 + $0x240] sm:$0xff]
  %v291 = vld [vmem:[%s0 + $0x248] sm:$0xff]
  %v292 = vld [vmem:[%s0 + $0x250] sm:$0xff]
  %v293 = vld [vmem:[%s0 + $0x258] sm:$0xff]
  %v294 = vld [vmem:[%s0 + $0x260] sm:$0xff]
  %v295 = vld [vmem:[%s0 + $0x268] sm:$0xff]
  %v296 = vld [vmem:[%s0 + $0x270] sm:$0xff]
  %v297 = vld [vmem:[%s0 + $0x278] sm:$0xff]
  %v298 = vld [vmem:[%s0 + $0x280] sm:$0xff]
  %v299 = vld [vmem:[%s0 + $0x288] sm:$0xff]
  %v300 = vld [vmem:[%s0 + $0x290] sm:$0xff]
  %v301 = vld [vmem:[%s0 + $0x298] sm:$0xff]
  %v302 = vld [vmem:[%s0 + $0x2a0] sm:$0xff]
  %v303 = vld [vmem:[%s0 + $0x2a8] sm:$0xff]
  %v304 = vld [vmem:[%s0 + $0x2b0] sm:$0xff]
  %v305 = vld [vmem:[%s0 + $0x2b8] sm:$0xff]
  %v306 = vld [vmem:[%s0 + $0x2c0] sm:$0xff]
  %v307 = vld [vmem:[%s0 + $0x2c8] sm:$0xff]
  %v308 = vld [vmem:[%s0 + $0x2d0] sm:$0xff]
  %v309 = vld [vmem:[%s0 + $0x2d8] sm:$0xff]
  %v310 = vld [vmem:[%s0 + $0x2e0] sm:$0xff]
  %v311 = vld [vmem:[%s0 + $0x2e8] sm:$0xff]
  %v312 = vld [vmem:[%s0 + $0x2f0] sm:$0xff]
  %v313 = vld [vmem:[%s0 + $0x2f8] sm:$0xff]
  %v314 = vld [vmem:[%s0 + $0x300] sm:$0xff]
  %v315 = vld [vmem:[%s0 + $0x308] sm:$0xff]
  %v316 = vld [vmem:[%s0 + $0x310] sm:$0xff]
  %v317 = vld [vmem:[%s0 + $0x318] sm:$0xff]
  %v318 = vld [vmem:[%s0 + $0x320] sm:$0xff]
  %v319 = vld [vmem:[%s0 + $0x328] sm:$0xff]
  %v320 = vld [vmem:[%s0 + $0x330] sm:$0xff]
  %v321 = vld [vmem:[%s0 + $0x338] sm:$0xff]
  %v322 = vld [vmem:[%s0 + $0x340] sm:$0xff]
  %v323 = vld [vmem:[%s0 + $0x348] sm:$0xff]
  %v324 = vld [vmem:[%s0 + $0x350] sm:$0xff]
  %v325 = vld [vmem:[%s0 + $0x358] sm:$0xff]
  %v326 = vld [vmem:[%s0 + $0x360] sm:$0xff]
  %v327 = vld [vmem:[%s0 + $0x368] sm:$0xff]
  %v328 = vld [vmem:[%s0 + $0x370] sm:$0xff]
  %v329 = vld [vmem:[%s0 + $0x378] sm:$0xff]
  %v330 = vld [vmem:[%s0 + $0x380] sm:$0xff]
  %v331 = vld [vmem:[%s0 + $0x388] sm:$0xff]
  %v332 = vld [vmem:[%s0 + $0x390] sm:$0xff]
  %v333 = vld [vmem:[%s0 + $0x398] sm:$0xff]
  %v334 = vld [vmem:[%s0 + $0x3a0] sm:$0xff]
  %v335 = vld [vmem:[%s0 + $0x3a8] sm:$0xff]
  %v336 = vld [vmem:[%s0 + $0x3b0] sm:$0xff]
  %v337 = vld [vmem:[%s0 + $0x3b8] sm:$0xff]
  %v338 = vld [vmem:[%s0 + $0x3c0] sm:$0xff]
  %v339 = vld [vmem:[%s0 + $0x3c8] sm:$0xff]
  %v340 = vld [vmem:[%s0 + $0x3d0] sm:$0xff]
  %v341 = vld [vmem:[%s0 + $0x3d8] sm:$0xff]
  %v342 = vld [vmem:[%s0 + $0x3e0] sm:$0xff]
  %v343 = vld [vmem:[%s0 + $0x3e8] sm:$0xff]
  %v344 = vld [vmem:[%s0 + $0x3f0] sm:$0xff]
  %v345 = vld [vmem:[%s0 + $0x3f8] sm:$0xff]
  %v474 = vunpack.c.l.b16 %v218
  %v475 = vunpack.c.h.b16 %v218
  %v476 = vunpack.c.l.b16 %v219
  %v477 = vunpack.c.h.b16 %v219
  %v478 = vunpack.c.l.b16 %v220
  %v479 = vunpack.c.h.b16 %v220
  %v480 = vunpack.c.l.b16 %v221
  %v481 = vunpack.c.h.b16 %v221
  %v482 = vunpack.c.l.b16 %v222
  %v483 = vunpack.c.h.b16 %v222
  %v484 = vunpack.c.l.b16 %v223
  %v485 = vunpack.c.h.b16 %v223
  %v486 = vunpack.c.l.b16 %v224
  %v487 = vunpack.c.h.b16 %v224
  %v488 = vunpack.c.l.b16 %v225
  %v489 = vunpack.c.h.b16 %v225
  %v490 = vunpack.c.l.b16 %v226
  %v491 = vunpack.c.h.b16 %v226
  %v492 = vunpack.c.l.b16 %v227
  %v493 = vunpack.c.h.b16 %v227
  %v494 = vunpack.c.l.b16 %v228
  %v495 = vunpack.c.h.b16 %v228
  %v496 = vunpack.c.l.b16 %v229
  %v497 = vunpack.c.h.b16 %v229
  %v498 = vunpack.c.l.b16 %v230
  %v499 = vunpack.c.h.b16 %v230
  %v500 = vunpack.c.l.b16 %v231
  %v501 = vunpack.c.h.b16 %v231
  %v502 = vunpack.c.l.b16 %v232
  %v503 = vunpack.c.h.b16 %v232
  %v504 = vunpack.c.l.b16 %v233
  %v505 = vunpack.c.h.b16 %v233
  %v506 = vunpack.c.l.b16 %v234
  %v507 = vunpack.c.h.b16 %v234
  %v508 = vunpack.c.l.b16 %v235
  %v509 = vunpack.c.h.b16 %v235
  %v510 = vunpack.c.l.b16 %v236
  %v511 = vunpack.c.h.b16 %v236
  %v512 = vunpack.c.l.b16 %v237
  %v513 = vunpack.c.h.b16 %v237
  %v514 = vunpack.c.l.b16 %v238
  %v515 = vunpack.c.h.b16 %v238
  %v516 = vunpack.c.l.b16 %v239
  %v517 = vunpack.c.h.b16 %v239
  %v518 = vunpack.c.l.b16 %v240
  %v519 = vunpack.c.h.b16 %v240
  %v520 = vunpack.c.l.b16 %v241
  %v521 = vunpack.c.h.b16 %v241
  %v522 = vunpack.c.l.b16 %v242
  %v523 = vunpack.c.h.b16 %v242
  %v524 = vunpack.c.l.b16 %v243
  %v525 = vunpack.c.h.b16 %v243
  %v526 = vunpack.c.l.b16 %v244
  %v527 = vunpack.c.h.b16 %v244
  %v528 = vunpack.c.l.b16 %v245
  %v529 = vunpack.c.h.b16 %v245
  %v530 = vunpack.c.l.b16 %v246
  %v531 = vunpack.c.h.b16 %v246
  %v532 = vunpack.c.l.b16 %v247
  %v533 = vunpack.c.h.b16 %v247
  %v534 = vunpack.c.l.b16 %v248
  %v535 = vunpack.c.h.b16 %v248
  %v536 = vunpack.c.l.b16 %v249
  %v537 = vunpack.c.h.b16 %v249
  %v538 = vunpack.c.l.b16 %v250
  %v539 = vunpack.c.h.b16 %v250
  %v540 = vunpack.c.l.b16 %v251
  %v541 = vunpack.c.h.b16 %v251
  %v542 = vunpack.c.l.b16 %v252
  %v543 = vunpack.c.h.b16 %v252
  %v544 = vunpack.c.l.b16 %v253
  %v545 = vunpack.c.h.b16 %v253
  %v546 = vunpack.c.l.b16 %v254
  %v547 = vunpack.c.h.b16 %v254
  %v548 = vunpack.c.l.b16 %v255
  %v549 = vunpack.c.h.b16 %v255
  %v550 = vunpack.c.l.b16 %v256
  %v551 = vunpack.c.h.b16 %v256
  %v552 = vunpack.c.l.b16 %v257
  %v553 = vunpack.c.h.b16 %v257
  %v554 = vunpack.c.l.b16 %v258
  %v555 = vunpack.c.h.b16 %v258
  %v556 = vunpack.c.l.b16 %v259
  %v557 = vunpack.c.h.b16 %v259
  %v558 = vunpack.c.l.b16 %v260
  %v559 = vunpack.c.h.b16 %v260
  %v560 = vunpack.c.l.b16 %v261
  %v561 = vunpack.c.h.b16 %v261
  %v562 = vunpack.c.l.b16 %v262
  %v563 = vunpack.c.h.b16 %v262
  %v564 = vunpack.c.l.b16 %v263
  %v565 = vunpack.c.h.b16 %v263
  %v566 = vunpack.c.l.b16 %v264
  %v567 = vunpack.c.h.b16 %v264
  %v568 = vunpack.c.l.b16 %v265
  %v569 = vunpack.c.h.b16 %v265
  %v570 = vunpack.c.l.b16 %v266
  %v571 = vunpack.c.h.b16 %v266
  %v572 = vunpack.c.l.b16 %v267
  %v573 = vunpack.c.h.b16 %v267
  %v574 = vunpack.c.l.b16 %v268
  %v575 = vunpack.c.h.b16 %v268
  %v576 = vunpack.c.l.b16 %v269
  %v577 = vunpack.c.h.b16 %v269
  %v578 = vunpack.c.l.b16 %v270
  %v579 = vunpack.c.h.b16 %v270
  %v580 = vunpack.c.l.b16 %v271
  %v581 = vunpack.c.h.b16 %v271
  %v582 = vunpack.c.l.b16 %v272
  %v583 = vunpack.c.h.b16 %v272
  %v584 = vunpack.c.l.b16 %v273
  %v585 = vunpack.c.h.b16 %v273
  %v586 = vunpack.c.l.b16 %v274
  %v587 = vunpack.c.h.b16 %v274
  %v588 = vunpack.c.l.b16 %v275
  %v589 = vunpack.c.h.b16 %v275
  %v590 = vunpack.c.l.b16 %v276
  %v591 = vunpack.c.h.b16 %v276
  %v592 = vunpack.c.l.b16 %v277
  %v593 = vunpack.c.h.b16 %v277
  %v594 = vunpack.c.l.b16 %v278
  %v595 = vunpack.c.h.b16 %v278
  %v596 = vunpack.c.l.b16 %v279
  %v597 = vunpack.c.h.b16 %v279
  %v598 = vunpack.c.l.b16 %v280
  %v599 = vunpack.c.h.b16 %v280
  %v600 = vunpack.c.l.b16 %v281
  %v601 = vunpack.c.h.b16 %v281
  %v602 = vunpack.c.l.b16 %v282
  %v603 = vunpack.c.h.b16 %v282
  %v604 = vunpack.c.l.b16 %v283
  %v605 = vunpack.c.h.b16 %v283
  %v606 = vunpack.c.l.b16 %v284
  %v607 = vunpack.c.h.b16 %v284
  %v608 = vunpack.c.l.b16 %v285
  %v609 = vunpack.c.h.b16 %v285
  %v610 = vunpack.c.l.b16 %v286
  %v611 = vunpack.c.h.b16 %v286
  %v612 = vunpack.c.l.b16 %v287
  %v613 = vunpack.c.h.b16 %v287
  %v614 = vunpack.c.l.b16 %v288
  %v615 = vunpack.c.h.b16 %v288
  %v616 = vunpack.c.l.b16 %v289
  %v617 = vunpack.c.h.b16 %v289
  %v618 = vunpack.c.l.b16 %v290
  %v619 = vunpack.c.h.b16 %v290
  %v620 = vunpack.c.l.b16 %v291
  %v621 = vunpack.c.h.b16 %v291
  %v622 = vunpack.c.l.b16 %v292
  %v623 = vunpack.c.h.b16 %v292
  %v624 = vunpack.c.l.b16 %v293
  %v625 = vunpack.c.h.b16 %v293
  %v626 = vunpack.c.l.b16 %v294
  %v627 = vunpack.c.h.b16 %v294
  %v628 = vunpack.c.l.b16 %v295
  %v629 = vunpack.c.h.b16 %v295
  %v630 = vunpack.c.l.b16 %v296
  %v631 = vunpack.c.h.b16 %v296
  %v632 = vunpack.c.l.b16 %v297
  %v633 = vunpack.c.h.b16 %v297
  %v634 = vunpack.c.l.b16 %v298
  %v635 = vunpack.c.h.b16 %v298
  %v636 = vunpack.c.l.b16 %v299
  %v637 = vunpack.c.h.b16 %v299
  %v638 = vunpack.c.l.b16 %v300
  %v639 = vunpack.c.h.b16 %v300
  %v640 = vunpack.c.l.b16 %v301
  %v641 = vunpack.c.h.b16 %v301
  %v642 = vunpack.c.l.b16 %v302
  %v643 = vunpack.c.h.b16 %v302
  %v644 = vunpack.c.l.b16 %v303
  %v645 = vunpack.c.h.b16 %v303
  %v646 = vunpack.c.l.b16 %v304
  %v647 = vunpack.c.h.b16 %v304
  %v648 = vunpack.c.l.b16 %v305
  %v649 = vunpack.c.h.b16 %v305
  %v650 = vunpack.c.l.b16 %v306
  %v651 = vunpack.c.h.b16 %v306
  %v652 = vunpack.c.l.b16 %v307
  %v653 = vunpack.c.h.b16 %v307
  %v654 = vunpack.c.l.b16 %v308
  %v655 = vunpack.c.h.b16 %v308
  %v656 = vunpack.c.l.b16 %v309
  %v657 = vunpack.c.h.b16 %v309
  %v658 = vunpack.c.l.b16 %v310
  %v659 = vunpack.c.h.b16 %v310
  %v660 = vunpack.c.l.b16 %v311
  %v661 = vunpack.c.h.b16 %v311
  %v662 = vunpack.c.l.b16 %v312
  %v663 = vunpack.c.h.b16 %v312
  %v664 = vunpack.c.l.b16 %v313
  %v665 = vunpack.c.h.b16 %v313
  %v666 = vunpack.c.l.b16 %v314
  %v667 = vunpack.c.h.b16 %v314
  %v668 = vunpack.c.l.b16 %v315
  %v669 = vunpack.c.h.b16 %v315
  %v670 = vunpack.c.l.b16 %v316
  %v671 = vunpack.c.h.b16 %v316
  %v672 = vunpack.c.l.b16 %v317
  %v673 = vunpack.c.h.b16 %v317
  %v674 = vunpack.c.l.b16 %v318
  %v675 = vunpack.c.h.b16 %v318
  %v676 = vunpack.c.l.b16 %v319
  %v677 = vunpack.c.h.b16 %v319
  %v678 = vunpack.c.l.b16 %v320
  %v679 = vunpack.c.h.b16 %v320
  %v680 = vunpack.c.l.b16 %v321
  %v681 = vunpack.c.h.b16 %v321
  %v682 = vunpack.c.l.b16 %v322
  %v683 = vunpack.c.h.b16 %v322
  %v684 = vunpack.c.l.b16 %v323
  %v685 = vunpack.c.h.b16 %v323
  %v686 = vunpack.c.l.b16 %v324
  %v687 = vunpack.c.h.b16 %v324
  %v688 = vunpack.c.l.b16 %v325
  %v689 = vunpack.c.h.b16 %v325
  %v690 = vunpack.c.l.b16 %v326
  %v691 = vunpack.c.h.b16 %v326
  %v692 = vunpack.c.l.b16 %v327
  %v693 = vunpack.c.h.b16 %v327
  %v694 = vunpack.c.l.b16 %v328
  %v695 = vunpack.c.h.b16 %v328
  %v696 = vunpack.c.l.b16 %v329
  %v697 = vunpack.c.h.b16 %v329
  %v698 = vunpack.c.l.b16 %v330
  %v699 = vunpack.c.h.b16 %v330
  %v700 = vunpack.c.l.b16 %v331
  %v701 = vunpack.c.h.b16 %v331
  %v702 = vunpack.c.l.b16 %v332
  %v703 = vunpack.c.h.b16 %v332
  %v704 = vunpack.c.l.b16 %v333
  %v705 = vunpack.c.h.b16 %v333
  %v706 = vunpack.c.l.b16 %v334
  %v707 = vunpack.c.h.b16 %v334
  %v708 = vunpack.c.l.b16 %v335
  %v709 = vunpack.c.h.b16 %v335
  %v710 = vunpack.c.l.b16 %v336
  %v711 = vunpack.c.h.b16 %v336
  %v712 = vunpack.c.l.b16 %v337
  %v713 = vunpack.c.h.b16 %v337
  %v714 = vunpack.c.l.b16 %v338
  %v715 = vunpack.c.h.b16 %v338
  %v716 = vunpack.c.l.b16 %v339
  %v717 = vunpack.c.h.b16 %v339
  %v718 = vunpack.c.l.b16 %v340
  %v719 = vunpack.c.h.b16 %v340
  %v720 = vunpack.c.l.b16 %v341
  %v721 = vunpack.c.h.b16 %v341
  %v722 = vunpack.c.l.b16 %v342
  %v723 = vunpack.c.h.b16 %v342
  %v724 = vunpack.c.l.b16 %v343
  %v725 = vunpack.c.h.b16 %v343
  %v726 = vunpack.c.l.b16 %v344
  %v727 = vunpack.c.h.b16 %v344
  %v728 = vunpack.c.l.b16 %v345
  %v729 = vunpack.c.h.b16 %v345
  %v730 = vpack.c.b16 %v478, %v474
  %v731 = vpack.c.b16 %v479, %v475
  %v732 = vpack.c.b16 %v480, %v476
  %v733 = vpack.c.b16 %v481, %v477
  %v734 = vpack.c.b16 %v486, %v482
  %v735 = vpack.c.b16 %v487, %v483
  %v736 = vpack.c.b16 %v488, %v484
  %v737 = vpack.c.b16 %v489, %v485
  %v738 = vpack.c.b16 %v494, %v490
  %v739 = vpack.c.b16 %v495, %v491
  %v740 = vpack.c.b16 %v496, %v492
  %v741 = vpack.c.b16 %v497, %v493
  %v742 = vpack.c.b16 %v502, %v498
  %v743 = vpack.c.b16 %v503, %v499
  %v744 = vpack.c.b16 %v504, %v500
  %v745 = vpack.c.b16 %v505, %v501
  %v746 = vpack.c.b16 %v510, %v506
  %v747 = vpack.c.b16 %v511, %v507
  %v748 = vpack.c.b16 %v512, %v508
  %v749 = vpack.c.b16 %v513, %v509
  %v750 = vpack.c.b16 %v518, %v514
  %v751 = vpack.c.b16 %v519, %v515
  %v752 = vpack.c.b16 %v520, %v516
  %v753 = vpack.c.b16 %v521, %v517
  %v754 = vpack.c.b16 %v526, %v522
  %v755 = vpack.c.b16 %v527, %v523
  %v756 = vpack.c.b16 %v528, %v524
  %v757 = vpack.c.b16 %v529, %v525
  %v758 = vpack.c.b16 %v534, %v530
  %v759 = vpack.c.b16 %v535, %v531
  %v760 = vpack.c.b16 %v536, %v532
  %v761 = vpack.c.b16 %v537, %v533
  %v762 = vpack.c.b16 %v542, %v538
  %v763 = vpack.c.b16 %v543, %v539
  %v764 = vpack.c.b16 %v544, %v540
  %v765 = vpack.c.b16 %v545, %v541
  %v766 = vpack.c.b16 %v550, %v546
  %v767 = vpack.c.b16 %v551, %v547
  %v768 = vpack.c.b16 %v552, %v548
  %v769 = vpack.c.b16 %v553, %v549
  %v770 = vpack.c.b16 %v558, %v554
  %v771 = vpack.c.b16 %v559, %v555
  %v772 = vpack.c.b16 %v560, %v556
  %v773 = vpack.c.b16 %v561, %v557
  %v774 = vpack.c.b16 %v566, %v562
  %v775 = vpack.c.b16 %v567, %v563
  %v776 = vpack.c.b16 %v568, %v564
  %v777 = vpack.c.b16 %v569, %v565
  %v778 = vpack.c.b16 %v574, %v570
  %v779 = vpack.c.b16 %v575, %v571
  %v780 = vpack.c.b16 %v576, %v572
  %v781 = vpack.c.b16 %v577, %v573
  %v782 = vpack.c.b16 %v582, %v578
  %v783 = vpack.c.b16 %v583, %v579
  %v784 = vpack.c.b16 %v584, %v580
  %v785 = vpack.c.b16 %v585, %v581
  %v786 = vpack.c.b16 %v590, %v586
  %v787 = vpack.c.b16 %v591, %v587
  %v788 = vpack.c.b16 %v592, %v588
  %v789 = vpack.c.b16 %v593, %v589
  %v790 = vpack.c.b16 %v598, %v594
  %v791 = vpack.c.b16 %v599, %v595
  %v792 = vpack.c.b16 %v600, %v596
  %v793 = vpack.c.b16 %v601, %v597
  %v794 = vpack.c.b16 %v606, %v602
  %v795 = vpack.c.b16 %v607, %v603
  %v796 = vpack.c.b16 %v608, %v604
  %v797 = vpack.c.b16 %v609, %v605
  %v798 = vpack.c.b16 %v614, %v610
  %v799 = vpack.c.b16 %v615, %v611
  %v800 = vpack.c.b16 %v616, %v612
  %v801 = vpack.c.b16 %v617, %v613
  %v802 = vpack.c.b16 %v622, %v618
  %v803 = vpack.c.b16 %v623, %v619
  %v804 = vpack.c.b16 %v624, %v620
  %v805 = vpack.c.b16 %v625, %v621
  %v806 = vpack.c.b16 %v630, %v626
  %v807 = vpack.c.b16 %v631, %v627
  %v808 = vpack.c.b16 %v632, %v628
  %v809 = vpack.c.b16 %v633, %v629
  %v810 = vpack.c.b16 %v638, %v634
  %v811 = vpack.c.b16 %v639, %v635
  %v812 = vpack.c.b16 %v640, %v636
  %v813 = vpack.c.b16 %v641, %v637
  %v814 = vpack.c.b16 %v646, %v642
  %v815 = vpack.c.b16 %v647, %v643
  %v816 = vpack.c.b16 %v648, %v644
  %v817 = vpack.c.b16 %v649, %v645
  %v818 = vpack.c.b16 %v654, %v650
  %v819 = vpack.c.b16 %v655, %v651
  %v820 = vpack.c.b16 %v656, %v652
  %v821 = vpack.c.b16 %v657, %v653
  %v822 = vpack.c.b16 %v662, %v658
  %v823 = vpack.c.b16 %v663, %v659
  %v824 = vpack.c.b16 %v664, %v660
  %v825 = vpack.c.b16 %v665, %v661
  %v826 = vpack.c.b16 %v670, %v666
  %v827 = vpack.c.b16 %v671, %v667
  %v828 = vpack.c.b16 %v672, %v668
  %v829 = vpack.c.b16 %v673, %v669
  %v830 = vpack.c.b16 %v678, %v674
  %v831 = vpack.c.b16 %v679, %v675
  %v832 = vpack.c.b16 %v680, %v676
  %v833 = vpack.c.b16 %v681, %v677
  %v834 = vpack.c.b16 %v686, %v682
  %v835 = vpack.c.b16 %v687, %v683
  %v836 = vpack.c.b16 %v688, %v684
  %v837 = vpack.c.b16 %v689, %v685
  %v838 = vpack.c.b16 %v694, %v690
  %v839 = vpack.c.b16 %v695, %v691
  %v840 = vpack.c.b16 %v696, %v692
  %v841 = vpack.c.b16 %v697, %v693
  %v842 = vpack.c.b16 %v702, %v698
  %v843 = vpack.c.b16 %v703, %v699
  %v844 = vpack.c.b16 %v704, %v700
  %v845 = vpack.c.b16 %v705, %v701
  %v846 = vpack.c.b16 %v710, %v706
  %v847 = vpack.c.b16 %v711, %v707
  %v848 = vpack.c.b16 %v712, %v708
  %v849 = vpack.c.b16 %v713, %v709
  %v850 = vpack.c.b16 %v718, %v714
  %v851 = vpack.c.b16 %v719, %v715
  %v852 = vpack.c.b16 %v720, %v716
  %v853 = vpack.c.b16 %v721, %v717
  %v854 = vpack.c.b16 %v726, %v722
  %v855 = vpack.c.b16 %v727, %v723
  %v856 = vpack.c.b16 %v728, %v724
  %v857 = vpack.c.b16 %v729, %v725
  %v1050 = vunpack.c.l.b16 %v90
  %v1051 = vunpack.c.l.b16 %v91
  %v1052 = vunpack.c.l.b16 %v92
  %v1053 = vunpack.c.l.b16 %v93
  %v1054 = vunpack.c.l.b16 %v94
  %v1055 = vunpack.c.l.b16 %v95
  %v1056 = vunpack.c.l.b16 %v96
  %v1057 = vunpack.c.l.b16 %v97
  %v1058 = vunpack.c.l.b16 %v98
  %v1059 = vunpack.c.l.b16 %v99
  %v1060 = vunpack.c.l.b16 %v100
  %v1061 = vunpack.c.l.b16 %v101
  %v1062 = vunpack.c.l.b16 %v102
  %v1063 = vunpack.c.l.b16 %v103
  %v1064 = vunpack.c.l.b16 %v104
  %v1065 = vunpack.c.l.b16 %v105
  %v1066 = vunpack.c.l.b16 %v106
  %v1067 = vunpack.c.l.b16 %v107
  %v1068 = vunpack.c.l.b16 %v108
  %v1069 = vunpack.c.l.b16 %v109
  %v1070 = vunpack.c.l.b16 %v110
  %v1071 = vunpack.c.l.b16 %v111
  %v1072 = vunpack.c.l.b16 %v112
  %v1073 = vunpack.c.l.b16 %v113
  %v1074 = vunpack.c.l.b16 %v114
  %v1075 = vunpack.c.l.b16 %v115
  %v1076 = vunpack.c.l.b16 %v116
  %v1077 = vunpack.c.l.b16 %v117
  %v1078 = vunpack.c.l.b16 %v118
  %v1079 = vunpack.c.l.b16 %v119
  %v1080 = vunpack.c.l.b16 %v120
  %v1081 = vunpack.c.l.b16 %v121
  %v1082 = vunpack.c.l.b16 %v122
  %v1083 = vunpack.c.l.b16 %v123
  %v1084 = vunpack.c.l.b16 %v124
  %v1085 = vunpack.c.l.b16 %v125
  %v1086 = vunpack.c.l.b16 %v126
  %v1087 = vunpack.c.l.b16 %v127
  %v1088 = vunpack.c.l.b16 %v128
  %v1089 = vunpack.c.l.b16 %v129
  %v1090 = vunpack.c.l.b16 %v130
  %v1091 = vunpack.c.l.b16 %v131
  %v1092 = vunpack.c.l.b16 %v132
  %v1093 = vunpack.c.l.b16 %v133
  %v1094 = vunpack.c.l.b16 %v134
  %v1095 = vunpack.c.l.b16 %v135
  %v1096 = vunpack.c.l.b16 %v136
  %v1097 = vunpack.c.l.b16 %v137
  %v1098 = vunpack.c.l.b16 %v138
  %v1099 = vunpack.c.l.b16 %v139
  %v1100 = vunpack.c.l.b16 %v140
  %v1101 = vunpack.c.l.b16 %v141
  %v1102 = vunpack.c.l.b16 %v142
  %v1103 = vunpack.c.l.b16 %v143
  %v1104 = vunpack.c.l.b16 %v144
  %v1105 = vunpack.c.l.b16 %v145
  %v1106 = vunpack.c.l.b16 %v146
  %v1107 = vunpack.c.l.b16 %v147
  %v1108 = vunpack.c.l.b16 %v148
  %v1109 = vunpack.c.l.b16 %v149
  %v1110 = vunpack.c.l.b16 %v150
  %v1111 = vunpack.c.l.b16 %v151
  %v1112 = vunpack.c.l.b16 %v152
  %v1113 = vunpack.c.l.b16 %v153
  %v1114 = vpack.c.b16 %v1051, %v1050
  %v1115 = vpack.c.b16 %v1053, %v1052
  %v1116 = vpack.c.b16 %v1055, %v1054
  %v1117 = vpack.c.b16 %v1057, %v1056
  %v1118 = vpack.c.b16 %v1059, %v1058
  %v1119 = vpack.c.b16 %v1061, %v1060
  %v1120 = vpack.c.b16 %v1063, %v1062
  %v1121 = vpack.c.b16 %v1065, %v1064
  %v1122 = vpack.c.b16 %v1067, %v1066
  %v1123 = vpack.c.b16 %v1069, %v1068
  %v1124 = vpack.c.b16 %v1071, %v1070
  %v1125 = vpack.c.b16 %v1073, %v1072
  %v1126 = vpack.c.b16 %v1075, %v1074
  %v1127 = vpack.c.b16 %v1077, %v1076
  %v1128 = vpack.c.b16 %v1079, %v1078
  %v1129 = vpack.c.b16 %v1081, %v1080
  %v1130 = vpack.c.b16 %v1083, %v1082
  %v1131 = vpack.c.b16 %v1085, %v1084
  %v1132 = vpack.c.b16 %v1087, %v1086
  %v1133 = vpack.c.b16 %v1089, %v1088
  %v1134 = vpack.c.b16 %v1091, %v1090
  %v1135 = vpack.c.b16 %v1093, %v1092
  %v1136 = vpack.c.b16 %v1095, %v1094
  %v1137 = vpack.c.b16 %v1097, %v1096
  %v1138 = vpack.c.b16 %v1099, %v1098
  %v1139 = vpack.c.b16 %v1101, %v1100
  %v1140 = vpack.c.b16 %v1103, %v1102
  %v1141 = vpack.c.b16 %v1105, %v1104
  %v1142 = vpack.c.b16 %v1107, %v1106
  %v1143 = vpack.c.b16 %v1109, %v1108
  %v1144 = vpack.c.b16 %v1111, %v1110
  %v1145 = vpack.c.b16 %v1113, %v1112
  %1178 = vmatpush.bf16.msra.mxu0 %v1121
  %1179 = vmatpush.bf16.msra.mxu0 %v1120
  %1180 = vmatpush.bf16.msra.mxu0 %v1119
  %1181 = vmatpush.bf16.msra.mxu0 %v1118
  %1182 = vmatpush.bf16.msra.mxu0 %v1117
  %1183 = vmatpush.bf16.msra.mxu0 %v1116
  %1184 = vmatpush.bf16.msra.mxu0 %v1115
  %1185 = vmatpush.bf16.msra.mxu0 %v1114
  %1186 = vmatmul.bf16.gmra.mxu0 %v730
  %v1187 = vpop.f32.mrf.mxu0
  %v1188 = vadd.f32 0.0, %v1187
  %v1189 = vpop.f32.mrf.mxu0
  %v1190 = vadd.f32 0.0, %v1189
  %1191 = vmatmul.bf16.gmra.mxu0 %v734
  %v1192 = vpop.f32.mrf.mxu0
  %v1193 = vadd.f32 0.0, %v1192
  %v1194 = vpop.f32.mrf.mxu0
  %v1195 = vadd.f32 0.0, %v1194
  %1196 = vmatmul.bf16.gmra.mxu0 %v738
  %v1197 = vpop.f32.mrf.mxu0
  %v1198 = vadd.f32 0.0, %v1197
  %v1199 = vpop.f32.mrf.mxu0
  %v1200 = vadd.f32 0.0, %v1199
  %1201 = vmatmul.bf16.gmra.mxu0 %v742
  %v1202 = vpop.f32.mrf.mxu0
  %v1203 = vadd.f32 0.0, %v1202
  %v1204 = vpop.f32.mrf.mxu0
  %v1205 = vadd.f32 0.0, %v1204
  %1206 = vmatmul.bf16.gmra.mxu0 %v746
  %v1207 = vpop.f32.mrf.mxu0
  %v1208 = vadd.f32 0.0, %v1207
  %v1209 = vpop.f32.mrf.mxu0
  %v1210 = vadd.f32 0.0, %v1209
  %1211 = vmatmul.bf16.gmra.mxu0 %v750
  %v1212 = vpop.f32.mrf.mxu0
  %v1213 = vadd.f32 0.0, %v1212
  %v1214 = vpop.f32.mrf.mxu0
  %v1215 = vadd.f32 0.0, %v1214
  %1216 = vmatmul.bf16.gmra.mxu0 %v754
  %v1217 = vpop.f32.mrf.mxu0
  %v1218 = vadd.f32 0.0, %v1217
  %v1219 = vpop.f32.mrf.mxu0
  %v1220 = vadd.f32 0.0, %v1219
  %1221 = vmatmul.bf16.gmra.mxu0 %v758
  %v1222 = vpop.f32.mrf.mxu0
  %v1223 = vadd.f32 0.0, %v1222
  %v1224 = vpop.f32.mrf.mxu0
  %v1225 = vadd.f32 0.0, %v1224
  %1226 = vmatmul.bf16.gmra.mxu0 %v762
  %v1227 = vpop.f32.mrf.mxu0
  %v1228 = vadd.f32 0.0, %v1227
  %v1229 = vpop.f32.mrf.mxu0
  %v1230 = vadd.f32 0.0, %v1229
  %1231 = vmatmul.bf16.gmra.mxu0 %v766
  %v1232 = vpop.f32.mrf.mxu0
  %v1233 = vadd.f32 0.0, %v1232
  %v1234 = vpop.f32.mrf.mxu0
  %v1235 = vadd.f32 0.0, %v1234
  %1236 = vmatmul.bf16.gmra.mxu0 %v770
  %v1237 = vpop.f32.mrf.mxu0
  %v1238 = vadd.f32 0.0, %v1237
  %v1239 = vpop.f32.mrf.mxu0
  %v1240 = vadd.f32 0.0, %v1239
  %1241 = vmatmul.bf16.gmra.mxu0 %v774
  %v1242 = vpop.f32.mrf.mxu0
  %v1243 = vadd.f32 0.0, %v1242
  %v1244 = vpop.f32.mrf.mxu0
  %v1245 = vadd.f32 0.0, %v1244
  %1246 = vmatmul.bf16.gmra.mxu0 %v778
  %v1247 = vpop.f32.mrf.mxu0
  %v1248 = vadd.f32 0.0, %v1247
  %v1249 = vpop.f32.mrf.mxu0
  %v1250 = vadd.f32 0.0, %v1249
  %1251 = vmatmul.bf16.gmra.mxu0 %v782
  %v1252 = vpop.f32.mrf.mxu0
  %v1253 = vadd.f32 0.0, %v1252
  %v1254 = vpop.f32.mrf.mxu0
  %v1255 = vadd.f32 0.0, %v1254
  %1256 = vmatmul.bf16.gmra.mxu0 %v786
  %v1257 = vpop.f32.mrf.mxu0
  %v1258 = vadd.f32 0.0, %v1257
  %v1259 = vpop.f32.mrf.mxu0
  %v1260 = vadd.f32 0.0, %v1259
  %1261 = vmatmul.bf16.gmra.mxu0 %v790
  %v1262 = vpop.f32.mrf.mxu0
  %v1263 = vadd.f32 0.0, %v1262
  %v1264 = vpop.f32.mrf.mxu0
  %v1265 = vadd.f32 0.0, %v1264
  %1266 = vmatmul.bf16.gmra.mxu0 %v794
  %v1267 = vpop.f32.mrf.mxu0
  %v1268 = vadd.f32 0.0, %v1267
  %v1269 = vpop.f32.mrf.mxu0
  %v1270 = vadd.f32 0.0, %v1269
  %1271 = vmatmul.bf16.gmra.mxu0 %v798
  %v1272 = vpop.f32.mrf.mxu0
  %v1273 = vadd.f32 0.0, %v1272
  %v1274 = vpop.f32.mrf.mxu0
  %v1275 = vadd.f32 0.0, %v1274
  %1276 = vmatmul.bf16.gmra.mxu0 %v802
  %v1277 = vpop.f32.mrf.mxu0
  %v1278 = vadd.f32 0.0, %v1277
  %v1279 = vpop.f32.mrf.mxu0
  %v1280 = vadd.f32 0.0, %v1279
  %1281 = vmatmul.bf16.gmra.mxu0 %v806
  %v1282 = vpop.f32.mrf.mxu0
  %v1283 = vadd.f32 0.0, %v1282
  %v1284 = vpop.f32.mrf.mxu0
  %v1285 = vadd.f32 0.0, %v1284
  %1286 = vmatmul.bf16.gmra.mxu0 %v810
  %v1287 = vpop.f32.mrf.mxu0
  %v1288 = vadd.f32 0.0, %v1287
  %v1289 = vpop.f32.mrf.mxu0
  %v1290 = vadd.f32 0.0, %v1289
  %1291 = vmatmul.bf16.gmra.mxu0 %v814
  %v1292 = vpop.f32.mrf.mxu0
  %v1293 = vadd.f32 0.0, %v1292
  %v1294 = vpop.f32.mrf.mxu0
  %v1295 = vadd.f32 0.0, %v1294
  %1296 = vmatmul.bf16.gmra.mxu0 %v818
  %v1297 = vpop.f32.mrf.mxu0
  %v1298 = vadd.f32 0.0, %v1297
  %v1299 = vpop.f32.mrf.mxu0
  %v1300 = vadd.f32 0.0, %v1299
  %1301 = vmatmul.bf16.gmra.mxu0 %v822
  %v1302 = vpop.f32.mrf.mxu0
  %v1303 = vadd.f32 0.0, %v1302
  %v1304 = vpop.f32.mrf.mxu0
  %v1305 = vadd.f32 0.0, %v1304
  %1306 = vmatmul.bf16.gmra.mxu0 %v826
  %v1307 = vpop.f32.mrf.mxu0
  %v1308 = vadd.f32 0.0, %v1307
  %v1309 = vpop.f32.mrf.mxu0
  %v1310 = vadd.f32 0.0, %v1309
  %1311 = vmatmul.bf16.gmra.mxu0 %v830
  %v1312 = vpop.f32.mrf.mxu0
  %v1313 = vadd.f32 0.0, %v1312
  %v1314 = vpop.f32.mrf.mxu0
  %v1315 = vadd.f32 0.0, %v1314
  %1316 = vmatmul.bf16.gmra.mxu0 %v834
  %v1317 = vpop.f32.mrf.mxu0
  %v1318 = vadd.f32 0.0, %v1317
  %v1319 = vpop.f32.mrf.mxu0
  %v1320 = vadd.f32 0.0, %v1319
  %1321 = vmatmul.bf16.gmra.mxu0 %v838
  %v1322 = vpop.f32.mrf.mxu0
  %v1323 = vadd.f32 0.0, %v1322
  %v1324 = vpop.f32.mrf.mxu0
  %v1325 = vadd.f32 0.0, %v1324
  %1326 = vmatmul.bf16.gmra.mxu0 %v842
  %v1327 = vpop.f32.mrf.mxu0
  %v1328 = vadd.f32 0.0, %v1327
  %v1329 = vpop.f32.mrf.mxu0
  %v1330 = vadd.f32 0.0, %v1329
  %1331 = vmatmul.bf16.gmra.mxu0 %v846
  %v1332 = vpop.f32.mrf.mxu0
  %v1333 = vadd.f32 0.0, %v1332
  %v1334 = vpop.f32.mrf.mxu0
  %v1335 = vadd.f32 0.0, %v1334
  %1336 = vmatmul.bf16.gmra.mxu0 %v850
  %v1337 = vpop.f32.mrf.mxu0
  %v1338 = vadd.f32 0.0, %v1337
  %v1339 = vpop.f32.mrf.mxu0
  %v1340 = vadd.f32 0.0, %v1339
  %1341 = vmatmul.bf16.gmra.mxu0 %v854
  %v1342 = vpop.f32.mrf.mxu0
  %v1343 = vadd.f32 0.0, %v1342
  %v1344 = vpop.f32.mrf.mxu0
  %v1345 = vadd.f32 0.0, %v1344
  %1346 = vdwg.mxu0
  %1347 = vmatpush.bf16.msra.mxu0 %v1129
  %1348 = vmatpush.bf16.msra.mxu0 %v1128
  %1349 = vmatpush.bf16.msra.mxu0 %v1127
  %1350 = vmatpush.bf16.msra.mxu0 %v1126
  %1351 = vmatpush.bf16.msra.mxu0 %v1125
  %1352 = vmatpush.bf16.msra.mxu0 %v1124
  %1353 = vmatpush.bf16.msra.mxu0 %v1123
  %1354 = vmatpush.bf16.msra.mxu0 %v1122
  %1355 = vmatmul.bf16.gmra.mxu0 %v731
  %v1356 = vpop.f32.mrf.mxu0
  %v1357 = vadd.f32 %v1188, %v1356
  %v1358 = vpop.f32.mrf.mxu0
  %v1359 = vadd.f32 %v1190, %v1358
  %1360 = vmatmul.bf16.gmra.mxu0 %v735
  %v1361 = vpop.f32.mrf.mxu0
  %v1362 = vadd.f32 %v1193, %v1361
  %v1363 = vpop.f32.mrf.mxu0
  %v1364 = vadd.f32 %v1195, %v1363
  %1365 = vmatmul.bf16.gmra.mxu0 %v739
  %v1366 = vpop.f32.mrf.mxu0
  %v1367 = vadd.f32 %v1198, %v1366
  %v1368 = vpop.f32.mrf.mxu0
  %v1369 = vadd.f32 %v1200, %v1368
  %1370 = vmatmul.bf16.gmra.mxu0 %v743
  %v1371 = vpop.f32.mrf.mxu0
  %v1372 = vadd.f32 %v1203, %v1371
  %v1373 = vpop.f32.mrf.mxu0
  %v1374 = vadd.f32 %v1205, %v1373
  %1375 = vmatmul.bf16.gmra.mxu0 %v747
  %v1376 = vpop.f32.mrf.mxu0
  %v1377 = vadd.f32 %v1208, %v1376
  %v1378 = vpop.f32.mrf.mxu0
  %v1379 = vadd.f32 %v1210, %v1378
  %1380 = vmatmul.bf16.gmra.mxu0 %v751
  %v1381 = vpop.f32.mrf.mxu0
  %v1382 = vadd.f32 %v1213, %v1381
  %v1383 = vpop.f32.mrf.mxu0
  %v1384 = vadd.f32 %v1215, %v1383
  %1385 = vmatmul.bf16.gmra.mxu0 %v755
  %v1386 = vpop.f32.mrf.mxu0
  %v1387 = vadd.f32 %v1218, %v1386
  %v1388 = vpop.f32.mrf.mxu0
  %v1389 = vadd.f32 %v1220, %v1388
  %1390 = vmatmul.bf16.gmra.mxu0 %v759
  %v1391 = vpop.f32.mrf.mxu0
  %v1392 = vadd.f32 %v1223, %v1391
  %v1393 = vpop.f32.mrf.mxu0
  %v1394 = vadd.f32 %v1225, %v1393
  %1395 = vmatmul.bf16.gmra.mxu0 %v763
  %v1396 = vpop.f32.mrf.mxu0
  %v1397 = vadd.f32 %v1228, %v1396
  %v1398 = vpop.f32.mrf.mxu0
  %v1399 = vadd.f32 %v1230, %v1398
  %1400 = vmatmul.bf16.gmra.mxu0 %v767
  %v1401 = vpop.f32.mrf.mxu0
  %v1402 = vadd.f32 %v1233, %v1401
  %v1403 = vpop.f32.mrf.mxu0
  %v1404 = vadd.f32 %v1235, %v1403
  %1405 = vmatmul.bf16.gmra.mxu0 %v771
  %v1406 = vpop.f32.mrf.mxu0
  %v1407 = vadd.f32 %v1238, %v1406
  %v1408 = vpop.f32.mrf.mxu0
  %v1409 = vadd.f32 %v1240, %v1408
  %1410 = vmatmul.bf16.gmra.mxu0 %v775
  %v1411 = vpop.f32.mrf.mxu0
  %v1412 = vadd.f32 %v1243, %v1411
  %v1413 = vpop.f32.mrf.mxu0
  %v1414 = vadd.f32 %v1245, %v1413
  %1415 = vmatmul.bf16.gmra.mxu0 %v779
  %v1416 = vpop.f32.mrf.mxu0
  %v1417 = vadd.f32 %v1248, %v1416
  %v1418 = vpop.f32.mrf.mxu0
  %v1419 = vadd.f32 %v1250, %v1418
  %1420 = vmatmul.bf16.gmra.mxu0 %v783
  %v1421 = vpop.f32.mrf.mxu0
  %v1422 = vadd.f32 %v1253, %v1421
  %v1423 = vpop.f32.mrf.mxu0
  %v1424 = vadd.f32 %v1255, %v1423
  %1425 = vmatmul.bf16.gmra.mxu0 %v787
  %v1426 = vpop.f32.mrf.mxu0
  %v1427 = vadd.f32 %v1258, %v1426
  %v1428 = vpop.f32.mrf.mxu0
  %v1429 = vadd.f32 %v1260, %v1428
  %1430 = vmatmul.bf16.gmra.mxu0 %v791
  %v1431 = vpop.f32.mrf.mxu0
  %v1432 = vadd.f32 %v1263, %v1431
  %v1433 = vpop.f32.mrf.mxu0
  %v1434 = vadd.f32 %v1265, %v1433
  %1435 = vmatmul.bf16.gmra.mxu0 %v795
  %v1436 = vpop.f32.mrf.mxu0
  %v1437 = vadd.f32 %v1268, %v1436
  %v1438 = vpop.f32.mrf.mxu0
  %v1439 = vadd.f32 %v1270, %v1438
  %1440 = vmatmul.bf16.gmra.mxu0 %v799
  %v1441 = vpop.f32.mrf.mxu0
  %v1442 = vadd.f32 %v1273, %v1441
  %v1443 = vpop.f32.mrf.mxu0
  %v1444 = vadd.f32 %v1275, %v1443
  %1445 = vmatmul.bf16.gmra.mxu0 %v803
  %v1446 = vpop.f32.mrf.mxu0
  %v1447 = vadd.f32 %v1278, %v1446
  %v1448 = vpop.f32.mrf.mxu0
  %v1449 = vadd.f32 %v1280, %v1448
  %1450 = vmatmul.bf16.gmra.mxu0 %v807
  %v1451 = vpop.f32.mrf.mxu0
  %v1452 = vadd.f32 %v1283, %v1451
  %v1453 = vpop.f32.mrf.mxu0
  %v1454 = vadd.f32 %v1285, %v1453
  %1455 = vmatmul.bf16.gmra.mxu0 %v811
  %v1456 = vpop.f32.mrf.mxu0
  %v1457 = vadd.f32 %v1288, %v1456
  %v1458 = vpop.f32.mrf.mxu0
  %v1459 = vadd.f32 %v1290, %v1458
  %1460 = vmatmul.bf16.gmra.mxu0 %v815
  %v1461 = vpop.f32.mrf.mxu0
  %v1462 = vadd.f32 %v1293, %v1461
  %v1463 = vpop.f32.mrf.mxu0
  %v1464 = vadd.f32 %v1295, %v1463
  %1465 = vmatmul.bf16.gmra.mxu0 %v819
  %v1466 = vpop.f32.mrf.mxu0
  %v1467 = vadd.f32 %v1298, %v1466
  %v1468 = vpop.f32.mrf.mxu0
  %v1469 = vadd.f32 %v1300, %v1468
  %1470 = vmatmul.bf16.gmra.mxu0 %v823
  %v1471 = vpop.f32.mrf.mxu0
  %v1472 = vadd.f32 %v1303, %v1471
  %v1473 = vpop.f32.mrf.mxu0
  %v1474 = vadd.f32 %v1305, %v1473
  %1475 = vmatmul.bf16.gmra.mxu0 %v827
  %v1476 = vpop.f32.mrf.mxu0
  %v1477 = vadd.f32 %v1308, %v1476
  %v1478 = vpop.f32.mrf.mxu0
  %v1479 = vadd.f32 %v1310, %v1478
  %1480 = vmatmul.bf16.gmra.mxu0 %v831
  %v1481 = vpop.f32.mrf.mxu0
  %v1482 = vadd.f32 %v1313, %v1481
  %v1483 = vpop.f32.mrf.mxu0
  %v1484 = vadd.f32 %v1315, %v1483
  %1485 = vmatmul.bf16.gmra.mxu0 %v835
  %v1486 = vpop.f32.mrf.mxu0
  %v1487 = vadd.f32 %v1318, %v1486
  %v1488 = vpop.f32.mrf.mxu0
  %v1489 = vadd.f32 %v1320, %v1488
  %1490 = vmatmul.bf16.gmra.mxu0 %v839
  %v1491 = vpop.f32.mrf.mxu0
  %v1492 = vadd.f32 %v1323, %v1491
  %v1493 = vpop.f32.mrf.mxu0
  %v1494 = vadd.f32 %v1325, %v1493
  %1495 = vmatmul.bf16.gmra.mxu0 %v843
  %v1496 = vpop.f32.mrf.mxu0
  %v1497 = vadd.f32 %v1328, %v1496
  %v1498 = vpop.f32.mrf.mxu0
  %v1499 = vadd.f32 %v1330, %v1498
  %1500 = vmatmul.bf16.gmra.mxu0 %v847
  %v1501 = vpop.f32.mrf.mxu0
  %v1502 = vadd.f32 %v1333, %v1501
  %v1503 = vpop.f32.mrf.mxu0
  %v1504 = vadd.f32 %v1335, %v1503
  %1505 = vmatmul.bf16.gmra.mxu0 %v851
  %v1506 = vpop.f32.mrf.mxu0
  %v1507 = vadd.f32 %v1338, %v1506
  %v1508 = vpop.f32.mrf.mxu0
  %v1509 = vadd.f32 %v1340, %v1508
  %1510 = vmatmul.bf16.gmra.mxu0 %v855
  %v1511 = vpop.f32.mrf.mxu0
  %v1512 = vadd.f32 %v1343, %v1511
  %v1513 = vpop.f32.mrf.mxu0
  %v1514 = vadd.f32 %v1345, %v1513
  %1515 = vdwg.mxu0
  %1516 = vmatpush.bf16.msra.mxu0 %v1137
  %1517 = vmatpush.bf16.msra.mxu0 %v1136
  %1518 = vmatpush.bf16.msra.mxu0 %v1135
  %1519 = vmatpush.bf16.msra.mxu0 %v1134
  %1520 = vmatpush.bf16.msra.mxu0 %v1133
  %1521 = vmatpush.bf16.msra.mxu0 %v1132
  %1522 = vmatpush.bf16.msra.mxu0 %v1131
  %1523 = vmatpush.bf16.msra.mxu0 %v1130
  %1524 = vmatmul.bf16.gmra.mxu0 %v732
  %v1525 = vpop.f32.mrf.mxu0
  %v1526 = vadd.f32 %v1357, %v1525
  %v1527 = vpop.f32.mrf.mxu0
  %v1528 = vadd.f32 %v1359, %v1527
  %1529 = vmatmul.bf16.gmra.mxu0 %v736
  %v1530 = vpop.f32.mrf.mxu0
  %v1531 = vadd.f32 %v1362, %v1530
  %v1532 = vpop.f32.mrf.mxu0
  %v1533 = vadd.f32 %v1364, %v1532
  %1534 = vmatmul.bf16.gmra.mxu0 %v740
  %v1535 = vpop.f32.mrf.mxu0
  %v1536 = vadd.f32 %v1367, %v1535
  %v1537 = vpop.f32.mrf.mxu0
  %v1538 = vadd.f32 %v1369, %v1537
  %1539 = vmatmul.bf16.gmra.mxu0 %v744
  %v1540 = vpop.f32.mrf.mxu0
  %v1541 = vadd.f32 %v1372, %v1540
  %v1542 = vpop.f32.mrf.mxu0
  %v1543 = vadd.f32 %v1374, %v1542
  %1544 = vmatmul.bf16.gmra.mxu0 %v748
  %v1545 = vpop.f32.mrf.mxu0
  %v1546 = vadd.f32 %v1377, %v1545
  %v1547 = vpop.f32.mrf.mxu0
  %v1548 = vadd.f32 %v1379, %v1547
  %1549 = vmatmul.bf16.gmra.mxu0 %v752
  %v1550 = vpop.f32.mrf.mxu0
  %v1551 = vadd.f32 %v1382, %v1550
  %v1552 = vpop.f32.mrf.mxu0
  %v1553 = vadd.f32 %v1384, %v1552
  %1554 = vmatmul.bf16.gmra.mxu0 %v756
  %v1555 = vpop.f32.mrf.mxu0
  %v1556 = vadd.f32 %v1387, %v1555
  %v1557 = vpop.f32.mrf.mxu0
  %v1558 = vadd.f32 %v1389, %v1557
  %1559 = vmatmul.bf16.gmra.mxu0 %v760
  %v1560 = vpop.f32.mrf.mxu0
  %v1561 = vadd.f32 %v1392, %v1560
  %v1562 = vpop.f32.mrf.mxu0
  %v1563 = vadd.f32 %v1394, %v1562
  %1564 = vmatmul.bf16.gmra.mxu0 %v764
  %v1565 = vpop.f32.mrf.mxu0
  %v1566 = vadd.f32 %v1397, %v1565
  %v1567 = vpop.f32.mrf.mxu0
  %v1568 = vadd.f32 %v1399, %v1567
  %1569 = vmatmul.bf16.gmra.mxu0 %v768
  %v1570 = vpop.f32.mrf.mxu0
  %v1571 = vadd.f32 %v1402, %v1570
  %v1572 = vpop.f32.mrf.mxu0
  %v1573 = vadd.f32 %v1404, %v1572
  %1574 = vmatmul.bf16.gmra.mxu0 %v772
  %v1575 = vpop.f32.mrf.mxu0
  %v1576 = vadd.f32 %v1407, %v1575
  %v1577 = vpop.f32.mrf.mxu0
  %v1578 = vadd.f32 %v1409, %v1577
  %1579 = vmatmul.bf16.gmra.mxu0 %v776
  %v1580 = vpop.f32.mrf.mxu0
  %v1581 = vadd.f32 %v1412, %v1580
  %v1582 = vpop.f32.mrf.mxu0
  %v1583 = vadd.f32 %v1414, %v1582
  %1584 = vmatmul.bf16.gmra.mxu0 %v780
  %v1585 = vpop.f32.mrf.mxu0
  %v1586 = vadd.f32 %v1417, %v1585
  %v1587 = vpop.f32.mrf.mxu0
  %v1588 = vadd.f32 %v1419, %v1587
  %1589 = vmatmul.bf16.gmra.mxu0 %v784
  %v1590 = vpop.f32.mrf.mxu0
  %v1591 = vadd.f32 %v1422, %v1590
  %v1592 = vpop.f32.mrf.mxu0
  %v1593 = vadd.f32 %v1424, %v1592
  %1594 = vmatmul.bf16.gmra.mxu0 %v788
  %v1595 = vpop.f32.mrf.mxu0
  %v1596 = vadd.f32 %v1427, %v1595
  %v1597 = vpop.f32.mrf.mxu0
  %v1598 = vadd.f32 %v1429, %v1597
  %1599 = vmatmul.bf16.gmra.mxu0 %v792
  %v1600 = vpop.f32.mrf.mxu0
  %v1601 = vadd.f32 %v1432, %v1600
  %v1602 = vpop.f32.mrf.mxu0
  %v1603 = vadd.f32 %v1434, %v1602
  %1604 = vmatmul.bf16.gmra.mxu0 %v796
  %v1605 = vpop.f32.mrf.mxu0
  %v1606 = vadd.f32 %v1437, %v1605
  %v1607 = vpop.f32.mrf.mxu0
  %v1608 = vadd.f32 %v1439, %v1607
  %1609 = vmatmul.bf16.gmra.mxu0 %v800
  %v1610 = vpop.f32.mrf.mxu0
  %v1611 = vadd.f32 %v1442, %v1610
  %v1612 = vpop.f32.mrf.mxu0
  %v1613 = vadd.f32 %v1444, %v1612
  %1614 = vmatmul.bf16.gmra.mxu0 %v804
  %v1615 = vpop.f32.mrf.mxu0
  %v1616 = vadd.f32 %v1447, %v1615
  %v1617 = vpop.f32.mrf.mxu0
  %v1618 = vadd.f32 %v1449, %v1617
  %1619 = vmatmul.bf16.gmra.mxu0 %v808
  %v1620 = vpop.f32.mrf.mxu0
  %v1621 = vadd.f32 %v1452, %v1620
  %v1622 = vpop.f32.mrf.mxu0
  %v1623 = vadd.f32 %v1454, %v1622
  %1624 = vmatmul.bf16.gmra.mxu0 %v812
  %v1625 = vpop.f32.mrf.mxu0
  %v1626 = vadd.f32 %v1457, %v1625
  %v1627 = vpop.f32.mrf.mxu0
  %v1628 = vadd.f32 %v1459, %v1627
  %1629 = vmatmul.bf16.gmra.mxu0 %v816
  %v1630 = vpop.f32.mrf.mxu0
  %v1631 = vadd.f32 %v1462, %v1630
  %v1632 = vpop.f32.mrf.mxu0
  %v1633 = vadd.f32 %v1464, %v1632
  %1634 = vmatmul.bf16.gmra.mxu0 %v820
  %v1635 = vpop.f32.mrf.mxu0
  %v1636 = vadd.f32 %v1467, %v1635
  %v1637 = vpop.f32.mrf.mxu0
  %v1638 = vadd.f32 %v1469, %v1637
  %1639 = vmatmul.bf16.gmra.mxu0 %v824
  %v1640 = vpop.f32.mrf.mxu0
  %v1641 = vadd.f32 %v1472, %v1640
  %v1642 = vpop.f32.mrf.mxu0
  %v1643 = vadd.f32 %v1474, %v1642
  %1644 = vmatmul.bf16.gmra.mxu0 %v828
  %v1645 = vpop.f32.mrf.mxu0
  %v1646 = vadd.f32 %v1477, %v1645
  %v1647 = vpop.f32.mrf.mxu0
  %v1648 = vadd.f32 %v1479, %v1647
  %1649 = vmatmul.bf16.gmra.mxu0 %v832
  %v1650 = vpop.f32.mrf.mxu0
  %v1651 = vadd.f32 %v1482, %v1650
  %v1652 = vpop.f32.mrf.mxu0
  %v1653 = vadd.f32 %v1484, %v1652
  %1654 = vmatmul.bf16.gmra.mxu0 %v836
  %v1655 = vpop.f32.mrf.mxu0
  %v1656 = vadd.f32 %v1487, %v1655
  %v1657 = vpop.f32.mrf.mxu0
  %v1658 = vadd.f32 %v1489, %v1657
  %1659 = vmatmul.bf16.gmra.mxu0 %v840
  %v1660 = vpop.f32.mrf.mxu0
  %v1661 = vadd.f32 %v1492, %v1660
  %v1662 = vpop.f32.mrf.mxu0
  %v1663 = vadd.f32 %v1494, %v1662
  %1664 = vmatmul.bf16.gmra.mxu0 %v844
  %v1665 = vpop.f32.mrf.mxu0
  %v1666 = vadd.f32 %v1497, %v1665
  %v1667 = vpop.f32.mrf.mxu0
  %v1668 = vadd.f32 %v1499, %v1667
  %1669 = vmatmul.bf16.gmra.mxu0 %v848
  %v1670 = vpop.f32.mrf.mxu0
  %v1671 = vadd.f32 %v1502, %v1670
  %v1672 = vpop.f32.mrf.mxu0
  %v1673 = vadd.f32 %v1504, %v1672
  %1674 = vmatmul.bf16.gmra.mxu0 %v852
  %v1675 = vpop.f32.mrf.mxu0
  %v1676 = vadd.f32 %v1507, %v1675
  %v1677 = vpop.f32.mrf.mxu0
  %v1678 = vadd.f32 %v1509, %v1677
  %1679 = vmatmul.bf16.gmra.mxu0 %v856
  %v1680 = vpop.f32.mrf.mxu0
  %v1681 = vadd.f32 %v1512, %v1680
  %v1682 = vpop.f32.mrf.mxu0
  %v1683 = vadd.f32 %v1514, %v1682
  %1684 = vdwg.mxu0
  %1685 = vmatpush.bf16.msra.mxu0 %v1145
  %1686 = vmatpush.bf16.msra.mxu0 %v1144
  %1687 = vmatpush.bf16.msra.mxu0 %v1143
  %1688 = vmatpush.bf16.msra.mxu0 %v1142
  %1689 = vmatpush.bf16.msra.mxu0 %v1141
  %1690 = vmatpush.bf16.msra.mxu0 %v1140
  %1691 = vmatpush.bf16.msra.mxu0 %v1139
  %1692 = vmatpush.bf16.msra.mxu0 %v1138
  %1693 = vmatmul.bf16.gmra.mxu0 %v733
  %v1694 = vpop.f32.mrf.mxu0
  %v1695 = vadd.f32 %v1526, %v1694
  %v1696 = vpop.f32.mrf.mxu0
  %v1697 = vadd.f32 %v1528, %v1696
  %1698 = vmatmul.bf16.gmra.mxu0 %v737
  %v1699 = vpop.f32.mrf.mxu0
  %v1700 = vadd.f32 %v1531, %v1699
  %v1701 = vpop.f32.mrf.mxu0
  %v1702 = vadd.f32 %v1533, %v1701
  %1703 = vmatmul.bf16.gmra.mxu0 %v741
  %v1704 = vpop.f32.mrf.mxu0
  %v1705 = vadd.f32 %v1536, %v1704
  %v1706 = vpop.f32.mrf.mxu0
  %v1707 = vadd.f32 %v1538, %v1706
  %1708 = vmatmul.bf16.gmra.mxu0 %v745
  %v1709 = vpop.f32.mrf.mxu0
  %v1710 = vadd.f32 %v1541, %v1709
  %v1711 = vpop.f32.mrf.mxu0
  %v1712 = vadd.f32 %v1543, %v1711
  %1713 = vmatmul.bf16.gmra.mxu0 %v749
  %v1714 = vpop.f32.mrf.mxu0
  %v1715 = vadd.f32 %v1546, %v1714
  %v1716 = vpop.f32.mrf.mxu0
  %v1717 = vadd.f32 %v1548, %v1716
  %1718 = vmatmul.bf16.gmra.mxu0 %v753
  %v1719 = vpop.f32.mrf.mxu0
  %v1720 = vadd.f32 %v1551, %v1719
  %v1721 = vpop.f32.mrf.mxu0
  %v1722 = vadd.f32 %v1553, %v1721
  %1723 = vmatmul.bf16.gmra.mxu0 %v757
  %v1724 = vpop.f32.mrf.mxu0
  %v1725 = vadd.f32 %v1556, %v1724
  %v1726 = vpop.f32.mrf.mxu0
  %v1727 = vadd.f32 %v1558, %v1726
  %1728 = vmatmul.bf16.gmra.mxu0 %v761
  %v1729 = vpop.f32.mrf.mxu0
  %v1730 = vadd.f32 %v1561, %v1729
  %v1731 = vpop.f32.mrf.mxu0
  %v1732 = vadd.f32 %v1563, %v1731
  %1733 = vmatmul.bf16.gmra.mxu0 %v765
  %v1734 = vpop.f32.mrf.mxu0
  %v1735 = vadd.f32 %v1566, %v1734
  %v1736 = vpop.f32.mrf.mxu0
  %v1737 = vadd.f32 %v1568, %v1736
  %1738 = vmatmul.bf16.gmra.mxu0 %v769
  %v1739 = vpop.f32.mrf.mxu0
  %v1740 = vadd.f32 %v1571, %v1739
  %v1741 = vpop.f32.mrf.mxu0
  %v1742 = vadd.f32 %v1573, %v1741
  %1743 = vmatmul.bf16.gmra.mxu0 %v773
  %v1744 = vpop.f32.mrf.mxu0
  %v1745 = vadd.f32 %v1576, %v1744
  %v1746 = vpop.f32.mrf.mxu0
  %v1747 = vadd.f32 %v1578, %v1746
  %1748 = vmatmul.bf16.gmra.mxu0 %v777
  %v1749 = vpop.f32.mrf.mxu0
  %v1750 = vadd.f32 %v1581, %v1749
  %v1751 = vpop.f32.mrf.mxu0
  %v1752 = vadd.f32 %v1583, %v1751
  %1753 = vmatmul.bf16.gmra.mxu0 %v781
  %v1754 = vpop.f32.mrf.mxu0
  %v1755 = vadd.f32 %v1586, %v1754
  %v1756 = vpop.f32.mrf.mxu0
  %v1757 = vadd.f32 %v1588, %v1756
  %1758 = vmatmul.bf16.gmra.mxu0 %v785
  %v1759 = vpop.f32.mrf.mxu0
  %v1760 = vadd.f32 %v1591, %v1759
  %v1761 = vpop.f32.mrf.mxu0
  %v1762 = vadd.f32 %v1593, %v1761
  %1763 = vmatmul.bf16.gmra.mxu0 %v789
  %v1764 = vpop.f32.mrf.mxu0
  %v1765 = vadd.f32 %v1596, %v1764
  %v1766 = vpop.f32.mrf.mxu0
  %v1767 = vadd.f32 %v1598, %v1766
  %1768 = vmatmul.bf16.gmra.mxu0 %v793
  %v1769 = vpop.f32.mrf.mxu0
  %v1770 = vadd.f32 %v1601, %v1769
  %v1771 = vpop.f32.mrf.mxu0
  %v1772 = vadd.f32 %v1603, %v1771
  %1773 = vmatmul.bf16.gmra.mxu0 %v797
  %v1774 = vpop.f32.mrf.mxu0
  %v1775 = vadd.f32 %v1606, %v1774
  %v1776 = vpop.f32.mrf.mxu0
  %v1777 = vadd.f32 %v1608, %v1776
  %1778 = vmatmul.bf16.gmra.mxu0 %v801
  %v1779 = vpop.f32.mrf.mxu0
  %v1780 = vadd.f32 %v1611, %v1779
  %v1781 = vpop.f32.mrf.mxu0
  %v1782 = vadd.f32 %v1613, %v1781
  %1783 = vmatmul.bf16.gmra.mxu0 %v805
  %v1784 = vpop.f32.mrf.mxu0
  %v1785 = vadd.f32 %v1616, %v1784
  %v1786 = vpop.f32.mrf.mxu0
  %v1787 = vadd.f32 %v1618, %v1786
  %1788 = vmatmul.bf16.gmra.mxu0 %v809
  %v1789 = vpop.f32.mrf.mxu0
  %v1790 = vadd.f32 %v1621, %v1789
  %v1791 = vpop.f32.mrf.mxu0
  %v1792 = vadd.f32 %v1623, %v1791
  %1793 = vmatmul.bf16.gmra.mxu0 %v813
  %v1794 = vpop.f32.mrf.mxu0
  %v1795 = vadd.f32 %v1626, %v1794
  %v1796 = vpop.f32.mrf.mxu0
  %v1797 = vadd.f32 %v1628, %v1796
  %1798 = vmatmul.bf16.gmra.mxu0 %v817
  %v1799 = vpop.f32.mrf.mxu0
  %v1800 = vadd.f32 %v1631, %v1799
  %v1801 = vpop.f32.mrf.mxu0
  %v1802 = vadd.f32 %v1633, %v1801
  %1803 = vmatmul.bf16.gmra.mxu0 %v821
  %v1804 = vpop.f32.mrf.mxu0
  %v1805 = vadd.f32 %v1636, %v1804
  %v1806 = vpop.f32.mrf.mxu0
  %v1807 = vadd.f32 %v1638, %v1806
  %1808 = vmatmul.bf16.gmra.mxu0 %v825
  %v1809 = vpop.f32.mrf.mxu0
  %v1810 = vadd.f32 %v1641, %v1809
  %v1811 = vpop.f32.mrf.mxu0
  %v1812 = vadd.f32 %v1643, %v1811
  %1813 = vmatmul.bf16.gmra.mxu0 %v829
  %v1814 = vpop.f32.mrf.mxu0
  %v1815 = vadd.f32 %v1646, %v1814
  %v1816 = vpop.f32.mrf.mxu0
  %v1817 = vadd.f32 %v1648, %v1816
  %1818 = vmatmul.bf16.gmra.mxu0 %v833
  %v1819 = vpop.f32.mrf.mxu0
  %v1820 = vadd.f32 %v1651, %v1819
  %v1821 = vpop.f32.mrf.mxu0
  %v1822 = vadd.f32 %v1653, %v1821
  %1823 = vmatmul.bf16.gmra.mxu0 %v837
  %v1824 = vpop.f32.mrf.mxu0
  %v1825 = vadd.f32 %v1656, %v1824
  %v1826 = vpop.f32.mrf.mxu0
  %v1827 = vadd.f32 %v1658, %v1826
  %1828 = vmatmul.bf16.gmra.mxu0 %v841
  %v1829 = vpop.f32.mrf.mxu0
  %v1830 = vadd.f32 %v1661, %v1829
  %v1831 = vpop.f32.mrf.mxu0
  %v1832 = vadd.f32 %v1663, %v1831
  %1833 = vmatmul.bf16.gmra.mxu0 %v845
  %v1834 = vpop.f32.mrf.mxu0
  %v1835 = vadd.f32 %v1666, %v1834
  %v1836 = vpop.f32.mrf.mxu0
  %v1837 = vadd.f32 %v1668, %v1836
  %1838 = vmatmul.bf16.gmra.mxu0 %v849
  %v1839 = vpop.f32.mrf.mxu0
  %v1840 = vadd.f32 %v1671, %v1839
  %v1841 = vpop.f32.mrf.mxu0
  %v1842 = vadd.f32 %v1673, %v1841
  %1843 = vmatmul.bf16.gmra.mxu0 %v853
  %v1844 = vpop.f32.mrf.mxu0
  %v1845 = vadd.f32 %v1676, %v1844
  %v1846 = vpop.f32.mrf.mxu0
  %v1847 = vadd.f32 %v1678, %v1846
  %1848 = vmatmul.bf16.gmra.mxu0 %v857
  %v1849 = vpop.f32.mrf.mxu0
  %v1850 = vadd.f32 %v1681, %v1849
  %v1851 = vpop.f32.mrf.mxu0
  %v1852 = vadd.f32 %v1683, %v1851
  %1853 = vdwg.mxu0
  %v1854 = vadd.f32 %v154, %v1695
  %v1855 = vadd.f32 %v155, %v1697
  %v1856 = vadd.f32 %v156, %v1700
  %v1857 = vadd.f32 %v157, %v1702
  %v1858 = vadd.f32 %v158, %v1705
  %v1859 = vadd.f32 %v159, %v1707
  %v1860 = vadd.f32 %v160, %v1710
  %v1861 = vadd.f32 %v161, %v1712
  %v1862 = vadd.f32 %v162, %v1715
  %v1863 = vadd.f32 %v163, %v1717
  %v1864 = vadd.f32 %v164, %v1720
  %v1865 = vadd.f32 %v165, %v1722
  %v1866 = vadd.f32 %v166, %v1725
  %v1867 = vadd.f32 %v167, %v1727
  %v1868 = vadd.f32 %v168, %v1730
  %v1869 = vadd.f32 %v169, %v1732
  %v1870 = vadd.f32 %v170, %v1735
  %v1871 = vadd.f32 %v171, %v1737
  %v1872 = vadd.f32 %v172, %v1740
  %v1873 = vadd.f32 %v173, %v1742
  %v1874 = vadd.f32 %v174, %v1745
  %v1875 = vadd.f32 %v175, %v1747
  %v1876 = vadd.f32 %v176, %v1750
  %v1877 = vadd.f32 %v177, %v1752
  %v1878 = vadd.f32 %v178, %v1755
  %v1879 = vadd.f32 %v179, %v1757
  %v1880 = vadd.f32 %v180, %v1760
  %v1881 = vadd.f32 %v181, %v1762
  %v1882 = vadd.f32 %v182, %v1765
  %v1883 = vadd.f32 %v183, %v1767
  %v1884 = vadd.f32 %v184, %v1770
  %v1885 = vadd.f32 %v185, %v1772
  %v1886 = vadd.f32 %v186, %v1775
  %v1887 = vadd.f32 %v187, %v1777
  %v1888 = vadd.f32 %v188, %v1780
  %v1889 = vadd.f32 %v189, %v1782
  %v1890 = vadd.f32 %v190, %v1785
  %v1891 = vadd.f32 %v191, %v1787
  %v1892 = vadd.f32 %v192, %v1790
  %v1893 = vadd.f32 %v193, %v1792
  %v1894 = vadd.f32 %v194, %v1795
  %v1895 = vadd.f32 %v195, %v1797
  %v1896 = vadd.f32 %v196, %v1800
  %v1897 = vadd.f32 %v197, %v1802
  %v1898 = vadd.f32 %v198, %v1805
  %v1899 = vadd.f32 %v199, %v1807
  %v1900 = vadd.f32 %v200, %v1810
  %v1901 = vadd.f32 %v201, %v1812
  %v1902 = vadd.f32 %v202, %v1815
  %v1903 = vadd.f32 %v203, %v1817
  %v1904 = vadd.f32 %v204, %v1820
  %v1905 = vadd.f32 %v205, %v1822
  %v1906 = vadd.f32 %v206, %v1825
  %v1907 = vadd.f32 %v207, %v1827
  %v1908 = vadd.f32 %v208, %v1830
  %v1909 = vadd.f32 %v209, %v1832
  %v1910 = vadd.f32 %v210, %v1835
  %v1911 = vadd.f32 %v211, %v1837
  %v1912 = vadd.f32 %v212, %v1840
  %v1913 = vadd.f32 %v213, %v1842
  %v1914 = vadd.f32 %v214, %v1845
  %v1915 = vadd.f32 %v215, %v1847
  %v1916 = vadd.f32 %v216, %v1850
  %v1917 = vadd.f32 %v217, %v1852
  %1918 = vst [vmem:[%s4] sm:$0xff] %v1854
  %1919 = vst [vmem:[%s4 + $0x8] sm:$0xff] %v1855
  %1920 = vst [vmem:[%s4 + $0x10] sm:$0xff] %v1856
  %1921 = vst [vmem:[%s4 + $0x18] sm:$0xff] %v1857
  %1922 = vst [vmem:[%s4 + $0x20] sm:$0xff] %v1858
  %1923 = vst [vmem:[%s4 + $0x28] sm:$0xff] %v1859
  %1924 = vst [vmem:[%s4 + $0x30] sm:$0xff] %v1860
  %1925 = vst [vmem:[%s4 + $0x38] sm:$0xff] %v1861
  %1926 = vst [vmem:[%s4 + $0x40] sm:$0xff] %v1862
  %1927 = vst [vmem:[%s4 + $0x48] sm:$0xff] %v1863
  %1928 = vst [vmem:[%s4 + $0x50] sm:$0xff] %v1864
  %1929 = vst [vmem:[%s4 + $0x58] sm:$0xff] %v1865
  %1930 = vst [vmem:[%s4 + $0x60] sm:$0xff] %v1866
  %1931 = vst [vmem:[%s4 + $0x68] sm:$0xff] %v1867
  %1932 = vst [vmem:[%s4 + $0x70] sm:$0xff] %v1868
  %1933 = vst [vmem:[%s4 + $0x78] sm:$0xff] %v1869
  %1934 = vst [vmem:[%s4 + $0x80] sm:$0xff] %v1870
  %1935 = vst [vmem:[%s4 + $0x88] sm:$0xff] %v1871
  %1936 = vst [vmem:[%s4 + $0x90] sm:$0xff] %v1872
  %1937 = vst [vmem:[%s4 + $0x98] sm:$0xff] %v1873
  %1938 = vst [vmem:[%s4 + $0xa0] sm:$0xff] %v1874
  %1939 = vst [vmem:[%s4 + $0xa8] sm:$0xff] %v1875
  %1940 = vst [vmem:[%s4 + $0xb0] sm:$0xff] %v1876
  %1941 = vst [vmem:[%s4 + $0xb8] sm:$0xff] %v1877
  %1942 = vst [vmem:[%s4 + $0xc0] sm:$0xff] %v1878
  %1943 = vst [vmem:[%s4 + $0xc8] sm:$0xff] %v1879
  %1944 = vst [vmem:[%s4 + $0xd0] sm:$0xff] %v1880
  %1945 = vst [vmem:[%s4 + $0xd8] sm:$0xff] %v1881
  %1946 = vst [vmem:[%s4 + $0xe0] sm:$0xff] %v1882
  %1947 = vst [vmem:[%s4 + $0xe8] sm:$0xff] %v1883
  %1948 = vst [vmem:[%s4 + $0xf0] sm:$0xff] %v1884
  %1949 = vst [vmem:[%s4 + $0xf8] sm:$0xff] %v1885
  %1950 = vst [vmem:[%s4 + $0x100] sm:$0xff] %v1886
  %1951 = vst [vmem:[%s4 + $0x108] sm:$0xff] %v1887
  %1952 = vst [vmem:[%s4 + $0x110] sm:$0xff] %v1888
  %1953 = vst [vmem:[%s4 + $0x118] sm:$0xff] %v1889
  %1954 = vst [vmem:[%s4 + $0x120] sm:$0xff] %v1890
  %1955 = vst [vmem:[%s4 + $0x128] sm:$0xff] %v1891
  %1956 = vst [vmem:[%s4 + $0x130] sm:$0xff] %v1892
  %1957 = vst [vmem:[%s4 + $0x138] sm:$0xff] %v1893
  %1958 = vst [vmem:[%s4 + $0x140] sm:$0xff] %v1894
  %1959 = vst [vmem:[%s4 + $0x148] sm:$0xff] %v1895
  %1960 = vst [vmem:[%s4 + $0x150] sm:$0xff] %v1896
  %1961 = vst [vmem:[%s4 + $0x158] sm:$0xff] %v1897
  %1962 = vst [vmem:[%s4 + $0x160] sm:$0xff] %v1898
  %1963 = vst [vmem:[%s4 + $0x168] sm:$0xff] %v1899
  %1964 = vst [vmem:[%s4 + $0x170] sm:$0xff] %v1900
  %1965 = vst [vmem:[%s4 + $0x178] sm:$0xff] %v1901
  %1966 = vst [vmem:[%s4 + $0x180] sm:$0xff] %v1902
  %1967 = vst [vmem:[%s4 + $0x188] sm:$0xff] %v1903
  %1968 = vst [vmem:[%s4 + $0x190] sm:$0xff] %v1904
  %1969 = vst [vmem:[%s4 + $0x198] sm:$0xff] %v1905
  %1970 = vst [vmem:[%s4 + $0x1a0] sm:$0xff] %v1906
  %1971 = vst [vmem:[%s4 + $0x1a8] sm:$0xff] %v1907
  %1972 = vst [vmem:[%s4 + $0x1b0] sm:$0xff] %v1908
  %1973 = vst [vmem:[%s4 + $0x1b8] sm:$0xff] %v1909
  %1974 = vst [vmem:[%s4 + $0x1c0] sm:$0xff] %v1910
  %1975 = vst [vmem:[%s4 + $0x1c8] sm:$0xff] %v1911
  %1976 = vst [vmem:[%s4 + $0x1d0] sm:$0xff] %v1912
  %1977 = vst [vmem:[%s4 + $0x1d8] sm:$0xff] %v1913
  %1978 = vst [vmem:[%s4 + $0x1e0] sm:$0xff] %v1914
  %1979 = vst [vmem:[%s4 + $0x1e8] sm:$0xff] %v1915
  %1980 = vst [vmem:[%s4 + $0x1f0] sm:$0xff] %v1916
  %1981 = vst [vmem:[%s4 + $0x1f8] sm:$0xff] %v1917
  // Predicated region
  $region22: #{gcn_forward.7} parent=0 // pred_check
    %p1982 = pneg %p17
  $region23: #{gcn_forward.7} parent=0 // pred_check_branch
    %1984 = sbr.rel (%p1982) target = $region25
  $region24: #{gcn_forward.7} parent=0 // pred_region
    %v1985 = vld [vmem:[%s4] sm:$0xff]
    %v1986 = vld [vmem:[%s4 + $0x8] sm:$0xff]
    %v1987 = vld [vmem:[%s4 + $0x10] sm:$0xff]
    %v1988 = vld [vmem:[%s4 + $0x18] sm:$0xff]
    %v1989 = vld [vmem:[%s4 + $0x20] sm:$0xff]
    %v1990 = vld [vmem:[%s4 + $0x28] sm:$0xff]
    %v1991 = vld [vmem:[%s4 + $0x30] sm:$0xff]
    %v1992 = vld [vmem:[%s4 + $0x38] sm:$0xff]
    %v1993 = vld [vmem:[%s4 + $0x40] sm:$0xff]
    %v1994 = vld [vmem:[%s4 + $0x48] sm:$0xff]
    %v1995 = vld [vmem:[%s4 + $0x50] sm:$0xff]
    %v1996 = vld [vmem:[%s4 + $0x58] sm:$0xff]
    %v1997 = vld [vmem:[%s4 + $0x60] sm:$0xff]
    %v1998 = vld [vmem:[%s4 + $0x68] sm:$0xff]
    %v1999 = vld [vmem:[%s4 + $0x70] sm:$0xff]
    %v2000 = vld [vmem:[%s4 + $0x78] sm:$0xff]
    %v2001 = vld [vmem:[%s4 + $0x80] sm:$0xff]
    %v2002 = vld [vmem:[%s4 + $0x88] sm:$0xff]
    %v2003 = vld [vmem:[%s4 + $0x90] sm:$0xff]
    %v2004 = vld [vmem:[%s4 + $0x98] sm:$0xff]
    %v2005 = vld [vmem:[%s4 + $0xa0] sm:$0xff]
    %v2006 = vld [vmem:[%s4 + $0xa8] sm:$0xff]
    %v2007 = vld [vmem:[%s4 + $0xb0] sm:$0xff]
    %v2008 = vld [vmem:[%s4 + $0xb8] sm:$0xff]
    %v2009 = vld [vmem:[%s4 + $0xc0] sm:$0xff]
    %v2010 = vld [vmem:[%s4 + $0xc8] sm:$0xff]
    %v2011 = vld [vmem:[%s4 + $0xd0] sm:$0xff]
    %v2012 = vld [vmem:[%s4 + $0xd8] sm:$0xff]
    %v2013 = vld [vmem:[%s4 + $0xe0] sm:$0xff]
    %v2014 = vld [vmem:[%s4 + $0xe8] sm:$0xff]
    %v2015 = vld [vmem:[%s4 + $0xf0] sm:$0xff]
    %v2016 = vld [vmem:[%s4 + $0xf8] sm:$0xff]
    %v2017 = vld [vmem:[%s4 + $0x100] sm:$0xff]
    %v2018 = vld [vmem:[%s4 + $0x108] sm:$0xff]
    %v2019 = vld [vmem:[%s4 + $0x110] sm:$0xff]
    %v2020 = vld [vmem:[%s4 + $0x118] sm:$0xff]
    %v2021 = vld [vmem:[%s4 + $0x120] sm:$0xff]
    %v2022 = vld [vmem:[%s4 + $0x128] sm:$0xff]
    %v2023 = vld [vmem:[%s4 + $0x130] sm:$0xff]
    %v2024 = vld [vmem:[%s4 + $0x138] sm:$0xff]
    %v2025 = vld [vmem:[%s4 + $0x140] sm:$0xff]
    %v2026 = vld [vmem:[%s4 + $0x148] sm:$0xff]
    %v2027 = vld [vmem:[%s4 + $0x150] sm:$0xff]
    %v2028 = vld [vmem:[%s4 + $0x158] sm:$0xff]
    %v2029 = vld [vmem:[%s4 + $0x160] sm:$0xff]
    %v2030 = vld [vmem:[%s4 + $0x168] sm:$0xff]
    %v2031 = vld [vmem:[%s4 + $0x170] sm:$0xff]
    %v2032 = vld [vmem:[%s4 + $0x178] sm:$0xff]
    %v2033 = vld [vmem:[%s4 + $0x180] sm:$0xff]
    %v2034 = vld [vmem:[%s4 + $0x188] sm:$0xff]
    %v2035 = vld [vmem:[%s4 + $0x190] sm:$0xff]
    %v2036 = vld [vmem:[%s4 + $0x198] sm:$0xff]
    %v2037 = vld [vmem:[%s4 + $0x1a0] sm:$0xff]
    %v2038 = vld [vmem:[%s4 + $0x1a8] sm:$0xff]
    %v2039 = vld [vmem:[%s4 + $0x1b0] sm:$0xff]
    %v2040 = vld [vmem:[%s4 + $0x1b8] sm:$0xff]
    %v2041 = vld [vmem:[%s4 + $0x1c0] sm:$0xff]
    %v2042 = vld [vmem:[%s4 + $0x1c8] sm:$0xff]
    %v2043 = vld [vmem:[%s4 + $0x1d0] sm:$0xff]
    %v2044 = vld [vmem:[%s4 + $0x1d8] sm:$0xff]
    %v2045 = vld [vmem:[%s4 + $0x1e0] sm:$0xff]
    %v2046 = vld [vmem:[%s4 + $0x1e8] sm:$0xff]
    %v2047 = vld [vmem:[%s4 + $0x1f0] sm:$0xff]
    %v2048 = vld [vmem:[%s4 + $0x1f8] sm:$0xff]
    %v2049 = vld [vmem:[%s2] sm:$0xff]
    %v2050 = vld [vmem:[%s2 + $0x8] sm:$0xff]
    %v2051 = vld [vmem:[%s2 + $0x10] sm:$0xff]
    %v2052 = vld [vmem:[%s2 + $0x18] sm:$0xff]
    %v2053 = vld [vmem:[%s2 + $0x20] sm:$0xff]
    %v2054 = vld [vmem:[%s2 + $0x28] sm:$0xff]
    %v2055 = vld [vmem:[%s2 + $0x30] sm:$0xff]
    %v2056 = vld [vmem:[%s2 + $0x38] sm:$0xff]
    %v2057 = vld [vmem:[%s2 + $0x40] sm:$0xff]
    %v2058 = vld [vmem:[%s2 + $0x48] sm:$0xff]
    %v2059 = vld [vmem:[%s2 + $0x50] sm:$0xff]
    %v2060 = vld [vmem:[%s2 + $0x58] sm:$0xff]
    %v2061 = vld [vmem:[%s2 + $0x60] sm:$0xff]
    %v2062 = vld [vmem:[%s2 + $0x68] sm:$0xff]
    %v2063 = vld [vmem:[%s2 + $0x70] sm:$0xff]
    %v2064 = vld [vmem:[%s2 + $0x78] sm:$0xff]
    %v2065 = vld [vmem:[%s2 + $0x80] sm:$0xff]
    %v2066 = vld [vmem:[%s2 + $0x88] sm:$0xff]
    %v2067 = vld [vmem:[%s2 + $0x90] sm:$0xff]
    %v2068 = vld [vmem:[%s2 + $0x98] sm:$0xff]
    %v2069 = vld [vmem:[%s2 + $0xa0] sm:$0xff]
    %v2070 = vld [vmem:[%s2 + $0xa8] sm:$0xff]
    %v2071 = vld [vmem:[%s2 + $0xb0] sm:$0xff]
    %v2072 = vld [vmem:[%s2 + $0xb8] sm:$0xff]
    %v2073 = vld [vmem:[%s2 + $0xc0] sm:$0xff]
    %v2074 = vld [vmem:[%s2 + $0xc8] sm:$0xff]
    %v2075 = vld [vmem:[%s2 + $0xd0] sm:$0xff]
    %v2076 = vld [vmem:[%s2 + $0xd8] sm:$0xff]
    %v2077 = vld [vmem:[%s2 + $0xe0] sm:$0xff]
    %v2078 = vld [vmem:[%s2 + $0xe8] sm:$0xff]
    %v2079 = vld [vmem:[%s2 + $0xf0] sm:$0xff]
    %v2080 = vld [vmem:[%s2 + $0xf8] sm:$0xff]
    %v2081 = vld [vmem:[%s2 + $0x100] sm:$0xff]
    %v2082 = vld [vmem:[%s2 + $0x108] sm:$0xff]
    %v2083 = vld [vmem:[%s2 + $0x110] sm:$0xff]
    %v2084 = vld [vmem:[%s2 + $0x118] sm:$0xff]
    %v2085 = vld [vmem:[%s2 + $0x120] sm:$0xff]
    %v2086 = vld [vmem:[%s2 + $0x128] sm:$0xff]
    %v2087 = vld [vmem:[%s2 + $0x130] sm:$0xff]
    %v2088 = vld [vmem:[%s2 + $0x138] sm:$0xff]
    %v2089 = vld [vmem:[%s2 + $0x140] sm:$0xff]
    %v2090 = vld [vmem:[%s2 + $0x148] sm:$0xff]
    %v2091 = vld [vmem:[%s2 + $0x150] sm:$0xff]
    %v2092 = vld [vmem:[%s2 + $0x158] sm:$0xff]
    %v2093 = vld [vmem:[%s2 + $0x160] sm:$0xff]
    %v2094 = vld [vmem:[%s2 + $0x168] sm:$0xff]
    %v2095 = vld [vmem:[%s2 + $0x170] sm:$0xff]
    %v2096 = vld [vmem:[%s2 + $0x178] sm:$0xff]
    %v2097 = vld [vmem:[%s2 + $0x180] sm:$0xff]
    %v2098 = vld [vmem:[%s2 + $0x188] sm:$0xff]
    %v2099 = vld [vmem:[%s2 + $0x190] sm:$0xff]
    %v2100 = vld [vmem:[%s2 + $0x198] sm:$0xff]
    %v2101 = vld [vmem:[%s2 + $0x1a0] sm:$0xff]
    %v2102 = vld [vmem:[%s2 + $0x1a8] sm:$0xff]
    %v2103 = vld [vmem:[%s2 + $0x1b0] sm:$0xff]
    %v2104 = vld [vmem:[%s2 + $0x1b8] sm:$0xff]
    %v2105 = vld [vmem:[%s2 + $0x1c0] sm:$0xff]
    %v2106 = vld [vmem:[%s2 + $0x1c8] sm:$0xff]
    %v2107 = vld [vmem:[%s2 + $0x1d0] sm:$0xff]
    %v2108 = vld [vmem:[%s2 + $0x1d8] sm:$0xff]
    %v2109 = vld [vmem:[%s2 + $0x1e0] sm:$0xff]
    %v2110 = vld [vmem:[%s2 + $0x1e8] sm:$0xff]
    %v2111 = vld [vmem:[%s2 + $0x1f0] sm:$0xff]
    %v2112 = vld [vmem:[%s2 + $0x1f8] sm:$0xff]
    %2114 = vset.pattern.permute.xlu0 0
    %2115 = vperm.xlu0 %2114, %v2049
    %v2116 = vpop.permute.xlu0 %2115
    %2119 = vset.pattern.permute.xlu0 0
    %2120 = vperm.xlu0 %2119, %v2050
    %v2121 = vpop.permute.xlu0 %2120
    %2124 = vset.pattern.permute.xlu0 0
    %2125 = vperm.xlu0 %2124, %v2051
    %v2126 = vpop.permute.xlu0 %2125
    %2129 = vset.pattern.permute.xlu0 0
    %2130 = vperm.xlu0 %2129, %v2052
    %v2131 = vpop.permute.xlu0 %2130
    %2134 = vset.pattern.permute.xlu0 0
    %2135 = vperm.xlu0 %2134, %v2053
    %v2136 = vpop.permute.xlu0 %2135
    %2139 = vset.pattern.permute.xlu0 0
    %2140 = vperm.xlu0 %2139, %v2054
    %v2141 = vpop.permute.xlu0 %2140
    %2144 = vset.pattern.permute.xlu0 0
    %2145 = vperm.xlu0 %2144, %v2055
    %v2146 = vpop.permute.xlu0 %2145
    %2149 = vset.pattern.permute.xlu0 0
    %2150 = vperm.xlu0 %2149, %v2056
    %v2151 = vpop.permute.xlu0 %2150
    %2154 = vset.pattern.permute.xlu0 0
    %2155 = vperm.xlu0 %2154, %v2057
    %v2156 = vpop.permute.xlu0 %2155
    %2159 = vset.pattern.permute.xlu0 0
    %2160 = vperm.xlu0 %2159, %v2058
    %v2161 = vpop.permute.xlu0 %2160
    %2164 = vset.pattern.permute.xlu0 0
    %2165 = vperm.xlu0 %2164, %v2059
    %v2166 = vpop.permute.xlu0 %2165
    %2169 = vset.pattern.permute.xlu0 0
    %2170 = vperm.xlu0 %2169, %v2060
    %v2171 = vpop.permute.xlu0 %2170
    %2174 = vset.pattern.permute.xlu0 0
    %2175 = vperm.xlu0 %2174, %v2061
    %v2176 = vpop.permute.xlu0 %2175
    %2179 = vset.pattern.permute.xlu0 0
    %2180 = vperm.xlu0 %2179, %v2062
    %v2181 = vpop.permute.xlu0 %2180
    %2184 = vset.pattern.permute.xlu0 0
    %2185 = vperm.xlu0 %2184, %v2063
    %v2186 = vpop.permute.xlu0 %2185
    %2189 = vset.pattern.permute.xlu0 0
    %2190 = vperm.xlu0 %2189, %v2064
    %v2191 = vpop.permute.xlu0 %2190
    %2194 = vset.pattern.permute.xlu0 0
    %2195 = vperm.xlu0 %2194, %v2065
    %v2196 = vpop.permute.xlu0 %2195
    %2199 = vset.pattern.permute.xlu0 0
    %2200 = vperm.xlu0 %2199, %v2066
    %v2201 = vpop.permute.xlu0 %2200
    %2204 = vset.pattern.permute.xlu0 0
    %2205 = vperm.xlu0 %2204, %v2067
    %v2206 = vpop.permute.xlu0 %2205
    %2209 = vset.pattern.permute.xlu0 0
    %2210 = vperm.xlu0 %2209, %v2068
    %v2211 = vpop.permute.xlu0 %2210
    %2214 = vset.pattern.permute.xlu0 0
    %2215 = vperm.xlu0 %2214, %v2069
    %v2216 = vpop.permute.xlu0 %2215
    %2219 = vset.pattern.permute.xlu0 0
    %2220 = vperm.xlu0 %2219, %v2070
    %v2221 = vpop.permute.xlu0 %2220
    %2224 = vset.pattern.permute.xlu0 0
    %2225 = vperm.xlu0 %2224, %v2071
    %v2226 = vpop.permute.xlu0 %2225
    %2229 = vset.pattern.permute.xlu0 0
    %2230 = vperm.xlu0 %2229, %v2072
    %v2231 = vpop.permute.xlu0 %2230
    %2234 = vset.pattern.permute.xlu0 0
    %2235 = vperm.xlu0 %2234, %v2073
    %v2236 = vpop.permute.xlu0 %2235
    %2239 = vset.pattern.permute.xlu0 0
    %2240 = vperm.xlu0 %2239, %v2074
    %v2241 = vpop.permute.xlu0 %2240
    %2244 = vset.pattern.permute.xlu0 0
    %2245 = vperm.xlu0 %2244, %v2075
    %v2246 = vpop.permute.xlu0 %2245
    %2249 = vset.pattern.permute.xlu0 0
    %2250 = vperm.xlu0 %2249, %v2076
    %v2251 = vpop.permute.xlu0 %2250
    %2254 = vset.pattern.permute.xlu0 0
    %2255 = vperm.xlu0 %2254, %v2077
    %v2256 = vpop.permute.xlu0 %2255
    %2259 = vset.pattern.permute.xlu0 0
    %2260 = vperm.xlu0 %2259, %v2078
    %v2261 = vpop.permute.xlu0 %2260
    %2264 = vset.pattern.permute.xlu0 0
    %2265 = vperm.xlu0 %2264, %v2079
    %v2266 = vpop.permute.xlu0 %2265
    %2269 = vset.pattern.permute.xlu0 0
    %2270 = vperm.xlu0 %2269, %v2080
    %v2271 = vpop.permute.xlu0 %2270
    %2274 = vset.pattern.permute.xlu0 0
    %2275 = vperm.xlu0 %2274, %v2081
    %v2276 = vpop.permute.xlu0 %2275
    %2279 = vset.pattern.permute.xlu0 0
    %2280 = vperm.xlu0 %2279, %v2082
    %v2281 = vpop.permute.xlu0 %2280
    %2284 = vset.pattern.permute.xlu0 0
    %2285 = vperm.xlu0 %2284, %v2083
    %v2286 = vpop.permute.xlu0 %2285
    %2289 = vset.pattern.permute.xlu0 0
    %2290 = vperm.xlu0 %2289, %v2084
    %v2291 = vpop.permute.xlu0 %2290
    %2294 = vset.pattern.permute.xlu0 0
    %2295 = vperm.xlu0 %2294, %v2085
    %v2296 = vpop.permute.xlu0 %2295
    %2299 = vset.pattern.permute.xlu0 0
    %2300 = vperm.xlu0 %2299, %v2086
    %v2301 = vpop.permute.xlu0 %2300
    %2304 = vset.pattern.permute.xlu0 0
    %2305 = vperm.xlu0 %2304, %v2087
    %v2306 = vpop.permute.xlu0 %2305
    %2309 = vset.pattern.permute.xlu0 0
    %2310 = vperm.xlu0 %2309, %v2088
    %v2311 = vpop.permute.xlu0 %2310
    %2314 = vset.pattern.permute.xlu0 0
    %2315 = vperm.xlu0 %2314, %v2089
    %v2316 = vpop.permute.xlu0 %2315
    %2319 = vset.pattern.permute.xlu0 0
    %2320 = vperm.xlu0 %2319, %v2090
    %v2321 = vpop.permute.xlu0 %2320
    %2324 = vset.pattern.permute.xlu0 0
    %2325 = vperm.xlu0 %2324, %v2091
    %v2326 = vpop.permute.xlu0 %2325
    %2329 = vset.pattern.permute.xlu0 0
    %2330 = vperm.xlu0 %2329, %v2092
    %v2331 = vpop.permute.xlu0 %2330
    %2334 = vset.pattern.permute.xlu0 0
    %2335 = vperm.xlu0 %2334, %v2093
    %v2336 = vpop.permute.xlu0 %2335
    %2339 = vset.pattern.permute.xlu0 0
    %2340 = vperm.xlu0 %2339, %v2094
    %v2341 = vpop.permute.xlu0 %2340
    %2344 = vset.pattern.permute.xlu0 0
    %2345 = vperm.xlu0 %2344, %v2095
    %v2346 = vpop.permute.xlu0 %2345
    %2349 = vset.pattern.permute.xlu0 0
    %2350 = vperm.xlu0 %2349, %v2096
    %v2351 = vpop.permute.xlu0 %2350
    %2354 = vset.pattern.permute.xlu0 0
    %2355 = vperm.xlu0 %2354, %v2097
    %v2356 = vpop.permute.xlu0 %2355
    %2359 = vset.pattern.permute.xlu0 0
    %2360 = vperm.xlu0 %2359, %v2098
    %v2361 = vpop.permute.xlu0 %2360
    %2364 = vset.pattern.permute.xlu0 0
    %2365 = vperm.xlu0 %2364, %v2099
    %v2366 = vpop.permute.xlu0 %2365
    %2369 = vset.pattern.permute.xlu0 0
    %2370 = vperm.xlu0 %2369, %v2100
    %v2371 = vpop.permute.xlu0 %2370
    %2374 = vset.pattern.permute.xlu0 0
    %2375 = vperm.xlu0 %2374, %v2101
    %v2376 = vpop.permute.xlu0 %2375
    %2379 = vset.pattern.permute.xlu0 0
    %2380 = vperm.xlu0 %2379, %v2102
    %v2381 = vpop.permute.xlu0 %2380
    %2384 = vset.pattern.permute.xlu0 0
    %2385 = vperm.xlu0 %2384, %v2103
    %v2386 = vpop.permute.xlu0 %2385
    %2389 = vset.pattern.permute.xlu0 0
    %2390 = vperm.xlu0 %2389, %v2104
    %v2391 = vpop.permute.xlu0 %2390
    %2394 = vset.pattern.permute.xlu0 0
    %2395 = vperm.xlu0 %2394, %v2105
    %v2396 = vpop.permute.xlu0 %2395
    %2399 = vset.pattern.permute.xlu0 0
    %2400 = vperm.xlu0 %2399, %v2106
    %v2401 = vpop.permute.xlu0 %2400
    %2404 = vset.pattern.permute.xlu0 0
    %2405 = vperm.xlu0 %2404, %v2107
    %v2406 = vpop.permute.xlu0 %2405
    %2409 = vset.pattern.permute.xlu0 0
    %2410 = vperm.xlu0 %2409, %v2108
    %v2411 = vpop.permute.xlu0 %2410
    %2414 = vset.pattern.permute.xlu0 0
    %2415 = vperm.xlu0 %2414, %v2109
    %v2416 = vpop.permute.xlu0 %2415
    %2419 = vset.pattern.permute.xlu0 0
    %2420 = vperm.xlu0 %2419, %v2110
    %v2421 = vpop.permute.xlu0 %2420
    %2424 = vset.pattern.permute.xlu0 0
    %2425 = vperm.xlu0 %2424, %v2111
    %v2426 = vpop.permute.xlu0 %2425
    %2429 = vset.pattern.permute.xlu0 0
    %2430 = vperm.xlu0 %2429, %v2112
    %v2431 = vpop.permute.xlu0 %2430
    %v2433 = vmul.f32 %v1985, %v2116
    %v2434 = vmul.f32 %v1986, %v2121
    %v2435 = vmul.f32 %v1987, %v2126
    %v2436 = vmul.f32 %v1988, %v2131
    %v2437 = vmul.f32 %v1989, %v2136
    %v2438 = vmul.f32 %v1990, %v2141
    %v2439 = vmul.f32 %v1991, %v2146
    %v2440 = vmul.f32 %v1992, %v2151
    %v2441 = vmul.f32 %v1993, %v2156
    %v2442 = vmul.f32 %v1994, %v2161
    %v2443 = vmul.f32 %v1995, %v2166
    %v2444 = vmul.f32 %v1996, %v2171
    %v2445 = vmul.f32 %v1997, %v2176
    %v2446 = vmul.f32 %v1998, %v2181
    %v2447 = vmul.f32 %v1999, %v2186
    %v2448 = vmul.f32 %v2000, %v2191
    %v2449 = vmul.f32 %v2001, %v2196
    %v2450 = vmul.f32 %v2002, %v2201
    %v2451 = vmul.f32 %v2003, %v2206
    %v2452 = vmul.f32 %v2004, %v2211
    %v2453 = vmul.f32 %v2005, %v2216
    %v2454 = vmul.f32 %v2006, %v2221
    %v2455 = vmul.f32 %v2007, %v2226
    %v2456 = vmul.f32 %v2008, %v2231
    %v2457 = vmul.f32 %v2009, %v2236
    %v2458 = vmul.f32 %v2010, %v2241
    %v2459 = vmul.f32 %v2011, %v2246
    %v2460 = vmul.f32 %v2012, %v2251
    %v2461 = vmul.f32 %v2013, %v2256
    %v2462 = vmul.f32 %v2014, %v2261
    %v2463 = vmul.f32 %v2015, %v2266
    %v2464 = vmul.f32 %v2016, %v2271
    %v2465 = vmul.f32 %v2017, %v2276
    %v2466 = vmul.f32 %v2018, %v2281
    %v2467 = vmul.f32 %v2019, %v2286
    %v2468 = vmul.f32 %v2020, %v2291
    %v2469 = vmul.f32 %v2021, %v2296
    %v2470 = vmul.f32 %v2022, %v2301
    %v2471 = vmul.f32 %v2023, %v2306
    %v2472 = vmul.f32 %v2024, %v2311
    %v2473 = vmul.f32 %v2025, %v2316
    %v2474 = vmul.f32 %v2026, %v2321
    %v2475 = vmul.f32 %v2027, %v2326
    %v2476 = vmul.f32 %v2028, %v2331
    %v2477 = vmul.f32 %v2029, %v2336
    %v2478 = vmul.f32 %v2030, %v2341
    %v2479 = vmul.f32 %v2031, %v2346
    %v2480 = vmul.f32 %v2032, %v2351
    %v2481 = vmul.f32 %v2033, %v2356
    %v2482 = vmul.f32 %v2034, %v2361
    %v2483 = vmul.f32 %v2035, %v2366
    %v2484 = vmul.f32 %v2036, %v2371
    %v2485 = vmul.f32 %v2037, %v2376
    %v2486 = vmul.f32 %v2038, %v2381
    %v2487 = vmul.f32 %v2039, %v2386
    %v2488 = vmul.f32 %v2040, %v2391
    %v2489 = vmul.f32 %v2041, %v2396
    %v2490 = vmul.f32 %v2042, %v2401
    %v2491 = vmul.f32 %v2043, %v2406
    %v2492 = vmul.f32 %v2044, %v2411
    %v2493 = vmul.f32 %v2045, %v2416
    %v2494 = vmul.f32 %v2046, %v2421
    %v2495 = vmul.f32 %v2047, %v2426
    %v2496 = vmul.f32 %v2048, %v2431
    %v2497 = vld [vmem:[%s3] sm:$0x1]
    %v2499 = vperm.slane %v2497, 0
    %v2501 = vadd.f32 %v2433, %v2499
    %v2502 = vadd.f32 %v2434, %v2499
    %v2503 = vadd.f32 %v2435, %v2499
    %v2504 = vadd.f32 %v2436, %v2499
    %v2505 = vadd.f32 %v2437, %v2499
    %v2506 = vadd.f32 %v2438, %v2499
    %v2507 = vadd.f32 %v2439, %v2499
    %v2508 = vadd.f32 %v2440, %v2499
    %v2509 = vadd.f32 %v2441, %v2499
    %v2510 = vadd.f32 %v2442, %v2499
    %v2511 = vadd.f32 %v2443, %v2499
    %v2512 = vadd.f32 %v2444, %v2499
    %v2513 = vadd.f32 %v2445, %v2499
    %v2514 = vadd.f32 %v2446, %v2499
    %v2515 = vadd.f32 %v2447, %v2499
    %v2516 = vadd.f32 %v2448, %v2499
    %v2517 = vadd.f32 %v2449, %v2499
    %v2518 = vadd.f32 %v2450, %v2499
    %v2519 = vadd.f32 %v2451, %v2499
    %v2520 = vadd.f32 %v2452, %v2499
    %v2521 = vadd.f32 %v2453, %v2499
    %v2522 = vadd.f32 %v2454, %v2499
    %v2523 = vadd.f32 %v2455, %v2499
    %v2524 = vadd.f32 %v2456, %v2499
    %v2525 = vadd.f32 %v2457, %v2499
    %v2526 = vadd.f32 %v2458, %v2499
    %v2527 = vadd.f32 %v2459, %v2499
    %v2528 = vadd.f32 %v2460, %v2499
    %v2529 = vadd.f32 %v2461, %v2499
    %v2530 = vadd.f32 %v2462, %v2499
    %v2531 = vadd.f32 %v2463, %v2499
    %v2532 = vadd.f32 %v2464, %v2499
    %v2533 = vadd.f32 %v2465, %v2499
    %v2534 = vadd.f32 %v2466, %v2499
    %v2535 = vadd.f32 %v2467, %v2499
    %v2536 = vadd.f32 %v2468, %v2499
    %v2537 = vadd.f32 %v2469, %v2499
    %v2538 = vadd.f32 %v2470, %v2499
    %v2539 = vadd.f32 %v2471, %v2499
    %v2540 = vadd.f32 %v2472, %v2499
    %v2541 = vadd.f32 %v2473, %v2499
    %v2542 = vadd.f32 %v2474, %v2499
    %v2543 = vadd.f32 %v2475, %v2499
    %v2544 = vadd.f32 %v2476, %v2499
    %v2545 = vadd.f32 %v2477, %v2499
    %v2546 = vadd.f32 %v2478, %v2499
    %v2547 = vadd.f32 %v2479, %v2499
    %v2548 = vadd.f32 %v2480, %v2499
    %v2549 = vadd.f32 %v2481, %v2499
    %v2550 = vadd.f32 %v2482, %v2499
    %v2551 = vadd.f32 %v2483, %v2499
    %v2552 = vadd.f32 %v2484, %v2499
    %v2553 = vadd.f32 %v2485, %v2499
    %v2554 = vadd.f32 %v2486, %v2499
    %v2555 = vadd.f32 %v2487, %v2499
    %v2556 = vadd.f32 %v2488, %v2499
    %v2557 = vadd.f32 %v2489, %v2499
    %v2558 = vadd.f32 %v2490, %v2499
    %v2559 = vadd.f32 %v2491, %v2499
    %v2560 = vadd.f32 %v2492, %v2499
    %v2561 = vadd.f32 %v2493, %v2499
    %v2562 = vadd.f32 %v2494, %v2499
    %v2563 = vadd.f32 %v2495, %v2499
    %v2564 = vadd.f32 %v2496, %v2499
    %2565 = vst [vmem:[%s4] sm:$0xff] %v2501
    %2566 = vst [vmem:[%s4 + $0x8] sm:$0xff] %v2502
    %2567 = vst [vmem:[%s4 + $0x10] sm:$0xff] %v2503
    %2568 = vst [vmem:[%s4 + $0x18] sm:$0xff] %v2504
    %2569 = vst [vmem:[%s4 + $0x20] sm:$0xff] %v2505
    %2570 = vst [vmem:[%s4 + $0x28] sm:$0xff] %v2506
    %2571 = vst [vmem:[%s4 + $0x30] sm:$0xff] %v2507
    %2572 = vst [vmem:[%s4 + $0x38] sm:$0xff] %v2508
    %2573 = vst [vmem:[%s4 + $0x40] sm:$0xff] %v2509
    %2574 = vst [vmem:[%s4 + $0x48] sm:$0xff] %v2510
    %2575 = vst [vmem:[%s4 + $0x50] sm:$0xff] %v2511
    %2576 = vst [vmem:[%s4 + $0x58] sm:$0xff] %v2512
    %2577 = vst [vmem:[%s4 + $0x60] sm:$0xff] %v2513
    %2578 = vst [vmem:[%s4 + $0x68] sm:$0xff] %v2514
    %2579 = vst [vmem:[%s4 + $0x70] sm:$0xff] %v2515
    %2580 = vst [vmem:[%s4 + $0x78] sm:$0xff] %v2516
    %2581 = vst [vmem:[%s4 + $0x80] sm:$0xff] %v2517
    %2582 = vst [vmem:[%s4 + $0x88] sm:$0xff] %v2518
    %2583 = vst [vmem:[%s4 + $0x90] sm:$0xff] %v2519
    %2584 = vst [vmem:[%s4 + $0x98] sm:$0xff] %v2520
    %2585 = vst [vmem:[%s4 + $0xa0] sm:$0xff] %v2521
    %2586 = vst [vmem:[%s4 + $0xa8] sm:$0xff] %v2522
    %2587 = vst [vmem:[%s4 + $0xb0] sm:$0xff] %v2523
    %2588 = vst [vmem:[%s4 + $0xb8] sm:$0xff] %v2524
    %2589 = vst [vmem:[%s4 + $0xc0] sm:$0xff] %v2525
    %2590 = vst [vmem:[%s4 + $0xc8] sm:$0xff] %v2526
    %2591 = vst [vmem:[%s4 + $0xd0] sm:$0xff] %v2527
    %2592 = vst [vmem:[%s4 + $0xd8] sm:$0xff] %v2528
    %2593 = vst [vmem:[%s4 + $0xe0] sm:$0xff] %v2529
    %2594 = vst [vmem:[%s4 + $0xe8] sm:$0xff] %v2530
    %2595 = vst [vmem:[%s4 + $0xf0] sm:$0xff] %v2531
    %2596 = vst [vmem:[%s4 + $0xf8] sm:$0xff] %v2532
    %2597 = vst [vmem:[%s4 + $0x100] sm:$0xff] %v2533
    %2598 = vst [vmem:[%s4 + $0x108] sm:$0xff] %v2534
    %2599 = vst [vmem:[%s4 + $0x110] sm:$0xff] %v2535
    %2600 = vst [vmem:[%s4 + $0x118] sm:$0xff] %v2536
    %2601 = vst [vmem:[%s4 + $0x120] sm:$0xff] %v2537
    %2602 = vst [vmem:[%s4 + $0x128] sm:$0xff] %v2538
    %2603 = vst [vmem:[%s4 + $0x130] sm:$0xff] %v2539
    %2604 = vst [vmem:[%s4 + $0x138] sm:$0xff] %v2540
    %2605 = vst [vmem:[%s4 + $0x140] sm:$0xff] %v2541
    %2606 = vst [vmem:[%s4 + $0x148] sm:$0xff] %v2542
    %2607 = vst [vmem:[%s4 + $0x150] sm:$0xff] %v2543
    %2608 = vst [vmem:[%s4 + $0x158] sm:$0xff] %v2544
    %2609 = vst [vmem:[%s4 + $0x160] sm:$0xff] %v2545
    %2610 = vst [vmem:[%s4 + $0x168] sm:$0xff] %v2546
    %2611 = vst [vmem:[%s4 + $0x170] sm:$0xff] %v2547
    %2612 = vst [vmem:[%s4 + $0x178] sm:$0xff] %v2548
    %2613 = vst [vmem:[%s4 + $0x180] sm:$0xff] %v2549
    %2614 = vst [vmem:[%s4 + $0x188] sm:$0xff] %v2550
    %2615 = vst [vmem:[%s4 + $0x190] sm:$0xff] %v2551
    %2616 = vst [vmem:[%s4 + $0x198] sm:$0xff] %v2552
    %2617 = vst [vmem:[%s4 + $0x1a0] sm:$0xff] %v2553
    %2618 = vst [vmem:[%s4 + $0x1a8] sm:$0xff] %v2554
    %2619 = vst [vmem:[%s4 + $0x1b0] sm:$0xff] %v2555
    %2620 = vst [vmem:[%s4 + $0x1b8] sm:$0xff] %v2556
    %2621 = vst [vmem:[%s4 + $0x1c0] sm:$0xff] %v2557
    %2622 = vst [vmem:[%s4 + $0x1c8] sm:$0xff] %v2558
    %2623 = vst [vmem:[%s4 + $0x1d0] sm:$0xff] %v2559
    %2624 = vst [vmem:[%s4 + $0x1d8] sm:$0xff] %v2560
    %2625 = vst [vmem:[%s4 + $0x1e0] sm:$0xff] %v2561
    %2626 = vst [vmem:[%s4 + $0x1e8] sm:$0xff] %v2562
    %2627 = vst [vmem:[%s4 + $0x1f0] sm:$0xff] %v2563
    %2628 = vst [vmem:[%s4 + $0x1f8] sm:$0xff] %v2564
  $region25: #{gcn_forward.7} parent=0 // pred_fallthru
    _
  // Predicated region
  $region26: #{gcn_forward.7} parent=0 // pred_check
    _
  $region27: #{gcn_forward.7} parent=0 // pred_check_branch
    %2630 = sbr.rel (0) target = $region29
  $region28: #{gcn_forward.7} parent=0 // pred_region
    _
  $region29: #{gcn_forward.7} parent=0 // pred_fallthru
    _
  // Predicated region
  $region30: #{gcn_forward.7} parent=0 // pred_check
    _
  $region31: #{gcn_forward.7} parent=0 // pred_check_branch
    %2632 = sbr.rel (0) target = $region33
  $region32: #{gcn_forward.7} parent=0 // pred_region
    _
  $region33: #{gcn_forward.7} parent=0 // pred_fallthru
    _

</llo_original>
